<compile_context>
chip_gen: v5e
topology: v5e:2x2
jax: 0.10.0
libtpu: 0.0.40
codegen_flags: <defaults>
</compile_context>

<pallas_src>
import numpy as np
import jax
import jax.numpy as jnp
from jax import lax
from jax.experimental import pallas as pl
from jax.experimental.pallas import tpu as pltpu

K5, S2 = 5, 2
EPS = 1e-5


def conv2d_size_out(size, kernel_size=5, stride=2):
    return (size - (kernel_size - 1) - 1) // stride + 1


# ------------------------ host-side weight packing (one-time) ---------------

def _fold_bn_into_conv(w, b, g, beta, mu, v):
    scale = g / np.sqrt(v + EPS)
    return w * scale[:, None, None, None], (b - mu) * scale + beta


def _build_row_taps(wf, iw, ow, k=K5, s=S2):
    """Pack folded conv weights (Cout,Cin,k,k) into per-kernel-row slabs.

    taps[di][wi*Cin+ci, o*Cout+co] = wf[co, ci, di, wi - s*o]  (0 <= wi-s*o < k)
    so that   out_row(oh)[o*Cout+co] = sum_di  in_row(2*oh+di) @ taps[di].
    """
    cout, cin = wf.shape[0], wf.shape[1]
    taps = np.zeros((k, iw * cin, ow * cout), np.float32)
    for di in range(k):
        for dj in range(k):
            blk = wf[:, :, di, dj].T.astype(np.float32)        # (Cin, Cout)
            for o in range(ow):
                wi = s * o + dj
                taps[di, wi * cin:(wi + 1) * cin, o * cout:(o + 1) * cout] = blk
    return taps


def pack_params(p, img_h, img_w, outputs):
    oh1, ow1 = conv2d_size_out(img_h), conv2d_size_out(img_w)
    oh2, ow2 = conv2d_size_out(oh1), conv2d_size_out(ow1)
    oh3, ow3 = conv2d_size_out(oh2), conv2d_size_out(ow2)
    lin_in = oh3 * ow3 * 32

    def npf(a):
        return np.asarray(a, np.float32)

    w1f, b1f = _fold_bn_into_conv(npf(p["w1"]), npf(p["b1"]), npf(p["g1"]),
                                  npf(p["be1"]), npf(p["mu1"]), npf(p["v1"]))
    w2f, b2f = _fold_bn_into_conv(npf(p["w2"]), npf(p["b2"]), npf(p["g2"]),
                                  npf(p["be2"]), npf(p["mu2"]), npf(p["v2"]))
    w3f, b3f = _fold_bn_into_conv(npf(p["w3"]), npf(p["b3"]), npf(p["g3"]),
                                  npf(p["be3"]), npf(p["mu3"]), npf(p["v3"]))

    packed = {
        "dims": dict(h=img_h, w=img_w, oh1=oh1, ow1=ow1, oh2=oh2, ow2=ow2,
                     oh3=oh3, ow3=ow3, lin_in=lin_in, outputs=outputs),
        "w1t": jnp.asarray(_build_row_taps(w1f, img_w, ow1)),   # (5, W*3,    ow1*16)
        "b1r": jnp.asarray(np.tile(b1f, ow1)[None, :]),
        "w2t": jnp.asarray(_build_row_taps(w2f, ow1, ow2)),     # (5, ow1*16, ow2*16)
        "b2r": jnp.asarray(np.tile(b2f, ow2)[None, :]),
        "w3t": jnp.asarray(_build_row_taps(w3f, ow2, ow3)),     # (5, ow2*16, ow3*32)
        "b3r": jnp.asarray(np.tile(b3f, ow3)[None, :]),
    }

    # dense + bn4: permute columns from torch .view(B,-1) (c,h,w) order to our
    # (h,w,c) feature order, fold bn4 (eval), transpose to (lin_in, 256).
    wd = npf(p["wd"]).reshape(256, 32, oh3, ow3).transpose(0, 2, 3, 1)
    wd = wd.reshape(256, lin_in)
    scale4 = npf(p["g4"]) / np.sqrt(npf(p["v4"]) + EPS)
    packed["wdf"] = jnp.asarray((wd * scale4[:, None]).T)        # (lin_in, 256)
    packed["bdf"] = jnp.asarray(((npf(p["bd"]) - npf(p["mu4"])) * scale4
                                 + npf(p["be4"]))[None, :])      # (1, 256)

    # head: fold the (m.view(-1,1,4) @ x.view(-1,4,64)) reduction into one
    # matmul against a 4x vertically tiled head weight (kernel applies m-gate).
    packed["wht"] = jnp.asarray(np.tile(npf(p["wh"]).T, (4, 1)))  # (256, outputs)
    packed["bhr"] = jnp.asarray(npf(p["bh"])[None, :])            # (1, outputs)
    return packed


# ------------------------------ fused kernel --------------------------------

def make_controlnet_forward(packed, batch, block_b=None):
    d = packed["dims"]
    img_h, img_w = d["h"], d["w"]
    oh1, ow1 = d["oh1"], d["ow1"]
    oh2, ow2 = d["oh2"], d["ow2"]
    oh3, ow3 = d["oh3"], d["ow3"]
    lin_in, outputs = d["lin_in"], d["outputs"]
    assert img_h % 2 == 0, "input height must be even for the H phase split"
    wc0, wc1, wc2, wc3 = img_w * 3, ow1 * 16, ow2 * 16, ow3 * 32

    if block_b is None:
        block_b = batch
    assert batch % block_b == 0
    # (block_b, N) blocks: second-to-last dim must be full or a multiple of 8.
    assert block_b == batch or block_b % 8 == 0
    grid = (batch // block_b,)

    def kernel(xp_ref, w1_ref, b1_ref, w2_ref, b2_ref, w3_ref, b3_ref,
               wd_ref, bd_ref, mg_ref, wh_ref, bh_ref,
               out_ref, a1_ref, a2_ref, feat_ref):
        # ---- conv1 + bn1 + relu : row-batched (all oh1 rows per image) ----
        # xp_ref[p, b, i, :] holds input row 2*i + p flattened as (w, c).
        for b in range(block_b):
            acc = jnp.dot(xp_ref[0, b, 0:oh1, :], w1_ref[0],
                          preferred_element_type=jnp.float32)
            for di in range(1, K5):
                xs = xp_ref[di % 2, b, di // 2:di // 2 + oh1, :]   # (oh1, W*Cin)
                acc = acc + jnp.dot(xs, w1_ref[di],
                                    preferred_element_type=jnp.float32)
            a1_ref[b] = jnp.maximum(acc + b1_ref[...], 0.0)        # (oh1, wc1)

        # ---- conv2 + bn2 + relu : per output row, batched over images ----
        for oh in range(oh2):
            acc = jnp.dot(a1_ref[:, 2 * oh, :], w2_ref[0],
                          preferred_element_type=jnp.float32)
            for di in range(1, K5):
                acc = acc + jnp.dot(a1_ref[:, 2 * oh + di, :], w2_ref[di],
                                    preferred_element_type=jnp.float32)
            a2_ref[:, oh, :] = jnp.maximum(acc + b2_ref[...], 0.0)  # (B, wc2)

        # ---- conv3 + bn3 + relu -> feat rows flattened (h, w, c) ----
        for oh in range(oh3):
            acc = jnp.dot(a2_ref[:, 2 * oh, :], w3_ref[0],
                          preferred_element_type=jnp.float32)
            for di in range(1, K5):
                acc = acc + jnp.dot(a2_ref[:, 2 * oh + di, :], w3_ref[di],
                                    preferred_element_type=jnp.float32)
            feat_ref[:, oh * wc3:(oh + 1) * wc3] = \
                jnp.maximum(acc + b3_ref[...], 0.0)

        # ---- dense + bn4 + relu, m-gating, head ----
        hdn = jnp.dot(feat_ref[...], wd_ref[...],
                      preferred_element_type=jnp.float32) + bd_ref[...]
        hdn = jnp.maximum(hdn, 0.0)                                 # (B, 256)
        gated = hdn * mg_ref[...]                                   # m-gate
        out_ref[...] = jnp.dot(gated, wh_ref[...],
                               preferred_element_type=jnp.float32) + bh_ref[...]

    in_specs = [
        pl.BlockSpec((2, block_b, img_h // 2, wc0), lambda i: (0, i, 0, 0)),
        pl.BlockSpec((K5, wc0, wc1), lambda i: (0, 0, 0)),
        pl.BlockSpec((1, wc1), lambda i: (0, 0)),
        pl.BlockSpec((K5, wc1, wc2), lambda i: (0, 0, 0)),
        pl.BlockSpec((1, wc2), lambda i: (0, 0)),
        pl.BlockSpec((K5, wc2, wc3), lambda i: (0, 0, 0)),
        pl.BlockSpec((1, wc3), lambda i: (0, 0)),
        pl.BlockSpec((lin_in, 256), lambda i: (0, 0)),
        pl.BlockSpec((1, 256), lambda i: (0, 0)),
        pl.BlockSpec((block_b, 256), lambda i: (i, 0)),
        pl.BlockSpec((256, outputs), lambda i: (0, 0)),
        pl.BlockSpec((1, outputs), lambda i: (0, 0)),
    ]
    out_specs = pl.BlockSpec((block_b, outputs), lambda i: (i, 0))
    scratch_shapes = [
        pltpu.VMEM((block_b, oh1, wc1), jnp.float32),   # conv1 output
        pltpu.VMEM((block_b, oh2, wc2), jnp.float32),   # conv2 output
        pltpu.VMEM((block_b, lin_in), jnp.float32),     # flattened conv3 out
    ]

    call = pl.pallas_call(
        kernel,
        out_shape=jax.ShapeDtypeStruct((batch, outputs), jnp.float32),
        grid=grid,
        in_specs=in_specs,
        out_specs=out_specs,
        scratch_shapes=scratch_shapes,
        compiler_params=pltpu.CompilerParams(
            dimension_semantics=("parallel",)),
    )

    def forward(x, m):
        # x: (B, 3, H, W) NCHW, m: (B, 4)   (cheap layout plumbing only)
        xt = jnp.transpose(x, (0, 2, 3, 1)).reshape(batch, img_h, wc0)
        xp = xt.reshape(batch, img_h // 2, 2, wc0).transpose(2, 0, 1, 3)
        mg = jnp.repeat(m, 256 // 4, axis=1)                        # (B, 256)
        return call(xp,
                    packed["w1t"], packed["b1r"],
                    packed["w2t"], packed["b2r"],
                    packed["w3t"], packed["b3r"],
                    packed["wdf"], packed["bdf"], mg,
                    packed["wht"], packed["bhr"])

    return jax.jit(forward)


# ------------------------- pure-JAX reference (check) ----------------------

def ref_forward(p, x, m):
    def conv(x, w, b):
        y = lax.conv_general_dilated(x, w, (2, 2), "VALID",
                                     dimension_numbers=("NCHW", "OIHW", "NCHW"))
        return y + b[None, :, None, None]

    def bn2d(x, g, be, mu, v):
        return ((x - mu[None, :, None, None]) /
                jnp.sqrt(v[None, :, None, None] + EPS)) * g[None, :, None, None] \
               + be[None, :, None, None]

    x = jax.nn.relu(bn2d(conv(x, p["w1"], p["b1"]), p["g1"], p["be1"], p["mu1"], p["v1"]))
    x = jax.nn.relu(bn2d(conv(x, p["w2"], p["b2"]), p["g2"], p["be2"], p["mu2"], p["v2"]))
    x = jax.nn.relu(bn2d(conv(x, p["w3"], p["b3"]), p["g3"], p["be3"], p["mu3"], p["v3"]))
    x = x.reshape(x.shape[0], -1)
    y = x @ p["wd"].T + p["bd"]
    y = ((y - p["mu4"]) / jnp.sqrt(p["v4"] + EPS)) * p["g4"] + p["be4"]
    y = jax.nn.relu(y)
    y = y.reshape(-1, 4, 64)
    mm = m.reshape(-1, 1, 4)
    z = jnp.matmul(mm, y).reshape(-1, 64)
    return z @ p["wh"].T + p["bh"]


# --------------------------------- params -----------------------------------

def make_params(key, h, w, outputs):
    convh = conv2d_size_out(conv2d_size_out(conv2d_size_out(h)))
    convw = conv2d_size_out(conv2d_size_out(conv2d_size_out(w)))
    lin_in = convh * convw * 32
    ks = jax.random.split(key, 32)
    it = iter(ks)

    def nrm(shape, scale=0.05):
        return jax.random.normal(next(it), shape, jnp.float32) * scale

    def bn_params(c):
        g = 1.0 + 0.1 * jax.random.normal(next(it), (c,), jnp.float32)
        be = 0.05 * jax.random.normal(next(it), (c,), jnp.float32)
        mu = 0.05 * jax.random.normal(next(it), (c,), jnp.float32)
        v = 1.0 + 0.1 * jnp.abs(jax.random.normal(next(it), (c,), jnp.float32))
        return g, be, mu, v

    p = {}
    p["w1"], p["b1"] = nrm((16, 3, 5, 5)), nrm((16,), 0.01)
    p["g1"], p["be1"], p["mu1"], p["v1"] = bn_params(16)
    p["w2"], p["b2"] = nrm((16, 16, 5, 5)), nrm((16,), 0.01)
    p["g2"], p["be2"], p["mu2"], p["v2"] = bn_params(16)
    p["w3"], p["b3"] = nrm((32, 16, 5, 5)), nrm((32,), 0.01)
    p["g3"], p["be3"], p["mu3"], p["v3"] = bn_params(32)
    p["wd"], p["bd"] = nrm((256, lin_in)), nrm((256,), 0.01)
    p["g4"], p["be4"], p["mu4"], p["v4"] = bn_params(256)
    p["wh"], p["bh"] = nrm((outputs, 64)), nrm((outputs,), 0.01)
    return p, lin_in


# ---------------------------------- main -------------------------------------

if __name__ == "__main__":
    # TODO(synk): BatchNorm is implemented in eval mode (running statistics);
    # training-mode batch statistics are not reproduced.
    B, H, W, OUTPUTS = 2, 40, 40, 3

    key = jax.random.PRNGKey(0)
    kx, km, kp = jax.random.split(key, 3)
    x = jax.random.normal(kx, (B, 3, H, W), jnp.float32)
    m = jax.random.normal(km, (B, 4), jnp.float32)
    params, _ = make_params(kp, H, W, OUTPUTS)

    packed = pack_params(params, H, W, OUTPUTS)
    forward = make_controlnet_forward(packed, B)

    out = jax.block_until_ready(forward(x, m))
    ref = jax.block_until_ready(ref_forward(params, x, m))

    assert out.shape == (B, OUTPUTS), out.shape
    np.testing.assert_allclose(np.asarray(out), np.asarray(ref),
                               rtol=1e-4, atol=1e-4)
    print("KERNEL_OK")
</pallas_src>

<mosaic_0001>
module attributes {stable_mosaic.version = 11 : i64} {
  func.func @kernel(%arg0: i32, %arg1: memref<2x2x20x120xf32, #tpu.memory_space<vmem>>, %arg2: memref<5x120x288xf32, #tpu.memory_space<vmem>>, %arg3: memref<1x288xf32, #tpu.memory_space<vmem>>, %arg4: memref<5x288x112xf32, #tpu.memory_space<vmem>>, %arg5: memref<1x112xf32, #tpu.memory_space<vmem>>, %arg6: memref<5x112x64xf32, #tpu.memory_space<vmem>>, %arg7: memref<1x64xf32, #tpu.memory_space<vmem>>, %arg8: memref<128x256xf32, #tpu.memory_space<vmem>>, %arg9: memref<1x256xf32, #tpu.memory_space<vmem>>, %arg10: memref<2x256xf32, #tpu.memory_space<vmem>>, %arg11: memref<256x3xf32, #tpu.memory_space<vmem>>, %arg12: memref<1x3xf32, #tpu.memory_space<vmem>>, %arg13: memref<2x3xf32, #tpu.memory_space<vmem>>, %arg14: memref<2x18x288xf32, #tpu.memory_space<vmem>>, %arg15: memref<2x7x112xf32, #tpu.memory_space<vmem>>, %arg16: memref<2x128xf32, #tpu.memory_space<vmem>>) attributes {dimension_semantics = [#tpu.dimension_semantics<parallel>], iteration_bounds = array<i64: 1>, scalar_prefetch = 0 : i64, scratch_operands = 3 : i64, tpu.core_type = #tpu.core_type<tc>, window_params = [{transform_indices = @transform_0, window_bounds = array<i64: 2, 2, 20, 120>}, {pipeline_mode = #tpu.pipeline_mode<synchronous>, transform_indices = @transform_1, window_bounds = array<i64: 5, 120, 288>}, {pipeline_mode = #tpu.pipeline_mode<synchronous>, transform_indices = @transform_2, window_bounds = array<i64: 1, 288>}, {pipeline_mode = #tpu.pipeline_mode<synchronous>, transform_indices = @transform_3, window_bounds = array<i64: 5, 288, 112>}, {pipeline_mode = #tpu.pipeline_mode<synchronous>, transform_indices = @transform_4, window_bounds = array<i64: 1, 112>}, {pipeline_mode = #tpu.pipeline_mode<synchronous>, transform_indices = @transform_5, window_bounds = array<i64: 5, 112, 64>}, {pipeline_mode = #tpu.pipeline_mode<synchronous>, transform_indices = @transform_6, window_bounds = array<i64: 1, 64>}, {pipeline_mode = #tpu.pipeline_mode<synchronous>, transform_indices = @transform_7, window_bounds = array<i64: 128, 256>}, {pipeline_mode = #tpu.pipeline_mode<synchronous>, transform_indices = @transform_8, window_bounds = array<i64: 1, 256>}, {transform_indices = @transform_9, window_bounds = array<i64: 2, 256>}, {pipeline_mode = #tpu.pipeline_mode<synchronous>, transform_indices = @transform_10, window_bounds = array<i64: 256, 3>}, {pipeline_mode = #tpu.pipeline_mode<synchronous>, transform_indices = @transform_11, window_bounds = array<i64: 1, 3>}, {transform_indices = @transform_12, window_bounds = array<i64: 2, 3>}]} {
    %c0 = arith.constant 0 : index
    %c0_0 = arith.constant 0 : index
    %c0_1 = arith.constant 0 : index
    %c0_2 = arith.constant 0 : index
    %0 = vector.load %arg1[%c0, %c0_0, %c0_1, %c0_2] : memref<2x2x20x120xf32, #tpu.memory_space<vmem>>, vector<1x1x18x120xf32>
    %1 = vector.shape_cast %0 : vector<1x1x18x120xf32> to vector<18x120xf32>
    %c0_3 = arith.constant 0 : index
    %c0_4 = arith.constant 0 : index
    %c0_5 = arith.constant 0 : index
    %2 = vector.load %arg2[%c0_3, %c0_4, %c0_5] : memref<5x120x288xf32, #tpu.memory_space<vmem>>, vector<1x120x288xf32>
    %3 = vector.shape_cast %2 : vector<1x120x288xf32> to vector<120x288xf32>
    %cst = arith.constant dense<0.000000e+00> : vector<18x288xf32>
    %4 = tpu.matmul %1, %3, %cst {dimension_numbers = #tpu.dot_dimension_numbers<[1], [0], [0], [1], [0, 0, 1, 1], [], []>} : vector<18x120xf32>, vector<120x288xf32>, vector<18x288xf32> -> vector<18x288xf32>
    %c1 = arith.constant 1 : index
    %c0_6 = arith.constant 0 : index
    %c0_7 = arith.constant 0 : index
    %c0_8 = arith.constant 0 : index
    %5 = vector.load %arg1[%c1, %c0_6, %c0_7, %c0_8] : memref<2x2x20x120xf32, #tpu.memory_space<vmem>>, vector<1x1x18x120xf32>
    %6 = vector.shape_cast %5 : vector<1x1x18x120xf32> to vector<18x120xf32>
    %c1_9 = arith.constant 1 : index
    %c0_10 = arith.constant 0 : index
    %c0_11 = arith.constant 0 : index
    %7 = vector.load %arg2[%c1_9, %c0_10, %c0_11] : memref<5x120x288xf32, #tpu.memory_space<vmem>>, vector<1x120x288xf32>
    %8 = vector.shape_cast %7 : vector<1x120x288xf32> to vector<120x288xf32>
    %cst_12 = arith.constant dense<0.000000e+00> : vector<18x288xf32>
    %9 = tpu.matmul %6, %8, %cst_12 {dimension_numbers = #tpu.dot_dimension_numbers<[1], [0], [0], [1], [0, 0, 1, 1], [], []>} : vector<18x120xf32>, vector<120x288xf32>, vector<18x288xf32> -> vector<18x288xf32>
    %10 = arith.addf %4, %9 : vector<18x288xf32>
    %c0_13 = arith.constant 0 : index
    %c0_14 = arith.constant 0 : index
    %c1_15 = arith.constant 1 : index
    %c0_16 = arith.constant 0 : index
    %11 = vector.load %arg1[%c0_13, %c0_14, %c1_15, %c0_16] : memref<2x2x20x120xf32, #tpu.memory_space<vmem>>, vector<1x1x18x120xf32>
    %12 = vector.shape_cast %11 : vector<1x1x18x120xf32> to vector<18x120xf32>
    %c2 = arith.constant 2 : index
    %c0_17 = arith.constant 0 : index
    %c0_18 = arith.constant 0 : index
    %13 = vector.load %arg2[%c2, %c0_17, %c0_18] : memref<5x120x288xf32, #tpu.memory_space<vmem>>, vector<1x120x288xf32>
    %14 = vector.shape_cast %13 : vector<1x120x288xf32> to vector<120x288xf32>
    %cst_19 = arith.constant dense<0.000000e+00> : vector<18x288xf32>
    %15 = tpu.matmul %12, %14, %cst_19 {dimension_numbers = #tpu.dot_dimension_numbers<[1], [0], [0], [1], [0, 0, 1, 1], [], []>} : vector<18x120xf32>, vector<120x288xf32>, vector<18x288xf32> -> vector<18x288xf32>
    %16 = arith.addf %10, %15 : vector<18x288xf32>
    %c1_20 = arith.constant 1 : index
    %c0_21 = arith.constant 0 : index
    %c1_22 = arith.constant 1 : index
    %c0_23 = arith.constant 0 : index
    %17 = vector.load %arg1[%c1_20, %c0_21, %c1_22, %c0_23] : memref<2x2x20x120xf32, #tpu.memory_space<vmem>>, vector<1x1x18x120xf32>
    %18 = vector.shape_cast %17 : vector<1x1x18x120xf32> to vector<18x120xf32>
    %c3 = arith.constant 3 : index
    %c0_24 = arith.constant 0 : index
    %c0_25 = arith.constant 0 : index
    %19 = vector.load %arg2[%c3, %c0_24, %c0_25] : memref<5x120x288xf32, #tpu.memory_space<vmem>>, vector<1x120x288xf32>
    %20 = vector.shape_cast %19 : vector<1x120x288xf32> to vector<120x288xf32>
    %cst_26 = arith.constant dense<0.000000e+00> : vector<18x288xf32>
    %21 = tpu.matmul %18, %20, %cst_26 {dimension_numbers = #tpu.dot_dimension_numbers<[1], [0], [0], [1], [0, 0, 1, 1], [], []>} : vector<18x120xf32>, vector<120x288xf32>, vector<18x288xf32> -> vector<18x288xf32>
    %22 = arith.addf %16, %21 : vector<18x288xf32>
    %c0_27 = arith.constant 0 : index
    %c0_28 = arith.constant 0 : index
    %c2_29 = arith.constant 2 : index
    %c0_30 = arith.constant 0 : index
    %23 = vector.load %arg1[%c0_27, %c0_28, %c2_29, %c0_30] : memref<2x2x20x120xf32, #tpu.memory_space<vmem>>, vector<1x1x18x120xf32>
    %24 = vector.shape_cast %23 : vector<1x1x18x120xf32> to vector<18x120xf32>
    %c4 = arith.constant 4 : index
    %c0_31 = arith.constant 0 : index
    %c0_32 = arith.constant 0 : index
    %25 = vector.load %arg2[%c4, %c0_31, %c0_32] : memref<5x120x288xf32, #tpu.memory_space<vmem>>, vector<1x120x288xf32>
    %26 = vector.shape_cast %25 : vector<1x120x288xf32> to vector<120x288xf32>
    %cst_33 = arith.constant dense<0.000000e+00> : vector<18x288xf32>
    %27 = tpu.matmul %24, %26, %cst_33 {dimension_numbers = #tpu.dot_dimension_numbers<[1], [0], [0], [1], [0, 0, 1, 1], [], []>} : vector<18x120xf32>, vector<120x288xf32>, vector<18x288xf32> -> vector<18x288xf32>
    %28 = arith.addf %22, %27 : vector<18x288xf32>
    %c0_34 = arith.constant 0 : index
    %c0_35 = arith.constant 0 : index
    %29 = vector.load %arg3[%c0_34, %c0_35] : memref<1x288xf32, #tpu.memory_space<vmem>>, vector<1x288xf32>
    %30 = vector.broadcast %29 : vector<1x288xf32> to vector<18x288xf32>
    %31 = arith.addf %28, %30 : vector<18x288xf32>
    %cst_36 = arith.constant 0.000000e+00 : f32
    %32 = vector.broadcast %cst_36 : f32 to vector<18x288xf32>
    %33 = arith.maximumf %31, %32 : vector<18x288xf32>
    %c0_37 = arith.constant 0 : index
    %c0_38 = arith.constant 0 : index
    %c0_39 = arith.constant 0 : index
    %34 = vector.load %arg14[%c0_37, %c0_38, %c0_39] : memref<2x18x288xf32, #tpu.memory_space<vmem>>, vector<1x18x288xf32>
    %35 = vector.shape_cast %34 : vector<1x18x288xf32> to vector<18x288xf32>
    %36 = vector.shape_cast %33 : vector<18x288xf32> to vector<1x18x288xf32>
    tpu.vector_store %arg14[%c0_37, %c0_38, %c0_39], %36 {strides = array<i32>} : memref<2x18x288xf32, #tpu.memory_space<vmem>>, vector<1x18x288xf32>,
    %c0_40 = arith.constant 0 : index
    %c1_41 = arith.constant 1 : index
    %c0_42 = arith.constant 0 : index
    %c0_43 = arith.constant 0 : index
    %37 = vector.load %arg1[%c0_40, %c1_41, %c0_42, %c0_43] : memref<2x2x20x120xf32, #tpu.memory_space<vmem>>, vector<1x1x18x120xf32>
    %38 = vector.shape_cast %37 : vector<1x1x18x120xf32> to vector<18x120xf32>
    %c0_44 = arith.constant 0 : index
    %c0_45 = arith.constant 0 : index
    %c0_46 = arith.constant 0 : index
    %39 = vector.load %arg2[%c0_44, %c0_45, %c0_46] : memref<5x120x288xf32, #tpu.memory_space<vmem>>, vector<1x120x288xf32>
    %40 = vector.shape_cast %39 : vector<1x120x288xf32> to vector<120x288xf32>
    %cst_47 = arith.constant dense<0.000000e+00> : vector<18x288xf32>
    %41 = tpu.matmul %38, %40, %cst_47 {dimension_numbers = #tpu.dot_dimension_numbers<[1], [0], [0], [1], [0, 0, 1, 1], [], []>} : vector<18x120xf32>, vector<120x288xf32>, vector<18x288xf32> -> vector<18x288xf32>
    %c1_48 = arith.constant 1 : index
    %c1_49 = arith.constant 1 : index
    %c0_50 = arith.constant 0 : index
    %c0_51 = arith.constant 0 : index
    %42 = vector.load %arg1[%c1_48, %c1_49, %c0_50, %c0_51] : memref<2x2x20x120xf32, #tpu.memory_space<vmem>>, vector<1x1x18x120xf32>
    %43 = vector.shape_cast %42 : vector<1x1x18x120xf32> to vector<18x120xf32>
    %c1_52 = arith.constant 1 : index
    %c0_53 = arith.constant 0 : index
    %c0_54 = arith.constant 0 : index
    %44 = vector.load %arg2[%c1_52, %c0_53, %c0_54] : memref<5x120x288xf32, #tpu.memory_space<vmem>>, vector<1x120x288xf32>
    %45 = vector.shape_cast %44 : vector<1x120x288xf32> to vector<120x288xf32>
    %cst_55 = arith.constant dense<0.000000e+00> : vector<18x288xf32>
    %46 = tpu.matmul %43, %45, %cst_55 {dimension_numbers = #tpu.dot_dimension_numbers<[1], [0], [0], [1], [0, 0, 1, 1], [], []>} : vector<18x120xf32>, vector<120x288xf32>, vector<18x288xf32> -> vector<18x288xf32>
    %47 = arith.addf %41, %46 : vector<18x288xf32>
    %c0_56 = arith.constant 0 : index
    %c1_57 = arith.constant 1 : index
    %c1_58 = arith.constant 1 : index
    %c0_59 = arith.constant 0 : index
    %48 = vector.load %arg1[%c0_56, %c1_57, %c1_58, %c0_59] : memref<2x2x20x120xf32, #tpu.memory_space<vmem>>, vector<1x1x18x120xf32>
    %49 = vector.shape_cast %48 : vector<1x1x18x120xf32> to vector<18x120xf32>
    %c2_60 = arith.constant 2 : index
    %c0_61 = arith.constant 0 : index
    %c0_62 = arith.constant 0 : index
    %50 = vector.load %arg2[%c2_60, %c0_61, %c0_62] : memref<5x120x288xf32, #tpu.memory_space<vmem>>, vector<1x120x288xf32>
    %51 = vector.shape_cast %50 : vector<1x120x288xf32> to vector<120x288xf32>
    %cst_63 = arith.constant dense<0.000000e+00> : vector<18x288xf32>
    %52 = tpu.matmul %49, %51, %cst_63 {dimension_numbers = #tpu.dot_dimension_numbers<[1], [0], [0], [1], [0, 0, 1, 1], [], []>} : vector<18x120xf32>, vector<120x288xf32>, vector<18x288xf32> -> vector<18x288xf32>
    %53 = arith.addf %47, %52 : vector<18x288xf32>
    %c1_64 = arith.constant 1 : index
    %c1_65 = arith.constant 1 : index
    %c1_66 = arith.constant 1 : index
    %c0_67 = arith.constant 0 : index
    %54 = vector.load %arg1[%c1_64, %c1_65, %c1_66, %c0_67] : memref<2x2x20x120xf32, #tpu.memory_space<vmem>>, vector<1x1x18x120xf32>
    %55 = vector.shape_cast %54 : vector<1x1x18x120xf32> to vector<18x120xf32>
    %c3_68 = arith.constant 3 : index
    %c0_69 = arith.constant 0 : index
    %c0_70 = arith.constant 0 : index
    %56 = vector.load %arg2[%c3_68, %c0_69, %c0_70] : memref<5x120x288xf32, #tpu.memory_space<vmem>>, vector<1x120x288xf32>
    %57 = vector.shape_cast %56 : vector<1x120x288xf32> to vector<120x288xf32>
    %cst_71 = arith.constant dense<0.000000e+00> : vector<18x288xf32>
    %58 = tpu.matmul %55, %57, %cst_71 {dimension_numbers = #tpu.dot_dimension_numbers<[1], [0], [0], [1], [0, 0, 1, 1], [], []>} : vector<18x120xf32>, vector<120x288xf32>, vector<18x288xf32> -> vector<18x288xf32>
    %59 = arith.addf %53, %58 : vector<18x288xf32>
    %c0_72 = arith.constant 0 : index
    %c1_73 = arith.constant 1 : index
    %c2_74 = arith.constant 2 : index
    %c0_75 = arith.constant 0 : index
    %60 = vector.load %arg1[%c0_72, %c1_73, %c2_74, %c0_75] : memref<2x2x20x120xf32, #tpu.memory_space<vmem>>, vector<1x1x18x120xf32>
    %61 = vector.shape_cast %60 : vector<1x1x18x120xf32> to vector<18x120xf32>
    %c4_76 = arith.constant 4 : index
    %c0_77 = arith.constant 0 : index
    %c0_78 = arith.constant 0 : index
    %62 = vector.load %arg2[%c4_76, %c0_77, %c0_78] : memref<5x120x288xf32, #tpu.memory_space<vmem>>, vector<1x120x288xf32>
    %63 = vector.shape_cast %62 : vector<1x120x288xf32> to vector<120x288xf32>
    %cst_79 = arith.constant dense<0.000000e+00> : vector<18x288xf32>
    %64 = tpu.matmul %61, %63, %cst_79 {dimension_numbers = #tpu.dot_dimension_numbers<[1], [0], [0], [1], [0, 0, 1, 1], [], []>} : vector<18x120xf32>, vector<120x288xf32>, vector<18x288xf32> -> vector<18x288xf32>
    %65 = arith.addf %59, %64 : vector<18x288xf32>
    %c0_80 = arith.constant 0 : index
    %c0_81 = arith.constant 0 : index
    %66 = vector.load %arg3[%c0_80, %c0_81] : memref<1x288xf32, #tpu.memory_space<vmem>>, vector<1x288xf32>
    %67 = vector.broadcast %66 : vector<1x288xf32> to vector<18x288xf32>
    %68 = arith.addf %65, %67 : vector<18x288xf32>
    %cst_82 = arith.constant 0.000000e+00 : f32
    %69 = vector.broadcast %cst_82 : f32 to vector<18x288xf32>
    %70 = arith.maximumf %68, %69 : vector<18x288xf32>
    %c1_83 = arith.constant 1 : index
    %c0_84 = arith.constant 0 : index
    %c0_85 = arith.constant 0 : index
    %71 = vector.load %arg14[%c1_83, %c0_84, %c0_85] : memref<2x18x288xf32, #tpu.memory_space<vmem>>, vector<1x18x288xf32>
    %72 = vector.shape_cast %71 : vector<1x18x288xf32> to vector<18x288xf32>
    %73 = vector.shape_cast %70 : vector<18x288xf32> to vector<1x18x288xf32>
    tpu.vector_store %arg14[%c1_83, %c0_84, %c0_85], %73 {strides = array<i32>} : memref<2x18x288xf32, #tpu.memory_space<vmem>>, vector<1x18x288xf32>,
    %c0_86 = arith.constant 0 : index
    %c0_87 = arith.constant 0 : index
    %c0_88 = arith.constant 0 : index
    %74 = vector.load %arg14[%c0_86, %c0_87, %c0_88] : memref<2x18x288xf32, #tpu.memory_space<vmem>>, vector<2x1x288xf32>
    %75 = vector.shape_cast %74 : vector<2x1x288xf32> to vector<2x288xf32>
    %c0_89 = arith.constant 0 : index
    %c0_90 = arith.constant 0 : index
    %c0_91 = arith.constant 0 : index
    %76 = vector.load %arg4[%c0_89, %c0_90, %c0_91] : memref<5x288x112xf32, #tpu.memory_space<vmem>>, vector<1x288x112xf32>
    %77 = vector.shape_cast %76 : vector<1x288x112xf32> to vector<288x112xf32>
    %cst_92 = arith.constant dense<0.000000e+00> : vector<2x112xf32>
    %78 = tpu.matmul %75, %77, %cst_92 {dimension_numbers = #tpu.dot_dimension_numbers<[1], [0], [0], [1], [0, 0, 1, 1], [], []>} : vector<2x288xf32>, vector<288x112xf32>, vector<2x112xf32> -> vector<2x112xf32>
    %c0_93 = arith.constant 0 : index
    %c1_94 = arith.constant 1 : index
    %c0_95 = arith.constant 0 : index
    %79 = vector.load %arg14[%c0_93, %c1_94, %c0_95] : memref<2x18x288xf32, #tpu.memory_space<vmem>>, vector<2x1x288xf32>
    %80 = vector.shape_cast %79 : vector<2x1x288xf32> to vector<2x288xf32>
    %c1_96 = arith.constant 1 : index
    %c0_97 = arith.constant 0 : index
    %c0_98 = arith.constant 0 : index
    %81 = vector.load %arg4[%c1_96, %c0_97, %c0_98] : memref<5x288x112xf32, #tpu.memory_space<vmem>>, vector<1x288x112xf32>
    %82 = vector.shape_cast %81 : vector<1x288x112xf32> to vector<288x112xf32>
    %cst_99 = arith.constant dense<0.000000e+00> : vector<2x112xf32>
    %83 = tpu.matmul %80, %82, %cst_99 {dimension_numbers = #tpu.dot_dimension_numbers<[1], [0], [0], [1], [0, 0, 1, 1], [], []>} : vector<2x288xf32>, vector<288x112xf32>, vector<2x112xf32> -> vector<2x112xf32>
    %84 = arith.addf %78, %83 : vector<2x112xf32>
    %c0_100 = arith.constant 0 : index
    %c2_101 = arith.constant 2 : index
    %c0_102 = arith.constant 0 : index
    %85 = vector.load %arg14[%c0_100, %c2_101, %c0_102] : memref<2x18x288xf32, #tpu.memory_space<vmem>>, vector<2x1x288xf32>
    %86 = vector.shape_cast %85 : vector<2x1x288xf32> to vector<2x288xf32>
    %c2_103 = arith.constant 2 : index
    %c0_104 = arith.constant 0 : index
    %c0_105 = arith.constant 0 : index
    %87 = vector.load %arg4[%c2_103, %c0_104, %c0_105] : memref<5x288x112xf32, #tpu.memory_space<vmem>>, vector<1x288x112xf32>
    %88 = vector.shape_cast %87 : vector<1x288x112xf32> to vector<288x112xf32>
    %cst_106 = arith.constant dense<0.000000e+00> : vector<2x112xf32>
    %89 = tpu.matmul %86, %88, %cst_106 {dimension_numbers = #tpu.dot_dimension_numbers<[1], [0], [0], [1], [0, 0, 1, 1], [], []>} : vector<2x288xf32>, vector<288x112xf32>, vector<2x112xf32> -> vector<2x112xf32>
    %90 = arith.addf %84, %89 : vector<2x112xf32>
    %c0_107 = arith.constant 0 : index
    %c3_108 = arith.constant 3 : index
    %c0_109 = arith.constant 0 : index
    %91 = vector.load %arg14[%c0_107, %c3_108, %c0_109] : memref<2x18x288xf32, #tpu.memory_space<vmem>>, vector<2x1x288xf32>
    %92 = vector.shape_cast %91 : vector<2x1x288xf32> to vector<2x288xf32>
    %c3_110 = arith.constant 3 : index
    %c0_111 = arith.constant 0 : index
    %c0_112 = arith.constant 0 : index
    %93 = vector.load %arg4[%c3_110, %c0_111, %c0_112] : memref<5x288x112xf32, #tpu.memory_space<vmem>>, vector<1x288x112xf32>
    %94 = vector.shape_cast %93 : vector<1x288x112xf32> to vector<288x112xf32>
    %cst_113 = arith.constant dense<0.000000e+00> : vector<2x112xf32>
    %95 = tpu.matmul %92, %94, %cst_113 {dimension_numbers = #tpu.dot_dimension_numbers<[1], [0], [0], [1], [0, 0, 1, 1], [], []>} : vector<2x288xf32>, vector<288x112xf32>, vector<2x112xf32> -> vector<2x112xf32>
    %96 = arith.addf %90, %95 : vector<2x112xf32>
    %c0_114 = arith.constant 0 : index
    %c4_115 = arith.constant 4 : index
    %c0_116 = arith.constant 0 : index
    %97 = vector.load %arg14[%c0_114, %c4_115, %c0_116] : memref<2x18x288xf32, #tpu.memory_space<vmem>>, vector<2x1x288xf32>
    %98 = vector.shape_cast %97 : vector<2x1x288xf32> to vector<2x288xf32>
    %c4_117 = arith.constant 4 : index
    %c0_118 = arith.constant 0 : index
    %c0_119 = arith.constant 0 : index
    %99 = vector.load %arg4[%c4_117, %c0_118, %c0_119] : memref<5x288x112xf32, #tpu.memory_space<vmem>>, vector<1x288x112xf32>
    %100 = vector.shape_cast %99 : vector<1x288x112xf32> to vector<288x112xf32>
    %cst_120 = arith.constant dense<0.000000e+00> : vector<2x112xf32>
    %101 = tpu.matmul %98, %100, %cst_120 {dimension_numbers = #tpu.dot_dimension_numbers<[1], [0], [0], [1], [0, 0, 1, 1], [], []>} : vector<2x288xf32>, vector<288x112xf32>, vector<2x112xf32> -> vector<2x112xf32>
    %102 = arith.addf %96, %101 : vector<2x112xf32>
    %c0_121 = arith.constant 0 : index
    %c0_122 = arith.constant 0 : index
    %103 = vector.load %arg5[%c0_121, %c0_122] : memref<1x112xf32, #tpu.memory_space<vmem>>, vector<1x112xf32>
    %104 = vector.broadcast %103 : vector<1x112xf32> to vector<2x112xf32>
    %105 = arith.addf %102, %104 : vector<2x112xf32>
    %cst_123 = arith.constant 0.000000e+00 : f32
    %106 = vector.broadcast %cst_123 : f32 to vector<2x112xf32>
    %107 = arith.maximumf %105, %106 : vector<2x112xf32>
    %c0_124 = arith.constant 0 : index
    %c0_125 = arith.constant 0 : index
    %c0_126 = arith.constant 0 : index
    %108 = vector.load %arg15[%c0_124, %c0_125, %c0_126] : memref<2x7x112xf32, #tpu.memory_space<vmem>>, vector<2x1x112xf32>
    %109 = vector.shape_cast %108 : vector<2x1x112xf32> to vector<2x112xf32>
    %110 = vector.shape_cast %107 : vector<2x112xf32> to vector<2x1x112xf32>
    tpu.vector_store %arg15[%c0_124, %c0_125, %c0_126], %110 {strides = array<i32>} : memref<2x7x112xf32, #tpu.memory_space<vmem>>, vector<2x1x112xf32>,
    %c0_127 = arith.constant 0 : index
    %c2_128 = arith.constant 2 : index
    %c0_129 = arith.constant 0 : index
    %111 = vector.load %arg14[%c0_127, %c2_128, %c0_129] : memref<2x18x288xf32, #tpu.memory_space<vmem>>, vector<2x1x288xf32>
    %112 = vector.shape_cast %111 : vector<2x1x288xf32> to vector<2x288xf32>
    %c0_130 = arith.constant 0 : index
    %c0_131 = arith.constant 0 : index
    %c0_132 = arith.constant 0 : index
    %113 = vector.load %arg4[%c0_130, %c0_131, %c0_132] : memref<5x288x112xf32, #tpu.memory_space<vmem>>, vector<1x288x112xf32>
    %114 = vector.shape_cast %113 : vector<1x288x112xf32> to vector<288x112xf32>
    %cst_133 = arith.constant dense<0.000000e+00> : vector<2x112xf32>
    %115 = tpu.matmul %112, %114, %cst_133 {dimension_numbers = #tpu.dot_dimension_numbers<[1], [0], [0], [1], [0, 0, 1, 1], [], []>} : vector<2x288xf32>, vector<288x112xf32>, vector<2x112xf32> -> vector<2x112xf32>
    %c0_134 = arith.constant 0 : index
    %c3_135 = arith.constant 3 : index
    %c0_136 = arith.constant 0 : index
    %116 = vector.load %arg14[%c0_134, %c3_135, %c0_136] : memref<2x18x288xf32, #tpu.memory_space<vmem>>, vector<2x1x288xf32>
    %117 = vector.shape_cast %116 : vector<2x1x288xf32> to vector<2x288xf32>
    %c1_137 = arith.constant 1 : index
    %c0_138 = arith.constant 0 : index
    %c0_139 = arith.constant 0 : index
    %118 = vector.load %arg4[%c1_137, %c0_138, %c0_139] : memref<5x288x112xf32, #tpu.memory_space<vmem>>, vector<1x288x112xf32>
    %119 = vector.shape_cast %118 : vector<1x288x112xf32> to vector<288x112xf32>
    %cst_140 = arith.constant dense<0.000000e+00> : vector<2x112xf32>
    %120 = tpu.matmul %117, %119, %cst_140 {dimension_numbers = #tpu.dot_dimension_numbers<[1], [0], [0], [1], [0, 0, 1, 1], [], []>} : vector<2x288xf32>, vector<288x112xf32>, vector<2x112xf32> -> vector<2x112xf32>
    %121 = arith.addf %115, %120 : vector<2x112xf32>
    %c0_141 = arith.constant 0 : index
    %c4_142 = arith.constant 4 : index
    %c0_143 = arith.constant 0 : index
    %122 = vector.load %arg14[%c0_141, %c4_142, %c0_143] : memref<2x18x288xf32, #tpu.memory_space<vmem>>, vector<2x1x288xf32>
    %123 = vector.shape_cast %122 : vector<2x1x288xf32> to vector<2x288xf32>
    %c2_144 = arith.constant 2 : index
    %c0_145 = arith.constant 0 : index
    %c0_146 = arith.constant 0 : index
    %124 = vector.load %arg4[%c2_144, %c0_145, %c0_146] : memref<5x288x112xf32, #tpu.memory_space<vmem>>, vector<1x288x112xf32>
    %125 = vector.shape_cast %124 : vector<1x288x112xf32> to vector<288x112xf32>
    %cst_147 = arith.constant dense<0.000000e+00> : vector<2x112xf32>
    %126 = tpu.matmul %123, %125, %cst_147 {dimension_numbers = #tpu.dot_dimension_numbers<[1], [0], [0], [1], [0, 0, 1, 1], [], []>} : vector<2x288xf32>, vector<288x112xf32>, vector<2x112xf32> -> vector<2x112xf32>
    %127 = arith.addf %121, %126 : vector<2x112xf32>
    %c0_148 = arith.constant 0 : index
    %c5 = arith.constant 5 : index
    %c0_149 = arith.constant 0 : index
    %128 = vector.load %arg14[%c0_148, %c5, %c0_149] : memref<2x18x288xf32, #tpu.memory_space<vmem>>, vector<2x1x288xf32>
    %129 = vector.shape_cast %128 : vector<2x1x288xf32> to vector<2x288xf32>
    %c3_150 = arith.constant 3 : index
    %c0_151 = arith.constant 0 : index
    %c0_152 = arith.constant 0 : index
    %130 = vector.load %arg4[%c3_150, %c0_151, %c0_152] : memref<5x288x112xf32, #tpu.memory_space<vmem>>, vector<1x288x112xf32>
    %131 = vector.shape_cast %130 : vector<1x288x112xf32> to vector<288x112xf32>
    %cst_153 = arith.constant dense<0.000000e+00> : vector<2x112xf32>
    %132 = tpu.matmul %129, %131, %cst_153 {dimension_numbers = #tpu.dot_dimension_numbers<[1], [0], [0], [1], [0, 0, 1, 1], [], []>} : vector<2x288xf32>, vector<288x112xf32>, vector<2x112xf32> -> vector<2x112xf32>
    %133 = arith.addf %127, %132 : vector<2x112xf32>
    %c0_154 = arith.constant 0 : index
    %c6 = arith.constant 6 : index
    %c0_155 = arith.constant 0 : index
    %134 = vector.load %arg14[%c0_154, %c6, %c0_155] : memref<2x18x288xf32, #tpu.memory_space<vmem>>, vector<2x1x288xf32>
    %135 = vector.shape_cast %134 : vector<2x1x288xf32> to vector<2x288xf32>
    %c4_156 = arith.constant 4 : index
    %c0_157 = arith.constant 0 : index
    %c0_158 = arith.constant 0 : index
    %136 = vector.load %arg4[%c4_156, %c0_157, %c0_158] : memref<5x288x112xf32, #tpu.memory_space<vmem>>, vector<1x288x112xf32>
    %137 = vector.shape_cast %136 : vector<1x288x112xf32> to vector<288x112xf32>
    %cst_159 = arith.constant dense<0.000000e+00> : vector<2x112xf32>
    %138 = tpu.matmul %135, %137, %cst_159 {dimension_numbers = #tpu.dot_dimension_numbers<[1], [0], [0], [1], [0, 0, 1, 1], [], []>} : vector<2x288xf32>, vector<288x112xf32>, vector<2x112xf32> -> vector<2x112xf32>
    %139 = arith.addf %133, %138 : vector<2x112xf32>
    %c0_160 = arith.constant 0 : index
    %c0_161 = arith.constant 0 : index
    %140 = vector.load %arg5[%c0_160, %c0_161] : memref<1x112xf32, #tpu.memory_space<vmem>>, vector<1x112xf32>
    %141 = vector.broadcast %140 : vector<1x112xf32> to vector<2x112xf32>
    %142 = arith.addf %139, %141 : vector<2x112xf32>
    %cst_162 = arith.constant 0.000000e+00 : f32
    %143 = vector.broadcast %cst_162 : f32 to vector<2x112xf32>
    %144 = arith.maximumf %142, %143 : vector<2x112xf32>
    %c0_163 = arith.constant 0 : index
    %c1_164 = arith.constant 1 : index
    %c0_165 = arith.constant 0 : index
    %145 = vector.load %arg15[%c0_163, %c1_164, %c0_165] : memref<2x7x112xf32, #tpu.memory_space<vmem>>, vector<2x1x112xf32>
    %146 = vector.shape_cast %145 : vector<2x1x112xf32> to vector<2x112xf32>
    %147 = vector.shape_cast %144 : vector<2x112xf32> to vector<2x1x112xf32>
    tpu.vector_store %arg15[%c0_163, %c1_164, %c0_165], %147 {strides = array<i32>} : memref<2x7x112xf32, #tpu.memory_space<vmem>>, vector<2x1x112xf32>,
    %c0_166 = arith.constant 0 : index
    %c4_167 = arith.constant 4 : index
    %c0_168 = arith.constant 0 : index
    %148 = vector.load %arg14[%c0_166, %c4_167, %c0_168] : memref<2x18x288xf32, #tpu.memory_space<vmem>>, vector<2x1x288xf32>
    %149 = vector.shape_cast %148 : vector<2x1x288xf32> to vector<2x288xf32>
    %c0_169 = arith.constant 0 : index
    %c0_170 = arith.constant 0 : index
    %c0_171 = arith.constant 0 : index
    %150 = vector.load %arg4[%c0_169, %c0_170, %c0_171] : memref<5x288x112xf32, #tpu.memory_space<vmem>>, vector<1x288x112xf32>
    %151 = vector.shape_cast %150 : vector<1x288x112xf32> to vector<288x112xf32>
    %cst_172 = arith.constant dense<0.000000e+00> : vector<2x112xf32>
    %152 = tpu.matmul %149, %151, %cst_172 {dimension_numbers = #tpu.dot_dimension_numbers<[1], [0], [0], [1], [0, 0, 1, 1], [], []>} : vector<2x288xf32>, vector<288x112xf32>, vector<2x112xf32> -> vector<2x112xf32>
    %c0_173 = arith.constant 0 : index
    %c5_174 = arith.constant 5 : index
    %c0_175 = arith.constant 0 : index
    %153 = vector.load %arg14[%c0_173, %c5_174, %c0_175] : memref<2x18x288xf32, #tpu.memory_space<vmem>>, vector<2x1x288xf32>
    %154 = vector.shape_cast %153 : vector<2x1x288xf32> to vector<2x288xf32>
    %c1_176 = arith.constant 1 : index
    %c0_177 = arith.constant 0 : index
    %c0_178 = arith.constant 0 : index
    %155 = vector.load %arg4[%c1_176, %c0_177, %c0_178] : memref<5x288x112xf32, #tpu.memory_space<vmem>>, vector<1x288x112xf32>
    %156 = vector.shape_cast %155 : vector<1x288x112xf32> to vector<288x112xf32>
    %cst_179 = arith.constant dense<0.000000e+00> : vector<2x112xf32>
    %157 = tpu.matmul %154, %156, %cst_179 {dimension_numbers = #tpu.dot_dimension_numbers<[1], [0], [0], [1], [0, 0, 1, 1], [], []>} : vector<2x288xf32>, vector<288x112xf32>, vector<2x112xf32> -> vector<2x112xf32>
    %158 = arith.addf %152, %157 : vector<2x112xf32>
    %c0_180 = arith.constant 0 : index
    %c6_181 = arith.constant 6 : index
    %c0_182 = arith.constant 0 : index
    %159 = vector.load %arg14[%c0_180, %c6_181, %c0_182] : memref<2x18x288xf32, #tpu.memory_space<vmem>>, vector<2x1x288xf32>
    %160 = vector.shape_cast %159 : vector<2x1x288xf32> to vector<2x288xf32>
    %c2_183 = arith.constant 2 : index
    %c0_184 = arith.constant 0 : index
    %c0_185 = arith.constant 0 : index
    %161 = vector.load %arg4[%c2_183, %c0_184, %c0_185] : memref<5x288x112xf32, #tpu.memory_space<vmem>>, vector<1x288x112xf32>
    %162 = vector.shape_cast %161 : vector<1x288x112xf32> to vector<288x112xf32>
    %cst_186 = arith.constant dense<0.000000e+00> : vector<2x112xf32>
    %163 = tpu.matmul %160, %162, %cst_186 {dimension_numbers = #tpu.dot_dimension_numbers<[1], [0], [0], [1], [0, 0, 1, 1], [], []>} : vector<2x288xf32>, vector<288x112xf32>, vector<2x112xf32> -> vector<2x112xf32>
    %164 = arith.addf %158, %163 : vector<2x112xf32>
    %c0_187 = arith.constant 0 : index
    %c7 = arith.constant 7 : index
    %c0_188 = arith.constant 0 : index
    %165 = vector.load %arg14[%c0_187, %c7, %c0_188] : memref<2x18x288xf32, #tpu.memory_space<vmem>>, vector<2x1x288xf32>
    %166 = vector.shape_cast %165 : vector<2x1x288xf32> to vector<2x288xf32>
    %c3_189 = arith.constant 3 : index
    %c0_190 = arith.constant 0 : index
    %c0_191 = arith.constant 0 : index
    %167 = vector.load %arg4[%c3_189, %c0_190, %c0_191] : memref<5x288x112xf32, #tpu.memory_space<vmem>>, vector<1x288x112xf32>
    %168 = vector.shape_cast %167 : vector<1x288x112xf32> to vector<288x112xf32>
    %cst_192 = arith.constant dense<0.000000e+00> : vector<2x112xf32>
    %169 = tpu.matmul %166, %168, %cst_192 {dimension_numbers = #tpu.dot_dimension_numbers<[1], [0], [0], [1], [0, 0, 1, 1], [], []>} : vector<2x288xf32>, vector<288x112xf32>, vector<2x112xf32> -> vector<2x112xf32>
    %170 = arith.addf %164, %169 : vector<2x112xf32>
    %c0_193 = arith.constant 0 : index
    %c8 = arith.constant 8 : index
    %c0_194 = arith.constant 0 : index
    %171 = vector.load %arg14[%c0_193, %c8, %c0_194] : memref<2x18x288xf32, #tpu.memory_space<vmem>>, vector<2x1x288xf32>
    %172 = vector.shape_cast %171 : vector<2x1x288xf32> to vector<2x288xf32>
    %c4_195 = arith.constant 4 : index
    %c0_196 = arith.constant 0 : index
    %c0_197 = arith.constant 0 : index
    %173 = vector.load %arg4[%c4_195, %c0_196, %c0_197] : memref<5x288x112xf32, #tpu.memory_space<vmem>>, vector<1x288x112xf32>
    %174 = vector.shape_cast %173 : vector<1x288x112xf32> to vector<288x112xf32>
    %cst_198 = arith.constant dense<0.000000e+00> : vector<2x112xf32>
    %175 = tpu.matmul %172, %174, %cst_198 {dimension_numbers = #tpu.dot_dimension_numbers<[1], [0], [0], [1], [0, 0, 1, 1], [], []>} : vector<2x288xf32>, vector<288x112xf32>, vector<2x112xf32> -> vector<2x112xf32>
    %176 = arith.addf %170, %175 : vector<2x112xf32>
    %c0_199 = arith.constant 0 : index
    %c0_200 = arith.constant 0 : index
    %177 = vector.load %arg5[%c0_199, %c0_200] : memref<1x112xf32, #tpu.memory_space<vmem>>, vector<1x112xf32>
    %178 = vector.broadcast %177 : vector<1x112xf32> to vector<2x112xf32>
    %179 = arith.addf %176, %178 : vector<2x112xf32>
    %cst_201 = arith.constant 0.000000e+00 : f32
    %180 = vector.broadcast %cst_201 : f32 to vector<2x112xf32>
    %181 = arith.maximumf %179, %180 : vector<2x112xf32>
    %c0_202 = arith.constant 0 : index
    %c2_203 = arith.constant 2 : index
    %c0_204 = arith.constant 0 : index
    %182 = vector.load %arg15[%c0_202, %c2_203, %c0_204] : memref<2x7x112xf32, #tpu.memory_space<vmem>>, vector<2x1x112xf32>
    %183 = vector.shape_cast %182 : vector<2x1x112xf32> to vector<2x112xf32>
    %184 = vector.shape_cast %181 : vector<2x112xf32> to vector<2x1x112xf32>
    tpu.vector_store %arg15[%c0_202, %c2_203, %c0_204], %184 {strides = array<i32>} : memref<2x7x112xf32, #tpu.memory_space<vmem>>, vector<2x1x112xf32>,
    %c0_205 = arith.constant 0 : index
    %c6_206 = arith.constant 6 : index
    %c0_207 = arith.constant 0 : index
    %185 = vector.load %arg14[%c0_205, %c6_206, %c0_207] : memref<2x18x288xf32, #tpu.memory_space<vmem>>, vector<2x1x288xf32>
    %186 = vector.shape_cast %185 : vector<2x1x288xf32> to vector<2x288xf32>
    %c0_208 = arith.constant 0 : index
    %c0_209 = arith.constant 0 : index
    %c0_210 = arith.constant 0 : index
    %187 = vector.load %arg4[%c0_208, %c0_209, %c0_210] : memref<5x288x112xf32, #tpu.memory_space<vmem>>, vector<1x288x112xf32>
    %188 = vector.shape_cast %187 : vector<1x288x112xf32> to vector<288x112xf32>
    %cst_211 = arith.constant dense<0.000000e+00> : vector<2x112xf32>
    %189 = tpu.matmul %186, %188, %cst_211 {dimension_numbers = #tpu.dot_dimension_numbers<[1], [0], [0], [1], [0, 0, 1, 1], [], []>} : vector<2x288xf32>, vector<288x112xf32>, vector<2x112xf32> -> vector<2x112xf32>
    %c0_212 = arith.constant 0 : index
    %c7_213 = arith.constant 7 : index
    %c0_214 = arith.constant 0 : index
    %190 = vector.load %arg14[%c0_212, %c7_213, %c0_214] : memref<2x18x288xf32, #tpu.memory_space<vmem>>, vector<2x1x288xf32>
    %191 = vector.shape_cast %190 : vector<2x1x288xf32> to vector<2x288xf32>
    %c1_215 = arith.constant 1 : index
    %c0_216 = arith.constant 0 : index
    %c0_217 = arith.constant 0 : index
    %192 = vector.load %arg4[%c1_215, %c0_216, %c0_217] : memref<5x288x112xf32, #tpu.memory_space<vmem>>, vector<1x288x112xf32>
    %193 = vector.shape_cast %192 : vector<1x288x112xf32> to vector<288x112xf32>
    %cst_218 = arith.constant dense<0.000000e+00> : vector<2x112xf32>
    %194 = tpu.matmul %191, %193, %cst_218 {dimension_numbers = #tpu.dot_dimension_numbers<[1], [0], [0], [1], [0, 0, 1, 1], [], []>} : vector<2x288xf32>, vector<288x112xf32>, vector<2x112xf32> -> vector<2x112xf32>
    %195 = arith.addf %189, %194 : vector<2x112xf32>
    %c0_219 = arith.constant 0 : index
    %c8_220 = arith.constant 8 : index
    %c0_221 = arith.constant 0 : index
    %196 = vector.load %arg14[%c0_219, %c8_220, %c0_221] : memref<2x18x288xf32, #tpu.memory_space<vmem>>, vector<2x1x288xf32>
    %197 = vector.shape_cast %196 : vector<2x1x288xf32> to vector<2x288xf32>
    %c2_222 = arith.constant 2 : index
    %c0_223 = arith.constant 0 : index
    %c0_224 = arith.constant 0 : index
    %198 = vector.load %arg4[%c2_222, %c0_223, %c0_224] : memref<5x288x112xf32, #tpu.memory_space<vmem>>, vector<1x288x112xf32>
    %199 = vector.shape_cast %198 : vector<1x288x112xf32> to vector<288x112xf32>
    %cst_225 = arith.constant dense<0.000000e+00> : vector<2x112xf32>
    %200 = tpu.matmul %197, %199, %cst_225 {dimension_numbers = #tpu.dot_dimension_numbers<[1], [0], [0], [1], [0, 0, 1, 1], [], []>} : vector<2x288xf32>, vector<288x112xf32>, vector<2x112xf32> -> vector<2x112xf32>
    %201 = arith.addf %195, %200 : vector<2x112xf32>
    %c0_226 = arith.constant 0 : index
    %c9 = arith.constant 9 : index
    %c0_227 = arith.constant 0 : index
    %202 = vector.load %arg14[%c0_226, %c9, %c0_227] : memref<2x18x288xf32, #tpu.memory_space<vmem>>, vector<2x1x288xf32>
    %203 = vector.shape_cast %202 : vector<2x1x288xf32> to vector<2x288xf32>
    %c3_228 = arith.constant 3 : index
    %c0_229 = arith.constant 0 : index
    %c0_230 = arith.constant 0 : index
    %204 = vector.load %arg4[%c3_228, %c0_229, %c0_230] : memref<5x288x112xf32, #tpu.memory_space<vmem>>, vector<1x288x112xf32>
    %205 = vector.shape_cast %204 : vector<1x288x112xf32> to vector<288x112xf32>
    %cst_231 = arith.constant dense<0.000000e+00> : vector<2x112xf32>
    %206 = tpu.matmul %203, %205, %cst_231 {dimension_numbers = #tpu.dot_dimension_numbers<[1], [0], [0], [1], [0, 0, 1, 1], [], []>} : vector<2x288xf32>, vector<288x112xf32>, vector<2x112xf32> -> vector<2x112xf32>
    %207 = arith.addf %201, %206 : vector<2x112xf32>
    %c0_232 = arith.constant 0 : index
    %c10 = arith.constant 10 : index
    %c0_233 = arith.constant 0 : index
    %208 = vector.load %arg14[%c0_232, %c10, %c0_233] : memref<2x18x288xf32, #tpu.memory_space<vmem>>, vector<2x1x288xf32>
    %209 = vector.shape_cast %208 : vector<2x1x288xf32> to vector<2x288xf32>
    %c4_234 = arith.constant 4 : index
    %c0_235 = arith.constant 0 : index
    %c0_236 = arith.constant 0 : index
    %210 = vector.load %arg4[%c4_234, %c0_235, %c0_236] : memref<5x288x112xf32, #tpu.memory_space<vmem>>, vector<1x288x112xf32>
    %211 = vector.shape_cast %210 : vector<1x288x112xf32> to vector<288x112xf32>
    %cst_237 = arith.constant dense<0.000000e+00> : vector<2x112xf32>
    %212 = tpu.matmul %209, %211, %cst_237 {dimension_numbers = #tpu.dot_dimension_numbers<[1], [0], [0], [1], [0, 0, 1, 1], [], []>} : vector<2x288xf32>, vector<288x112xf32>, vector<2x112xf32> -> vector<2x112xf32>
    %213 = arith.addf %207, %212 : vector<2x112xf32>
    %c0_238 = arith.constant 0 : index
    %c0_239 = arith.constant 0 : index
    %214 = vector.load %arg5[%c0_238, %c0_239] : memref<1x112xf32, #tpu.memory_space<vmem>>, vector<1x112xf32>
    %215 = vector.broadcast %214 : vector<1x112xf32> to vector<2x112xf32>
    %216 = arith.addf %213, %215 : vector<2x112xf32>
    %cst_240 = arith.constant 0.000000e+00 : f32
    %217 = vector.broadcast %cst_240 : f32 to vector<2x112xf32>
    %218 = arith.maximumf %216, %217 : vector<2x112xf32>
    %c0_241 = arith.constant 0 : index
    %c3_242 = arith.constant 3 : index
    %c0_243 = arith.constant 0 : index
    %219 = vector.load %arg15[%c0_241, %c3_242, %c0_243] : memref<2x7x112xf32, #tpu.memory_space<vmem>>, vector<2x1x112xf32>
    %220 = vector.shape_cast %219 : vector<2x1x112xf32> to vector<2x112xf32>
    %221 = vector.shape_cast %218 : vector<2x112xf32> to vector<2x1x112xf32>
    tpu.vector_store %arg15[%c0_241, %c3_242, %c0_243], %221 {strides = array<i32>} : memref<2x7x112xf32, #tpu.memory_space<vmem>>, vector<2x1x112xf32>,
    %c0_244 = arith.constant 0 : index
    %c8_245 = arith.constant 8 : index
    %c0_246 = arith.constant 0 : index
    %222 = vector.load %arg14[%c0_244, %c8_245, %c0_246] : memref<2x18x288xf32, #tpu.memory_space<vmem>>, vector<2x1x288xf32>
    %223 = vector.shape_cast %222 : vector<2x1x288xf32> to vector<2x288xf32>
    %c0_247 = arith.constant 0 : index
    %c0_248 = arith.constant 0 : index
    %c0_249 = arith.constant 0 : index
    %224 = vector.load %arg4[%c0_247, %c0_248, %c0_249] : memref<5x288x112xf32, #tpu.memory_space<vmem>>, vector<1x288x112xf32>
    %225 = vector.shape_cast %224 : vector<1x288x112xf32> to vector<288x112xf32>
    %cst_250 = arith.constant dense<0.000000e+00> : vector<2x112xf32>
    %226 = tpu.matmul %223, %225, %cst_250 {dimension_numbers = #tpu.dot_dimension_numbers<[1], [0], [0], [1], [0, 0, 1, 1], [], []>} : vector<2x288xf32>, vector<288x112xf32>, vector<2x112xf32> -> vector<2x112xf32>
    %c0_251 = arith.constant 0 : index
    %c9_252 = arith.constant 9 : index
    %c0_253 = arith.constant 0 : index
    %227 = vector.load %arg14[%c0_251, %c9_252, %c0_253] : memref<2x18x288xf32, #tpu.memory_space<vmem>>, vector<2x1x288xf32>
    %228 = vector.shape_cast %227 : vector<2x1x288xf32> to vector<2x288xf32>
    %c1_254 = arith.constant 1 : index
    %c0_255 = arith.constant 0 : index
    %c0_256 = arith.constant 0 : index
    %229 = vector.load %arg4[%c1_254, %c0_255, %c0_256] : memref<5x288x112xf32, #tpu.memory_space<vmem>>, vector<1x288x112xf32>
    %230 = vector.shape_cast %229 : vector<1x288x112xf32> to vector<288x112xf32>
    %cst_257 = arith.constant dense<0.000000e+00> : vector<2x112xf32>
    %231 = tpu.matmul %228, %230, %cst_257 {dimension_numbers = #tpu.dot_dimension_numbers<[1], [0], [0], [1], [0, 0, 1, 1], [], []>} : vector<2x288xf32>, vector<288x112xf32>, vector<2x112xf32> -> vector<2x112xf32>
    %232 = arith.addf %226, %231 : vector<2x112xf32>
    %c0_258 = arith.constant 0 : index
    %c10_259 = arith.constant 10 : index
    %c0_260 = arith.constant 0 : index
    %233 = vector.load %arg14[%c0_258, %c10_259, %c0_260] : memref<2x18x288xf32, #tpu.memory_space<vmem>>, vector<2x1x288xf32>
    %234 = vector.shape_cast %233 : vector<2x1x288xf32> to vector<2x288xf32>
    %c2_261 = arith.constant 2 : index
    %c0_262 = arith.constant 0 : index
    %c0_263 = arith.constant 0 : index
    %235 = vector.load %arg4[%c2_261, %c0_262, %c0_263] : memref<5x288x112xf32, #tpu.memory_space<vmem>>, vector<1x288x112xf32>
    %236 = vector.shape_cast %235 : vector<1x288x112xf32> to vector<288x112xf32>
    %cst_264 = arith.constant dense<0.000000e+00> : vector<2x112xf32>
    %237 = tpu.matmul %234, %236, %cst_264 {dimension_numbers = #tpu.dot_dimension_numbers<[1], [0], [0], [1], [0, 0, 1, 1], [], []>} : vector<2x288xf32>, vector<288x112xf32>, vector<2x112xf32> -> vector<2x112xf32>
    %238 = arith.addf %232, %237 : vector<2x112xf32>
    %c0_265 = arith.constant 0 : index
    %c11 = arith.constant 11 : index
    %c0_266 = arith.constant 0 : index
    %239 = vector.load %arg14[%c0_265, %c11, %c0_266] : memref<2x18x288xf32, #tpu.memory_space<vmem>>, vector<2x1x288xf32>
    %240 = vector.shape_cast %239 : vector<2x1x288xf32> to vector<2x288xf32>
    %c3_267 = arith.constant 3 : index
    %c0_268 = arith.constant 0 : index
    %c0_269 = arith.constant 0 : index
    %241 = vector.load %arg4[%c3_267, %c0_268, %c0_269] : memref<5x288x112xf32, #tpu.memory_space<vmem>>, vector<1x288x112xf32>
    %242 = vector.shape_cast %241 : vector<1x288x112xf32> to vector<288x112xf32>
    %cst_270 = arith.constant dense<0.000000e+00> : vector<2x112xf32>
    %243 = tpu.matmul %240, %242, %cst_270 {dimension_numbers = #tpu.dot_dimension_numbers<[1], [0], [0], [1], [0, 0, 1, 1], [], []>} : vector<2x288xf32>, vector<288x112xf32>, vector<2x112xf32> -> vector<2x112xf32>
    %244 = arith.addf %238, %243 : vector<2x112xf32>
    %c0_271 = arith.constant 0 : index
    %c12 = arith.constant 12 : index
    %c0_272 = arith.constant 0 : index
    %245 = vector.load %arg14[%c0_271, %c12, %c0_272] : memref<2x18x288xf32, #tpu.memory_space<vmem>>, vector<2x1x288xf32>
    %246 = vector.shape_cast %245 : vector<2x1x288xf32> to vector<2x288xf32>
    %c4_273 = arith.constant 4 : index
    %c0_274 = arith.constant 0 : index
    %c0_275 = arith.constant 0 : index
    %247 = vector.load %arg4[%c4_273, %c0_274, %c0_275] : memref<5x288x112xf32, #tpu.memory_space<vmem>>, vector<1x288x112xf32>
    %248 = vector.shape_cast %247 : vector<1x288x112xf32> to vector<288x112xf32>
    %cst_276 = arith.constant dense<0.000000e+00> : vector<2x112xf32>
    %249 = tpu.matmul %246, %248, %cst_276 {dimension_numbers = #tpu.dot_dimension_numbers<[1], [0], [0], [1], [0, 0, 1, 1], [], []>} : vector<2x288xf32>, vector<288x112xf32>, vector<2x112xf32> -> vector<2x112xf32>
    %250 = arith.addf %244, %249 : vector<2x112xf32>
    %c0_277 = arith.constant 0 : index
    %c0_278 = arith.constant 0 : index
    %251 = vector.load %arg5[%c0_277, %c0_278] : memref<1x112xf32, #tpu.memory_space<vmem>>, vector<1x112xf32>
    %252 = vector.broadcast %251 : vector<1x112xf32> to vector<2x112xf32>
    %253 = arith.addf %250, %252 : vector<2x112xf32>
    %cst_279 = arith.constant 0.000000e+00 : f32
    %254 = vector.broadcast %cst_279 : f32 to vector<2x112xf32>
    %255 = arith.maximumf %253, %254 : vector<2x112xf32>
    %c0_280 = arith.constant 0 : index
    %c4_281 = arith.constant 4 : index
    %c0_282 = arith.constant 0 : index
    %256 = vector.load %arg15[%c0_280, %c4_281, %c0_282] : memref<2x7x112xf32, #tpu.memory_space<vmem>>, vector<2x1x112xf32>
    %257 = vector.shape_cast %256 : vector<2x1x112xf32> to vector<2x112xf32>
    %258 = vector.shape_cast %255 : vector<2x112xf32> to vector<2x1x112xf32>
    tpu.vector_store %arg15[%c0_280, %c4_281, %c0_282], %258 {strides = array<i32>} : memref<2x7x112xf32, #tpu.memory_space<vmem>>, vector<2x1x112xf32>,
    %c0_283 = arith.constant 0 : index
    %c10_284 = arith.constant 10 : index
    %c0_285 = arith.constant 0 : index
    %259 = vector.load %arg14[%c0_283, %c10_284, %c0_285] : memref<2x18x288xf32, #tpu.memory_space<vmem>>, vector<2x1x288xf32>
    %260 = vector.shape_cast %259 : vector<2x1x288xf32> to vector<2x288xf32>
    %c0_286 = arith.constant 0 : index
    %c0_287 = arith.constant 0 : index
    %c0_288 = arith.constant 0 : index
    %261 = vector.load %arg4[%c0_286, %c0_287, %c0_288] : memref<5x288x112xf32, #tpu.memory_space<vmem>>, vector<1x288x112xf32>
    %262 = vector.shape_cast %261 : vector<1x288x112xf32> to vector<288x112xf32>
    %cst_289 = arith.constant dense<0.000000e+00> : vector<2x112xf32>
    %263 = tpu.matmul %260, %262, %cst_289 {dimension_numbers = #tpu.dot_dimension_numbers<[1], [0], [0], [1], [0, 0, 1, 1], [], []>} : vector<2x288xf32>, vector<288x112xf32>, vector<2x112xf32> -> vector<2x112xf32>
    %c0_290 = arith.constant 0 : index
    %c11_291 = arith.constant 11 : index
    %c0_292 = arith.constant 0 : index
    %264 = vector.load %arg14[%c0_290, %c11_291, %c0_292] : memref<2x18x288xf32, #tpu.memory_space<vmem>>, vector<2x1x288xf32>
    %265 = vector.shape_cast %264 : vector<2x1x288xf32> to vector<2x288xf32>
    %c1_293 = arith.constant 1 : index
    %c0_294 = arith.constant 0 : index
    %c0_295 = arith.constant 0 : index
    %266 = vector.load %arg4[%c1_293, %c0_294, %c0_295] : memref<5x288x112xf32, #tpu.memory_space<vmem>>, vector<1x288x112xf32>
    %267 = vector.shape_cast %266 : vector<1x288x112xf32> to vector<288x112xf32>
    %cst_296 = arith.constant dense<0.000000e+00> : vector<2x112xf32>
    %268 = tpu.matmul %265, %267, %cst_296 {dimension_numbers = #tpu.dot_dimension_numbers<[1], [0], [0], [1], [0, 0, 1, 1], [], []>} : vector<2x288xf32>, vector<288x112xf32>, vector<2x112xf32> -> vector<2x112xf32>
    %269 = arith.addf %263, %268 : vector<2x112xf32>
    %c0_297 = arith.constant 0 : index
    %c12_298 = arith.constant 12 : index
    %c0_299 = arith.constant 0 : index
    %270 = vector.load %arg14[%c0_297, %c12_298, %c0_299] : memref<2x18x288xf32, #tpu.memory_space<vmem>>, vector<2x1x288xf32>
    %271 = vector.shape_cast %270 : vector<2x1x288xf32> to vector<2x288xf32>
    %c2_300 = arith.constant 2 : index
    %c0_301 = arith.constant 0 : index
    %c0_302 = arith.constant 0 : index
    %272 = vector.load %arg4[%c2_300, %c0_301, %c0_302] : memref<5x288x112xf32, #tpu.memory_space<vmem>>, vector<1x288x112xf32>
    %273 = vector.shape_cast %272 : vector<1x288x112xf32> to vector<288x112xf32>
    %cst_303 = arith.constant dense<0.000000e+00> : vector<2x112xf32>
    %274 = tpu.matmul %271, %273, %cst_303 {dimension_numbers = #tpu.dot_dimension_numbers<[1], [0], [0], [1], [0, 0, 1, 1], [], []>} : vector<2x288xf32>, vector<288x112xf32>, vector<2x112xf32> -> vector<2x112xf32>
    %275 = arith.addf %269, %274 : vector<2x112xf32>
    %c0_304 = arith.constant 0 : index
    %c13 = arith.constant 13 : index
    %c0_305 = arith.constant 0 : index
    %276 = vector.load %arg14[%c0_304, %c13, %c0_305] : memref<2x18x288xf32, #tpu.memory_space<vmem>>, vector<2x1x288xf32>
    %277 = vector.shape_cast %276 : vector<2x1x288xf32> to vector<2x288xf32>
    %c3_306 = arith.constant 3 : index
    %c0_307 = arith.constant 0 : index
    %c0_308 = arith.constant 0 : index
    %278 = vector.load %arg4[%c3_306, %c0_307, %c0_308] : memref<5x288x112xf32, #tpu.memory_space<vmem>>, vector<1x288x112xf32>
    %279 = vector.shape_cast %278 : vector<1x288x112xf32> to vector<288x112xf32>
    %cst_309 = arith.constant dense<0.000000e+00> : vector<2x112xf32>
    %280 = tpu.matmul %277, %279, %cst_309 {dimension_numbers = #tpu.dot_dimension_numbers<[1], [0], [0], [1], [0, 0, 1, 1], [], []>} : vector<2x288xf32>, vector<288x112xf32>, vector<2x112xf32> -> vector<2x112xf32>
    %281 = arith.addf %275, %280 : vector<2x112xf32>
    %c0_310 = arith.constant 0 : index
    %c14 = arith.constant 14 : index
    %c0_311 = arith.constant 0 : index
    %282 = vector.load %arg14[%c0_310, %c14, %c0_311] : memref<2x18x288xf32, #tpu.memory_space<vmem>>, vector<2x1x288xf32>
    %283 = vector.shape_cast %282 : vector<2x1x288xf32> to vector<2x288xf32>
    %c4_312 = arith.constant 4 : index
    %c0_313 = arith.constant 0 : index
    %c0_314 = arith.constant 0 : index
    %284 = vector.load %arg4[%c4_312, %c0_313, %c0_314] : memref<5x288x112xf32, #tpu.memory_space<vmem>>, vector<1x288x112xf32>
    %285 = vector.shape_cast %284 : vector<1x288x112xf32> to vector<288x112xf32>
    %cst_315 = arith.constant dense<0.000000e+00> : vector<2x112xf32>
    %286 = tpu.matmul %283, %285, %cst_315 {dimension_numbers = #tpu.dot_dimension_numbers<[1], [0], [0], [1], [0, 0, 1, 1], [], []>} : vector<2x288xf32>, vector<288x112xf32>, vector<2x112xf32> -> vector<2x112xf32>
    %287 = arith.addf %281, %286 : vector<2x112xf32>
    %c0_316 = arith.constant 0 : index
    %c0_317 = arith.constant 0 : index
    %288 = vector.load %arg5[%c0_316, %c0_317] : memref<1x112xf32, #tpu.memory_space<vmem>>, vector<1x112xf32>
    %289 = vector.broadcast %288 : vector<1x112xf32> to vector<2x112xf32>
    %290 = arith.addf %287, %289 : vector<2x112xf32>
    %cst_318 = arith.constant 0.000000e+00 : f32
    %291 = vector.broadcast %cst_318 : f32 to vector<2x112xf32>
    %292 = arith.maximumf %290, %291 : vector<2x112xf32>
    %c0_319 = arith.constant 0 : index
    %c5_320 = arith.constant 5 : index
    %c0_321 = arith.constant 0 : index
    %293 = vector.load %arg15[%c0_319, %c5_320, %c0_321] : memref<2x7x112xf32, #tpu.memory_space<vmem>>, vector<2x1x112xf32>
    %294 = vector.shape_cast %293 : vector<2x1x112xf32> to vector<2x112xf32>
    %295 = vector.shape_cast %292 : vector<2x112xf32> to vector<2x1x112xf32>
    tpu.vector_store %arg15[%c0_319, %c5_320, %c0_321], %295 {strides = array<i32>} : memref<2x7x112xf32, #tpu.memory_space<vmem>>, vector<2x1x112xf32>,
    %c0_322 = arith.constant 0 : index
    %c12_323 = arith.constant 12 : index
    %c0_324 = arith.constant 0 : index
    %296 = vector.load %arg14[%c0_322, %c12_323, %c0_324] : memref<2x18x288xf32, #tpu.memory_space<vmem>>, vector<2x1x288xf32>
    %297 = vector.shape_cast %296 : vector<2x1x288xf32> to vector<2x288xf32>
    %c0_325 = arith.constant 0 : index
    %c0_326 = arith.constant 0 : index
    %c0_327 = arith.constant 0 : index
    %298 = vector.load %arg4[%c0_325, %c0_326, %c0_327] : memref<5x288x112xf32, #tpu.memory_space<vmem>>, vector<1x288x112xf32>
    %299 = vector.shape_cast %298 : vector<1x288x112xf32> to vector<288x112xf32>
    %cst_328 = arith.constant dense<0.000000e+00> : vector<2x112xf32>
    %300 = tpu.matmul %297, %299, %cst_328 {dimension_numbers = #tpu.dot_dimension_numbers<[1], [0], [0], [1], [0, 0, 1, 1], [], []>} : vector<2x288xf32>, vector<288x112xf32>, vector<2x112xf32> -> vector<2x112xf32>
    %c0_329 = arith.constant 0 : index
    %c13_330 = arith.constant 13 : index
    %c0_331 = arith.constant 0 : index
    %301 = vector.load %arg14[%c0_329, %c13_330, %c0_331] : memref<2x18x288xf32, #tpu.memory_space<vmem>>, vector<2x1x288xf32>
    %302 = vector.shape_cast %301 : vector<2x1x288xf32> to vector<2x288xf32>
    %c1_332 = arith.constant 1 : index
    %c0_333 = arith.constant 0 : index
    %c0_334 = arith.constant 0 : index
    %303 = vector.load %arg4[%c1_332, %c0_333, %c0_334] : memref<5x288x112xf32, #tpu.memory_space<vmem>>, vector<1x288x112xf32>
    %304 = vector.shape_cast %303 : vector<1x288x112xf32> to vector<288x112xf32>
    %cst_335 = arith.constant dense<0.000000e+00> : vector<2x112xf32>
    %305 = tpu.matmul %302, %304, %cst_335 {dimension_numbers = #tpu.dot_dimension_numbers<[1], [0], [0], [1], [0, 0, 1, 1], [], []>} : vector<2x288xf32>, vector<288x112xf32>, vector<2x112xf32> -> vector<2x112xf32>
    %306 = arith.addf %300, %305 : vector<2x112xf32>
    %c0_336 = arith.constant 0 : index
    %c14_337 = arith.constant 14 : index
    %c0_338 = arith.constant 0 : index
    %307 = vector.load %arg14[%c0_336, %c14_337, %c0_338] : memref<2x18x288xf32, #tpu.memory_space<vmem>>, vector<2x1x288xf32>
    %308 = vector.shape_cast %307 : vector<2x1x288xf32> to vector<2x288xf32>
    %c2_339 = arith.constant 2 : index
    %c0_340 = arith.constant 0 : index
    %c0_341 = arith.constant 0 : index
    %309 = vector.load %arg4[%c2_339, %c0_340, %c0_341] : memref<5x288x112xf32, #tpu.memory_space<vmem>>, vector<1x288x112xf32>
    %310 = vector.shape_cast %309 : vector<1x288x112xf32> to vector<288x112xf32>
    %cst_342 = arith.constant dense<0.000000e+00> : vector<2x112xf32>
    %311 = tpu.matmul %308, %310, %cst_342 {dimension_numbers = #tpu.dot_dimension_numbers<[1], [0], [0], [1], [0, 0, 1, 1], [], []>} : vector<2x288xf32>, vector<288x112xf32>, vector<2x112xf32> -> vector<2x112xf32>
    %312 = arith.addf %306, %311 : vector<2x112xf32>
    %c0_343 = arith.constant 0 : index
    %c15 = arith.constant 15 : index
    %c0_344 = arith.constant 0 : index
    %313 = vector.load %arg14[%c0_343, %c15, %c0_344] : memref<2x18x288xf32, #tpu.memory_space<vmem>>, vector<2x1x288xf32>
    %314 = vector.shape_cast %313 : vector<2x1x288xf32> to vector<2x288xf32>
    %c3_345 = arith.constant 3 : index
    %c0_346 = arith.constant 0 : index
    %c0_347 = arith.constant 0 : index
    %315 = vector.load %arg4[%c3_345, %c0_346, %c0_347] : memref<5x288x112xf32, #tpu.memory_space<vmem>>, vector<1x288x112xf32>
    %316 = vector.shape_cast %315 : vector<1x288x112xf32> to vector<288x112xf32>
    %cst_348 = arith.constant dense<0.000000e+00> : vector<2x112xf32>
    %317 = tpu.matmul %314, %316, %cst_348 {dimension_numbers = #tpu.dot_dimension_numbers<[1], [0], [0], [1], [0, 0, 1, 1], [], []>} : vector<2x288xf32>, vector<288x112xf32>, vector<2x112xf32> -> vector<2x112xf32>
    %318 = arith.addf %312, %317 : vector<2x112xf32>
    %c0_349 = arith.constant 0 : index
    %c16 = arith.constant 16 : index
    %c0_350 = arith.constant 0 : index
    %319 = vector.load %arg14[%c0_349, %c16, %c0_350] : memref<2x18x288xf32, #tpu.memory_space<vmem>>, vector<2x1x288xf32>
    %320 = vector.shape_cast %319 : vector<2x1x288xf32> to vector<2x288xf32>
    %c4_351 = arith.constant 4 : index
    %c0_352 = arith.constant 0 : index
    %c0_353 = arith.constant 0 : index
    %321 = vector.load %arg4[%c4_351, %c0_352, %c0_353] : memref<5x288x112xf32, #tpu.memory_space<vmem>>, vector<1x288x112xf32>
    %322 = vector.shape_cast %321 : vector<1x288x112xf32> to vector<288x112xf32>
    %cst_354 = arith.constant dense<0.000000e+00> : vector<2x112xf32>
    %323 = tpu.matmul %320, %322, %cst_354 {dimension_numbers = #tpu.dot_dimension_numbers<[1], [0], [0], [1], [0, 0, 1, 1], [], []>} : vector<2x288xf32>, vector<288x112xf32>, vector<2x112xf32> -> vector<2x112xf32>
    %324 = arith.addf %318, %323 : vector<2x112xf32>
    %c0_355 = arith.constant 0 : index
    %c0_356 = arith.constant 0 : index
    %325 = vector.load %arg5[%c0_355, %c0_356] : memref<1x112xf32, #tpu.memory_space<vmem>>, vector<1x112xf32>
    %326 = vector.broadcast %325 : vector<1x112xf32> to vector<2x112xf32>
    %327 = arith.addf %324, %326 : vector<2x112xf32>
    %cst_357 = arith.constant 0.000000e+00 : f32
    %328 = vector.broadcast %cst_357 : f32 to vector<2x112xf32>
    %329 = arith.maximumf %327, %328 : vector<2x112xf32>
    %c0_358 = arith.constant 0 : index
    %c6_359 = arith.constant 6 : index
    %c0_360 = arith.constant 0 : index
    %330 = vector.load %arg15[%c0_358, %c6_359, %c0_360] : memref<2x7x112xf32, #tpu.memory_space<vmem>>, vector<2x1x112xf32>
    %331 = vector.shape_cast %330 : vector<2x1x112xf32> to vector<2x112xf32>
    %332 = vector.shape_cast %329 : vector<2x112xf32> to vector<2x1x112xf32>
    tpu.vector_store %arg15[%c0_358, %c6_359, %c0_360], %332 {strides = array<i32>} : memref<2x7x112xf32, #tpu.memory_space<vmem>>, vector<2x1x112xf32>,
    %c0_361 = arith.constant 0 : index
    %c0_362 = arith.constant 0 : index
    %c0_363 = arith.constant 0 : index
    %333 = vector.load %arg15[%c0_361, %c0_362, %c0_363] : memref<2x7x112xf32, #tpu.memory_space<vmem>>, vector<2x1x112xf32>
    %334 = vector.shape_cast %333 : vector<2x1x112xf32> to vector<2x112xf32>
    %c0_364 = arith.constant 0 : index
    %c0_365 = arith.constant 0 : index
    %c0_366 = arith.constant 0 : index
    %335 = vector.load %arg6[%c0_364, %c0_365, %c0_366] : memref<5x112x64xf32, #tpu.memory_space<vmem>>, vector<1x112x64xf32>
    %336 = vector.shape_cast %335 : vector<1x112x64xf32> to vector<112x64xf32>
    %cst_367 = arith.constant dense<0.000000e+00> : vector<2x64xf32>
    %337 = tpu.matmul %334, %336, %cst_367 {dimension_numbers = #tpu.dot_dimension_numbers<[1], [0], [0], [1], [0, 0, 1, 1], [], []>} : vector<2x112xf32>, vector<112x64xf32>, vector<2x64xf32> -> vector<2x64xf32>
    %c0_368 = arith.constant 0 : index
    %c1_369 = arith.constant 1 : index
    %c0_370 = arith.constant 0 : index
    %338 = vector.load %arg15[%c0_368, %c1_369, %c0_370] : memref<2x7x112xf32, #tpu.memory_space<vmem>>, vector<2x1x112xf32>
    %339 = vector.shape_cast %338 : vector<2x1x112xf32> to vector<2x112xf32>
    %c1_371 = arith.constant 1 : index
    %c0_372 = arith.constant 0 : index
    %c0_373 = arith.constant 0 : index
    %340 = vector.load %arg6[%c1_371, %c0_372, %c0_373] : memref<5x112x64xf32, #tpu.memory_space<vmem>>, vector<1x112x64xf32>
    %341 = vector.shape_cast %340 : vector<1x112x64xf32> to vector<112x64xf32>
    %cst_374 = arith.constant dense<0.000000e+00> : vector<2x64xf32>
    %342 = tpu.matmul %339, %341, %cst_374 {dimension_numbers = #tpu.dot_dimension_numbers<[1], [0], [0], [1], [0, 0, 1, 1], [], []>} : vector<2x112xf32>, vector<112x64xf32>, vector<2x64xf32> -> vector<2x64xf32>
    %343 = arith.addf %337, %342 : vector<2x64xf32>
    %c0_375 = arith.constant 0 : index
    %c2_376 = arith.constant 2 : index
    %c0_377 = arith.constant 0 : index
    %344 = vector.load %arg15[%c0_375, %c2_376, %c0_377] : memref<2x7x112xf32, #tpu.memory_space<vmem>>, vector<2x1x112xf32>
    %345 = vector.shape_cast %344 : vector<2x1x112xf32> to vector<2x112xf32>
    %c2_378 = arith.constant 2 : index
    %c0_379 = arith.constant 0 : index
    %c0_380 = arith.constant 0 : index
    %346 = vector.load %arg6[%c2_378, %c0_379, %c0_380] : memref<5x112x64xf32, #tpu.memory_space<vmem>>, vector<1x112x64xf32>
    %347 = vector.shape_cast %346 : vector<1x112x64xf32> to vector<112x64xf32>
    %cst_381 = arith.constant dense<0.000000e+00> : vector<2x64xf32>
    %348 = tpu.matmul %345, %347, %cst_381 {dimension_numbers = #tpu.dot_dimension_numbers<[1], [0], [0], [1], [0, 0, 1, 1], [], []>} : vector<2x112xf32>, vector<112x64xf32>, vector<2x64xf32> -> vector<2x64xf32>
    %349 = arith.addf %343, %348 : vector<2x64xf32>
    %c0_382 = arith.constant 0 : index
    %c3_383 = arith.constant 3 : index
    %c0_384 = arith.constant 0 : index
    %350 = vector.load %arg15[%c0_382, %c3_383, %c0_384] : memref<2x7x112xf32, #tpu.memory_space<vmem>>, vector<2x1x112xf32>
    %351 = vector.shape_cast %350 : vector<2x1x112xf32> to vector<2x112xf32>
    %c3_385 = arith.constant 3 : index
    %c0_386 = arith.constant 0 : index
    %c0_387 = arith.constant 0 : index
    %352 = vector.load %arg6[%c3_385, %c0_386, %c0_387] : memref<5x112x64xf32, #tpu.memory_space<vmem>>, vector<1x112x64xf32>
    %353 = vector.shape_cast %352 : vector<1x112x64xf32> to vector<112x64xf32>
    %cst_388 = arith.constant dense<0.000000e+00> : vector<2x64xf32>
    %354 = tpu.matmul %351, %353, %cst_388 {dimension_numbers = #tpu.dot_dimension_numbers<[1], [0], [0], [1], [0, 0, 1, 1], [], []>} : vector<2x112xf32>, vector<112x64xf32>, vector<2x64xf32> -> vector<2x64xf32>
    %355 = arith.addf %349, %354 : vector<2x64xf32>
    %c0_389 = arith.constant 0 : index
    %c4_390 = arith.constant 4 : index
    %c0_391 = arith.constant 0 : index
    %356 = vector.load %arg15[%c0_389, %c4_390, %c0_391] : memref<2x7x112xf32, #tpu.memory_space<vmem>>, vector<2x1x112xf32>
    %357 = vector.shape_cast %356 : vector<2x1x112xf32> to vector<2x112xf32>
    %c4_392 = arith.constant 4 : index
    %c0_393 = arith.constant 0 : index
    %c0_394 = arith.constant 0 : index
    %358 = vector.load %arg6[%c4_392, %c0_393, %c0_394] : memref<5x112x64xf32, #tpu.memory_space<vmem>>, vector<1x112x64xf32>
    %359 = vector.shape_cast %358 : vector<1x112x64xf32> to vector<112x64xf32>
    %cst_395 = arith.constant dense<0.000000e+00> : vector<2x64xf32>
    %360 = tpu.matmul %357, %359, %cst_395 {dimension_numbers = #tpu.dot_dimension_numbers<[1], [0], [0], [1], [0, 0, 1, 1], [], []>} : vector<2x112xf32>, vector<112x64xf32>, vector<2x64xf32> -> vector<2x64xf32>
    %361 = arith.addf %355, %360 : vector<2x64xf32>
    %c0_396 = arith.constant 0 : index
    %c0_397 = arith.constant 0 : index
    %362 = vector.load %arg7[%c0_396, %c0_397] : memref<1x64xf32, #tpu.memory_space<vmem>>, vector<1x64xf32>
    %363 = vector.broadcast %362 : vector<1x64xf32> to vector<2x64xf32>
    %364 = arith.addf %361, %363 : vector<2x64xf32>
    %cst_398 = arith.constant 0.000000e+00 : f32
    %365 = vector.broadcast %cst_398 : f32 to vector<2x64xf32>
    %366 = arith.maximumf %364, %365 : vector<2x64xf32>
    %c0_399 = arith.constant 0 : index
    %c0_400 = arith.constant 0 : index
    %367 = vector.load %arg16[%c0_399, %c0_400] : memref<2x128xf32, #tpu.memory_space<vmem>>, vector<2x64xf32>
    tpu.vector_store %arg16[%c0_399, %c0_400], %366 {strides = array<i32>} : memref<2x128xf32, #tpu.memory_space<vmem>>, vector<2x64xf32>,
    %c0_401 = arith.constant 0 : index
    %c2_402 = arith.constant 2 : index
    %c0_403 = arith.constant 0 : index
    %368 = vector.load %arg15[%c0_401, %c2_402, %c0_403] : memref<2x7x112xf32, #tpu.memory_space<vmem>>, vector<2x1x112xf32>
    %369 = vector.shape_cast %368 : vector<2x1x112xf32> to vector<2x112xf32>
    %c0_404 = arith.constant 0 : index
    %c0_405 = arith.constant 0 : index
    %c0_406 = arith.constant 0 : index
    %370 = vector.load %arg6[%c0_404, %c0_405, %c0_406] : memref<5x112x64xf32, #tpu.memory_space<vmem>>, vector<1x112x64xf32>
    %371 = vector.shape_cast %370 : vector<1x112x64xf32> to vector<112x64xf32>
    %cst_407 = arith.constant dense<0.000000e+00> : vector<2x64xf32>
    %372 = tpu.matmul %369, %371, %cst_407 {dimension_numbers = #tpu.dot_dimension_numbers<[1], [0], [0], [1], [0, 0, 1, 1], [], []>} : vector<2x112xf32>, vector<112x64xf32>, vector<2x64xf32> -> vector<2x64xf32>
    %c0_408 = arith.constant 0 : index
    %c3_409 = arith.constant 3 : index
    %c0_410 = arith.constant 0 : index
    %373 = vector.load %arg15[%c0_408, %c3_409, %c0_410] : memref<2x7x112xf32, #tpu.memory_space<vmem>>, vector<2x1x112xf32>
    %374 = vector.shape_cast %373 : vector<2x1x112xf32> to vector<2x112xf32>
    %c1_411 = arith.constant 1 : index
    %c0_412 = arith.constant 0 : index
    %c0_413 = arith.constant 0 : index
    %375 = vector.load %arg6[%c1_411, %c0_412, %c0_413] : memref<5x112x64xf32, #tpu.memory_space<vmem>>, vector<1x112x64xf32>
    %376 = vector.shape_cast %375 : vector<1x112x64xf32> to vector<112x64xf32>
    %cst_414 = arith.constant dense<0.000000e+00> : vector<2x64xf32>
    %377 = tpu.matmul %374, %376, %cst_414 {dimension_numbers = #tpu.dot_dimension_numbers<[1], [0], [0], [1], [0, 0, 1, 1], [], []>} : vector<2x112xf32>, vector<112x64xf32>, vector<2x64xf32> -> vector<2x64xf32>
    %378 = arith.addf %372, %377 : vector<2x64xf32>
    %c0_415 = arith.constant 0 : index
    %c4_416 = arith.constant 4 : index
    %c0_417 = arith.constant 0 : index
    %379 = vector.load %arg15[%c0_415, %c4_416, %c0_417] : memref<2x7x112xf32, #tpu.memory_space<vmem>>, vector<2x1x112xf32>
    %380 = vector.shape_cast %379 : vector<2x1x112xf32> to vector<2x112xf32>
    %c2_418 = arith.constant 2 : index
    %c0_419 = arith.constant 0 : index
    %c0_420 = arith.constant 0 : index
    %381 = vector.load %arg6[%c2_418, %c0_419, %c0_420] : memref<5x112x64xf32, #tpu.memory_space<vmem>>, vector<1x112x64xf32>
    %382 = vector.shape_cast %381 : vector<1x112x64xf32> to vector<112x64xf32>
    %cst_421 = arith.constant dense<0.000000e+00> : vector<2x64xf32>
    %383 = tpu.matmul %380, %382, %cst_421 {dimension_numbers = #tpu.dot_dimension_numbers<[1], [0], [0], [1], [0, 0, 1, 1], [], []>} : vector<2x112xf32>, vector<112x64xf32>, vector<2x64xf32> -> vector<2x64xf32>
    %384 = arith.addf %378, %383 : vector<2x64xf32>
    %c0_422 = arith.constant 0 : index
    %c5_423 = arith.constant 5 : index
    %c0_424 = arith.constant 0 : index
    %385 = vector.load %arg15[%c0_422, %c5_423, %c0_424] : memref<2x7x112xf32, #tpu.memory_space<vmem>>, vector<2x1x112xf32>
    %386 = vector.shape_cast %385 : vector<2x1x112xf32> to vector<2x112xf32>
    %c3_425 = arith.constant 3 : index
    %c0_426 = arith.constant 0 : index
    %c0_427 = arith.constant 0 : index
    %387 = vector.load %arg6[%c3_425, %c0_426, %c0_427] : memref<5x112x64xf32, #tpu.memory_space<vmem>>, vector<1x112x64xf32>
    %388 = vector.shape_cast %387 : vector<1x112x64xf32> to vector<112x64xf32>
    %cst_428 = arith.constant dense<0.000000e+00> : vector<2x64xf32>
    %389 = tpu.matmul %386, %388, %cst_428 {dimension_numbers = #tpu.dot_dimension_numbers<[1], [0], [0], [1], [0, 0, 1, 1], [], []>} : vector<2x112xf32>, vector<112x64xf32>, vector<2x64xf32> -> vector<2x64xf32>
    %390 = arith.addf %384, %389 : vector<2x64xf32>
    %c0_429 = arith.constant 0 : index
    %c6_430 = arith.constant 6 : index
    %c0_431 = arith.constant 0 : index
    %391 = vector.load %arg15[%c0_429, %c6_430, %c0_431] : memref<2x7x112xf32, #tpu.memory_space<vmem>>, vector<2x1x112xf32>
    %392 = vector.shape_cast %391 : vector<2x1x112xf32> to vector<2x112xf32>
    %c4_432 = arith.constant 4 : index
    %c0_433 = arith.constant 0 : index
    %c0_434 = arith.constant 0 : index
    %393 = vector.load %arg6[%c4_432, %c0_433, %c0_434] : memref<5x112x64xf32, #tpu.memory_space<vmem>>, vector<1x112x64xf32>
    %394 = vector.shape_cast %393 : vector<1x112x64xf32> to vector<112x64xf32>
    %cst_435 = arith.constant dense<0.000000e+00> : vector<2x64xf32>
    %395 = tpu.matmul %392, %394, %cst_435 {dimension_numbers = #tpu.dot_dimension_numbers<[1], [0], [0], [1], [0, 0, 1, 1], [], []>} : vector<2x112xf32>, vector<112x64xf32>, vector<2x64xf32> -> vector<2x64xf32>
    %396 = arith.addf %390, %395 : vector<2x64xf32>
    %c0_436 = arith.constant 0 : index
    %c0_437 = arith.constant 0 : index
    %397 = vector.load %arg7[%c0_436, %c0_437] : memref<1x64xf32, #tpu.memory_space<vmem>>, vector<1x64xf32>
    %398 = vector.broadcast %397 : vector<1x64xf32> to vector<2x64xf32>
    %399 = arith.addf %396, %398 : vector<2x64xf32>
    %cst_438 = arith.constant 0.000000e+00 : f32
    %400 = vector.broadcast %cst_438 : f32 to vector<2x64xf32>
    %401 = arith.maximumf %399, %400 : vector<2x64xf32>
    %c0_439 = arith.constant 0 : index
    %c64 = arith.constant 64 : index
    %402 = vector.load %arg16[%c0_439, %c64] : memref<2x128xf32, #tpu.memory_space<vmem>>, vector<2x64xf32>
    tpu.vector_store %arg16[%c0_439, %c64], %401 {strides = array<i32>} : memref<2x128xf32, #tpu.memory_space<vmem>>, vector<2x64xf32>,
    %c0_440 = arith.constant 0 : index
    %c0_441 = arith.constant 0 : index
    %403 = vector.load %arg16[%c0_440, %c0_441] : memref<2x128xf32, #tpu.memory_space<vmem>>, vector<2x128xf32>
    %c0_442 = arith.constant 0 : index
    %c0_443 = arith.constant 0 : index
    %404 = vector.load %arg8[%c0_442, %c0_443] : memref<128x256xf32, #tpu.memory_space<vmem>>, vector<128x256xf32>
    %cst_444 = arith.constant dense<0.000000e+00> : vector<2x256xf32>
    %405 = tpu.matmul %403, %404, %cst_444 {dimension_numbers = #tpu.dot_dimension_numbers<[1], [0], [0], [1], [0, 0, 1, 1], [], []>} : vector<2x128xf32>, vector<128x256xf32>, vector<2x256xf32> -> vector<2x256xf32>
    %c0_445 = arith.constant 0 : index
    %c0_446 = arith.constant 0 : index
    %406 = vector.load %arg9[%c0_445, %c0_446] : memref<1x256xf32, #tpu.memory_space<vmem>>, vector<1x256xf32>
    %407 = vector.broadcast %406 : vector<1x256xf32> to vector<2x256xf32>
    %408 = arith.addf %405, %407 : vector<2x256xf32>
    %cst_447 = arith.constant 0.000000e+00 : f32
    %409 = vector.broadcast %cst_447 : f32 to vector<2x256xf32>
    %410 = arith.maximumf %408, %409 : vector<2x256xf32>
    %c0_448 = arith.constant 0 : index
    %c0_449 = arith.constant 0 : index
    %411 = vector.load %arg10[%c0_448, %c0_449] : memref<2x256xf32, #tpu.memory_space<vmem>>, vector<2x256xf32>
    %412 = arith.mulf %410, %411 : vector<2x256xf32>
    %c0_450 = arith.constant 0 : index
    %c0_451 = arith.constant 0 : index
    %413 = vector.load %arg11[%c0_450, %c0_451] : memref<256x3xf32, #tpu.memory_space<vmem>>, vector<256x3xf32>
    %cst_452 = arith.constant dense<0.000000e+00> : vector<2x3xf32>
    %414 = tpu.matmul %412, %413, %cst_452 {dimension_numbers = #tpu.dot_dimension_numbers<[1], [0], [0], [1], [0, 0, 1, 1], [], []>} : vector<2x256xf32>, vector<256x3xf32>, vector<2x3xf32> -> vector<2x3xf32>
    %c0_453 = arith.constant 0 : index
    %c0_454 = arith.constant 0 : index
    %415 = vector.load %arg12[%c0_453, %c0_454] : memref<1x3xf32, #tpu.memory_space<vmem>>, vector<1x3xf32>
    %416 = vector.broadcast %415 : vector<1x3xf32> to vector<2x3xf32>
    %417 = arith.addf %414, %416 : vector<2x3xf32>
    %c0_455 = arith.constant 0 : index
    %c0_456 = arith.constant 0 : index
    %418 = vector.load %arg13[%c0_455, %c0_456] : memref<2x3xf32, #tpu.memory_space<vmem>>, vector<2x3xf32>
    tpu.vector_store %arg13[%c0_455, %c0_456], %417 {strides = array<i32>} : memref<2x3xf32, #tpu.memory_space<vmem>>, vector<2x3xf32>,
    return
  }
  func.func @transform_0(%arg0: i32) -> (i32, i32, i32, i32) {
    %c0_i32 = arith.constant 0 : i32
    %c0_i32_0 = arith.constant 0 : i32
    %c0_i32_1 = arith.constant 0 : i32
    %c0_i32_2 = arith.constant 0 : i32
    return %c0_i32, %arg0, %c0_i32_0, %c0_i32_1 : i32, i32, i32, i32
  }
  func.func @transform_1(%arg0: i32) -> (i32, i32, i32) {
    %c0_i32 = arith.constant 0 : i32
    %c0_i32_0 = arith.constant 0 : i32
    %c0_i32_1 = arith.constant 0 : i32
    %c0_i32_2 = arith.constant 0 : i32
    return %c0_i32, %c0_i32_0, %c0_i32_1 : i32, i32, i32
  }
  func.func @transform_2(%arg0: i32) -> (i32, i32) {
    %c0_i32 = arith.constant 0 : i32
    %c0_i32_0 = arith.constant 0 : i32
    %c0_i32_1 = arith.constant 0 : i32
    return %c0_i32, %c0_i32_0 : i32, i32
  }
  func.func @transform_3(%arg0: i32) -> (i32, i32, i32) {
    %c0_i32 = arith.constant 0 : i32
    %c0_i32_0 = arith.constant 0 : i32
    %c0_i32_1 = arith.constant 0 : i32
    %c0_i32_2 = arith.constant 0 : i32
    return %c0_i32, %c0_i32_0, %c0_i32_1 : i32, i32, i32
  }
  func.func @transform_4(%arg0: i32) -> (i32, i32) {
    %c0_i32 = arith.constant 0 : i32
    %c0_i32_0 = arith.constant 0 : i32
    %c0_i32_1 = arith.constant 0 : i32
    return %c0_i32, %c0_i32_0 : i32, i32
  }
  func.func @transform_5(%arg0: i32) -> (i32, i32, i32) {
    %c0_i32 = arith.constant 0 : i32
    %c0_i32_0 = arith.constant 0 : i32
    %c0_i32_1 = arith.constant 0 : i32
    %c0_i32_2 = arith.constant 0 : i32
    return %c0_i32, %c0_i32_0, %c0_i32_1 : i32, i32, i32
  }
  func.func @transform_6(%arg0: i32) -> (i32, i32) {
    %c0_i32 = arith.constant 0 : i32
    %c0_i32_0 = arith.constant 0 : i32
    %c0_i32_1 = arith.constant 0 : i32
    return %c0_i32, %c0_i32_0 : i32, i32
  }
  func.func @transform_7(%arg0: i32) -> (i32, i32) {
    %c0_i32 = arith.constant 0 : i32
    %c0_i32_0 = arith.constant 0 : i32
    %c0_i32_1 = arith.constant 0 : i32
    return %c0_i32, %c0_i32_0 : i32, i32
  }
  func.func @transform_8(%arg0: i32) -> (i32, i32) {
    %c0_i32 = arith.constant 0 : i32
    %c0_i32_0 = arith.constant 0 : i32
    %c0_i32_1 = arith.constant 0 : i32
    return %c0_i32, %c0_i32_0 : i32, i32
  }
  func.func @transform_9(%arg0: i32) -> (i32, i32) {
    %c0_i32 = arith.constant 0 : i32
    %c0_i32_0 = arith.constant 0 : i32
    return %arg0, %c0_i32 : i32, i32
  }
  func.func @transform_10(%arg0: i32) -> (i32, i32) {
    %c0_i32 = arith.constant 0 : i32
    %c0_i32_0 = arith.constant 0 : i32
    %c0_i32_1 = arith.constant 0 : i32
    return %c0_i32, %c0_i32_0 : i32, i32
  }
  func.func @transform_11(%arg0: i32) -> (i32, i32) {
    %c0_i32 = arith.constant 0 : i32
    %c0_i32_0 = arith.constant 0 : i32
    %c0_i32_1 = arith.constant 0 : i32
    return %c0_i32, %c0_i32_0 : i32, i32
  }
  func.func @transform_12(%arg0: i32) -> (i32, i32) {
    %c0_i32 = arith.constant 0 : i32
    %c0_i32_0 = arith.constant 0 : i32
    return %arg0, %c0_i32 : i32, i32
  }
}

</mosaic_0001>

<llo_original>
// kernel: forward.1
$region0: #{forward.1}
  #allocation0 [shape = 'u32[]', space=smem, size = 0x4, offset = 0x4, fixed_abs, tag = 'smem constant byte address 0x4 - core index']
  #allocation1 [shape = 'u32[72,128]{1,0:T(1,128)}', space=vmem, size = 0x9000, scoped, tag = 'internal scratch']
  #allocation2 [shape = 'f32[2,18,288]{2,1,0:T(8,128)}', space=vmem, size = 0x12000, scoped, tag = 'scratch operand']
  #allocation3 [shape = 'f32[2,7,112]{2,1,0:T(8,128)}', space=vmem, size = 0x2000, scoped, tag = 'scratch operand']
  #allocation4 [shape = 'f32[2,128]{1,0:T(2,128)}', space=vmem, size = 0x400, scoped, tag = 'scratch operand']
  %s0 = inlined_call_operand.vmem [shape: f32[2,2,20,120], index: 0, kind: input, shape index: {}]
  %s1 = inlined_call_operand.vmem [shape: f32[5,120,288], index: 1, kind: input, shape index: {}]
  %s2 = inlined_call_operand.vmem [shape: f32[1,288], index: 2, kind: input, shape index: {}]
  %s3 = inlined_call_operand.vmem [shape: f32[5,288,112], index: 3, kind: input, shape index: {}]
  %s4 = inlined_call_operand.vmem [shape: f32[1,112], index: 4, kind: input, shape index: {}]
  %s5 = inlined_call_operand.vmem [shape: f32[5,112,64], index: 5, kind: input, shape index: {}]
  %s6 = inlined_call_operand.vmem [shape: f32[1,64], index: 6, kind: input, shape index: {}]
  %s7 = inlined_call_operand.vmem [shape: f32[128,256], index: 7, kind: input, shape index: {}]
  %s8 = inlined_call_operand.vmem [shape: f32[1,256], index: 8, kind: input, shape index: {}]
  %s9 = inlined_call_operand.vmem [shape: f32[2,256], index: 9, kind: input, shape index: {}]
  %s10 = inlined_call_operand.vmem [shape: f32[256,3], index: 10, kind: input, shape index: {}]
  %s11 = inlined_call_operand.vmem [shape: f32[1,3], index: 11, kind: input, shape index: {}]
  %s12 = inlined_call_operand.hbm [shape: f32[2,3], index: 12, kind: output, shape index: {}]
  %s13 = sld [smem:[#allocation0]]
  $region58: #{forward.1} parent=0
    _
  %s15 = ssub.s32 1, %s13
  %s16 = scalar_select 0, %s15, %s13
  $region1: #{forward.1} parent=0
    #allocation5 [shape = 'u8[1024]{0}', space=vmem, size = 0x400, scoped, tag = 'output window, operand 0, single buffered']
    #allocation6 [shape = 's32[1]{0}', space=sflag, size = 0x4, scoped, tag = 'scoped memory for forward.1']
    %17 = vsyncpa [#allocation6], 0
    // Predicated region
    $region2: #{forward.1} parent=1 // pred_check
      _
    $region3: #{forward.1} parent=1 // pred_check_branch
      %19 = sbr.rel (0) target = $region5
    $region4: #{forward.1} parent=1 // pred_region
      _
    $region5: #{forward.1} parent=1 // pred_fallthru
      _
    // Predicated region
    $region6: #{forward.1} parent=1 // pred_check
      _
    $region7: #{forward.1} parent=1 // pred_check_branch
      %21 = sbr.rel (0) target = $region9
    $region8: #{forward.1} parent=1 // pred_region
      _
    $region9: #{forward.1} parent=1 // pred_fallthru
      _
    // Predicated region
    $region10: #{forward.1} parent=1 // pred_check
      _
    $region11: #{forward.1} parent=1 // pred_check_branch
      %23 = sbr.rel (0) target = $region13
    $region12: #{forward.1} parent=1 // pred_region
      _
    $region13: #{forward.1} parent=1 // pred_fallthru
      _
    // Predicated region
    $region14: #{forward.1} parent=1 // pred_check
      _
    $region15: #{forward.1} parent=1 // pred_check_branch
      %25 = sbr.rel (0) target = $region17
    $region16: #{forward.1} parent=1 // pred_region
      _
    $region17: #{forward.1} parent=1 // pred_fallthru
      _
    // Predicated region
    $region18: #{forward.1} parent=1 // pred_check
      _
    $region19: #{forward.1} parent=1 // pred_check_branch
      %27 = sbr.rel (0) target = $region21
    $region20: #{forward.1} parent=1 // pred_region
      _
    $region21: #{forward.1} parent=1 // pred_fallthru
      _
    // Predicated region
    $region22: #{forward.1} parent=1 // pred_check
      _
    $region23: #{forward.1} parent=1 // pred_check_branch
      %29 = sbr.rel (0) target = $region25
    $region24: #{forward.1} parent=1 // pred_region
      _
    $region25: #{forward.1} parent=1 // pred_fallthru
      _
    // Predicated region
    $region26: #{forward.1} parent=1 // pred_check
      _
    $region27: #{forward.1} parent=1 // pred_check_branch
      %31 = sbr.rel (0) target = $region29
    $region28: #{forward.1} parent=1 // pred_region
      _
    $region29: #{forward.1} parent=1 // pred_fallthru
      _
    // Predicated region
    $region30: #{forward.1} parent=1 // pred_check
      _
    $region31: #{forward.1} parent=1 // pred_check_branch
      %33 = sbr.rel (0) target = $region33
    $region32: #{forward.1} parent=1 // pred_region
      _
    $region33: #{forward.1} parent=1 // pred_fallthru
      _
    // Predicated region
    $region34: #{forward.1} parent=1 // pred_check
      _
    $region35: #{forward.1} parent=1 // pred_check_branch
      %35 = sbr.rel (0) target = $region37
    $region36: #{forward.1} parent=1 // pred_region
      _
    $region37: #{forward.1} parent=1 // pred_fallthru
      _
    // Predicated region
    $region38: #{forward.1} parent=1 // pred_check
      _
    $region39: #{forward.1} parent=1 // pred_check_branch
      %37 = sbr.rel (0) target = $region41
    $region40: #{forward.1} parent=1 // pred_region
      _
    $region41: #{forward.1} parent=1 // pred_fallthru
      _
    // Predicated region
    $region42: #{forward.1} parent=1 // pred_check
      _
    $region43: #{forward.1} parent=1 // pred_check_branch
      %39 = sbr.rel (0) target = $region45
    $region44: #{forward.1} parent=1 // pred_region
      _
    $region45: #{forward.1} parent=1 // pred_fallthru
      _
    // Predicated region
    $region46: #{forward.1} parent=1 // pred_check
      _
    $region47: #{forward.1} parent=1 // pred_check_branch
      %41 = sbr.rel (0) target = $region49
    $region48: #{forward.1} parent=1 // pred_region
      _
    $region49: #{forward.1} parent=1 // pred_fallthru
      _
    %v42 = vld [vmem:[%s0] sm:$0xff]
    %v43 = vld [vmem:[%s0 + $0x8] sm:$0xff]
    %v44 = vld [vmem:[%s0 + $0x10] sm:$0x3]
    %v45 = vld [vmem:[%s1] sm:$0xff]
    %v46 = vld [vmem:[%s1 + $0x8] sm:$0xff]
    %v47 = vld [vmem:[%s1 + $0x10] sm:$0xff]
    %v48 = vld [vmem:[%s1 + $0x18] sm:$0xff]
    %v49 = vld [vmem:[%s1 + $0x20] sm:$0xff]
    %v50 = vld [vmem:[%s1 + $0x28] sm:$0xff]
    %v51 = vld [vmem:[%s1 + $0x30] sm:$0xff]
    %v52 = vld [vmem:[%s1 + $0x38] sm:$0xff]
    %v53 = vld [vmem:[%s1 + $0x40] sm:$0xff]
    %v54 = vld [vmem:[%s1 + $0x48] sm:$0xff]
    %v55 = vld [vmem:[%s1 + $0x50] sm:$0xff]
    %v56 = vld [vmem:[%s1 + $0x58] sm:$0xff]
    %v57 = vld [vmem:[%s1 + $0x60] sm:$0xff]
    %v58 = vld [vmem:[%s1 + $0x68] sm:$0xff]
    %v59 = vld [vmem:[%s1 + $0x70] sm:$0xff]
    %v60 = vld [vmem:[%s1 + $0x78] sm:$0xff]
    %v61 = vld [vmem:[%s1 + $0x80] sm:$0xff]
    %v62 = vld [vmem:[%s1 + $0x88] sm:$0xff]
    %v63 = vld [vmem:[%s1 + $0x90] sm:$0xff]
    %v64 = vld [vmem:[%s1 + $0x98] sm:$0xff]
    %v65 = vld [vmem:[%s1 + $0xa0] sm:$0xff]
    %v66 = vld [vmem:[%s1 + $0xa8] sm:$0xff]
    %v67 = vld [vmem:[%s1 + $0xb0] sm:$0xff]
    %v68 = vld [vmem:[%s1 + $0xb8] sm:$0xff]
    %v69 = vld [vmem:[%s1 + $0xc0] sm:$0xff]
    %v70 = vld [vmem:[%s1 + $0xc8] sm:$0xff]
    %v71 = vld [vmem:[%s1 + $0xd0] sm:$0xff]
    %v72 = vld [vmem:[%s1 + $0xd8] sm:$0xff]
    %v73 = vld [vmem:[%s1 + $0xe0] sm:$0xff]
    %v74 = vld [vmem:[%s1 + $0xe8] sm:$0xff]
    %v75 = vld [vmem:[%s1 + $0xf0] sm:$0xff]
    %v76 = vld [vmem:[%s1 + $0xf8] sm:$0xff]
    %v77 = vld [vmem:[%s1 + $0x100] sm:$0xff]
    %v78 = vld [vmem:[%s1 + $0x108] sm:$0xff]
    %v79 = vld [vmem:[%s1 + $0x110] sm:$0xff]
    %v80 = vld [vmem:[%s1 + $0x118] sm:$0xff]
    %v81 = vld [vmem:[%s1 + $0x120] sm:$0xff]
    %v82 = vld [vmem:[%s1 + $0x128] sm:$0xff]
    %v83 = vld [vmem:[%s1 + $0x130] sm:$0xff]
    %v84 = vld [vmem:[%s1 + $0x138] sm:$0xff]
    %v85 = vld [vmem:[%s1 + $0x140] sm:$0xff]
    %v86 = vld [vmem:[%s1 + $0x148] sm:$0xff]
    %v87 = vld [vmem:[%s1 + $0x150] sm:$0xff]
    %v88 = vld [vmem:[%s1 + $0x158] sm:$0xff]
    %v89 = vld [vmem:[%s1 + $0x160] sm:$0xff]
    %s90 = scalar_lea.vmem %s0, 48
    %v91 = vld [vmem:[%s90] sm:$0xff]
    %v92 = vld [vmem:[%s90 + $0x8] sm:$0xff]
    %v93 = vld [vmem:[%s90 + $0x10] sm:$0x3]
    %s94 = scalar_lea.vmem %s1, 360
    %v95 = vld [vmem:[%s94] sm:$0xff]
    %v96 = vld [vmem:[%s94 + $0x8] sm:$0xff]
    %v97 = vld [vmem:[%s94 + $0x10] sm:$0xff]
    %v98 = vld [vmem:[%s94 + $0x18] sm:$0xff]
    %v99 = vld [vmem:[%s94 + $0x20] sm:$0xff]
    %v100 = vld [vmem:[%s94 + $0x28] sm:$0xff]
    %v101 = vld [vmem:[%s94 + $0x30] sm:$0xff]
    %v102 = vld [vmem:[%s94 + $0x38] sm:$0xff]
    %v103 = vld [vmem:[%s94 + $0x40] sm:$0xff]
    %v104 = vld [vmem:[%s94 + $0x48] sm:$0xff]
    %v105 = vld [vmem:[%s94 + $0x50] sm:$0xff]
    %v106 = vld [vmem:[%s94 + $0x58] sm:$0xff]
    %v107 = vld [vmem:[%s94 + $0x60] sm:$0xff]
    %v108 = vld [vmem:[%s94 + $0x68] sm:$0xff]
    %v109 = vld [vmem:[%s94 + $0x70] sm:$0xff]
    %v110 = vld [vmem:[%s94 + $0x78] sm:$0xff]
    %v111 = vld [vmem:[%s94 + $0x80] sm:$0xff]
    %v112 = vld [vmem:[%s94 + $0x88] sm:$0xff]
    %v113 = vld [vmem:[%s94 + $0x90] sm:$0xff]
    %v114 = vld [vmem:[%s94 + $0x98] sm:$0xff]
    %v115 = vld [vmem:[%s94 + $0xa0] sm:$0xff]
    %v116 = vld [vmem:[%s94 + $0xa8] sm:$0xff]
    %v117 = vld [vmem:[%s94 + $0xb0] sm:$0xff]
    %v118 = vld [vmem:[%s94 + $0xb8] sm:$0xff]
    %v119 = vld [vmem:[%s94 + $0xc0] sm:$0xff]
    %v120 = vld [vmem:[%s94 + $0xc8] sm:$0xff]
    %v121 = vld [vmem:[%s94 + $0xd0] sm:$0xff]
    %v122 = vld [vmem:[%s94 + $0xd8] sm:$0xff]
    %v123 = vld [vmem:[%s94 + $0xe0] sm:$0xff]
    %v124 = vld [vmem:[%s94 + $0xe8] sm:$0xff]
    %v125 = vld [vmem:[%s94 + $0xf0] sm:$0xff]
    %v126 = vld [vmem:[%s94 + $0xf8] sm:$0xff]
    %v127 = vld [vmem:[%s94 + $0x100] sm:$0xff]
    %v128 = vld [vmem:[%s94 + $0x108] sm:$0xff]
    %v129 = vld [vmem:[%s94 + $0x110] sm:$0xff]
    %v130 = vld [vmem:[%s94 + $0x118] sm:$0xff]
    %v131 = vld [vmem:[%s94 + $0x120] sm:$0xff]
    %v132 = vld [vmem:[%s94 + $0x128] sm:$0xff]
    %v133 = vld [vmem:[%s94 + $0x130] sm:$0xff]
    %v134 = vld [vmem:[%s94 + $0x138] sm:$0xff]
    %v135 = vld [vmem:[%s94 + $0x140] sm:$0xff]
    %v136 = vld [vmem:[%s94 + $0x148] sm:$0xff]
    %v137 = vld [vmem:[%s94 + $0x150] sm:$0xff]
    %v138 = vld [vmem:[%s94 + $0x158] sm:$0xff]
    %v139 = vld [vmem:[%s94 + $0x160] sm:$0xff]
    %vm140 = vcmask 982016
    %v142 = vsel %vm140, %v91, 0
    %v145 = vsel %vm140, %v92, 0
    %v148 = vsel %vm140, %v93, 0
    %150 = vmatpush.msra.mxu0 0.0
    %151 = vmatpush.msra.mxu0 %v137
    %152 = vmatpush.msra.mxu0 %v134
    %153 = vmatpush.msra.mxu0 %v131
    %154 = vmatpush.msra.mxu0 %v128
    %155 = vmatpush.msra.mxu0 %v125
    %156 = vmatpush.msra.mxu0 %v122
    %157 = vmatpush.msra.mxu0 %v119
    %158 = vmatpush.msra.mxu0 %v116
    %159 = vmatpush.msra.mxu0 %v113
    %160 = vmatpush.msra.mxu0 %v110
    %161 = vmatpush.msra.mxu0 %v107
    %162 = vmatpush.msra.mxu0 %v104
    %163 = vmatpush.msra.mxu0 %v101
    %164 = vmatpush.msra.mxu0 %v98
    %165 = vmatpush.msra.mxu0 %v95
    %166 = vmatmul.f32.gmra.mxu0 %v142
    %v167 = vpop.f32.mrf.mxu0
    %v168 = vadd.f32 0.0, %v167
    %169 = vmatmul.f32.gmra.mxu0 %v145
    %v170 = vpop.f32.mrf.mxu0
    %v171 = vadd.f32 0.0, %v170
    %172 = vmatmul.f32.gmra.mxu0 %v148
    %v173 = vpop.f32.mrf.mxu0
    %v174 = vadd.f32 0.0, %v173
    %175 = vdwg.mxu0
    %176 = vmatpush.msra.mxu0 0.0
    %177 = vmatpush.msra.mxu0 %v138
    %178 = vmatpush.msra.mxu0 %v135
    %179 = vmatpush.msra.mxu0 %v132
    %180 = vmatpush.msra.mxu0 %v129
    %181 = vmatpush.msra.mxu0 %v126
    %182 = vmatpush.msra.mxu0 %v123
    %183 = vmatpush.msra.mxu0 %v120
    %184 = vmatpush.msra.mxu0 %v117
    %185 = vmatpush.msra.mxu0 %v114
    %186 = vmatpush.msra.mxu0 %v111
    %187 = vmatpush.msra.mxu0 %v108
    %188 = vmatpush.msra.mxu0 %v105
    %189 = vmatpush.msra.mxu0 %v102
    %190 = vmatpush.msra.mxu0 %v99
    %191 = vmatpush.msra.mxu0 %v96
    %192 = vmatmul.f32.gmra.mxu0 %v142
    %v193 = vpop.f32.mrf.mxu0
    %v194 = vadd.f32 0.0, %v193
    %195 = vmatmul.f32.gmra.mxu0 %v145
    %v196 = vpop.f32.mrf.mxu0
    %v197 = vadd.f32 0.0, %v196
    %198 = vmatmul.f32.gmra.mxu0 %v148
    %v199 = vpop.f32.mrf.mxu0
    %v200 = vadd.f32 0.0, %v199
    %201 = vdwg.mxu0
    %202 = vmatpush.msra.mxu0 0.0
    %203 = vmatpush.msra.mxu0 %v139
    %204 = vmatpush.msra.mxu0 %v136
    %205 = vmatpush.msra.mxu0 %v133
    %206 = vmatpush.msra.mxu0 %v130
    %207 = vmatpush.msra.mxu0 %v127
    %208 = vmatpush.msra.mxu0 %v124
    %209 = vmatpush.msra.mxu0 %v121
    %210 = vmatpush.msra.mxu0 %v118
    %211 = vmatpush.msra.mxu0 %v115
    %212 = vmatpush.msra.mxu0 %v112
    %213 = vmatpush.msra.mxu0 %v109
    %214 = vmatpush.msra.mxu0 %v106
    %215 = vmatpush.msra.mxu0 %v103
    %216 = vmatpush.msra.mxu0 %v100
    %217 = vmatpush.msra.mxu0 %v97
    %218 = vmatmul.f32.gmra.mxu0 %v142
    %v219 = vpop.f32.mrf.mxu0
    %v220 = vadd.f32 0.0, %v219
    %221 = vmatmul.f32.gmra.mxu0 %v145
    %v222 = vpop.f32.mrf.mxu0
    %v223 = vadd.f32 0.0, %v222
    %224 = vmatmul.f32.gmra.mxu0 %v148
    %v225 = vpop.f32.mrf.mxu0
    %v226 = vadd.f32 0.0, %v225
    %227 = vdwg.mxu0
    %v229 = vsel %vm140, %v42, 0
    %v232 = vsel %vm140, %v43, 0
    %v235 = vsel %vm140, %v44, 0
    %237 = vmatpush.msra.mxu0 0.0
    %238 = vmatpush.msra.mxu0 %v87
    %239 = vmatpush.msra.mxu0 %v84
    %240 = vmatpush.msra.mxu0 %v81
    %241 = vmatpush.msra.mxu0 %v78
    %242 = vmatpush.msra.mxu0 %v75
    %243 = vmatpush.msra.mxu0 %v72
    %244 = vmatpush.msra.mxu0 %v69
    %245 = vmatpush.msra.mxu0 %v66
    %246 = vmatpush.msra.mxu0 %v63
    %247 = vmatpush.msra.mxu0 %v60
    %248 = vmatpush.msra.mxu0 %v57
    %249 = vmatpush.msra.mxu0 %v54
    %250 = vmatpush.msra.mxu0 %v51
    %251 = vmatpush.msra.mxu0 %v48
    %252 = vmatpush.msra.mxu0 %v45
    %253 = vmatmul.f32.gmra.mxu0 %v229
    %v254 = vpop.f32.mrf.mxu0
    %v255 = vadd.f32 %v168, %v254
    %256 = vmatmul.f32.gmra.mxu0 %v232
    %v257 = vpop.f32.mrf.mxu0
    %v258 = vadd.f32 %v171, %v257
    %259 = vmatmul.f32.gmra.mxu0 %v235
    %v260 = vpop.f32.mrf.mxu0
    %v261 = vadd.f32 %v174, %v260
    %262 = vdwg.mxu0
    %263 = vmatpush.msra.mxu0 0.0
    %264 = vmatpush.msra.mxu0 %v88
    %265 = vmatpush.msra.mxu0 %v85
    %266 = vmatpush.msra.mxu0 %v82
    %267 = vmatpush.msra.mxu0 %v79
    %268 = vmatpush.msra.mxu0 %v76
    %269 = vmatpush.msra.mxu0 %v73
    %270 = vmatpush.msra.mxu0 %v70
    %271 = vmatpush.msra.mxu0 %v67
    %272 = vmatpush.msra.mxu0 %v64
    %273 = vmatpush.msra.mxu0 %v61
    %274 = vmatpush.msra.mxu0 %v58
    %275 = vmatpush.msra.mxu0 %v55
    %276 = vmatpush.msra.mxu0 %v52
    %277 = vmatpush.msra.mxu0 %v49
    %278 = vmatpush.msra.mxu0 %v46
    %279 = vmatmul.f32.gmra.mxu0 %v229
    %v280 = vpop.f32.mrf.mxu0
    %v281 = vadd.f32 %v194, %v280
    %282 = vmatmul.f32.gmra.mxu0 %v232
    %v283 = vpop.f32.mrf.mxu0
    %v284 = vadd.f32 %v197, %v283
    %285 = vmatmul.f32.gmra.mxu0 %v235
    %v286 = vpop.f32.mrf.mxu0
    %v287 = vadd.f32 %v200, %v286
    %288 = vdwg.mxu0
    %289 = vmatpush.msra.mxu0 0.0
    %290 = vmatpush.msra.mxu0 %v89
    %291 = vmatpush.msra.mxu0 %v86
    %292 = vmatpush.msra.mxu0 %v83
    %293 = vmatpush.msra.mxu0 %v80
    %294 = vmatpush.msra.mxu0 %v77
    %295 = vmatpush.msra.mxu0 %v74
    %296 = vmatpush.msra.mxu0 %v71
    %297 = vmatpush.msra.mxu0 %v68
    %298 = vmatpush.msra.mxu0 %v65
    %299 = vmatpush.msra.mxu0 %v62
    %300 = vmatpush.msra.mxu0 %v59
    %301 = vmatpush.msra.mxu0 %v56
    %302 = vmatpush.msra.mxu0 %v53
    %303 = vmatpush.msra.mxu0 %v50
    %304 = vmatpush.msra.mxu0 %v47
    %305 = vmatmul.f32.gmra.mxu0 %v229
    %v306 = vpop.f32.mrf.mxu0
    %v307 = vadd.f32 %v220, %v306
    %308 = vmatmul.f32.gmra.mxu0 %v232
    %v309 = vpop.f32.mrf.mxu0
    %v310 = vadd.f32 %v223, %v309
    %311 = vmatmul.f32.gmra.mxu0 %v235
    %v312 = vpop.f32.mrf.mxu0
    %v313 = vadd.f32 %v226, %v312
    %314 = vdwg.mxu0
    %v315 = vld [vmem:[%s0 + $0x1] sm:$0xff]
    %v316 = vld [vmem:[%s0 + $0x9] sm:$0xff]
    %v317 = vld [vmem:[%s0 + $0x11] sm:$0x3]
    %s318 = scalar_lea.vmem %s1, 720
    %v319 = vld [vmem:[%s318] sm:$0xff]
    %v320 = vld [vmem:[%s318 + $0x8] sm:$0xff]
    %v321 = vld [vmem:[%s318 + $0x10] sm:$0xff]
    %v322 = vld [vmem:[%s318 + $0x18] sm:$0xff]
    %v323 = vld [vmem:[%s318 + $0x20] sm:$0xff]
    %v324 = vld [vmem:[%s318 + $0x28] sm:$0xff]
    %v325 = vld [vmem:[%s318 + $0x30] sm:$0xff]
    %v326 = vld [vmem:[%s318 + $0x38] sm:$0xff]
    %v327 = vld [vmem:[%s318 + $0x40] sm:$0xff]
    %v328 = vld [vmem:[%s318 + $0x48] sm:$0xff]
    %v329 = vld [vmem:[%s318 + $0x50] sm:$0xff]
    %v330 = vld [vmem:[%s318 + $0x58] sm:$0xff]
    %v331 = vld [vmem:[%s318 + $0x60] sm:$0xff]
    %v332 = vld [vmem:[%s318 + $0x68] sm:$0xff]
    %v333 = vld [vmem:[%s318 + $0x70] sm:$0xff]
    %v334 = vld [vmem:[%s318 + $0x78] sm:$0xff]
    %v335 = vld [vmem:[%s318 + $0x80] sm:$0xff]
    %v336 = vld [vmem:[%s318 + $0x88] sm:$0xff]
    %v337 = vld [vmem:[%s318 + $0x90] sm:$0xff]
    %v338 = vld [vmem:[%s318 + $0x98] sm:$0xff]
    %v339 = vld [vmem:[%s318 + $0xa0] sm:$0xff]
    %v340 = vld [vmem:[%s318 + $0xa8] sm:$0xff]
    %v341 = vld [vmem:[%s318 + $0xb0] sm:$0xff]
    %v342 = vld [vmem:[%s318 + $0xb8] sm:$0xff]
    %v343 = vld [vmem:[%s318 + $0xc0] sm:$0xff]
    %v344 = vld [vmem:[%s318 + $0xc8] sm:$0xff]
    %v345 = vld [vmem:[%s318 + $0xd0] sm:$0xff]
    %v346 = vld [vmem:[%s318 + $0xd8] sm:$0xff]
    %v347 = vld [vmem:[%s318 + $0xe0] sm:$0xff]
    %v348 = vld [vmem:[%s318 + $0xe8] sm:$0xff]
    %v349 = vld [vmem:[%s318 + $0xf0] sm:$0xff]
    %v350 = vld [vmem:[%s318 + $0xf8] sm:$0xff]
    %v351 = vld [vmem:[%s318 + $0x100] sm:$0xff]
    %v352 = vld [vmem:[%s318 + $0x108] sm:$0xff]
    %v353 = vld [vmem:[%s318 + $0x110] sm:$0xff]
    %v354 = vld [vmem:[%s318 + $0x118] sm:$0xff]
    %v355 = vld [vmem:[%s318 + $0x120] sm:$0xff]
    %v356 = vld [vmem:[%s318 + $0x128] sm:$0xff]
    %v357 = vld [vmem:[%s318 + $0x130] sm:$0xff]
    %v358 = vld [vmem:[%s318 + $0x138] sm:$0xff]
    %v359 = vld [vmem:[%s318 + $0x140] sm:$0xff]
    %v360 = vld [vmem:[%s318 + $0x148] sm:$0xff]
    %v361 = vld [vmem:[%s318 + $0x150] sm:$0xff]
    %v362 = vld [vmem:[%s318 + $0x158] sm:$0xff]
    %v363 = vld [vmem:[%s318 + $0x160] sm:$0xff]
    %v365 = vsel %vm140, %v315, 0
    %v368 = vsel %vm140, %v316, 0
    %v371 = vsel %vm140, %v317, 0
    %373 = vmatpush.msra.mxu0 0.0
    %374 = vmatpush.msra.mxu0 %v361
    %375 = vmatpush.msra.mxu0 %v358
    %376 = vmatpush.msra.mxu0 %v355
    %377 = vmatpush.msra.mxu0 %v352
    %378 = vmatpush.msra.mxu0 %v349
    %379 = vmatpush.msra.mxu0 %v346
    %380 = vmatpush.msra.mxu0 %v343
    %381 = vmatpush.msra.mxu0 %v340
    %382 = vmatpush.msra.mxu0 %v337
    %383 = vmatpush.msra.mxu0 %v334
    %384 = vmatpush.msra.mxu0 %v331
    %385 = vmatpush.msra.mxu0 %v328
    %386 = vmatpush.msra.mxu0 %v325
    %387 = vmatpush.msra.mxu0 %v322
    %388 = vmatpush.msra.mxu0 %v319
    %389 = vmatmul.f32.gmra.mxu0 %v365
    %v390 = vpop.f32.mrf.mxu0
    %v391 = vadd.f32 0.0, %v390
    %392 = vmatmul.f32.gmra.mxu0 %v368
    %v393 = vpop.f32.mrf.mxu0
    %v394 = vadd.f32 0.0, %v393
    %395 = vmatmul.f32.gmra.mxu0 %v371
    %v396 = vpop.f32.mrf.mxu0
    %v397 = vadd.f32 0.0, %v396
    %398 = vdwg.mxu0
    %399 = vmatpush.msra.mxu0 0.0
    %400 = vmatpush.msra.mxu0 %v362
    %401 = vmatpush.msra.mxu0 %v359
    %402 = vmatpush.msra.mxu0 %v356
    %403 = vmatpush.msra.mxu0 %v353
    %404 = vmatpush.msra.mxu0 %v350
    %405 = vmatpush.msra.mxu0 %v347
    %406 = vmatpush.msra.mxu0 %v344
    %407 = vmatpush.msra.mxu0 %v341
    %408 = vmatpush.msra.mxu0 %v338
    %409 = vmatpush.msra.mxu0 %v335
    %410 = vmatpush.msra.mxu0 %v332
    %411 = vmatpush.msra.mxu0 %v329
    %412 = vmatpush.msra.mxu0 %v326
    %413 = vmatpush.msra.mxu0 %v323
    %414 = vmatpush.msra.mxu0 %v320
    %415 = vmatmul.f32.gmra.mxu0 %v365
    %v416 = vpop.f32.mrf.mxu0
    %v417 = vadd.f32 0.0, %v416
    %418 = vmatmul.f32.gmra.mxu0 %v368
    %v419 = vpop.f32.mrf.mxu0
    %v420 = vadd.f32 0.0, %v419
    %421 = vmatmul.f32.gmra.mxu0 %v371
    %v422 = vpop.f32.mrf.mxu0
    %v423 = vadd.f32 0.0, %v422
    %424 = vdwg.mxu0
    %425 = vmatpush.msra.mxu0 0.0
    %426 = vmatpush.msra.mxu0 %v363
    %427 = vmatpush.msra.mxu0 %v360
    %428 = vmatpush.msra.mxu0 %v357
    %429 = vmatpush.msra.mxu0 %v354
    %430 = vmatpush.msra.mxu0 %v351
    %431 = vmatpush.msra.mxu0 %v348
    %432 = vmatpush.msra.mxu0 %v345
    %433 = vmatpush.msra.mxu0 %v342
    %434 = vmatpush.msra.mxu0 %v339
    %435 = vmatpush.msra.mxu0 %v336
    %436 = vmatpush.msra.mxu0 %v333
    %437 = vmatpush.msra.mxu0 %v330
    %438 = vmatpush.msra.mxu0 %v327
    %439 = vmatpush.msra.mxu0 %v324
    %440 = vmatpush.msra.mxu0 %v321
    %441 = vmatmul.f32.gmra.mxu0 %v365
    %v442 = vpop.f32.mrf.mxu0
    %v443 = vadd.f32 0.0, %v442
    %444 = vmatmul.f32.gmra.mxu0 %v368
    %v445 = vpop.f32.mrf.mxu0
    %v446 = vadd.f32 0.0, %v445
    %447 = vmatmul.f32.gmra.mxu0 %v371
    %v448 = vpop.f32.mrf.mxu0
    %v449 = vadd.f32 0.0, %v448
    %450 = vdwg.mxu0
    %v451 = vadd.f32 %v255, %v391
    %v452 = vadd.f32 %v281, %v417
    %v453 = vadd.f32 %v307, %v443
    %v454 = vadd.f32 %v258, %v394
    %v455 = vadd.f32 %v284, %v420
    %v456 = vadd.f32 %v310, %v446
    %v457 = vadd.f32 %v261, %v397
    %v458 = vadd.f32 %v287, %v423
    %v459 = vadd.f32 %v313, %v449
    %v460 = vld [vmem:[%s90 + $0x1] sm:$0xff]
    %v461 = vld [vmem:[%s90 + $0x9] sm:$0xff]
    %v462 = vld [vmem:[%s90 + $0x11] sm:$0x3]
    %s463 = scalar_lea.vmem %s1, 1080
    %v464 = vld [vmem:[%s463] sm:$0xff]
    %v465 = vld [vmem:[%s463 + $0x8] sm:$0xff]
    %v466 = vld [vmem:[%s463 + $0x10] sm:$0xff]
    %v467 = vld [vmem:[%s463 + $0x18] sm:$0xff]
    %v468 = vld [vmem:[%s463 + $0x20] sm:$0xff]
    %v469 = vld [vmem:[%s463 + $0x28] sm:$0xff]
    %v470 = vld [vmem:[%s463 + $0x30] sm:$0xff]
    %v471 = vld [vmem:[%s463 + $0x38] sm:$0xff]
    %v472 = vld [vmem:[%s463 + $0x40] sm:$0xff]
    %v473 = vld [vmem:[%s463 + $0x48] sm:$0xff]
    %v474 = vld [vmem:[%s463 + $0x50] sm:$0xff]
    %v475 = vld [vmem:[%s463 + $0x58] sm:$0xff]
    %v476 = vld [vmem:[%s463 + $0x60] sm:$0xff]
    %v477 = vld [vmem:[%s463 + $0x68] sm:$0xff]
    %v478 = vld [vmem:[%s463 + $0x70] sm:$0xff]
    %v479 = vld [vmem:[%s463 + $0x78] sm:$0xff]
    %v480 = vld [vmem:[%s463 + $0x80] sm:$0xff]
    %v481 = vld [vmem:[%s463 + $0x88] sm:$0xff]
    %v482 = vld [vmem:[%s463 + $0x90] sm:$0xff]
    %v483 = vld [vmem:[%s463 + $0x98] sm:$0xff]
    %v484 = vld [vmem:[%s463 + $0xa0] sm:$0xff]
    %v485 = vld [vmem:[%s463 + $0xa8] sm:$0xff]
    %v486 = vld [vmem:[%s463 + $0xb0] sm:$0xff]
    %v487 = vld [vmem:[%s463 + $0xb8] sm:$0xff]
    %v488 = vld [vmem:[%s463 + $0xc0] sm:$0xff]
    %v489 = vld [vmem:[%s463 + $0xc8] sm:$0xff]
    %v490 = vld [vmem:[%s463 + $0xd0] sm:$0xff]
    %v491 = vld [vmem:[%s463 + $0xd8] sm:$0xff]
    %v492 = vld [vmem:[%s463 + $0xe0] sm:$0xff]
    %v493 = vld [vmem:[%s463 + $0xe8] sm:$0xff]
    %v494 = vld [vmem:[%s463 + $0xf0] sm:$0xff]
    %v495 = vld [vmem:[%s463 + $0xf8] sm:$0xff]
    %v496 = vld [vmem:[%s463 + $0x100] sm:$0xff]
    %v497 = vld [vmem:[%s463 + $0x108] sm:$0xff]
    %v498 = vld [vmem:[%s463 + $0x110] sm:$0xff]
    %v499 = vld [vmem:[%s463 + $0x118] sm:$0xff]
    %v500 = vld [vmem:[%s463 + $0x120] sm:$0xff]
    %v501 = vld [vmem:[%s463 + $0x128] sm:$0xff]
    %v502 = vld [vmem:[%s463 + $0x130] sm:$0xff]
    %v503 = vld [vmem:[%s463 + $0x138] sm:$0xff]
    %v504 = vld [vmem:[%s463 + $0x140] sm:$0xff]
    %v505 = vld [vmem:[%s463 + $0x148] sm:$0xff]
    %v506 = vld [vmem:[%s463 + $0x150] sm:$0xff]
    %v507 = vld [vmem:[%s463 + $0x158] sm:$0xff]
    %v508 = vld [vmem:[%s463 + $0x160] sm:$0xff]
    %v510 = vsel %vm140, %v460, 0
    %v513 = vsel %vm140, %v461, 0
    %v516 = vsel %vm140, %v462, 0
    %518 = vmatpush.msra.mxu0 0.0
    %519 = vmatpush.msra.mxu0 %v506
    %520 = vmatpush.msra.mxu0 %v503
    %521 = vmatpush.msra.mxu0 %v500
    %522 = vmatpush.msra.mxu0 %v497
    %523 = vmatpush.msra.mxu0 %v494
    %524 = vmatpush.msra.mxu0 %v491
    %525 = vmatpush.msra.mxu0 %v488
    %526 = vmatpush.msra.mxu0 %v485
    %527 = vmatpush.msra.mxu0 %v482
    %528 = vmatpush.msra.mxu0 %v479
    %529 = vmatpush.msra.mxu0 %v476
    %530 = vmatpush.msra.mxu0 %v473
    %531 = vmatpush.msra.mxu0 %v470
    %532 = vmatpush.msra.mxu0 %v467
    %533 = vmatpush.msra.mxu0 %v464
    %534 = vmatmul.f32.gmra.mxu0 %v510
    %v535 = vpop.f32.mrf.mxu0
    %v536 = vadd.f32 0.0, %v535
    %537 = vmatmul.f32.gmra.mxu0 %v513
    %v538 = vpop.f32.mrf.mxu0
    %v539 = vadd.f32 0.0, %v538
    %540 = vmatmul.f32.gmra.mxu0 %v516
    %v541 = vpop.f32.mrf.mxu0
    %v542 = vadd.f32 0.0, %v541
    %543 = vdwg.mxu0
    %544 = vmatpush.msra.mxu0 0.0
    %545 = vmatpush.msra.mxu0 %v507
    %546 = vmatpush.msra.mxu0 %v504
    %547 = vmatpush.msra.mxu0 %v501
    %548 = vmatpush.msra.mxu0 %v498
    %549 = vmatpush.msra.mxu0 %v495
    %550 = vmatpush.msra.mxu0 %v492
    %551 = vmatpush.msra.mxu0 %v489
    %552 = vmatpush.msra.mxu0 %v486
    %553 = vmatpush.msra.mxu0 %v483
    %554 = vmatpush.msra.mxu0 %v480
    %555 = vmatpush.msra.mxu0 %v477
    %556 = vmatpush.msra.mxu0 %v474
    %557 = vmatpush.msra.mxu0 %v471
    %558 = vmatpush.msra.mxu0 %v468
    %559 = vmatpush.msra.mxu0 %v465
    %560 = vmatmul.f32.gmra.mxu0 %v510
    %v561 = vpop.f32.mrf.mxu0
    %v562 = vadd.f32 0.0, %v561
    %563 = vmatmul.f32.gmra.mxu0 %v513
    %v564 = vpop.f32.mrf.mxu0
    %v565 = vadd.f32 0.0, %v564
    %566 = vmatmul.f32.gmra.mxu0 %v516
    %v567 = vpop.f32.mrf.mxu0
    %v568 = vadd.f32 0.0, %v567
    %569 = vdwg.mxu0
    %570 = vmatpush.msra.mxu0 0.0
    %571 = vmatpush.msra.mxu0 %v508
    %572 = vmatpush.msra.mxu0 %v505
    %573 = vmatpush.msra.mxu0 %v502
    %574 = vmatpush.msra.mxu0 %v499
    %575 = vmatpush.msra.mxu0 %v496
    %576 = vmatpush.msra.mxu0 %v493
    %577 = vmatpush.msra.mxu0 %v490
    %578 = vmatpush.msra.mxu0 %v487
    %579 = vmatpush.msra.mxu0 %v484
    %580 = vmatpush.msra.mxu0 %v481
    %581 = vmatpush.msra.mxu0 %v478
    %582 = vmatpush.msra.mxu0 %v475
    %583 = vmatpush.msra.mxu0 %v472
    %584 = vmatpush.msra.mxu0 %v469
    %585 = vmatpush.msra.mxu0 %v466
    %586 = vmatmul.f32.gmra.mxu0 %v510
    %v587 = vpop.f32.mrf.mxu0
    %v588 = vadd.f32 0.0, %v587
    %589 = vmatmul.f32.gmra.mxu0 %v513
    %v590 = vpop.f32.mrf.mxu0
    %v591 = vadd.f32 0.0, %v590
    %592 = vmatmul.f32.gmra.mxu0 %v516
    %v593 = vpop.f32.mrf.mxu0
    %v594 = vadd.f32 0.0, %v593
    %595 = vdwg.mxu0
    %v596 = vadd.f32 %v451, %v536
    %v597 = vadd.f32 %v452, %v562
    %v598 = vadd.f32 %v453, %v588
    %v599 = vadd.f32 %v454, %v539
    %v600 = vadd.f32 %v455, %v565
    %v601 = vadd.f32 %v456, %v591
    %v602 = vadd.f32 %v457, %v542
    %v603 = vadd.f32 %v458, %v568
    %v604 = vadd.f32 %v459, %v594
    %v605 = vld [vmem:[%s0 + $0x2] sm:$0xff]
    %v606 = vld [vmem:[%s0 + $0xa] sm:$0xff]
    %v607 = vld [vmem:[%s0 + $0x12] sm:$0x3]
    %s608 = scalar_lea.vmem %s1, 1440
    %v609 = vld [vmem:[%s608] sm:$0xff]
    %v610 = vld [vmem:[%s608 + $0x8] sm:$0xff]
    %v611 = vld [vmem:[%s608 + $0x10] sm:$0xff]
    %v612 = vld [vmem:[%s608 + $0x18] sm:$0xff]
    %v613 = vld [vmem:[%s608 + $0x20] sm:$0xff]
    %v614 = vld [vmem:[%s608 + $0x28] sm:$0xff]
    %v615 = vld [vmem:[%s608 + $0x30] sm:$0xff]
    %v616 = vld [vmem:[%s608 + $0x38] sm:$0xff]
    %v617 = vld [vmem:[%s608 + $0x40] sm:$0xff]
    %v618 = vld [vmem:[%s608 + $0x48] sm:$0xff]
    %v619 = vld [vmem:[%s608 + $0x50] sm:$0xff]
    %v620 = vld [vmem:[%s608 + $0x58] sm:$0xff]
    %v621 = vld [vmem:[%s608 + $0x60] sm:$0xff]
    %v622 = vld [vmem:[%s608 + $0x68] sm:$0xff]
    %v623 = vld [vmem:[%s608 + $0x70] sm:$0xff]
    %v624 = vld [vmem:[%s608 + $0x78] sm:$0xff]
    %v625 = vld [vmem:[%s608 + $0x80] sm:$0xff]
    %v626 = vld [vmem:[%s608 + $0x88] sm:$0xff]
    %v627 = vld [vmem:[%s608 + $0x90] sm:$0xff]
    %v628 = vld [vmem:[%s608 + $0x98] sm:$0xff]
    %v629 = vld [vmem:[%s608 + $0xa0] sm:$0xff]
    %v630 = vld [vmem:[%s608 + $0xa8] sm:$0xff]
    %v631 = vld [vmem:[%s608 + $0xb0] sm:$0xff]
    %v632 = vld [vmem:[%s608 + $0xb8] sm:$0xff]
    %v633 = vld [vmem:[%s608 + $0xc0] sm:$0xff]
    %v634 = vld [vmem:[%s608 + $0xc8] sm:$0xff]
    %v635 = vld [vmem:[%s608 + $0xd0] sm:$0xff]
    %v636 = vld [vmem:[%s608 + $0xd8] sm:$0xff]
    %v637 = vld [vmem:[%s608 + $0xe0] sm:$0xff]
    %v638 = vld [vmem:[%s608 + $0xe8] sm:$0xff]
    %v639 = vld [vmem:[%s608 + $0xf0] sm:$0xff]
    %v640 = vld [vmem:[%s608 + $0xf8] sm:$0xff]
    %v641 = vld [vmem:[%s608 + $0x100] sm:$0xff]
    %v642 = vld [vmem:[%s608 + $0x108] sm:$0xff]
    %v643 = vld [vmem:[%s608 + $0x110] sm:$0xff]
    %v644 = vld [vmem:[%s608 + $0x118] sm:$0xff]
    %v645 = vld [vmem:[%s608 + $0x120] sm:$0xff]
    %v646 = vld [vmem:[%s608 + $0x128] sm:$0xff]
    %v647 = vld [vmem:[%s608 + $0x130] sm:$0xff]
    %v648 = vld [vmem:[%s608 + $0x138] sm:$0xff]
    %v649 = vld [vmem:[%s608 + $0x140] sm:$0xff]
    %v650 = vld [vmem:[%s608 + $0x148] sm:$0xff]
    %v651 = vld [vmem:[%s608 + $0x150] sm:$0xff]
    %v652 = vld [vmem:[%s608 + $0x158] sm:$0xff]
    %v653 = vld [vmem:[%s608 + $0x160] sm:$0xff]
    %v655 = vsel %vm140, %v605, 0
    %v658 = vsel %vm140, %v606, 0
    %v661 = vsel %vm140, %v607, 0
    %663 = vmatpush.msra.mxu0 0.0
    %664 = vmatpush.msra.mxu0 %v651
    %665 = vmatpush.msra.mxu0 %v648
    %666 = vmatpush.msra.mxu0 %v645
    %667 = vmatpush.msra.mxu0 %v642
    %668 = vmatpush.msra.mxu0 %v639
    %669 = vmatpush.msra.mxu0 %v636
    %670 = vmatpush.msra.mxu0 %v633
    %671 = vmatpush.msra.mxu0 %v630
    %672 = vmatpush.msra.mxu0 %v627
    %673 = vmatpush.msra.mxu0 %v624
    %674 = vmatpush.msra.mxu0 %v621
    %675 = vmatpush.msra.mxu0 %v618
    %676 = vmatpush.msra.mxu0 %v615
    %677 = vmatpush.msra.mxu0 %v612
    %678 = vmatpush.msra.mxu0 %v609
    %679 = vmatmul.f32.gmra.mxu0 %v655
    %v680 = vpop.f32.mrf.mxu0
    %v681 = vadd.f32 0.0, %v680
    %682 = vmatmul.f32.gmra.mxu0 %v658
    %v683 = vpop.f32.mrf.mxu0
    %v684 = vadd.f32 0.0, %v683
    %685 = vmatmul.f32.gmra.mxu0 %v661
    %v686 = vpop.f32.mrf.mxu0
    %v687 = vadd.f32 0.0, %v686
    %688 = vdwg.mxu0
    %689 = vmatpush.msra.mxu0 0.0
    %690 = vmatpush.msra.mxu0 %v652
    %691 = vmatpush.msra.mxu0 %v649
    %692 = vmatpush.msra.mxu0 %v646
    %693 = vmatpush.msra.mxu0 %v643
    %694 = vmatpush.msra.mxu0 %v640
    %695 = vmatpush.msra.mxu0 %v637
    %696 = vmatpush.msra.mxu0 %v634
    %697 = vmatpush.msra.mxu0 %v631
    %698 = vmatpush.msra.mxu0 %v628
    %699 = vmatpush.msra.mxu0 %v625
    %700 = vmatpush.msra.mxu0 %v622
    %701 = vmatpush.msra.mxu0 %v619
    %702 = vmatpush.msra.mxu0 %v616
    %703 = vmatpush.msra.mxu0 %v613
    %704 = vmatpush.msra.mxu0 %v610
    %705 = vmatmul.f32.gmra.mxu0 %v655
    %v706 = vpop.f32.mrf.mxu0
    %v707 = vadd.f32 0.0, %v706
    %708 = vmatmul.f32.gmra.mxu0 %v658
    %v709 = vpop.f32.mrf.mxu0
    %v710 = vadd.f32 0.0, %v709
    %711 = vmatmul.f32.gmra.mxu0 %v661
    %v712 = vpop.f32.mrf.mxu0
    %v713 = vadd.f32 0.0, %v712
    %714 = vdwg.mxu0
    %715 = vmatpush.msra.mxu0 0.0
    %716 = vmatpush.msra.mxu0 %v653
    %717 = vmatpush.msra.mxu0 %v650
    %718 = vmatpush.msra.mxu0 %v647
    %719 = vmatpush.msra.mxu0 %v644
    %720 = vmatpush.msra.mxu0 %v641
    %721 = vmatpush.msra.mxu0 %v638
    %722 = vmatpush.msra.mxu0 %v635
    %723 = vmatpush.msra.mxu0 %v632
    %724 = vmatpush.msra.mxu0 %v629
    %725 = vmatpush.msra.mxu0 %v626
    %726 = vmatpush.msra.mxu0 %v623
    %727 = vmatpush.msra.mxu0 %v620
    %728 = vmatpush.msra.mxu0 %v617
    %729 = vmatpush.msra.mxu0 %v614
    %730 = vmatpush.msra.mxu0 %v611
    %731 = vmatmul.f32.gmra.mxu0 %v655
    %v732 = vpop.f32.mrf.mxu0
    %v733 = vadd.f32 0.0, %v732
    %734 = vmatmul.f32.gmra.mxu0 %v658
    %v735 = vpop.f32.mrf.mxu0
    %v736 = vadd.f32 0.0, %v735
    %737 = vmatmul.f32.gmra.mxu0 %v661
    %v738 = vpop.f32.mrf.mxu0
    %v739 = vadd.f32 0.0, %v738
    %740 = vdwg.mxu0
    %v741 = vadd.f32 %v596, %v681
    %v742 = vadd.f32 %v597, %v707
    %v743 = vadd.f32 %v598, %v733
    %v744 = vadd.f32 %v599, %v684
    %v745 = vadd.f32 %v600, %v710
    %v746 = vadd.f32 %v601, %v736
    %v747 = vadd.f32 %v602, %v687
    %v748 = vadd.f32 %v603, %v713
    %v749 = vadd.f32 %v604, %v739
    %v750 = vld [vmem:[%s2] sm:$0x7]
    %v752 = vperm.slane %v750, 0
    %v753 = vperm.slane %v750, 1
    %v754 = vperm.slane %v750, 2
    %v758 = vadd.f32 %v741, %v752
    %v759 = vadd.f32 %v742, %v753
    %v760 = vadd.f32 %v743, %v754
    %v761 = vadd.f32 %v744, %v752
    %v762 = vadd.f32 %v745, %v753
    %v763 = vadd.f32 %v746, %v754
    %v764 = vadd.f32 %v747, %v752
    %v765 = vadd.f32 %v748, %v753
    %v766 = vadd.f32 %v749, %v754
    %v767 = vmax.f32 %v758, 0.0
    %v768 = vmax.f32 %v759, 0.0
    %v769 = vmax.f32 %v760, 0.0
    %v770 = vmax.f32 %v761, 0.0
    %v771 = vmax.f32 %v762, 0.0
    %v772 = vmax.f32 %v763, 0.0
    %v773 = vmax.f32 %v764, 0.0
    %v774 = vmax.f32 %v765, 0.0
    %v775 = vmax.f32 %v766, 0.0
    %776 = vst [vmem:[#allocation2] sm:$0xff] %v767
    %777 = vst [vmem:[#allocation2 + $0x8] sm:$0xff] %v768
    %vm778 = vcmask 261120
    %779 = vst.msk [vmem:[#allocation2 + $0x10] sm:$0xff] %vm778, %v769
    %780 = vst [vmem:[#allocation2 + $0x18] sm:$0xff] %v770
    %781 = vst [vmem:[#allocation2 + $0x20] sm:$0xff] %v771
    %782 = vst.msk [vmem:[#allocation2 + $0x28] sm:$0xff] %vm778, %v772
    %783 = vst [vmem:[#allocation2 + $0x30] sm:$0x3] %v773
    %784 = vst [vmem:[#allocation2 + $0x38] sm:$0x3] %v774
    %vm785 = vcmask 254976
    %786 = vst.msk [vmem:[#allocation2 + $0x40] sm:$0x3] %vm785, %v775
    %s787 = scalar_lea.vmem %s0, 24
    %v788 = vld [vmem:[%s787] sm:$0xff]
    %v789 = vld [vmem:[%s787 + $0x8] sm:$0xff]
    %v790 = vld [vmem:[%s787 + $0x10] sm:$0x3]
    %v791 = vld [vmem:[%s1] sm:$0xff]
    %v792 = vld [vmem:[%s1 + $0x8] sm:$0xff]
    %v793 = vld [vmem:[%s1 + $0x10] sm:$0xff]
    %v794 = vld [vmem:[%s1 + $0x18] sm:$0xff]
    %v795 = vld [vmem:[%s1 + $0x20] sm:$0xff]
    %v796 = vld [vmem:[%s1 + $0x28] sm:$0xff]
    %v797 = vld [vmem:[%s1 + $0x30] sm:$0xff]
    %v798 = vld [vmem:[%s1 + $0x38] sm:$0xff]
    %v799 = vld [vmem:[%s1 + $0x40] sm:$0xff]
    %v800 = vld [vmem:[%s1 + $0x48] sm:$0xff]
    %v801 = vld [vmem:[%s1 + $0x50] sm:$0xff]
    %v802 = vld [vmem:[%s1 + $0x58] sm:$0xff]
    %v803 = vld [vmem:[%s1 + $0x60] sm:$0xff]
    %v804 = vld [vmem:[%s1 + $0x68] sm:$0xff]
    %v805 = vld [vmem:[%s1 + $0x70] sm:$0xff]
    %v806 = vld [vmem:[%s1 + $0x78] sm:$0xff]
    %v807 = vld [vmem:[%s1 + $0x80] sm:$0xff]
    %v808 = vld [vmem:[%s1 + $0x88] sm:$0xff]
    %v809 = vld [vmem:[%s1 + $0x90] sm:$0xff]
    %v810 = vld [vmem:[%s1 + $0x98] sm:$0xff]
    %v811 = vld [vmem:[%s1 + $0xa0] sm:$0xff]
    %v812 = vld [vmem:[%s1 + $0xa8] sm:$0xff]
    %v813 = vld [vmem:[%s1 + $0xb0] sm:$0xff]
    %v814 = vld [vmem:[%s1 + $0xb8] sm:$0xff]
    %v815 = vld [vmem:[%s1 + $0xc0] sm:$0xff]
    %v816 = vld [vmem:[%s1 + $0xc8] sm:$0xff]
    %v817 = vld [vmem:[%s1 + $0xd0] sm:$0xff]
    %v818 = vld [vmem:[%s1 + $0xd8] sm:$0xff]
    %v819 = vld [vmem:[%s1 + $0xe0] sm:$0xff]
    %v820 = vld [vmem:[%s1 + $0xe8] sm:$0xff]
    %v821 = vld [vmem:[%s1 + $0xf0] sm:$0xff]
    %v822 = vld [vmem:[%s1 + $0xf8] sm:$0xff]
    %v823 = vld [vmem:[%s1 + $0x100] sm:$0xff]
    %v824 = vld [vmem:[%s1 + $0x108] sm:$0xff]
    %v825 = vld [vmem:[%s1 + $0x110] sm:$0xff]
    %v826 = vld [vmem:[%s1 + $0x118] sm:$0xff]
    %v827 = vld [vmem:[%s1 + $0x120] sm:$0xff]
    %v828 = vld [vmem:[%s1 + $0x128] sm:$0xff]
    %v829 = vld [vmem:[%s1 + $0x130] sm:$0xff]
    %v830 = vld [vmem:[%s1 + $0x138] sm:$0xff]
    %v831 = vld [vmem:[%s1 + $0x140] sm:$0xff]
    %v832 = vld [vmem:[%s1 + $0x148] sm:$0xff]
    %v833 = vld [vmem:[%s1 + $0x150] sm:$0xff]
    %v834 = vld [vmem:[%s1 + $0x158] sm:$0xff]
    %v835 = vld [vmem:[%s1 + $0x160] sm:$0xff]
    %s836 = scalar_lea.vmem %s0, 72
    %v837 = vld [vmem:[%s836] sm:$0xff]
    %v838 = vld [vmem:[%s836 + $0x8] sm:$0xff]
    %v839 = vld [vmem:[%s836 + $0x10] sm:$0x3]
    %v840 = vld [vmem:[%s94] sm:$0xff]
    %v841 = vld [vmem:[%s94 + $0x8] sm:$0xff]
    %v842 = vld [vmem:[%s94 + $0x10] sm:$0xff]
    %v843 = vld [vmem:[%s94 + $0x18] sm:$0xff]
    %v844 = vld [vmem:[%s94 + $0x20] sm:$0xff]
    %v845 = vld [vmem:[%s94 + $0x28] sm:$0xff]
    %v846 = vld [vmem:[%s94 + $0x30] sm:$0xff]
    %v847 = vld [vmem:[%s94 + $0x38] sm:$0xff]
    %v848 = vld [vmem:[%s94 + $0x40] sm:$0xff]
    %v849 = vld [vmem:[%s94 + $0x48] sm:$0xff]
    %v850 = vld [vmem:[%s94 + $0x50] sm:$0xff]
    %v851 = vld [vmem:[%s94 + $0x58] sm:$0xff]
    %v852 = vld [vmem:[%s94 + $0x60] sm:$0xff]
    %v853 = vld [vmem:[%s94 + $0x68] sm:$0xff]
    %v854 = vld [vmem:[%s94 + $0x70] sm:$0xff]
    %v855 = vld [vmem:[%s94 + $0x78] sm:$0xff]
    %v856 = vld [vmem:[%s94 + $0x80] sm:$0xff]
    %v857 = vld [vmem:[%s94 + $0x88] sm:$0xff]
    %v858 = vld [vmem:[%s94 + $0x90] sm:$0xff]
    %v859 = vld [vmem:[%s94 + $0x98] sm:$0xff]
    %v860 = vld [vmem:[%s94 + $0xa0] sm:$0xff]
    %v861 = vld [vmem:[%s94 + $0xa8] sm:$0xff]
    %v862 = vld [vmem:[%s94 + $0xb0] sm:$0xff]
    %v863 = vld [vmem:[%s94 + $0xb8] sm:$0xff]
    %v864 = vld [vmem:[%s94 + $0xc0] sm:$0xff]
    %v865 = vld [vmem:[%s94 + $0xc8] sm:$0xff]
    %v866 = vld [vmem:[%s94 + $0xd0] sm:$0xff]
    %v867 = vld [vmem:[%s94 + $0xd8] sm:$0xff]
    %v868 = vld [vmem:[%s94 + $0xe0] sm:$0xff]
    %v869 = vld [vmem:[%s94 + $0xe8] sm:$0xff]
    %v870 = vld [vmem:[%s94 + $0xf0] sm:$0xff]
    %v871 = vld [vmem:[%s94 + $0xf8] sm:$0xff]
    %v872 = vld [vmem:[%s94 + $0x100] sm:$0xff]
    %v873 = vld [vmem:[%s94 + $0x108] sm:$0xff]
    %v874 = vld [vmem:[%s94 + $0x110] sm:$0xff]
    %v875 = vld [vmem:[%s94 + $0x118] sm:$0xff]
    %v876 = vld [vmem:[%s94 + $0x120] sm:$0xff]
    %v877 = vld [vmem:[%s94 + $0x128] sm:$0xff]
    %v878 = vld [vmem:[%s94 + $0x130] sm:$0xff]
    %v879 = vld [vmem:[%s94 + $0x138] sm:$0xff]
    %v880 = vld [vmem:[%s94 + $0x140] sm:$0xff]
    %v881 = vld [vmem:[%s94 + $0x148] sm:$0xff]
    %v882 = vld [vmem:[%s94 + $0x150] sm:$0xff]
    %v883 = vld [vmem:[%s94 + $0x158] sm:$0xff]
    %v884 = vld [vmem:[%s94 + $0x160] sm:$0xff]
    %v886 = vsel %vm140, %v837, 0
    %v889 = vsel %vm140, %v838, 0
    %v892 = vsel %vm140, %v839, 0
    %894 = vmatpush.msra.mxu0 0.0
    %895 = vmatpush.msra.mxu0 %v882
    %896 = vmatpush.msra.mxu0 %v879
    %897 = vmatpush.msra.mxu0 %v876
    %898 = vmatpush.msra.mxu0 %v873
    %899 = vmatpush.msra.mxu0 %v870
    %900 = vmatpush.msra.mxu0 %v867
    %901 = vmatpush.msra.mxu0 %v864
    %902 = vmatpush.msra.mxu0 %v861
    %903 = vmatpush.msra.mxu0 %v858
    %904 = vmatpush.msra.mxu0 %v855
    %905 = vmatpush.msra.mxu0 %v852
    %906 = vmatpush.msra.mxu0 %v849
    %907 = vmatpush.msra.mxu0 %v846
    %908 = vmatpush.msra.mxu0 %v843
    %909 = vmatpush.msra.mxu0 %v840
    %910 = vmatmul.f32.gmra.mxu0 %v886
    %v911 = vpop.f32.mrf.mxu0
    %v912 = vadd.f32 0.0, %v911
    %913 = vmatmul.f32.gmra.mxu0 %v889
    %v914 = vpop.f32.mrf.mxu0
    %v915 = vadd.f32 0.0, %v914
    %916 = vmatmul.f32.gmra.mxu0 %v892
    %v917 = vpop.f32.mrf.mxu0
    %v918 = vadd.f32 0.0, %v917
    %919 = vdwg.mxu0
    %920 = vmatpush.msra.mxu0 0.0
    %921 = vmatpush.msra.mxu0 %v883
    %922 = vmatpush.msra.mxu0 %v880
    %923 = vmatpush.msra.mxu0 %v877
    %924 = vmatpush.msra.mxu0 %v874
    %925 = vmatpush.msra.mxu0 %v871
    %926 = vmatpush.msra.mxu0 %v868
    %927 = vmatpush.msra.mxu0 %v865
    %928 = vmatpush.msra.mxu0 %v862
    %929 = vmatpush.msra.mxu0 %v859
    %930 = vmatpush.msra.mxu0 %v856
    %931 = vmatpush.msra.mxu0 %v853
    %932 = vmatpush.msra.mxu0 %v850
    %933 = vmatpush.msra.mxu0 %v847
    %934 = vmatpush.msra.mxu0 %v844
    %935 = vmatpush.msra.mxu0 %v841
    %936 = vmatmul.f32.gmra.mxu0 %v886
    %v937 = vpop.f32.mrf.mxu0
    %v938 = vadd.f32 0.0, %v937
    %939 = vmatmul.f32.gmra.mxu0 %v889
    %v940 = vpop.f32.mrf.mxu0
    %v941 = vadd.f32 0.0, %v940
    %942 = vmatmul.f32.gmra.mxu0 %v892
    %v943 = vpop.f32.mrf.mxu0
    %v944 = vadd.f32 0.0, %v943
    %945 = vdwg.mxu0
    %946 = vmatpush.msra.mxu0 0.0
    %947 = vmatpush.msra.mxu0 %v884
    %948 = vmatpush.msra.mxu0 %v881
    %949 = vmatpush.msra.mxu0 %v878
    %950 = vmatpush.msra.mxu0 %v875
    %951 = vmatpush.msra.mxu0 %v872
    %952 = vmatpush.msra.mxu0 %v869
    %953 = vmatpush.msra.mxu0 %v866
    %954 = vmatpush.msra.mxu0 %v863
    %955 = vmatpush.msra.mxu0 %v860
    %956 = vmatpush.msra.mxu0 %v857
    %957 = vmatpush.msra.mxu0 %v854
    %958 = vmatpush.msra.mxu0 %v851
    %959 = vmatpush.msra.mxu0 %v848
    %960 = vmatpush.msra.mxu0 %v845
    %961 = vmatpush.msra.mxu0 %v842
    %962 = vmatmul.f32.gmra.mxu0 %v886
    %v963 = vpop.f32.mrf.mxu0
    %v964 = vadd.f32 0.0, %v963
    %965 = vmatmul.f32.gmra.mxu0 %v889
    %v966 = vpop.f32.mrf.mxu0
    %v967 = vadd.f32 0.0, %v966
    %968 = vmatmul.f32.gmra.mxu0 %v892
    %v969 = vpop.f32.mrf.mxu0
    %v970 = vadd.f32 0.0, %v969
    %971 = vdwg.mxu0
    %v973 = vsel %vm140, %v788, 0
    %v976 = vsel %vm140, %v789, 0
    %v979 = vsel %vm140, %v790, 0
    %981 = vmatpush.msra.mxu0 0.0
    %982 = vmatpush.msra.mxu0 %v833
    %983 = vmatpush.msra.mxu0 %v830
    %984 = vmatpush.msra.mxu0 %v827
    %985 = vmatpush.msra.mxu0 %v824
    %986 = vmatpush.msra.mxu0 %v821
    %987 = vmatpush.msra.mxu0 %v818
    %988 = vmatpush.msra.mxu0 %v815
    %989 = vmatpush.msra.mxu0 %v812
    %990 = vmatpush.msra.mxu0 %v809
    %991 = vmatpush.msra.mxu0 %v806
    %992 = vmatpush.msra.mxu0 %v803
    %993 = vmatpush.msra.mxu0 %v800
    %994 = vmatpush.msra.mxu0 %v797
    %995 = vmatpush.msra.mxu0 %v794
    %996 = vmatpush.msra.mxu0 %v791
    %997 = vmatmul.f32.gmra.mxu0 %v973
    %v998 = vpop.f32.mrf.mxu0
    %v999 = vadd.f32 %v912, %v998
    %1000 = vmatmul.f32.gmra.mxu0 %v976
    %v1001 = vpop.f32.mrf.mxu0
    %v1002 = vadd.f32 %v915, %v1001
    %1003 = vmatmul.f32.gmra.mxu0 %v979
    %v1004 = vpop.f32.mrf.mxu0
    %v1005 = vadd.f32 %v918, %v1004
    %1006 = vdwg.mxu0
    %1007 = vmatpush.msra.mxu0 0.0
    %1008 = vmatpush.msra.mxu0 %v834
    %1009 = vmatpush.msra.mxu0 %v831
    %1010 = vmatpush.msra.mxu0 %v828
    %1011 = vmatpush.msra.mxu0 %v825
    %1012 = vmatpush.msra.mxu0 %v822
    %1013 = vmatpush.msra.mxu0 %v819
    %1014 = vmatpush.msra.mxu0 %v816
    %1015 = vmatpush.msra.mxu0 %v813
    %1016 = vmatpush.msra.mxu0 %v810
    %1017 = vmatpush.msra.mxu0 %v807
    %1018 = vmatpush.msra.mxu0 %v804
    %1019 = vmatpush.msra.mxu0 %v801
    %1020 = vmatpush.msra.mxu0 %v798
    %1021 = vmatpush.msra.mxu0 %v795
    %1022 = vmatpush.msra.mxu0 %v792
    %1023 = vmatmul.f32.gmra.mxu0 %v973
    %v1024 = vpop.f32.mrf.mxu0
    %v1025 = vadd.f32 %v938, %v1024
    %1026 = vmatmul.f32.gmra.mxu0 %v976
    %v1027 = vpop.f32.mrf.mxu0
    %v1028 = vadd.f32 %v941, %v1027
    %1029 = vmatmul.f32.gmra.mxu0 %v979
    %v1030 = vpop.f32.mrf.mxu0
    %v1031 = vadd.f32 %v944, %v1030
    %1032 = vdwg.mxu0
    %1033 = vmatpush.msra.mxu0 0.0
    %1034 = vmatpush.msra.mxu0 %v835
    %1035 = vmatpush.msra.mxu0 %v832
    %1036 = vmatpush.msra.mxu0 %v829
    %1037 = vmatpush.msra.mxu0 %v826
    %1038 = vmatpush.msra.mxu0 %v823
    %1039 = vmatpush.msra.mxu0 %v820
    %1040 = vmatpush.msra.mxu0 %v817
    %1041 = vmatpush.msra.mxu0 %v814
    %1042 = vmatpush.msra.mxu0 %v811
    %1043 = vmatpush.msra.mxu0 %v808
    %1044 = vmatpush.msra.mxu0 %v805
    %1045 = vmatpush.msra.mxu0 %v802
    %1046 = vmatpush.msra.mxu0 %v799
    %1047 = vmatpush.msra.mxu0 %v796
    %1048 = vmatpush.msra.mxu0 %v793
    %1049 = vmatmul.f32.gmra.mxu0 %v973
    %v1050 = vpop.f32.mrf.mxu0
    %v1051 = vadd.f32 %v964, %v1050
    %1052 = vmatmul.f32.gmra.mxu0 %v976
    %v1053 = vpop.f32.mrf.mxu0
    %v1054 = vadd.f32 %v967, %v1053
    %1055 = vmatmul.f32.gmra.mxu0 %v979
    %v1056 = vpop.f32.mrf.mxu0
    %v1057 = vadd.f32 %v970, %v1056
    %1058 = vdwg.mxu0
    %v1059 = vld [vmem:[%s787 + $0x1] sm:$0xff]
    %v1060 = vld [vmem:[%s787 + $0x9] sm:$0xff]
    %v1061 = vld [vmem:[%s787 + $0x11] sm:$0x3]
    %v1062 = vld [vmem:[%s318] sm:$0xff]
    %v1063 = vld [vmem:[%s318 + $0x8] sm:$0xff]
    %v1064 = vld [vmem:[%s318 + $0x10] sm:$0xff]
    %v1065 = vld [vmem:[%s318 + $0x18] sm:$0xff]
    %v1066 = vld [vmem:[%s318 + $0x20] sm:$0xff]
    %v1067 = vld [vmem:[%s318 + $0x28] sm:$0xff]
    %v1068 = vld [vmem:[%s318 + $0x30] sm:$0xff]
    %v1069 = vld [vmem:[%s318 + $0x38] sm:$0xff]
    %v1070 = vld [vmem:[%s318 + $0x40] sm:$0xff]
    %v1071 = vld [vmem:[%s318 + $0x48] sm:$0xff]
    %v1072 = vld [vmem:[%s318 + $0x50] sm:$0xff]
    %v1073 = vld [vmem:[%s318 + $0x58] sm:$0xff]
    %v1074 = vld [vmem:[%s318 + $0x60] sm:$0xff]
    %v1075 = vld [vmem:[%s318 + $0x68] sm:$0xff]
    %v1076 = vld [vmem:[%s318 + $0x70] sm:$0xff]
    %v1077 = vld [vmem:[%s318 + $0x78] sm:$0xff]
    %v1078 = vld [vmem:[%s318 + $0x80] sm:$0xff]
    %v1079 = vld [vmem:[%s318 + $0x88] sm:$0xff]
    %v1080 = vld [vmem:[%s318 + $0x90] sm:$0xff]
    %v1081 = vld [vmem:[%s318 + $0x98] sm:$0xff]
    %v1082 = vld [vmem:[%s318 + $0xa0] sm:$0xff]
    %v1083 = vld [vmem:[%s318 + $0xa8] sm:$0xff]
    %v1084 = vld [vmem:[%s318 + $0xb0] sm:$0xff]
    %v1085 = vld [vmem:[%s318 + $0xb8] sm:$0xff]
    %v1086 = vld [vmem:[%s318 + $0xc0] sm:$0xff]
    %v1087 = vld [vmem:[%s318 + $0xc8] sm:$0xff]
    %v1088 = vld [vmem:[%s318 + $0xd0] sm:$0xff]
    %v1089 = vld [vmem:[%s318 + $0xd8] sm:$0xff]
    %v1090 = vld [vmem:[%s318 + $0xe0] sm:$0xff]
    %v1091 = vld [vmem:[%s318 + $0xe8] sm:$0xff]
    %v1092 = vld [vmem:[%s318 + $0xf0] sm:$0xff]
    %v1093 = vld [vmem:[%s318 + $0xf8] sm:$0xff]
    %v1094 = vld [vmem:[%s318 + $0x100] sm:$0xff]
    %v1095 = vld [vmem:[%s318 + $0x108] sm:$0xff]
    %v1096 = vld [vmem:[%s318 + $0x110] sm:$0xff]
    %v1097 = vld [vmem:[%s318 + $0x118] sm:$0xff]
    %v1098 = vld [vmem:[%s318 + $0x120] sm:$0xff]
    %v1099 = vld [vmem:[%s318 + $0x128] sm:$0xff]
    %v1100 = vld [vmem:[%s318 + $0x130] sm:$0xff]
    %v1101 = vld [vmem:[%s318 + $0x138] sm:$0xff]
    %v1102 = vld [vmem:[%s318 + $0x140] sm:$0xff]
    %v1103 = vld [vmem:[%s318 + $0x148] sm:$0xff]
    %v1104 = vld [vmem:[%s318 + $0x150] sm:$0xff]
    %v1105 = vld [vmem:[%s318 + $0x158] sm:$0xff]
    %v1106 = vld [vmem:[%s318 + $0x160] sm:$0xff]
    %v1108 = vsel %vm140, %v1059, 0
    %v1111 = vsel %vm140, %v1060, 0
    %v1114 = vsel %vm140, %v1061, 0
    %1116 = vmatpush.msra.mxu0 0.0
    %1117 = vmatpush.msra.mxu0 %v1104
    %1118 = vmatpush.msra.mxu0 %v1101
    %1119 = vmatpush.msra.mxu0 %v1098
    %1120 = vmatpush.msra.mxu0 %v1095
    %1121 = vmatpush.msra.mxu0 %v1092
    %1122 = vmatpush.msra.mxu0 %v1089
    %1123 = vmatpush.msra.mxu0 %v1086
    %1124 = vmatpush.msra.mxu0 %v1083
    %1125 = vmatpush.msra.mxu0 %v1080
    %1126 = vmatpush.msra.mxu0 %v1077
    %1127 = vmatpush.msra.mxu0 %v1074
    %1128 = vmatpush.msra.mxu0 %v1071
    %1129 = vmatpush.msra.mxu0 %v1068
    %1130 = vmatpush.msra.mxu0 %v1065
    %1131 = vmatpush.msra.mxu0 %v1062
    %1132 = vmatmul.f32.gmra.mxu0 %v1108
    %v1133 = vpop.f32.mrf.mxu0
    %v1134 = vadd.f32 0.0, %v1133
    %1135 = vmatmul.f32.gmra.mxu0 %v1111
    %v1136 = vpop.f32.mrf.mxu0
    %v1137 = vadd.f32 0.0, %v1136
    %1138 = vmatmul.f32.gmra.mxu0 %v1114
    %v1139 = vpop.f32.mrf.mxu0
    %v1140 = vadd.f32 0.0, %v1139
    %1141 = vdwg.mxu0
    %1142 = vmatpush.msra.mxu0 0.0
    %1143 = vmatpush.msra.mxu0 %v1105
    %1144 = vmatpush.msra.mxu0 %v1102
    %1145 = vmatpush.msra.mxu0 %v1099
    %1146 = vmatpush.msra.mxu0 %v1096
    %1147 = vmatpush.msra.mxu0 %v1093
    %1148 = vmatpush.msra.mxu0 %v1090
    %1149 = vmatpush.msra.mxu0 %v1087
    %1150 = vmatpush.msra.mxu0 %v1084
    %1151 = vmatpush.msra.mxu0 %v1081
    %1152 = vmatpush.msra.mxu0 %v1078
    %1153 = vmatpush.msra.mxu0 %v1075
    %1154 = vmatpush.msra.mxu0 %v1072
    %1155 = vmatpush.msra.mxu0 %v1069
    %1156 = vmatpush.msra.mxu0 %v1066
    %1157 = vmatpush.msra.mxu0 %v1063
    %1158 = vmatmul.f32.gmra.mxu0 %v1108
    %v1159 = vpop.f32.mrf.mxu0
    %v1160 = vadd.f32 0.0, %v1159
    %1161 = vmatmul.f32.gmra.mxu0 %v1111
    %v1162 = vpop.f32.mrf.mxu0
    %v1163 = vadd.f32 0.0, %v1162
    %1164 = vmatmul.f32.gmra.mxu0 %v1114
    %v1165 = vpop.f32.mrf.mxu0
    %v1166 = vadd.f32 0.0, %v1165
    %1167 = vdwg.mxu0
    %1168 = vmatpush.msra.mxu0 0.0
    %1169 = vmatpush.msra.mxu0 %v1106
    %1170 = vmatpush.msra.mxu0 %v1103
    %1171 = vmatpush.msra.mxu0 %v1100
    %1172 = vmatpush.msra.mxu0 %v1097
    %1173 = vmatpush.msra.mxu0 %v1094
    %1174 = vmatpush.msra.mxu0 %v1091
    %1175 = vmatpush.msra.mxu0 %v1088
    %1176 = vmatpush.msra.mxu0 %v1085
    %1177 = vmatpush.msra.mxu0 %v1082
    %1178 = vmatpush.msra.mxu0 %v1079
    %1179 = vmatpush.msra.mxu0 %v1076
    %1180 = vmatpush.msra.mxu0 %v1073
    %1181 = vmatpush.msra.mxu0 %v1070
    %1182 = vmatpush.msra.mxu0 %v1067
    %1183 = vmatpush.msra.mxu0 %v1064
    %1184 = vmatmul.f32.gmra.mxu0 %v1108
    %v1185 = vpop.f32.mrf.mxu0
    %v1186 = vadd.f32 0.0, %v1185
    %1187 = vmatmul.f32.gmra.mxu0 %v1111
    %v1188 = vpop.f32.mrf.mxu0
    %v1189 = vadd.f32 0.0, %v1188
    %1190 = vmatmul.f32.gmra.mxu0 %v1114
    %v1191 = vpop.f32.mrf.mxu0
    %v1192 = vadd.f32 0.0, %v1191
    %1193 = vdwg.mxu0
    %v1194 = vadd.f32 %v999, %v1134
    %v1195 = vadd.f32 %v1025, %v1160
    %v1196 = vadd.f32 %v1051, %v1186
    %v1197 = vadd.f32 %v1002, %v1137
    %v1198 = vadd.f32 %v1028, %v1163
    %v1199 = vadd.f32 %v1054, %v1189
    %v1200 = vadd.f32 %v1005, %v1140
    %v1201 = vadd.f32 %v1031, %v1166
    %v1202 = vadd.f32 %v1057, %v1192
    %v1203 = vld [vmem:[%s836 + $0x1] sm:$0xff]
    %v1204 = vld [vmem:[%s836 + $0x9] sm:$0xff]
    %v1205 = vld [vmem:[%s836 + $0x11] sm:$0x3]
    %v1206 = vld [vmem:[%s463] sm:$0xff]
    %v1207 = vld [vmem:[%s463 + $0x8] sm:$0xff]
    %v1208 = vld [vmem:[%s463 + $0x10] sm:$0xff]
    %v1209 = vld [vmem:[%s463 + $0x18] sm:$0xff]
    %v1210 = vld [vmem:[%s463 + $0x20] sm:$0xff]
    %v1211 = vld [vmem:[%s463 + $0x28] sm:$0xff]
    %v1212 = vld [vmem:[%s463 + $0x30] sm:$0xff]
    %v1213 = vld [vmem:[%s463 + $0x38] sm:$0xff]
    %v1214 = vld [vmem:[%s463 + $0x40] sm:$0xff]
    %v1215 = vld [vmem:[%s463 + $0x48] sm:$0xff]
    %v1216 = vld [vmem:[%s463 + $0x50] sm:$0xff]
    %v1217 = vld [vmem:[%s463 + $0x58] sm:$0xff]
    %v1218 = vld [vmem:[%s463 + $0x60] sm:$0xff]
    %v1219 = vld [vmem:[%s463 + $0x68] sm:$0xff]
    %v1220 = vld [vmem:[%s463 + $0x70] sm:$0xff]
    %v1221 = vld [vmem:[%s463 + $0x78] sm:$0xff]
    %v1222 = vld [vmem:[%s463 + $0x80] sm:$0xff]
    %v1223 = vld [vmem:[%s463 + $0x88] sm:$0xff]
    %v1224 = vld [vmem:[%s463 + $0x90] sm:$0xff]
    %v1225 = vld [vmem:[%s463 + $0x98] sm:$0xff]
    %v1226 = vld [vmem:[%s463 + $0xa0] sm:$0xff]
    %v1227 = vld [vmem:[%s463 + $0xa8] sm:$0xff]
    %v1228 = vld [vmem:[%s463 + $0xb0] sm:$0xff]
    %v1229 = vld [vmem:[%s463 + $0xb8] sm:$0xff]
    %v1230 = vld [vmem:[%s463 + $0xc0] sm:$0xff]
    %v1231 = vld [vmem:[%s463 + $0xc8] sm:$0xff]
    %v1232 = vld [vmem:[%s463 + $0xd0] sm:$0xff]
    %v1233 = vld [vmem:[%s463 + $0xd8] sm:$0xff]
    %v1234 = vld [vmem:[%s463 + $0xe0] sm:$0xff]
    %v1235 = vld [vmem:[%s463 + $0xe8] sm:$0xff]
    %v1236 = vld [vmem:[%s463 + $0xf0] sm:$0xff]
    %v1237 = vld [vmem:[%s463 + $0xf8] sm:$0xff]
    %v1238 = vld [vmem:[%s463 + $0x100] sm:$0xff]
    %v1239 = vld [vmem:[%s463 + $0x108] sm:$0xff]
    %v1240 = vld [vmem:[%s463 + $0x110] sm:$0xff]
    %v1241 = vld [vmem:[%s463 + $0x118] sm:$0xff]
    %v1242 = vld [vmem:[%s463 + $0x120] sm:$0xff]
    %v1243 = vld [vmem:[%s463 + $0x128] sm:$0xff]
    %v1244 = vld [vmem:[%s463 + $0x130] sm:$0xff]
    %v1245 = vld [vmem:[%s463 + $0x138] sm:$0xff]
    %v1246 = vld [vmem:[%s463 + $0x140] sm:$0xff]
    %v1247 = vld [vmem:[%s463 + $0x148] sm:$0xff]
    %v1248 = vld [vmem:[%s463 + $0x150] sm:$0xff]
    %v1249 = vld [vmem:[%s463 + $0x158] sm:$0xff]
    %v1250 = vld [vmem:[%s463 + $0x160] sm:$0xff]
    %v1252 = vsel %vm140, %v1203, 0
    %v1255 = vsel %vm140, %v1204, 0
    %v1258 = vsel %vm140, %v1205, 0
    %1260 = vmatpush.msra.mxu0 0.0
    %1261 = vmatpush.msra.mxu0 %v1248
    %1262 = vmatpush.msra.mxu0 %v1245
    %1263 = vmatpush.msra.mxu0 %v1242
    %1264 = vmatpush.msra.mxu0 %v1239
    %1265 = vmatpush.msra.mxu0 %v1236
    %1266 = vmatpush.msra.mxu0 %v1233
    %1267 = vmatpush.msra.mxu0 %v1230
    %1268 = vmatpush.msra.mxu0 %v1227
    %1269 = vmatpush.msra.mxu0 %v1224
    %1270 = vmatpush.msra.mxu0 %v1221
    %1271 = vmatpush.msra.mxu0 %v1218
    %1272 = vmatpush.msra.mxu0 %v1215
    %1273 = vmatpush.msra.mxu0 %v1212
    %1274 = vmatpush.msra.mxu0 %v1209
    %1275 = vmatpush.msra.mxu0 %v1206
    %1276 = vmatmul.f32.gmra.mxu0 %v1252
    %v1277 = vpop.f32.mrf.mxu0
    %v1278 = vadd.f32 0.0, %v1277
    %1279 = vmatmul.f32.gmra.mxu0 %v1255
    %v1280 = vpop.f32.mrf.mxu0
    %v1281 = vadd.f32 0.0, %v1280
    %1282 = vmatmul.f32.gmra.mxu0 %v1258
    %v1283 = vpop.f32.mrf.mxu0
    %v1284 = vadd.f32 0.0, %v1283
    %1285 = vdwg.mxu0
    %1286 = vmatpush.msra.mxu0 0.0
    %1287 = vmatpush.msra.mxu0 %v1249
    %1288 = vmatpush.msra.mxu0 %v1246
    %1289 = vmatpush.msra.mxu0 %v1243
    %1290 = vmatpush.msra.mxu0 %v1240
    %1291 = vmatpush.msra.mxu0 %v1237
    %1292 = vmatpush.msra.mxu0 %v1234
    %1293 = vmatpush.msra.mxu0 %v1231
    %1294 = vmatpush.msra.mxu0 %v1228
    %1295 = vmatpush.msra.mxu0 %v1225
    %1296 = vmatpush.msra.mxu0 %v1222
    %1297 = vmatpush.msra.mxu0 %v1219
    %1298 = vmatpush.msra.mxu0 %v1216
    %1299 = vmatpush.msra.mxu0 %v1213
    %1300 = vmatpush.msra.mxu0 %v1210
    %1301 = vmatpush.msra.mxu0 %v1207
    %1302 = vmatmul.f32.gmra.mxu0 %v1252
    %v1303 = vpop.f32.mrf.mxu0
    %v1304 = vadd.f32 0.0, %v1303
    %1305 = vmatmul.f32.gmra.mxu0 %v1255
    %v1306 = vpop.f32.mrf.mxu0
    %v1307 = vadd.f32 0.0, %v1306
    %1308 = vmatmul.f32.gmra.mxu0 %v1258
    %v1309 = vpop.f32.mrf.mxu0
    %v1310 = vadd.f32 0.0, %v1309
    %1311 = vdwg.mxu0
    %1312 = vmatpush.msra.mxu0 0.0
    %1313 = vmatpush.msra.mxu0 %v1250
    %1314 = vmatpush.msra.mxu0 %v1247
    %1315 = vmatpush.msra.mxu0 %v1244
    %1316 = vmatpush.msra.mxu0 %v1241
    %1317 = vmatpush.msra.mxu0 %v1238
    %1318 = vmatpush.msra.mxu0 %v1235
    %1319 = vmatpush.msra.mxu0 %v1232
    %1320 = vmatpush.msra.mxu0 %v1229
    %1321 = vmatpush.msra.mxu0 %v1226
    %1322 = vmatpush.msra.mxu0 %v1223
    %1323 = vmatpush.msra.mxu0 %v1220
    %1324 = vmatpush.msra.mxu0 %v1217
    %1325 = vmatpush.msra.mxu0 %v1214
    %1326 = vmatpush.msra.mxu0 %v1211
    %1327 = vmatpush.msra.mxu0 %v1208
    %1328 = vmatmul.f32.gmra.mxu0 %v1252
    %v1329 = vpop.f32.mrf.mxu0
    %v1330 = vadd.f32 0.0, %v1329
    %1331 = vmatmul.f32.gmra.mxu0 %v1255
    %v1332 = vpop.f32.mrf.mxu0
    %v1333 = vadd.f32 0.0, %v1332
    %1334 = vmatmul.f32.gmra.mxu0 %v1258
    %v1335 = vpop.f32.mrf.mxu0
    %v1336 = vadd.f32 0.0, %v1335
    %1337 = vdwg.mxu0
    %v1338 = vadd.f32 %v1194, %v1278
    %v1339 = vadd.f32 %v1195, %v1304
    %v1340 = vadd.f32 %v1196, %v1330
    %v1341 = vadd.f32 %v1197, %v1281
    %v1342 = vadd.f32 %v1198, %v1307
    %v1343 = vadd.f32 %v1199, %v1333
    %v1344 = vadd.f32 %v1200, %v1284
    %v1345 = vadd.f32 %v1201, %v1310
    %v1346 = vadd.f32 %v1202, %v1336
    %v1347 = vld [vmem:[%s787 + $0x2] sm:$0xff]
    %v1348 = vld [vmem:[%s787 + $0xa] sm:$0xff]
    %v1349 = vld [vmem:[%s787 + $0x12] sm:$0x3]
    %v1350 = vld [vmem:[%s608] sm:$0xff]
    %v1351 = vld [vmem:[%s608 + $0x8] sm:$0xff]
    %v1352 = vld [vmem:[%s608 + $0x10] sm:$0xff]
    %v1353 = vld [vmem:[%s608 + $0x18] sm:$0xff]
    %v1354 = vld [vmem:[%s608 + $0x20] sm:$0xff]
    %v1355 = vld [vmem:[%s608 + $0x28] sm:$0xff]
    %v1356 = vld [vmem:[%s608 + $0x30] sm:$0xff]
    %v1357 = vld [vmem:[%s608 + $0x38] sm:$0xff]
    %v1358 = vld [vmem:[%s608 + $0x40] sm:$0xff]
    %v1359 = vld [vmem:[%s608 + $0x48] sm:$0xff]
    %v1360 = vld [vmem:[%s608 + $0x50] sm:$0xff]
    %v1361 = vld [vmem:[%s608 + $0x58] sm:$0xff]
    %v1362 = vld [vmem:[%s608 + $0x60] sm:$0xff]
    %v1363 = vld [vmem:[%s608 + $0x68] sm:$0xff]
    %v1364 = vld [vmem:[%s608 + $0x70] sm:$0xff]
    %v1365 = vld [vmem:[%s608 + $0x78] sm:$0xff]
    %v1366 = vld [vmem:[%s608 + $0x80] sm:$0xff]
    %v1367 = vld [vmem:[%s608 + $0x88] sm:$0xff]
    %v1368 = vld [vmem:[%s608 + $0x90] sm:$0xff]
    %v1369 = vld [vmem:[%s608 + $0x98] sm:$0xff]
    %v1370 = vld [vmem:[%s608 + $0xa0] sm:$0xff]
    %v1371 = vld [vmem:[%s608 + $0xa8] sm:$0xff]
    %v1372 = vld [vmem:[%s608 + $0xb0] sm:$0xff]
    %v1373 = vld [vmem:[%s608 + $0xb8] sm:$0xff]
    %v1374 = vld [vmem:[%s608 + $0xc0] sm:$0xff]
    %v1375 = vld [vmem:[%s608 + $0xc8] sm:$0xff]
    %v1376 = vld [vmem:[%s608 + $0xd0] sm:$0xff]
    %v1377 = vld [vmem:[%s608 + $0xd8] sm:$0xff]
    %v1378 = vld [vmem:[%s608 + $0xe0] sm:$0xff]
    %v1379 = vld [vmem:[%s608 + $0xe8] sm:$0xff]
    %v1380 = vld [vmem:[%s608 + $0xf0] sm:$0xff]
    %v1381 = vld [vmem:[%s608 + $0xf8] sm:$0xff]
    %v1382 = vld [vmem:[%s608 + $0x100] sm:$0xff]
    %v1383 = vld [vmem:[%s608 + $0x108] sm:$0xff]
    %v1384 = vld [vmem:[%s608 + $0x110] sm:$0xff]
    %v1385 = vld [vmem:[%s608 + $0x118] sm:$0xff]
    %v1386 = vld [vmem:[%s608 + $0x120] sm:$0xff]
    %v1387 = vld [vmem:[%s608 + $0x128] sm:$0xff]
    %v1388 = vld [vmem:[%s608 + $0x130] sm:$0xff]
    %v1389 = vld [vmem:[%s608 + $0x138] sm:$0xff]
    %v1390 = vld [vmem:[%s608 + $0x140] sm:$0xff]
    %v1391 = vld [vmem:[%s608 + $0x148] sm:$0xff]
    %v1392 = vld [vmem:[%s608 + $0x150] sm:$0xff]
    %v1393 = vld [vmem:[%s608 + $0x158] sm:$0xff]
    %v1394 = vld [vmem:[%s608 + $0x160] sm:$0xff]
    %v1396 = vsel %vm140, %v1347, 0
    %v1399 = vsel %vm140, %v1348, 0
    %v1402 = vsel %vm140, %v1349, 0
    %1404 = vmatpush.msra.mxu0 0.0
    %1405 = vmatpush.msra.mxu0 %v1392
    %1406 = vmatpush.msra.mxu0 %v1389
    %1407 = vmatpush.msra.mxu0 %v1386
    %1408 = vmatpush.msra.mxu0 %v1383
    %1409 = vmatpush.msra.mxu0 %v1380
    %1410 = vmatpush.msra.mxu0 %v1377
    %1411 = vmatpush.msra.mxu0 %v1374
    %1412 = vmatpush.msra.mxu0 %v1371
    %1413 = vmatpush.msra.mxu0 %v1368
    %1414 = vmatpush.msra.mxu0 %v1365
    %1415 = vmatpush.msra.mxu0 %v1362
    %1416 = vmatpush.msra.mxu0 %v1359
    %1417 = vmatpush.msra.mxu0 %v1356
    %1418 = vmatpush.msra.mxu0 %v1353
    %1419 = vmatpush.msra.mxu0 %v1350
    %1420 = vmatmul.f32.gmra.mxu0 %v1396
    %v1421 = vpop.f32.mrf.mxu0
    %v1422 = vadd.f32 0.0, %v1421
    %1423 = vmatmul.f32.gmra.mxu0 %v1399
    %v1424 = vpop.f32.mrf.mxu0
    %v1425 = vadd.f32 0.0, %v1424
    %1426 = vmatmul.f32.gmra.mxu0 %v1402
    %v1427 = vpop.f32.mrf.mxu0
    %v1428 = vadd.f32 0.0, %v1427
    %1429 = vdwg.mxu0
    %1430 = vmatpush.msra.mxu0 0.0
    %1431 = vmatpush.msra.mxu0 %v1393
    %1432 = vmatpush.msra.mxu0 %v1390
    %1433 = vmatpush.msra.mxu0 %v1387
    %1434 = vmatpush.msra.mxu0 %v1384
    %1435 = vmatpush.msra.mxu0 %v1381
    %1436 = vmatpush.msra.mxu0 %v1378
    %1437 = vmatpush.msra.mxu0 %v1375
    %1438 = vmatpush.msra.mxu0 %v1372
    %1439 = vmatpush.msra.mxu0 %v1369
    %1440 = vmatpush.msra.mxu0 %v1366
    %1441 = vmatpush.msra.mxu0 %v1363
    %1442 = vmatpush.msra.mxu0 %v1360
    %1443 = vmatpush.msra.mxu0 %v1357
    %1444 = vmatpush.msra.mxu0 %v1354
    %1445 = vmatpush.msra.mxu0 %v1351
    %1446 = vmatmul.f32.gmra.mxu0 %v1396
    %v1447 = vpop.f32.mrf.mxu0
    %v1448 = vadd.f32 0.0, %v1447
    %1449 = vmatmul.f32.gmra.mxu0 %v1399
    %v1450 = vpop.f32.mrf.mxu0
    %v1451 = vadd.f32 0.0, %v1450
    %1452 = vmatmul.f32.gmra.mxu0 %v1402
    %v1453 = vpop.f32.mrf.mxu0
    %v1454 = vadd.f32 0.0, %v1453
    %1455 = vdwg.mxu0
    %1456 = vmatpush.msra.mxu0 0.0
    %1457 = vmatpush.msra.mxu0 %v1394
    %1458 = vmatpush.msra.mxu0 %v1391
    %1459 = vmatpush.msra.mxu0 %v1388
    %1460 = vmatpush.msra.mxu0 %v1385
    %1461 = vmatpush.msra.mxu0 %v1382
    %1462 = vmatpush.msra.mxu0 %v1379
    %1463 = vmatpush.msra.mxu0 %v1376
    %1464 = vmatpush.msra.mxu0 %v1373
    %1465 = vmatpush.msra.mxu0 %v1370
    %1466 = vmatpush.msra.mxu0 %v1367
    %1467 = vmatpush.msra.mxu0 %v1364
    %1468 = vmatpush.msra.mxu0 %v1361
    %1469 = vmatpush.msra.mxu0 %v1358
    %1470 = vmatpush.msra.mxu0 %v1355
    %1471 = vmatpush.msra.mxu0 %v1352
    %1472 = vmatmul.f32.gmra.mxu0 %v1396
    %v1473 = vpop.f32.mrf.mxu0
    %v1474 = vadd.f32 0.0, %v1473
    %1475 = vmatmul.f32.gmra.mxu0 %v1399
    %v1476 = vpop.f32.mrf.mxu0
    %v1477 = vadd.f32 0.0, %v1476
    %1478 = vmatmul.f32.gmra.mxu0 %v1402
    %v1479 = vpop.f32.mrf.mxu0
    %v1480 = vadd.f32 0.0, %v1479
    %1481 = vdwg.mxu0
    %v1482 = vadd.f32 %v1338, %v1422
    %v1483 = vadd.f32 %v1339, %v1448
    %v1484 = vadd.f32 %v1340, %v1474
    %v1485 = vadd.f32 %v1341, %v1425
    %v1486 = vadd.f32 %v1342, %v1451
    %v1487 = vadd.f32 %v1343, %v1477
    %v1488 = vadd.f32 %v1344, %v1428
    %v1489 = vadd.f32 %v1345, %v1454
    %v1490 = vadd.f32 %v1346, %v1480
    %v1491 = vld [vmem:[%s2] sm:$0x7]
    %v1493 = vperm.slane %v1491, 0
    %v1494 = vperm.slane %v1491, 1
    %v1495 = vperm.slane %v1491, 2
    %v1499 = vadd.f32 %v1482, %v1493
    %v1500 = vadd.f32 %v1483, %v1494
    %v1501 = vadd.f32 %v1484, %v1495
    %v1502 = vadd.f32 %v1485, %v1493
    %v1503 = vadd.f32 %v1486, %v1494
    %v1504 = vadd.f32 %v1487, %v1495
    %v1505 = vadd.f32 %v1488, %v1493
    %v1506 = vadd.f32 %v1489, %v1494
    %v1507 = vadd.f32 %v1490, %v1495
    %v1508 = vmax.f32 %v1499, 0.0
    %v1509 = vmax.f32 %v1500, 0.0
    %v1510 = vmax.f32 %v1501, 0.0
    %v1511 = vmax.f32 %v1502, 0.0
    %v1512 = vmax.f32 %v1503, 0.0
    %v1513 = vmax.f32 %v1504, 0.0
    %v1514 = vmax.f32 %v1505, 0.0
    %v1515 = vmax.f32 %v1506, 0.0
    %v1516 = vmax.f32 %v1507, 0.0
    %s1517 = scalar_lea.vmem [#allocation2], 72
    %1518 = vst [vmem:[%s1517] sm:$0xff] %v1508
    %1519 = vst [vmem:[%s1517 + $0x8] sm:$0xff] %v1509
    %1520 = vst.msk [vmem:[%s1517 + $0x10] sm:$0xff] %vm778, %v1510
    %1521 = vst [vmem:[%s1517 + $0x18] sm:$0xff] %v1511
    %1522 = vst [vmem:[%s1517 + $0x20] sm:$0xff] %v1512
    %1523 = vst.msk [vmem:[%s1517 + $0x28] sm:$0xff] %vm778, %v1513
    %1524 = vst [vmem:[%s1517 + $0x30] sm:$0x3] %v1514
    %1525 = vst [vmem:[%s1517 + $0x38] sm:$0x3] %v1515
    %1526 = vst.msk [vmem:[%s1517 + $0x40] sm:$0x3] %vm785, %v1516
    %v1527 = vld [vmem:[#allocation2] ss:$8 sm:$0x7]
    %s1528 = scalar_lea.vmem [#allocation2], 72
    %v1529 = vld [vmem:[%s1528] ss:$8 sm:$0x7]
    %v1530 = vld [vmem:[%s3] sm:$0xff]
    %v1531 = vld [vmem:[%s3 + $0x8] sm:$0xff]
    %v1532 = vld [vmem:[%s3 + $0x10] sm:$0xff]
    %v1533 = vld [vmem:[%s3 + $0x18] sm:$0xff]
    %v1534 = vld [vmem:[%s3 + $0x20] sm:$0xff]
    %v1535 = vld [vmem:[%s3 + $0x28] sm:$0xff]
    %v1536 = vld [vmem:[%s3 + $0x30] sm:$0xff]
    %v1537 = vld [vmem:[%s3 + $0x38] sm:$0xff]
    %v1538 = vld [vmem:[%s3 + $0x40] sm:$0xff]
    %v1539 = vld [vmem:[%s3 + $0x48] sm:$0xff]
    %v1540 = vld [vmem:[%s3 + $0x50] sm:$0xff]
    %v1541 = vld [vmem:[%s3 + $0x58] sm:$0xff]
    %v1542 = vld [vmem:[%s3 + $0x60] sm:$0xff]
    %v1543 = vld [vmem:[%s3 + $0x68] sm:$0xff]
    %v1544 = vld [vmem:[%s3 + $0x70] sm:$0xff]
    %v1545 = vld [vmem:[%s3 + $0x78] sm:$0xff]
    %v1546 = vld [vmem:[%s3 + $0x80] sm:$0xff]
    %v1547 = vld [vmem:[%s3 + $0x88] sm:$0xff]
    %v1548 = vld [vmem:[%s3 + $0x90] sm:$0xff]
    %v1549 = vld [vmem:[%s3 + $0x98] sm:$0xff]
    %v1550 = vld [vmem:[%s3 + $0xa0] sm:$0xff]
    %v1551 = vld [vmem:[%s3 + $0xa8] sm:$0xff]
    %v1552 = vld [vmem:[%s3 + $0xb0] sm:$0xff]
    %v1553 = vld [vmem:[%s3 + $0xb8] sm:$0xff]
    %v1554 = vld [vmem:[%s3 + $0xc0] sm:$0xff]
    %v1555 = vld [vmem:[%s3 + $0xc8] sm:$0xff]
    %v1556 = vld [vmem:[%s3 + $0xd0] sm:$0xff]
    %v1557 = vld [vmem:[%s3 + $0xd8] sm:$0xff]
    %v1558 = vld [vmem:[%s3 + $0xe0] sm:$0xff]
    %v1559 = vld [vmem:[%s3 + $0xe8] sm:$0xff]
    %v1560 = vld [vmem:[%s3 + $0xf0] sm:$0xff]
    %v1561 = vld [vmem:[%s3 + $0xf8] sm:$0xff]
    %v1562 = vld [vmem:[%s3 + $0x100] sm:$0xff]
    %v1563 = vld [vmem:[%s3 + $0x108] sm:$0xff]
    %v1564 = vld [vmem:[%s3 + $0x110] sm:$0xff]
    %v1565 = vld [vmem:[%s3 + $0x118] sm:$0xff]
    %s1566 = scalar_lea.vmem [#allocation2], 1
    %v1567 = vld [vmem:[%s1566] ss:$8 sm:$0x7]
    %s1568 = scalar_lea.vmem [#allocation2], 73
    %v1569 = vld [vmem:[%s1568] ss:$8 sm:$0x7]
    %s1570 = scalar_lea.vmem %s3, 288
    %v1571 = vld [vmem:[%s1570] sm:$0xff]
    %v1572 = vld [vmem:[%s1570 + $0x8] sm:$0xff]
    %v1573 = vld [vmem:[%s1570 + $0x10] sm:$0xff]
    %v1574 = vld [vmem:[%s1570 + $0x18] sm:$0xff]
    %v1575 = vld [vmem:[%s1570 + $0x20] sm:$0xff]
    %v1576 = vld [vmem:[%s1570 + $0x28] sm:$0xff]
    %v1577 = vld [vmem:[%s1570 + $0x30] sm:$0xff]
    %v1578 = vld [vmem:[%s1570 + $0x38] sm:$0xff]
    %v1579 = vld [vmem:[%s1570 + $0x40] sm:$0xff]
    %v1580 = vld [vmem:[%s1570 + $0x48] sm:$0xff]
    %v1581 = vld [vmem:[%s1570 + $0x50] sm:$0xff]
    %v1582 = vld [vmem:[%s1570 + $0x58] sm:$0xff]
    %v1583 = vld [vmem:[%s1570 + $0x60] sm:$0xff]
    %v1584 = vld [vmem:[%s1570 + $0x68] sm:$0xff]
    %v1585 = vld [vmem:[%s1570 + $0x70] sm:$0xff]
    %v1586 = vld [vmem:[%s1570 + $0x78] sm:$0xff]
    %v1587 = vld [vmem:[%s1570 + $0x80] sm:$0xff]
    %v1588 = vld [vmem:[%s1570 + $0x88] sm:$0xff]
    %v1589 = vld [vmem:[%s1570 + $0x90] sm:$0xff]
    %v1590 = vld [vmem:[%s1570 + $0x98] sm:$0xff]
    %v1591 = vld [vmem:[%s1570 + $0xa0] sm:$0xff]
    %v1592 = vld [vmem:[%s1570 + $0xa8] sm:$0xff]
    %v1593 = vld [vmem:[%s1570 + $0xb0] sm:$0xff]
    %v1594 = vld [vmem:[%s1570 + $0xb8] sm:$0xff]
    %v1595 = vld [vmem:[%s1570 + $0xc0] sm:$0xff]
    %v1596 = vld [vmem:[%s1570 + $0xc8] sm:$0xff]
    %v1597 = vld [vmem:[%s1570 + $0xd0] sm:$0xff]
    %v1598 = vld [vmem:[%s1570 + $0xd8] sm:$0xff]
    %v1599 = vld [vmem:[%s1570 + $0xe0] sm:$0xff]
    %v1600 = vld [vmem:[%s1570 + $0xe8] sm:$0xff]
    %v1601 = vld [vmem:[%s1570 + $0xf0] sm:$0xff]
    %v1602 = vld [vmem:[%s1570 + $0xf8] sm:$0xff]
    %v1603 = vld [vmem:[%s1570 + $0x100] sm:$0xff]
    %v1604 = vld [vmem:[%s1570 + $0x108] sm:$0xff]
    %v1605 = vld [vmem:[%s1570 + $0x110] sm:$0xff]
    %v1606 = vld [vmem:[%s1570 + $0x118] sm:$0xff]
    %1609 = vst [vmem:[#allocation1] ss:$9 sm:$0xff] %v1567
    %s1610 = scalar_lea.vmem [#allocation1], 1
    %1611 = vst [vmem:[%s1610] ss:$9 sm:$0xff] %v1569
    %v1612 = vld [vmem:[#allocation1] sm:$0xff]
    %v1613 = vld [vmem:[#allocation1 + $0x9] sm:$0xff]
    %v1614 = vld [vmem:[#allocation1 + $0x12] sm:$0xff]
    %v1617 = vsel %vm778, %v1614, 0
    %1619 = vmatpush.msra.mxu0 %v1586
    %1620 = vmatpush.msra.mxu0 %v1585
    %1621 = vmatpush.msra.mxu0 %v1584
    %1622 = vmatpush.msra.mxu0 %v1583
    %1623 = vmatpush.msra.mxu0 %v1582
    %1624 = vmatpush.msra.mxu0 %v1581
    %1625 = vmatpush.msra.mxu0 %v1580
    %1626 = vmatpush.msra.mxu0 %v1579
    %1627 = vmatpush.msra.mxu0 %v1578
    %1628 = vmatpush.msra.mxu0 %v1577
    %1629 = vmatpush.msra.mxu0 %v1576
    %1630 = vmatpush.msra.mxu0 %v1575
    %1631 = vmatpush.msra.mxu0 %v1574
    %1632 = vmatpush.msra.mxu0 %v1573
    %1633 = vmatpush.msra.mxu0 %v1572
    %1634 = vmatpush.msra.mxu0 %v1571
    %1635 = vmatmul.f32.gmra.mxu0 %v1612
    %v1636 = vpop.f32.mrf.mxu0
    %v1637 = vadd.f32 0.0, %v1636
    %1638 = vdwg.mxu0
    %1639 = vmatpush.msra.mxu0 %v1602
    %1640 = vmatpush.msra.mxu0 %v1601
    %1641 = vmatpush.msra.mxu0 %v1600
    %1642 = vmatpush.msra.mxu0 %v1599
    %1643 = vmatpush.msra.mxu0 %v1598
    %1644 = vmatpush.msra.mxu0 %v1597
    %1645 = vmatpush.msra.mxu0 %v1596
    %1646 = vmatpush.msra.mxu0 %v1595
    %1647 = vmatpush.msra.mxu0 %v1594
    %1648 = vmatpush.msra.mxu0 %v1593
    %1649 = vmatpush.msra.mxu0 %v1592
    %1650 = vmatpush.msra.mxu0 %v1591
    %1651 = vmatpush.msra.mxu0 %v1590
    %1652 = vmatpush.msra.mxu0 %v1589
    %1653 = vmatpush.msra.mxu0 %v1588
    %1654 = vmatpush.msra.mxu0 %v1587
    %1655 = vmatmul.f32.gmra.mxu0 %v1613
    %v1656 = vpop.f32.mrf.mxu0
    %v1657 = vadd.f32 %v1637, %v1656
    %1658 = vdwg.mxu0
    %1659 = vmatpush.msra.mxu0 0.0
    %1660 = vmatpush.msra.mxu0 0.0
    %1661 = vmatpush.msra.mxu0 0.0
    %1662 = vmatpush.msra.mxu0 0.0
    %1663 = vmatpush.msra.mxu0 0.0
    %1664 = vmatpush.msra.mxu0 0.0
    %1665 = vmatpush.msra.mxu0 0.0
    %1666 = vmatpush.msra.mxu0 0.0
    %1667 = vmatpush.msra.mxu0 0.0
    %1668 = vmatpush.msra.mxu0 0.0
    %1669 = vmatpush.msra.mxu0 0.0
    %1670 = vmatpush.msra.mxu0 0.0
    %1671 = vmatpush.msra.mxu0 %v1606
    %1672 = vmatpush.msra.mxu0 %v1605
    %1673 = vmatpush.msra.mxu0 %v1604
    %1674 = vmatpush.msra.mxu0 %v1603
    %1675 = vmatmul.f32.gmra.mxu0 %v1617
    %v1676 = vpop.f32.mrf.mxu0
    %v1677 = vadd.f32 %v1657, %v1676
    %1678 = vdwg.mxu0
    %1681 = vst [vmem:[#allocation1] ss:$9 sm:$0xff] %v1527
    %s1682 = scalar_lea.vmem [#allocation1], 1
    %1683 = vst [vmem:[%s1682] ss:$9 sm:$0xff] %v1529
    %v1684 = vld [vmem:[#allocation1] sm:$0xff]
    %v1685 = vld [vmem:[#allocation1 + $0x9] sm:$0xff]
    %v1686 = vld [vmem:[#allocation1 + $0x12] sm:$0xff]
    %v1689 = vsel %vm778, %v1686, 0
    %1691 = vmatpush.msra.mxu0 %v1545
    %1692 = vmatpush.msra.mxu0 %v1544
    %1693 = vmatpush.msra.mxu0 %v1543
    %1694 = vmatpush.msra.mxu0 %v1542
    %1695 = vmatpush.msra.mxu0 %v1541
    %1696 = vmatpush.msra.mxu0 %v1540
    %1697 = vmatpush.msra.mxu0 %v1539
    %1698 = vmatpush.msra.mxu0 %v1538
    %1699 = vmatpush.msra.mxu0 %v1537
    %1700 = vmatpush.msra.mxu0 %v1536
    %1701 = vmatpush.msra.mxu0 %v1535
    %1702 = vmatpush.msra.mxu0 %v1534
    %1703 = vmatpush.msra.mxu0 %v1533
    %1704 = vmatpush.msra.mxu0 %v1532
    %1705 = vmatpush.msra.mxu0 %v1531
    %1706 = vmatpush.msra.mxu0 %v1530
    %1707 = vmatmul.f32.gmra.mxu0 %v1684
    %v1708 = vpop.f32.mrf.mxu0
    %v1709 = vadd.f32 %v1677, %v1708
    %1710 = vdwg.mxu0
    %1711 = vmatpush.msra.mxu0 %v1561
    %1712 = vmatpush.msra.mxu0 %v1560
    %1713 = vmatpush.msra.mxu0 %v1559
    %1714 = vmatpush.msra.mxu0 %v1558
    %1715 = vmatpush.msra.mxu0 %v1557
    %1716 = vmatpush.msra.mxu0 %v1556
    %1717 = vmatpush.msra.mxu0 %v1555
    %1718 = vmatpush.msra.mxu0 %v1554
    %1719 = vmatpush.msra.mxu0 %v1553
    %1720 = vmatpush.msra.mxu0 %v1552
    %1721 = vmatpush.msra.mxu0 %v1551
    %1722 = vmatpush.msra.mxu0 %v1550
    %1723 = vmatpush.msra.mxu0 %v1549
    %1724 = vmatpush.msra.mxu0 %v1548
    %1725 = vmatpush.msra.mxu0 %v1547
    %1726 = vmatpush.msra.mxu0 %v1546
    %1727 = vmatmul.f32.gmra.mxu0 %v1685
    %v1728 = vpop.f32.mrf.mxu0
    %v1729 = vadd.f32 %v1709, %v1728
    %1730 = vdwg.mxu0
    %1731 = vmatpush.msra.mxu0 0.0
    %1732 = vmatpush.msra.mxu0 0.0
    %1733 = vmatpush.msra.mxu0 0.0
    %1734 = vmatpush.msra.mxu0 0.0
    %1735 = vmatpush.msra.mxu0 0.0
    %1736 = vmatpush.msra.mxu0 0.0
    %1737 = vmatpush.msra.mxu0 0.0
    %1738 = vmatpush.msra.mxu0 0.0
    %1739 = vmatpush.msra.mxu0 0.0
    %1740 = vmatpush.msra.mxu0 0.0
    %1741 = vmatpush.msra.mxu0 0.0
    %1742 = vmatpush.msra.mxu0 0.0
    %1743 = vmatpush.msra.mxu0 %v1565
    %1744 = vmatpush.msra.mxu0 %v1564
    %1745 = vmatpush.msra.mxu0 %v1563
    %1746 = vmatpush.msra.mxu0 %v1562
    %1747 = vmatmul.f32.gmra.mxu0 %v1689
    %v1748 = vpop.f32.mrf.mxu0
    %v1749 = vadd.f32 %v1729, %v1748
    %1750 = vdwg.mxu0
    %s1751 = scalar_lea.vmem [#allocation2], 2
    %v1752 = vld [vmem:[%s1751] ss:$8 sm:$0x7]
    %s1753 = scalar_lea.vmem [#allocation2], 74
    %v1754 = vld [vmem:[%s1753] ss:$8 sm:$0x7]
    %s1755 = scalar_lea.vmem %s3, 576
    %v1756 = vld [vmem:[%s1755] sm:$0xff]
    %v1757 = vld [vmem:[%s1755 + $0x8] sm:$0xff]
    %v1758 = vld [vmem:[%s1755 + $0x10] sm:$0xff]
    %v1759 = vld [vmem:[%s1755 + $0x18] sm:$0xff]
    %v1760 = vld [vmem:[%s1755 + $0x20] sm:$0xff]
    %v1761 = vld [vmem:[%s1755 + $0x28] sm:$0xff]
    %v1762 = vld [vmem:[%s1755 + $0x30] sm:$0xff]
    %v1763 = vld [vmem:[%s1755 + $0x38] sm:$0xff]
    %v1764 = vld [vmem:[%s1755 + $0x40] sm:$0xff]
    %v1765 = vld [vmem:[%s1755 + $0x48] sm:$0xff]
    %v1766 = vld [vmem:[%s1755 + $0x50] sm:$0xff]
    %v1767 = vld [vmem:[%s1755 + $0x58] sm:$0xff]
    %v1768 = vld [vmem:[%s1755 + $0x60] sm:$0xff]
    %v1769 = vld [vmem:[%s1755 + $0x68] sm:$0xff]
    %v1770 = vld [vmem:[%s1755 + $0x70] sm:$0xff]
    %v1771 = vld [vmem:[%s1755 + $0x78] sm:$0xff]
    %v1772 = vld [vmem:[%s1755 + $0x80] sm:$0xff]
    %v1773 = vld [vmem:[%s1755 + $0x88] sm:$0xff]
    %v1774 = vld [vmem:[%s1755 + $0x90] sm:$0xff]
    %v1775 = vld [vmem:[%s1755 + $0x98] sm:$0xff]
    %v1776 = vld [vmem:[%s1755 + $0xa0] sm:$0xff]
    %v1777 = vld [vmem:[%s1755 + $0xa8] sm:$0xff]
    %v1778 = vld [vmem:[%s1755 + $0xb0] sm:$0xff]
    %v1779 = vld [vmem:[%s1755 + $0xb8] sm:$0xff]
    %v1780 = vld [vmem:[%s1755 + $0xc0] sm:$0xff]
    %v1781 = vld [vmem:[%s1755 + $0xc8] sm:$0xff]
    %v1782 = vld [vmem:[%s1755 + $0xd0] sm:$0xff]
    %v1783 = vld [vmem:[%s1755 + $0xd8] sm:$0xff]
    %v1784 = vld [vmem:[%s1755 + $0xe0] sm:$0xff]
    %v1785 = vld [vmem:[%s1755 + $0xe8] sm:$0xff]
    %v1786 = vld [vmem:[%s1755 + $0xf0] sm:$0xff]
    %v1787 = vld [vmem:[%s1755 + $0xf8] sm:$0xff]
    %v1788 = vld [vmem:[%s1755 + $0x100] sm:$0xff]
    %v1789 = vld [vmem:[%s1755 + $0x108] sm:$0xff]
    %v1790 = vld [vmem:[%s1755 + $0x110] sm:$0xff]
    %v1791 = vld [vmem:[%s1755 + $0x118] sm:$0xff]
    %1794 = vst [vmem:[#allocation1] ss:$9 sm:$0xff] %v1752
    %s1795 = scalar_lea.vmem [#allocation1], 1
    %1796 = vst [vmem:[%s1795] ss:$9 sm:$0xff] %v1754
    %v1797 = vld [vmem:[#allocation1] sm:$0xff]
    %v1798 = vld [vmem:[#allocation1 + $0x9] sm:$0xff]
    %v1799 = vld [vmem:[#allocation1 + $0x12] sm:$0xff]
    %v1802 = vsel %vm778, %v1799, 0
    %1804 = vmatpush.msra.mxu0 %v1771
    %1805 = vmatpush.msra.mxu0 %v1770
    %1806 = vmatpush.msra.mxu0 %v1769
    %1807 = vmatpush.msra.mxu0 %v1768
    %1808 = vmatpush.msra.mxu0 %v1767
    %1809 = vmatpush.msra.mxu0 %v1766
    %1810 = vmatpush.msra.mxu0 %v1765
    %1811 = vmatpush.msra.mxu0 %v1764
    %1812 = vmatpush.msra.mxu0 %v1763
    %1813 = vmatpush.msra.mxu0 %v1762
    %1814 = vmatpush.msra.mxu0 %v1761
    %1815 = vmatpush.msra.mxu0 %v1760
    %1816 = vmatpush.msra.mxu0 %v1759
    %1817 = vmatpush.msra.mxu0 %v1758
    %1818 = vmatpush.msra.mxu0 %v1757
    %1819 = vmatpush.msra.mxu0 %v1756
    %1820 = vmatmul.f32.gmra.mxu0 %v1797
    %v1821 = vpop.f32.mrf.mxu0
    %v1822 = vadd.f32 0.0, %v1821
    %1823 = vdwg.mxu0
    %1824 = vmatpush.msra.mxu0 %v1787
    %1825 = vmatpush.msra.mxu0 %v1786
    %1826 = vmatpush.msra.mxu0 %v1785
    %1827 = vmatpush.msra.mxu0 %v1784
    %1828 = vmatpush.msra.mxu0 %v1783
    %1829 = vmatpush.msra.mxu0 %v1782
    %1830 = vmatpush.msra.mxu0 %v1781
    %1831 = vmatpush.msra.mxu0 %v1780
    %1832 = vmatpush.msra.mxu0 %v1779
    %1833 = vmatpush.msra.mxu0 %v1778
    %1834 = vmatpush.msra.mxu0 %v1777
    %1835 = vmatpush.msra.mxu0 %v1776
    %1836 = vmatpush.msra.mxu0 %v1775
    %1837 = vmatpush.msra.mxu0 %v1774
    %1838 = vmatpush.msra.mxu0 %v1773
    %1839 = vmatpush.msra.mxu0 %v1772
    %1840 = vmatmul.f32.gmra.mxu0 %v1798
    %v1841 = vpop.f32.mrf.mxu0
    %v1842 = vadd.f32 %v1822, %v1841
    %1843 = vdwg.mxu0
    %1844 = vmatpush.msra.mxu0 0.0
    %1845 = vmatpush.msra.mxu0 0.0
    %1846 = vmatpush.msra.mxu0 0.0
    %1847 = vmatpush.msra.mxu0 0.0
    %1848 = vmatpush.msra.mxu0 0.0
    %1849 = vmatpush.msra.mxu0 0.0
    %1850 = vmatpush.msra.mxu0 0.0
    %1851 = vmatpush.msra.mxu0 0.0
    %1852 = vmatpush.msra.mxu0 0.0
    %1853 = vmatpush.msra.mxu0 0.0
    %1854 = vmatpush.msra.mxu0 0.0
    %1855 = vmatpush.msra.mxu0 0.0
    %1856 = vmatpush.msra.mxu0 %v1791
    %1857 = vmatpush.msra.mxu0 %v1790
    %1858 = vmatpush.msra.mxu0 %v1789
    %1859 = vmatpush.msra.mxu0 %v1788
    %1860 = vmatmul.f32.gmra.mxu0 %v1802
    %v1861 = vpop.f32.mrf.mxu0
    %v1862 = vadd.f32 %v1842, %v1861
    %1863 = vdwg.mxu0
    %v1864 = vadd.f32 %v1749, %v1862
    %s1865 = scalar_lea.vmem [#allocation2], 3
    %v1866 = vld [vmem:[%s1865] ss:$8 sm:$0x7]
    %s1867 = scalar_lea.vmem [#allocation2], 75
    %v1868 = vld [vmem:[%s1867] ss:$8 sm:$0x7]
    %s1869 = scalar_lea.vmem %s3, 864
    %v1870 = vld [vmem:[%s1869] sm:$0xff]
    %v1871 = vld [vmem:[%s1869 + $0x8] sm:$0xff]
    %v1872 = vld [vmem:[%s1869 + $0x10] sm:$0xff]
    %v1873 = vld [vmem:[%s1869 + $0x18] sm:$0xff]
    %v1874 = vld [vmem:[%s1869 + $0x20] sm:$0xff]
    %v1875 = vld [vmem:[%s1869 + $0x28] sm:$0xff]
    %v1876 = vld [vmem:[%s1869 + $0x30] sm:$0xff]
    %v1877 = vld [vmem:[%s1869 + $0x38] sm:$0xff]
    %v1878 = vld [vmem:[%s1869 + $0x40] sm:$0xff]
    %v1879 = vld [vmem:[%s1869 + $0x48] sm:$0xff]
    %v1880 = vld [vmem:[%s1869 + $0x50] sm:$0xff]
    %v1881 = vld [vmem:[%s1869 + $0x58] sm:$0xff]
    %v1882 = vld [vmem:[%s1869 + $0x60] sm:$0xff]
    %v1883 = vld [vmem:[%s1869 + $0x68] sm:$0xff]
    %v1884 = vld [vmem:[%s1869 + $0x70] sm:$0xff]
    %v1885 = vld [vmem:[%s1869 + $0x78] sm:$0xff]
    %v1886 = vld [vmem:[%s1869 + $0x80] sm:$0xff]
    %v1887 = vld [vmem:[%s1869 + $0x88] sm:$0xff]
    %v1888 = vld [vmem:[%s1869 + $0x90] sm:$0xff]
    %v1889 = vld [vmem:[%s1869 + $0x98] sm:$0xff]
    %v1890 = vld [vmem:[%s1869 + $0xa0] sm:$0xff]
    %v1891 = vld [vmem:[%s1869 + $0xa8] sm:$0xff]
    %v1892 = vld [vmem:[%s1869 + $0xb0] sm:$0xff]
    %v1893 = vld [vmem:[%s1869 + $0xb8] sm:$0xff]
    %v1894 = vld [vmem:[%s1869 + $0xc0] sm:$0xff]
    %v1895 = vld [vmem:[%s1869 + $0xc8] sm:$0xff]
    %v1896 = vld [vmem:[%s1869 + $0xd0] sm:$0xff]
    %v1897 = vld [vmem:[%s1869 + $0xd8] sm:$0xff]
    %v1898 = vld [vmem:[%s1869 + $0xe0] sm:$0xff]
    %v1899 = vld [vmem:[%s1869 + $0xe8] sm:$0xff]
    %v1900 = vld [vmem:[%s1869 + $0xf0] sm:$0xff]
    %v1901 = vld [vmem:[%s1869 + $0xf8] sm:$0xff]
    %v1902 = vld [vmem:[%s1869 + $0x100] sm:$0xff]
    %v1903 = vld [vmem:[%s1869 + $0x108] sm:$0xff]
    %v1904 = vld [vmem:[%s1869 + $0x110] sm:$0xff]
    %v1905 = vld [vmem:[%s1869 + $0x118] sm:$0xff]
    %1908 = vst [vmem:[#allocation1] ss:$9 sm:$0xff] %v1866
    %s1909 = scalar_lea.vmem [#allocation1], 1
    %1910 = vst [vmem:[%s1909] ss:$9 sm:$0xff] %v1868
    %v1911 = vld [vmem:[#allocation1] sm:$0xff]
    %v1912 = vld [vmem:[#allocation1 + $0x9] sm:$0xff]
    %v1913 = vld [vmem:[#allocation1 + $0x12] sm:$0xff]
    %v1916 = vsel %vm778, %v1913, 0
    %1918 = vmatpush.msra.mxu0 %v1885
    %1919 = vmatpush.msra.mxu0 %v1884
    %1920 = vmatpush.msra.mxu0 %v1883
    %1921 = vmatpush.msra.mxu0 %v1882
    %1922 = vmatpush.msra.mxu0 %v1881
    %1923 = vmatpush.msra.mxu0 %v1880
    %1924 = vmatpush.msra.mxu0 %v1879
    %1925 = vmatpush.msra.mxu0 %v1878
    %1926 = vmatpush.msra.mxu0 %v1877
    %1927 = vmatpush.msra.mxu0 %v1876
    %1928 = vmatpush.msra.mxu0 %v1875
    %1929 = vmatpush.msra.mxu0 %v1874
    %1930 = vmatpush.msra.mxu0 %v1873
    %1931 = vmatpush.msra.mxu0 %v1872
    %1932 = vmatpush.msra.mxu0 %v1871
    %1933 = vmatpush.msra.mxu0 %v1870
    %1934 = vmatmul.f32.gmra.mxu0 %v1911
    %v1935 = vpop.f32.mrf.mxu0
    %v1936 = vadd.f32 0.0, %v1935
    %1937 = vdwg.mxu0
    %1938 = vmatpush.msra.mxu0 %v1901
    %1939 = vmatpush.msra.mxu0 %v1900
    %1940 = vmatpush.msra.mxu0 %v1899
    %1941 = vmatpush.msra.mxu0 %v1898
    %1942 = vmatpush.msra.mxu0 %v1897
    %1943 = vmatpush.msra.mxu0 %v1896
    %1944 = vmatpush.msra.mxu0 %v1895
    %1945 = vmatpush.msra.mxu0 %v1894
    %1946 = vmatpush.msra.mxu0 %v1893
    %1947 = vmatpush.msra.mxu0 %v1892
    %1948 = vmatpush.msra.mxu0 %v1891
    %1949 = vmatpush.msra.mxu0 %v1890
    %1950 = vmatpush.msra.mxu0 %v1889
    %1951 = vmatpush.msra.mxu0 %v1888
    %1952 = vmatpush.msra.mxu0 %v1887
    %1953 = vmatpush.msra.mxu0 %v1886
    %1954 = vmatmul.f32.gmra.mxu0 %v1912
    %v1955 = vpop.f32.mrf.mxu0
    %v1956 = vadd.f32 %v1936, %v1955
    %1957 = vdwg.mxu0
    %1958 = vmatpush.msra.mxu0 0.0
    %1959 = vmatpush.msra.mxu0 0.0
    %1960 = vmatpush.msra.mxu0 0.0
    %1961 = vmatpush.msra.mxu0 0.0
    %1962 = vmatpush.msra.mxu0 0.0
    %1963 = vmatpush.msra.mxu0 0.0
    %1964 = vmatpush.msra.mxu0 0.0
    %1965 = vmatpush.msra.mxu0 0.0
    %1966 = vmatpush.msra.mxu0 0.0
    %1967 = vmatpush.msra.mxu0 0.0
    %1968 = vmatpush.msra.mxu0 0.0
    %1969 = vmatpush.msra.mxu0 0.0
    %1970 = vmatpush.msra.mxu0 %v1905
    %1971 = vmatpush.msra.mxu0 %v1904
    %1972 = vmatpush.msra.mxu0 %v1903
    %1973 = vmatpush.msra.mxu0 %v1902
    %1974 = vmatmul.f32.gmra.mxu0 %v1916
    %v1975 = vpop.f32.mrf.mxu0
    %v1976 = vadd.f32 %v1956, %v1975
    %1977 = vdwg.mxu0
    %v1978 = vadd.f32 %v1864, %v1976
    %s1979 = scalar_lea.vmem [#allocation2], 4
    %v1980 = vld [vmem:[%s1979] ss:$8 sm:$0x7]
    %s1981 = scalar_lea.vmem [#allocation2], 76
    %v1982 = vld [vmem:[%s1981] ss:$8 sm:$0x7]
    %s1983 = scalar_lea.vmem %s3, 1152
    %v1984 = vld [vmem:[%s1983] sm:$0xff]
    %v1985 = vld [vmem:[%s1983 + $0x8] sm:$0xff]
    %v1986 = vld [vmem:[%s1983 + $0x10] sm:$0xff]
    %v1987 = vld [vmem:[%s1983 + $0x18] sm:$0xff]
    %v1988 = vld [vmem:[%s1983 + $0x20] sm:$0xff]
    %v1989 = vld [vmem:[%s1983 + $0x28] sm:$0xff]
    %v1990 = vld [vmem:[%s1983 + $0x30] sm:$0xff]
    %v1991 = vld [vmem:[%s1983 + $0x38] sm:$0xff]
    %v1992 = vld [vmem:[%s1983 + $0x40] sm:$0xff]
    %v1993 = vld [vmem:[%s1983 + $0x48] sm:$0xff]
    %v1994 = vld [vmem:[%s1983 + $0x50] sm:$0xff]
    %v1995 = vld [vmem:[%s1983 + $0x58] sm:$0xff]
    %v1996 = vld [vmem:[%s1983 + $0x60] sm:$0xff]
    %v1997 = vld [vmem:[%s1983 + $0x68] sm:$0xff]
    %v1998 = vld [vmem:[%s1983 + $0x70] sm:$0xff]
    %v1999 = vld [vmem:[%s1983 + $0x78] sm:$0xff]
    %v2000 = vld [vmem:[%s1983 + $0x80] sm:$0xff]
    %v2001 = vld [vmem:[%s1983 + $0x88] sm:$0xff]
    %v2002 = vld [vmem:[%s1983 + $0x90] sm:$0xff]
    %v2003 = vld [vmem:[%s1983 + $0x98] sm:$0xff]
    %v2004 = vld [vmem:[%s1983 + $0xa0] sm:$0xff]
    %v2005 = vld [vmem:[%s1983 + $0xa8] sm:$0xff]
    %v2006 = vld [vmem:[%s1983 + $0xb0] sm:$0xff]
    %v2007 = vld [vmem:[%s1983 + $0xb8] sm:$0xff]
    %v2008 = vld [vmem:[%s1983 + $0xc0] sm:$0xff]
    %v2009 = vld [vmem:[%s1983 + $0xc8] sm:$0xff]
    %v2010 = vld [vmem:[%s1983 + $0xd0] sm:$0xff]
    %v2011 = vld [vmem:[%s1983 + $0xd8] sm:$0xff]
    %v2012 = vld [vmem:[%s1983 + $0xe0] sm:$0xff]
    %v2013 = vld [vmem:[%s1983 + $0xe8] sm:$0xff]
    %v2014 = vld [vmem:[%s1983 + $0xf0] sm:$0xff]
    %v2015 = vld [vmem:[%s1983 + $0xf8] sm:$0xff]
    %v2016 = vld [vmem:[%s1983 + $0x100] sm:$0xff]
    %v2017 = vld [vmem:[%s1983 + $0x108] sm:$0xff]
    %v2018 = vld [vmem:[%s1983 + $0x110] sm:$0xff]
    %v2019 = vld [vmem:[%s1983 + $0x118] sm:$0xff]
    %2022 = vst [vmem:[#allocation1] ss:$9 sm:$0xff] %v1980
    %s2023 = scalar_lea.vmem [#allocation1], 1
    %2024 = vst [vmem:[%s2023] ss:$9 sm:$0xff] %v1982
    %v2025 = vld [vmem:[#allocation1] sm:$0xff]
    %v2026 = vld [vmem:[#allocation1 + $0x9] sm:$0xff]
    %v2027 = vld [vmem:[#allocation1 + $0x12] sm:$0xff]
    %v2030 = vsel %vm778, %v2027, 0
    %2032 = vmatpush.msra.mxu0 %v1999
    %2033 = vmatpush.msra.mxu0 %v1998
    %2034 = vmatpush.msra.mxu0 %v1997
    %2035 = vmatpush.msra.mxu0 %v1996
    %2036 = vmatpush.msra.mxu0 %v1995
    %2037 = vmatpush.msra.mxu0 %v1994
    %2038 = vmatpush.msra.mxu0 %v1993
    %2039 = vmatpush.msra.mxu0 %v1992
    %2040 = vmatpush.msra.mxu0 %v1991
    %2041 = vmatpush.msra.mxu0 %v1990
    %2042 = vmatpush.msra.mxu0 %v1989
    %2043 = vmatpush.msra.mxu0 %v1988
    %2044 = vmatpush.msra.mxu0 %v1987
    %2045 = vmatpush.msra.mxu0 %v1986
    %2046 = vmatpush.msra.mxu0 %v1985
    %2047 = vmatpush.msra.mxu0 %v1984
    %2048 = vmatmul.f32.gmra.mxu0 %v2025
    %v2049 = vpop.f32.mrf.mxu0
    %v2050 = vadd.f32 0.0, %v2049
    %2051 = vdwg.mxu0
    %2052 = vmatpush.msra.mxu0 %v2015
    %2053 = vmatpush.msra.mxu0 %v2014
    %2054 = vmatpush.msra.mxu0 %v2013
    %2055 = vmatpush.msra.mxu0 %v2012
    %2056 = vmatpush.msra.mxu0 %v2011
    %2057 = vmatpush.msra.mxu0 %v2010
    %2058 = vmatpush.msra.mxu0 %v2009
    %2059 = vmatpush.msra.mxu0 %v2008
    %2060 = vmatpush.msra.mxu0 %v2007
    %2061 = vmatpush.msra.mxu0 %v2006
    %2062 = vmatpush.msra.mxu0 %v2005
    %2063 = vmatpush.msra.mxu0 %v2004
    %2064 = vmatpush.msra.mxu0 %v2003
    %2065 = vmatpush.msra.mxu0 %v2002
    %2066 = vmatpush.msra.mxu0 %v2001
    %2067 = vmatpush.msra.mxu0 %v2000
    %2068 = vmatmul.f32.gmra.mxu0 %v2026
    %v2069 = vpop.f32.mrf.mxu0
    %v2070 = vadd.f32 %v2050, %v2069
    %2071 = vdwg.mxu0
    %2072 = vmatpush.msra.mxu0 0.0
    %2073 = vmatpush.msra.mxu0 0.0
    %2074 = vmatpush.msra.mxu0 0.0
    %2075 = vmatpush.msra.mxu0 0.0
    %2076 = vmatpush.msra.mxu0 0.0
    %2077 = vmatpush.msra.mxu0 0.0
    %2078 = vmatpush.msra.mxu0 0.0
    %2079 = vmatpush.msra.mxu0 0.0
    %2080 = vmatpush.msra.mxu0 0.0
    %2081 = vmatpush.msra.mxu0 0.0
    %2082 = vmatpush.msra.mxu0 0.0
    %2083 = vmatpush.msra.mxu0 0.0
    %2084 = vmatpush.msra.mxu0 %v2019
    %2085 = vmatpush.msra.mxu0 %v2018
    %2086 = vmatpush.msra.mxu0 %v2017
    %2087 = vmatpush.msra.mxu0 %v2016
    %2088 = vmatmul.f32.gmra.mxu0 %v2030
    %v2089 = vpop.f32.mrf.mxu0
    %v2090 = vadd.f32 %v2070, %v2089
    %2091 = vdwg.mxu0
    %v2092 = vadd.f32 %v1978, %v2090
    %v2093 = vld [vmem:[%s4] sm:$0x1]
    %v2095 = vperm.slane %v2093, 0
    %v2097 = vadd.f32 %v2092, %v2095
    %v2098 = vmax.f32 %v2097, 0.0
    %v2100 = vrot.slane %v2098, 1
    %vm2102 = vcmask 909312
    %2103 = vst.msk [vmem:[#allocation3] sm:$0x1] %vm2102, %v2098
    %2104 = vst.msk [vmem:[#allocation3 + $0x8] sm:$0x1] %vm2102, %v2100
    %v2105 = vld [vmem:[%s1751] ss:$8 sm:$0x7]
    %v2106 = vld [vmem:[%s1753] ss:$8 sm:$0x7]
    %v2107 = vld [vmem:[%s3] sm:$0xff]
    %v2108 = vld [vmem:[%s3 + $0x8] sm:$0xff]
    %v2109 = vld [vmem:[%s3 + $0x10] sm:$0xff]
    %v2110 = vld [vmem:[%s3 + $0x18] sm:$0xff]
    %v2111 = vld [vmem:[%s3 + $0x20] sm:$0xff]
    %v2112 = vld [vmem:[%s3 + $0x28] sm:$0xff]
    %v2113 = vld [vmem:[%s3 + $0x30] sm:$0xff]
    %v2114 = vld [vmem:[%s3 + $0x38] sm:$0xff]
    %v2115 = vld [vmem:[%s3 + $0x40] sm:$0xff]
    %v2116 = vld [vmem:[%s3 + $0x48] sm:$0xff]
    %v2117 = vld [vmem:[%s3 + $0x50] sm:$0xff]
    %v2118 = vld [vmem:[%s3 + $0x58] sm:$0xff]
    %v2119 = vld [vmem:[%s3 + $0x60] sm:$0xff]
    %v2120 = vld [vmem:[%s3 + $0x68] sm:$0xff]
    %v2121 = vld [vmem:[%s3 + $0x70] sm:$0xff]
    %v2122 = vld [vmem:[%s3 + $0x78] sm:$0xff]
    %v2123 = vld [vmem:[%s3 + $0x80] sm:$0xff]
    %v2124 = vld [vmem:[%s3 + $0x88] sm:$0xff]
    %v2125 = vld [vmem:[%s3 + $0x90] sm:$0xff]
    %v2126 = vld [vmem:[%s3 + $0x98] sm:$0xff]
    %v2127 = vld [vmem:[%s3 + $0xa0] sm:$0xff]
    %v2128 = vld [vmem:[%s3 + $0xa8] sm:$0xff]
    %v2129 = vld [vmem:[%s3 + $0xb0] sm:$0xff]
    %v2130 = vld [vmem:[%s3 + $0xb8] sm:$0xff]
    %v2131 = vld [vmem:[%s3 + $0xc0] sm:$0xff]
    %v2132 = vld [vmem:[%s3 + $0xc8] sm:$0xff]
    %v2133 = vld [vmem:[%s3 + $0xd0] sm:$0xff]
    %v2134 = vld [vmem:[%s3 + $0xd8] sm:$0xff]
    %v2135 = vld [vmem:[%s3 + $0xe0] sm:$0xff]
    %v2136 = vld [vmem:[%s3 + $0xe8] sm:$0xff]
    %v2137 = vld [vmem:[%s3 + $0xf0] sm:$0xff]
    %v2138 = vld [vmem:[%s3 + $0xf8] sm:$0xff]
    %v2139 = vld [vmem:[%s3 + $0x100] sm:$0xff]
    %v2140 = vld [vmem:[%s3 + $0x108] sm:$0xff]
    %v2141 = vld [vmem:[%s3 + $0x110] sm:$0xff]
    %v2142 = vld [vmem:[%s3 + $0x118] sm:$0xff]
    %v2143 = vld [vmem:[%s1865] ss:$8 sm:$0x7]
    %v2144 = vld [vmem:[%s1867] ss:$8 sm:$0x7]
    %v2145 = vld [vmem:[%s1570] sm:$0xff]
    %v2146 = vld [vmem:[%s1570 + $0x8] sm:$0xff]
    %v2147 = vld [vmem:[%s1570 + $0x10] sm:$0xff]
    %v2148 = vld [vmem:[%s1570 + $0x18] sm:$0xff]
    %v2149 = vld [vmem:[%s1570 + $0x20] sm:$0xff]
    %v2150 = vld [vmem:[%s1570 + $0x28] sm:$0xff]
    %v2151 = vld [vmem:[%s1570 + $0x30] sm:$0xff]
    %v2152 = vld [vmem:[%s1570 + $0x38] sm:$0xff]
    %v2153 = vld [vmem:[%s1570 + $0x40] sm:$0xff]
    %v2154 = vld [vmem:[%s1570 + $0x48] sm:$0xff]
    %v2155 = vld [vmem:[%s1570 + $0x50] sm:$0xff]
    %v2156 = vld [vmem:[%s1570 + $0x58] sm:$0xff]
    %v2157 = vld [vmem:[%s1570 + $0x60] sm:$0xff]
    %v2158 = vld [vmem:[%s1570 + $0x68] sm:$0xff]
    %v2159 = vld [vmem:[%s1570 + $0x70] sm:$0xff]
    %v2160 = vld [vmem:[%s1570 + $0x78] sm:$0xff]
    %v2161 = vld [vmem:[%s1570 + $0x80] sm:$0xff]
    %v2162 = vld [vmem:[%s1570 + $0x88] sm:$0xff]
    %v2163 = vld [vmem:[%s1570 + $0x90] sm:$0xff]
    %v2164 = vld [vmem:[%s1570 + $0x98] sm:$0xff]
    %v2165 = vld [vmem:[%s1570 + $0xa0] sm:$0xff]
    %v2166 = vld [vmem:[%s1570 + $0xa8] sm:$0xff]
    %v2167 = vld [vmem:[%s1570 + $0xb0] sm:$0xff]
    %v2168 = vld [vmem:[%s1570 + $0xb8] sm:$0xff]
    %v2169 = vld [vmem:[%s1570 + $0xc0] sm:$0xff]
    %v2170 = vld [vmem:[%s1570 + $0xc8] sm:$0xff]
    %v2171 = vld [vmem:[%s1570 + $0xd0] sm:$0xff]
    %v2172 = vld [vmem:[%s1570 + $0xd8] sm:$0xff]
    %v2173 = vld [vmem:[%s1570 + $0xe0] sm:$0xff]
    %v2174 = vld [vmem:[%s1570 + $0xe8] sm:$0xff]
    %v2175 = vld [vmem:[%s1570 + $0xf0] sm:$0xff]
    %v2176 = vld [vmem:[%s1570 + $0xf8] sm:$0xff]
    %v2177 = vld [vmem:[%s1570 + $0x100] sm:$0xff]
    %v2178 = vld [vmem:[%s1570 + $0x108] sm:$0xff]
    %v2179 = vld [vmem:[%s1570 + $0x110] sm:$0xff]
    %v2180 = vld [vmem:[%s1570 + $0x118] sm:$0xff]
    %2183 = vst [vmem:[#allocation1] ss:$9 sm:$0xff] %v2143
    %s2184 = scalar_lea.vmem [#allocation1], 1
    %2185 = vst [vmem:[%s2184] ss:$9 sm:$0xff] %v2144
    %v2186 = vld [vmem:[#allocation1] sm:$0xff]
    %v2187 = vld [vmem:[#allocation1 + $0x9] sm:$0xff]
    %v2188 = vld [vmem:[#allocation1 + $0x12] sm:$0xff]
    %v2191 = vsel %vm778, %v2188, 0
    %2193 = vmatpush.msra.mxu0 %v2160
    %2194 = vmatpush.msra.mxu0 %v2159
    %2195 = vmatpush.msra.mxu0 %v2158
    %2196 = vmatpush.msra.mxu0 %v2157
    %2197 = vmatpush.msra.mxu0 %v2156
    %2198 = vmatpush.msra.mxu0 %v2155
    %2199 = vmatpush.msra.mxu0 %v2154
    %2200 = vmatpush.msra.mxu0 %v2153
    %2201 = vmatpush.msra.mxu0 %v2152
    %2202 = vmatpush.msra.mxu0 %v2151
    %2203 = vmatpush.msra.mxu0 %v2150
    %2204 = vmatpush.msra.mxu0 %v2149
    %2205 = vmatpush.msra.mxu0 %v2148
    %2206 = vmatpush.msra.mxu0 %v2147
    %2207 = vmatpush.msra.mxu0 %v2146
    %2208 = vmatpush.msra.mxu0 %v2145
    %2209 = vmatmul.f32.gmra.mxu0 %v2186
    %v2210 = vpop.f32.mrf.mxu0
    %v2211 = vadd.f32 0.0, %v2210
    %2212 = vdwg.mxu0
    %2213 = vmatpush.msra.mxu0 %v2176
    %2214 = vmatpush.msra.mxu0 %v2175
    %2215 = vmatpush.msra.mxu0 %v2174
    %2216 = vmatpush.msra.mxu0 %v2173
    %2217 = vmatpush.msra.mxu0 %v2172
    %2218 = vmatpush.msra.mxu0 %v2171
    %2219 = vmatpush.msra.mxu0 %v2170
    %2220 = vmatpush.msra.mxu0 %v2169
    %2221 = vmatpush.msra.mxu0 %v2168
    %2222 = vmatpush.msra.mxu0 %v2167
    %2223 = vmatpush.msra.mxu0 %v2166
    %2224 = vmatpush.msra.mxu0 %v2165
    %2225 = vmatpush.msra.mxu0 %v2164
    %2226 = vmatpush.msra.mxu0 %v2163
    %2227 = vmatpush.msra.mxu0 %v2162
    %2228 = vmatpush.msra.mxu0 %v2161
    %2229 = vmatmul.f32.gmra.mxu0 %v2187
    %v2230 = vpop.f32.mrf.mxu0
    %v2231 = vadd.f32 %v2211, %v2230
    %2232 = vdwg.mxu0
    %2233 = vmatpush.msra.mxu0 0.0
    %2234 = vmatpush.msra.mxu0 0.0
    %2235 = vmatpush.msra.mxu0 0.0
    %2236 = vmatpush.msra.mxu0 0.0
    %2237 = vmatpush.msra.mxu0 0.0
    %2238 = vmatpush.msra.mxu0 0.0
    %2239 = vmatpush.msra.mxu0 0.0
    %2240 = vmatpush.msra.mxu0 0.0
    %2241 = vmatpush.msra.mxu0 0.0
    %2242 = vmatpush.msra.mxu0 0.0
    %2243 = vmatpush.msra.mxu0 0.0
    %2244 = vmatpush.msra.mxu0 0.0
    %2245 = vmatpush.msra.mxu0 %v2180
    %2246 = vmatpush.msra.mxu0 %v2179
    %2247 = vmatpush.msra.mxu0 %v2178
    %2248 = vmatpush.msra.mxu0 %v2177
    %2249 = vmatmul.f32.gmra.mxu0 %v2191
    %v2250 = vpop.f32.mrf.mxu0
    %v2251 = vadd.f32 %v2231, %v2250
    %2252 = vdwg.mxu0
    %2255 = vst [vmem:[#allocation1] ss:$9 sm:$0xff] %v2105
    %s2256 = scalar_lea.vmem [#allocation1], 1
    %2257 = vst [vmem:[%s2256] ss:$9 sm:$0xff] %v2106
    %v2258 = vld [vmem:[#allocation1] sm:$0xff]
    %v2259 = vld [vmem:[#allocation1 + $0x9] sm:$0xff]
    %v2260 = vld [vmem:[#allocation1 + $0x12] sm:$0xff]
    %v2263 = vsel %vm778, %v2260, 0
    %2265 = vmatpush.msra.mxu0 %v2122
    %2266 = vmatpush.msra.mxu0 %v2121
    %2267 = vmatpush.msra.mxu0 %v2120
    %2268 = vmatpush.msra.mxu0 %v2119
    %2269 = vmatpush.msra.mxu0 %v2118
    %2270 = vmatpush.msra.mxu0 %v2117
    %2271 = vmatpush.msra.mxu0 %v2116
    %2272 = vmatpush.msra.mxu0 %v2115
    %2273 = vmatpush.msra.mxu0 %v2114
    %2274 = vmatpush.msra.mxu0 %v2113
    %2275 = vmatpush.msra.mxu0 %v2112
    %2276 = vmatpush.msra.mxu0 %v2111
    %2277 = vmatpush.msra.mxu0 %v2110
    %2278 = vmatpush.msra.mxu0 %v2109
    %2279 = vmatpush.msra.mxu0 %v2108
    %2280 = vmatpush.msra.mxu0 %v2107
    %2281 = vmatmul.f32.gmra.mxu0 %v2258
    %v2282 = vpop.f32.mrf.mxu0
    %v2283 = vadd.f32 %v2251, %v2282
    %2284 = vdwg.mxu0
    %2285 = vmatpush.msra.mxu0 %v2138
    %2286 = vmatpush.msra.mxu0 %v2137
    %2287 = vmatpush.msra.mxu0 %v2136
    %2288 = vmatpush.msra.mxu0 %v2135
    %2289 = vmatpush.msra.mxu0 %v2134
    %2290 = vmatpush.msra.mxu0 %v2133
    %2291 = vmatpush.msra.mxu0 %v2132
    %2292 = vmatpush.msra.mxu0 %v2131
    %2293 = vmatpush.msra.mxu0 %v2130
    %2294 = vmatpush.msra.mxu0 %v2129
    %2295 = vmatpush.msra.mxu0 %v2128
    %2296 = vmatpush.msra.mxu0 %v2127
    %2297 = vmatpush.msra.mxu0 %v2126
    %2298 = vmatpush.msra.mxu0 %v2125
    %2299 = vmatpush.msra.mxu0 %v2124
    %2300 = vmatpush.msra.mxu0 %v2123
    %2301 = vmatmul.f32.gmra.mxu0 %v2259
    %v2302 = vpop.f32.mrf.mxu0
    %v2303 = vadd.f32 %v2283, %v2302
    %2304 = vdwg.mxu0
    %2305 = vmatpush.msra.mxu0 0.0
    %2306 = vmatpush.msra.mxu0 0.0
    %2307 = vmatpush.msra.mxu0 0.0
    %2308 = vmatpush.msra.mxu0 0.0
    %2309 = vmatpush.msra.mxu0 0.0
    %2310 = vmatpush.msra.mxu0 0.0
    %2311 = vmatpush.msra.mxu0 0.0
    %2312 = vmatpush.msra.mxu0 0.0
    %2313 = vmatpush.msra.mxu0 0.0
    %2314 = vmatpush.msra.mxu0 0.0
    %2315 = vmatpush.msra.mxu0 0.0
    %2316 = vmatpush.msra.mxu0 0.0
    %2317 = vmatpush.msra.mxu0 %v2142
    %2318 = vmatpush.msra.mxu0 %v2141
    %2319 = vmatpush.msra.mxu0 %v2140
    %2320 = vmatpush.msra.mxu0 %v2139
    %2321 = vmatmul.f32.gmra.mxu0 %v2263
    %v2322 = vpop.f32.mrf.mxu0
    %v2323 = vadd.f32 %v2303, %v2322
    %2324 = vdwg.mxu0
    %v2325 = vld [vmem:[%s1979] ss:$8 sm:$0x7]
    %v2326 = vld [vmem:[%s1981] ss:$8 sm:$0x7]
    %v2327 = vld [vmem:[%s1755] sm:$0xff]
    %v2328 = vld [vmem:[%s1755 + $0x8] sm:$0xff]
    %v2329 = vld [vmem:[%s1755 + $0x10] sm:$0xff]
    %v2330 = vld [vmem:[%s1755 + $0x18] sm:$0xff]
    %v2331 = vld [vmem:[%s1755 + $0x20] sm:$0xff]
    %v2332 = vld [vmem:[%s1755 + $0x28] sm:$0xff]
    %v2333 = vld [vmem:[%s1755 + $0x30] sm:$0xff]
    %v2334 = vld [vmem:[%s1755 + $0x38] sm:$0xff]
    %v2335 = vld [vmem:[%s1755 + $0x40] sm:$0xff]
    %v2336 = vld [vmem:[%s1755 + $0x48] sm:$0xff]
    %v2337 = vld [vmem:[%s1755 + $0x50] sm:$0xff]
    %v2338 = vld [vmem:[%s1755 + $0x58] sm:$0xff]
    %v2339 = vld [vmem:[%s1755 + $0x60] sm:$0xff]
    %v2340 = vld [vmem:[%s1755 + $0x68] sm:$0xff]
    %v2341 = vld [vmem:[%s1755 + $0x70] sm:$0xff]
    %v2342 = vld [vmem:[%s1755 + $0x78] sm:$0xff]
    %v2343 = vld [vmem:[%s1755 + $0x80] sm:$0xff]
    %v2344 = vld [vmem:[%s1755 + $0x88] sm:$0xff]
    %v2345 = vld [vmem:[%s1755 + $0x90] sm:$0xff]
    %v2346 = vld [vmem:[%s1755 + $0x98] sm:$0xff]
    %v2347 = vld [vmem:[%s1755 + $0xa0] sm:$0xff]
    %v2348 = vld [vmem:[%s1755 + $0xa8] sm:$0xff]
    %v2349 = vld [vmem:[%s1755 + $0xb0] sm:$0xff]
    %v2350 = vld [vmem:[%s1755 + $0xb8] sm:$0xff]
    %v2351 = vld [vmem:[%s1755 + $0xc0] sm:$0xff]
    %v2352 = vld [vmem:[%s1755 + $0xc8] sm:$0xff]
    %v2353 = vld [vmem:[%s1755 + $0xd0] sm:$0xff]
    %v2354 = vld [vmem:[%s1755 + $0xd8] sm:$0xff]
    %v2355 = vld [vmem:[%s1755 + $0xe0] sm:$0xff]
    %v2356 = vld [vmem:[%s1755 + $0xe8] sm:$0xff]
    %v2357 = vld [vmem:[%s1755 + $0xf0] sm:$0xff]
    %v2358 = vld [vmem:[%s1755 + $0xf8] sm:$0xff]
    %v2359 = vld [vmem:[%s1755 + $0x100] sm:$0xff]
    %v2360 = vld [vmem:[%s1755 + $0x108] sm:$0xff]
    %v2361 = vld [vmem:[%s1755 + $0x110] sm:$0xff]
    %v2362 = vld [vmem:[%s1755 + $0x118] sm:$0xff]
    %2365 = vst [vmem:[#allocation1] ss:$9 sm:$0xff] %v2325
    %s2366 = scalar_lea.vmem [#allocation1], 1
    %2367 = vst [vmem:[%s2366] ss:$9 sm:$0xff] %v2326
    %v2368 = vld [vmem:[#allocation1] sm:$0xff]
    %v2369 = vld [vmem:[#allocation1 + $0x9] sm:$0xff]
    %v2370 = vld [vmem:[#allocation1 + $0x12] sm:$0xff]
    %v2373 = vsel %vm778, %v2370, 0
    %2375 = vmatpush.msra.mxu0 %v2342
    %2376 = vmatpush.msra.mxu0 %v2341
    %2377 = vmatpush.msra.mxu0 %v2340
    %2378 = vmatpush.msra.mxu0 %v2339
    %2379 = vmatpush.msra.mxu0 %v2338
    %2380 = vmatpush.msra.mxu0 %v2337
    %2381 = vmatpush.msra.mxu0 %v2336
    %2382 = vmatpush.msra.mxu0 %v2335
    %2383 = vmatpush.msra.mxu0 %v2334
    %2384 = vmatpush.msra.mxu0 %v2333
    %2385 = vmatpush.msra.mxu0 %v2332
    %2386 = vmatpush.msra.mxu0 %v2331
    %2387 = vmatpush.msra.mxu0 %v2330
    %2388 = vmatpush.msra.mxu0 %v2329
    %2389 = vmatpush.msra.mxu0 %v2328
    %2390 = vmatpush.msra.mxu0 %v2327
    %2391 = vmatmul.f32.gmra.mxu0 %v2368
    %v2392 = vpop.f32.mrf.mxu0
    %v2393 = vadd.f32 0.0, %v2392
    %2394 = vdwg.mxu0
    %2395 = vmatpush.msra.mxu0 %v2358
    %2396 = vmatpush.msra.mxu0 %v2357
    %2397 = vmatpush.msra.mxu0 %v2356
    %2398 = vmatpush.msra.mxu0 %v2355
    %2399 = vmatpush.msra.mxu0 %v2354
    %2400 = vmatpush.msra.mxu0 %v2353
    %2401 = vmatpush.msra.mxu0 %v2352
    %2402 = vmatpush.msra.mxu0 %v2351
    %2403 = vmatpush.msra.mxu0 %v2350
    %2404 = vmatpush.msra.mxu0 %v2349
    %2405 = vmatpush.msra.mxu0 %v2348
    %2406 = vmatpush.msra.mxu0 %v2347
    %2407 = vmatpush.msra.mxu0 %v2346
    %2408 = vmatpush.msra.mxu0 %v2345
    %2409 = vmatpush.msra.mxu0 %v2344
    %2410 = vmatpush.msra.mxu0 %v2343
    %2411 = vmatmul.f32.gmra.mxu0 %v2369
    %v2412 = vpop.f32.mrf.mxu0
    %v2413 = vadd.f32 %v2393, %v2412
    %2414 = vdwg.mxu0
    %2415 = vmatpush.msra.mxu0 0.0
    %2416 = vmatpush.msra.mxu0 0.0
    %2417 = vmatpush.msra.mxu0 0.0
    %2418 = vmatpush.msra.mxu0 0.0
    %2419 = vmatpush.msra.mxu0 0.0
    %2420 = vmatpush.msra.mxu0 0.0
    %2421 = vmatpush.msra.mxu0 0.0
    %2422 = vmatpush.msra.mxu0 0.0
    %2423 = vmatpush.msra.mxu0 0.0
    %2424 = vmatpush.msra.mxu0 0.0
    %2425 = vmatpush.msra.mxu0 0.0
    %2426 = vmatpush.msra.mxu0 0.0
    %2427 = vmatpush.msra.mxu0 %v2362
    %2428 = vmatpush.msra.mxu0 %v2361
    %2429 = vmatpush.msra.mxu0 %v2360
    %2430 = vmatpush.msra.mxu0 %v2359
    %2431 = vmatmul.f32.gmra.mxu0 %v2373
    %v2432 = vpop.f32.mrf.mxu0
    %v2433 = vadd.f32 %v2413, %v2432
    %2434 = vdwg.mxu0
    %v2435 = vadd.f32 %v2323, %v2433
    %s2436 = scalar_lea.vmem [#allocation2], 5
    %v2437 = vld [vmem:[%s2436] ss:$8 sm:$0x7]
    %s2438 = scalar_lea.vmem [#allocation2], 77
    %v2439 = vld [vmem:[%s2438] ss:$8 sm:$0x7]
    %v2440 = vld [vmem:[%s1869] sm:$0xff]
    %v2441 = vld [vmem:[%s1869 + $0x8] sm:$0xff]
    %v2442 = vld [vmem:[%s1869 + $0x10] sm:$0xff]
    %v2443 = vld [vmem:[%s1869 + $0x18] sm:$0xff]
    %v2444 = vld [vmem:[%s1869 + $0x20] sm:$0xff]
    %v2445 = vld [vmem:[%s1869 + $0x28] sm:$0xff]
    %v2446 = vld [vmem:[%s1869 + $0x30] sm:$0xff]
    %v2447 = vld [vmem:[%s1869 + $0x38] sm:$0xff]
    %v2448 = vld [vmem:[%s1869 + $0x40] sm:$0xff]
    %v2449 = vld [vmem:[%s1869 + $0x48] sm:$0xff]
    %v2450 = vld [vmem:[%s1869 + $0x50] sm:$0xff]
    %v2451 = vld [vmem:[%s1869 + $0x58] sm:$0xff]
    %v2452 = vld [vmem:[%s1869 + $0x60] sm:$0xff]
    %v2453 = vld [vmem:[%s1869 + $0x68] sm:$0xff]
    %v2454 = vld [vmem:[%s1869 + $0x70] sm:$0xff]
    %v2455 = vld [vmem:[%s1869 + $0x78] sm:$0xff]
    %v2456 = vld [vmem:[%s1869 + $0x80] sm:$0xff]
    %v2457 = vld [vmem:[%s1869 + $0x88] sm:$0xff]
    %v2458 = vld [vmem:[%s1869 + $0x90] sm:$0xff]
    %v2459 = vld [vmem:[%s1869 + $0x98] sm:$0xff]
    %v2460 = vld [vmem:[%s1869 + $0xa0] sm:$0xff]
    %v2461 = vld [vmem:[%s1869 + $0xa8] sm:$0xff]
    %v2462 = vld [vmem:[%s1869 + $0xb0] sm:$0xff]
    %v2463 = vld [vmem:[%s1869 + $0xb8] sm:$0xff]
    %v2464 = vld [vmem:[%s1869 + $0xc0] sm:$0xff]
    %v2465 = vld [vmem:[%s1869 + $0xc8] sm:$0xff]
    %v2466 = vld [vmem:[%s1869 + $0xd0] sm:$0xff]
    %v2467 = vld [vmem:[%s1869 + $0xd8] sm:$0xff]
    %v2468 = vld [vmem:[%s1869 + $0xe0] sm:$0xff]
    %v2469 = vld [vmem:[%s1869 + $0xe8] sm:$0xff]
    %v2470 = vld [vmem:[%s1869 + $0xf0] sm:$0xff]
    %v2471 = vld [vmem:[%s1869 + $0xf8] sm:$0xff]
    %v2472 = vld [vmem:[%s1869 + $0x100] sm:$0xff]
    %v2473 = vld [vmem:[%s1869 + $0x108] sm:$0xff]
    %v2474 = vld [vmem:[%s1869 + $0x110] sm:$0xff]
    %v2475 = vld [vmem:[%s1869 + $0x118] sm:$0xff]
    %2478 = vst [vmem:[#allocation1] ss:$9 sm:$0xff] %v2437
    %s2479 = scalar_lea.vmem [#allocation1], 1
    %2480 = vst [vmem:[%s2479] ss:$9 sm:$0xff] %v2439
    %v2481 = vld [vmem:[#allocation1] sm:$0xff]
    %v2482 = vld [vmem:[#allocation1 + $0x9] sm:$0xff]
    %v2483 = vld [vmem:[#allocation1 + $0x12] sm:$0xff]
    %v2486 = vsel %vm778, %v2483, 0
    %2488 = vmatpush.msra.mxu0 %v2455
    %2489 = vmatpush.msra.mxu0 %v2454
    %2490 = vmatpush.msra.mxu0 %v2453
    %2491 = vmatpush.msra.mxu0 %v2452
    %2492 = vmatpush.msra.mxu0 %v2451
    %2493 = vmatpush.msra.mxu0 %v2450
    %2494 = vmatpush.msra.mxu0 %v2449
    %2495 = vmatpush.msra.mxu0 %v2448
    %2496 = vmatpush.msra.mxu0 %v2447
    %2497 = vmatpush.msra.mxu0 %v2446
    %2498 = vmatpush.msra.mxu0 %v2445
    %2499 = vmatpush.msra.mxu0 %v2444
    %2500 = vmatpush.msra.mxu0 %v2443
    %2501 = vmatpush.msra.mxu0 %v2442
    %2502 = vmatpush.msra.mxu0 %v2441
    %2503 = vmatpush.msra.mxu0 %v2440
    %2504 = vmatmul.f32.gmra.mxu0 %v2481
    %v2505 = vpop.f32.mrf.mxu0
    %v2506 = vadd.f32 0.0, %v2505
    %2507 = vdwg.mxu0
    %2508 = vmatpush.msra.mxu0 %v2471
    %2509 = vmatpush.msra.mxu0 %v2470
    %2510 = vmatpush.msra.mxu0 %v2469
    %2511 = vmatpush.msra.mxu0 %v2468
    %2512 = vmatpush.msra.mxu0 %v2467
    %2513 = vmatpush.msra.mxu0 %v2466
    %2514 = vmatpush.msra.mxu0 %v2465
    %2515 = vmatpush.msra.mxu0 %v2464
    %2516 = vmatpush.msra.mxu0 %v2463
    %2517 = vmatpush.msra.mxu0 %v2462
    %2518 = vmatpush.msra.mxu0 %v2461
    %2519 = vmatpush.msra.mxu0 %v2460
    %2520 = vmatpush.msra.mxu0 %v2459
    %2521 = vmatpush.msra.mxu0 %v2458
    %2522 = vmatpush.msra.mxu0 %v2457
    %2523 = vmatpush.msra.mxu0 %v2456
    %2524 = vmatmul.f32.gmra.mxu0 %v2482
    %v2525 = vpop.f32.mrf.mxu0
    %v2526 = vadd.f32 %v2506, %v2525
    %2527 = vdwg.mxu0
    %2528 = vmatpush.msra.mxu0 0.0
    %2529 = vmatpush.msra.mxu0 0.0
    %2530 = vmatpush.msra.mxu0 0.0
    %2531 = vmatpush.msra.mxu0 0.0
    %2532 = vmatpush.msra.mxu0 0.0
    %2533 = vmatpush.msra.mxu0 0.0
    %2534 = vmatpush.msra.mxu0 0.0
    %2535 = vmatpush.msra.mxu0 0.0
    %2536 = vmatpush.msra.mxu0 0.0
    %2537 = vmatpush.msra.mxu0 0.0
    %2538 = vmatpush.msra.mxu0 0.0
    %2539 = vmatpush.msra.mxu0 0.0
    %2540 = vmatpush.msra.mxu0 %v2475
    %2541 = vmatpush.msra.mxu0 %v2474
    %2542 = vmatpush.msra.mxu0 %v2473
    %2543 = vmatpush.msra.mxu0 %v2472
    %2544 = vmatmul.f32.gmra.mxu0 %v2486
    %v2545 = vpop.f32.mrf.mxu0
    %v2546 = vadd.f32 %v2526, %v2545
    %2547 = vdwg.mxu0
    %v2548 = vadd.f32 %v2435, %v2546
    %s2549 = scalar_lea.vmem [#allocation2], 6
    %v2550 = vld [vmem:[%s2549] ss:$8 sm:$0x7]
    %s2551 = scalar_lea.vmem [#allocation2], 78
    %v2552 = vld [vmem:[%s2551] ss:$8 sm:$0x7]
    %v2553 = vld [vmem:[%s1983] sm:$0xff]
    %v2554 = vld [vmem:[%s1983 + $0x8] sm:$0xff]
    %v2555 = vld [vmem:[%s1983 + $0x10] sm:$0xff]
    %v2556 = vld [vmem:[%s1983 + $0x18] sm:$0xff]
    %v2557 = vld [vmem:[%s1983 + $0x20] sm:$0xff]
    %v2558 = vld [vmem:[%s1983 + $0x28] sm:$0xff]
    %v2559 = vld [vmem:[%s1983 + $0x30] sm:$0xff]
    %v2560 = vld [vmem:[%s1983 + $0x38] sm:$0xff]
    %v2561 = vld [vmem:[%s1983 + $0x40] sm:$0xff]
    %v2562 = vld [vmem:[%s1983 + $0x48] sm:$0xff]
    %v2563 = vld [vmem:[%s1983 + $0x50] sm:$0xff]
    %v2564 = vld [vmem:[%s1983 + $0x58] sm:$0xff]
    %v2565 = vld [vmem:[%s1983 + $0x60] sm:$0xff]
    %v2566 = vld [vmem:[%s1983 + $0x68] sm:$0xff]
    %v2567 = vld [vmem:[%s1983 + $0x70] sm:$0xff]
    %v2568 = vld [vmem:[%s1983 + $0x78] sm:$0xff]
    %v2569 = vld [vmem:[%s1983 + $0x80] sm:$0xff]
    %v2570 = vld [vmem:[%s1983 + $0x88] sm:$0xff]
    %v2571 = vld [vmem:[%s1983 + $0x90] sm:$0xff]
    %v2572 = vld [vmem:[%s1983 + $0x98] sm:$0xff]
    %v2573 = vld [vmem:[%s1983 + $0xa0] sm:$0xff]
    %v2574 = vld [vmem:[%s1983 + $0xa8] sm:$0xff]
    %v2575 = vld [vmem:[%s1983 + $0xb0] sm:$0xff]
    %v2576 = vld [vmem:[%s1983 + $0xb8] sm:$0xff]
    %v2577 = vld [vmem:[%s1983 + $0xc0] sm:$0xff]
    %v2578 = vld [vmem:[%s1983 + $0xc8] sm:$0xff]
    %v2579 = vld [vmem:[%s1983 + $0xd0] sm:$0xff]
    %v2580 = vld [vmem:[%s1983 + $0xd8] sm:$0xff]
    %v2581 = vld [vmem:[%s1983 + $0xe0] sm:$0xff]
    %v2582 = vld [vmem:[%s1983 + $0xe8] sm:$0xff]
    %v2583 = vld [vmem:[%s1983 + $0xf0] sm:$0xff]
    %v2584 = vld [vmem:[%s1983 + $0xf8] sm:$0xff]
    %v2585 = vld [vmem:[%s1983 + $0x100] sm:$0xff]
    %v2586 = vld [vmem:[%s1983 + $0x108] sm:$0xff]
    %v2587 = vld [vmem:[%s1983 + $0x110] sm:$0xff]
    %v2588 = vld [vmem:[%s1983 + $0x118] sm:$0xff]
    %2591 = vst [vmem:[#allocation1] ss:$9 sm:$0xff] %v2550
    %s2592 = scalar_lea.vmem [#allocation1], 1
    %2593 = vst [vmem:[%s2592] ss:$9 sm:$0xff] %v2552
    %v2594 = vld [vmem:[#allocation1] sm:$0xff]
    %v2595 = vld [vmem:[#allocation1 + $0x9] sm:$0xff]
    %v2596 = vld [vmem:[#allocation1 + $0x12] sm:$0xff]
    %v2599 = vsel %vm778, %v2596, 0
    %2601 = vmatpush.msra.mxu0 %v2568
    %2602 = vmatpush.msra.mxu0 %v2567
    %2603 = vmatpush.msra.mxu0 %v2566
    %2604 = vmatpush.msra.mxu0 %v2565
    %2605 = vmatpush.msra.mxu0 %v2564
    %2606 = vmatpush.msra.mxu0 %v2563
    %2607 = vmatpush.msra.mxu0 %v2562
    %2608 = vmatpush.msra.mxu0 %v2561
    %2609 = vmatpush.msra.mxu0 %v2560
    %2610 = vmatpush.msra.mxu0 %v2559
    %2611 = vmatpush.msra.mxu0 %v2558
    %2612 = vmatpush.msra.mxu0 %v2557
    %2613 = vmatpush.msra.mxu0 %v2556
    %2614 = vmatpush.msra.mxu0 %v2555
    %2615 = vmatpush.msra.mxu0 %v2554
    %2616 = vmatpush.msra.mxu0 %v2553
    %2617 = vmatmul.f32.gmra.mxu0 %v2594
    %v2618 = vpop.f32.mrf.mxu0
    %v2619 = vadd.f32 0.0, %v2618
    %2620 = vdwg.mxu0
    %2621 = vmatpush.msra.mxu0 %v2584
    %2622 = vmatpush.msra.mxu0 %v2583
    %2623 = vmatpush.msra.mxu0 %v2582
    %2624 = vmatpush.msra.mxu0 %v2581
    %2625 = vmatpush.msra.mxu0 %v2580
    %2626 = vmatpush.msra.mxu0 %v2579
    %2627 = vmatpush.msra.mxu0 %v2578
    %2628 = vmatpush.msra.mxu0 %v2577
    %2629 = vmatpush.msra.mxu0 %v2576
    %2630 = vmatpush.msra.mxu0 %v2575
    %2631 = vmatpush.msra.mxu0 %v2574
    %2632 = vmatpush.msra.mxu0 %v2573
    %2633 = vmatpush.msra.mxu0 %v2572
    %2634 = vmatpush.msra.mxu0 %v2571
    %2635 = vmatpush.msra.mxu0 %v2570
    %2636 = vmatpush.msra.mxu0 %v2569
    %2637 = vmatmul.f32.gmra.mxu0 %v2595
    %v2638 = vpop.f32.mrf.mxu0
    %v2639 = vadd.f32 %v2619, %v2638
    %2640 = vdwg.mxu0
    %2641 = vmatpush.msra.mxu0 0.0
    %2642 = vmatpush.msra.mxu0 0.0
    %2643 = vmatpush.msra.mxu0 0.0
    %2644 = vmatpush.msra.mxu0 0.0
    %2645 = vmatpush.msra.mxu0 0.0
    %2646 = vmatpush.msra.mxu0 0.0
    %2647 = vmatpush.msra.mxu0 0.0
    %2648 = vmatpush.msra.mxu0 0.0
    %2649 = vmatpush.msra.mxu0 0.0
    %2650 = vmatpush.msra.mxu0 0.0
    %2651 = vmatpush.msra.mxu0 0.0
    %2652 = vmatpush.msra.mxu0 0.0
    %2653 = vmatpush.msra.mxu0 %v2588
    %2654 = vmatpush.msra.mxu0 %v2587
    %2655 = vmatpush.msra.mxu0 %v2586
    %2656 = vmatpush.msra.mxu0 %v2585
    %2657 = vmatmul.f32.gmra.mxu0 %v2599
    %v2658 = vpop.f32.mrf.mxu0
    %v2659 = vadd.f32 %v2639, %v2658
    %2660 = vdwg.mxu0
    %v2661 = vadd.f32 %v2548, %v2659
    %v2662 = vld [vmem:[%s4] sm:$0x1]
    %v2664 = vperm.slane %v2662, 0
    %v2666 = vadd.f32 %v2661, %v2664
    %v2667 = vmax.f32 %v2666, 0.0
    %v2669 = vrot.slane %v2667, 1
    %2671 = vst.msk [vmem:[#allocation3 + $0x1] sm:$0x1] %vm2102, %v2667
    %2672 = vst.msk [vmem:[#allocation3 + $0x9] sm:$0x1] %vm2102, %v2669
    %v2673 = vld [vmem:[%s1979] ss:$8 sm:$0x7]
    %v2674 = vld [vmem:[%s1981] ss:$8 sm:$0x7]
    %v2675 = vld [vmem:[%s3] sm:$0xff]
    %v2676 = vld [vmem:[%s3 + $0x8] sm:$0xff]
    %v2677 = vld [vmem:[%s3 + $0x10] sm:$0xff]
    %v2678 = vld [vmem:[%s3 + $0x18] sm:$0xff]
    %v2679 = vld [vmem:[%s3 + $0x20] sm:$0xff]
    %v2680 = vld [vmem:[%s3 + $0x28] sm:$0xff]
    %v2681 = vld [vmem:[%s3 + $0x30] sm:$0xff]
    %v2682 = vld [vmem:[%s3 + $0x38] sm:$0xff]
    %v2683 = vld [vmem:[%s3 + $0x40] sm:$0xff]
    %v2684 = vld [vmem:[%s3 + $0x48] sm:$0xff]
    %v2685 = vld [vmem:[%s3 + $0x50] sm:$0xff]
    %v2686 = vld [vmem:[%s3 + $0x58] sm:$0xff]
    %v2687 = vld [vmem:[%s3 + $0x60] sm:$0xff]
    %v2688 = vld [vmem:[%s3 + $0x68] sm:$0xff]
    %v2689 = vld [vmem:[%s3 + $0x70] sm:$0xff]
    %v2690 = vld [vmem:[%s3 + $0x78] sm:$0xff]
    %v2691 = vld [vmem:[%s3 + $0x80] sm:$0xff]
    %v2692 = vld [vmem:[%s3 + $0x88] sm:$0xff]
    %v2693 = vld [vmem:[%s3 + $0x90] sm:$0xff]
    %v2694 = vld [vmem:[%s3 + $0x98] sm:$0xff]
    %v2695 = vld [vmem:[%s3 + $0xa0] sm:$0xff]
    %v2696 = vld [vmem:[%s3 + $0xa8] sm:$0xff]
    %v2697 = vld [vmem:[%s3 + $0xb0] sm:$0xff]
    %v2698 = vld [vmem:[%s3 + $0xb8] sm:$0xff]
    %v2699 = vld [vmem:[%s3 + $0xc0] sm:$0xff]
    %v2700 = vld [vmem:[%s3 + $0xc8] sm:$0xff]
    %v2701 = vld [vmem:[%s3 + $0xd0] sm:$0xff]
    %v2702 = vld [vmem:[%s3 + $0xd8] sm:$0xff]
    %v2703 = vld [vmem:[%s3 + $0xe0] sm:$0xff]
    %v2704 = vld [vmem:[%s3 + $0xe8] sm:$0xff]
    %v2705 = vld [vmem:[%s3 + $0xf0] sm:$0xff]
    %v2706 = vld [vmem:[%s3 + $0xf8] sm:$0xff]
    %v2707 = vld [vmem:[%s3 + $0x100] sm:$0xff]
    %v2708 = vld [vmem:[%s3 + $0x108] sm:$0xff]
    %v2709 = vld [vmem:[%s3 + $0x110] sm:$0xff]
    %v2710 = vld [vmem:[%s3 + $0x118] sm:$0xff]
    %v2711 = vld [vmem:[%s2436] ss:$8 sm:$0x7]
    %v2712 = vld [vmem:[%s2438] ss:$8 sm:$0x7]
    %v2713 = vld [vmem:[%s1570] sm:$0xff]
    %v2714 = vld [vmem:[%s1570 + $0x8] sm:$0xff]
    %v2715 = vld [vmem:[%s1570 + $0x10] sm:$0xff]
    %v2716 = vld [vmem:[%s1570 + $0x18] sm:$0xff]
    %v2717 = vld [vmem:[%s1570 + $0x20] sm:$0xff]
    %v2718 = vld [vmem:[%s1570 + $0x28] sm:$0xff]
    %v2719 = vld [vmem:[%s1570 + $0x30] sm:$0xff]
    %v2720 = vld [vmem:[%s1570 + $0x38] sm:$0xff]
    %v2721 = vld [vmem:[%s1570 + $0x40] sm:$0xff]
    %v2722 = vld [vmem:[%s1570 + $0x48] sm:$0xff]
    %v2723 = vld [vmem:[%s1570 + $0x50] sm:$0xff]
    %v2724 = vld [vmem:[%s1570 + $0x58] sm:$0xff]
    %v2725 = vld [vmem:[%s1570 + $0x60] sm:$0xff]
    %v2726 = vld [vmem:[%s1570 + $0x68] sm:$0xff]
    %v2727 = vld [vmem:[%s1570 + $0x70] sm:$0xff]
    %v2728 = vld [vmem:[%s1570 + $0x78] sm:$0xff]
    %v2729 = vld [vmem:[%s1570 + $0x80] sm:$0xff]
    %v2730 = vld [vmem:[%s1570 + $0x88] sm:$0xff]
    %v2731 = vld [vmem:[%s1570 + $0x90] sm:$0xff]
    %v2732 = vld [vmem:[%s1570 + $0x98] sm:$0xff]
    %v2733 = vld [vmem:[%s1570 + $0xa0] sm:$0xff]
    %v2734 = vld [vmem:[%s1570 + $0xa8] sm:$0xff]
    %v2735 = vld [vmem:[%s1570 + $0xb0] sm:$0xff]
    %v2736 = vld [vmem:[%s1570 + $0xb8] sm:$0xff]
    %v2737 = vld [vmem:[%s1570 + $0xc0] sm:$0xff]
    %v2738 = vld [vmem:[%s1570 + $0xc8] sm:$0xff]
    %v2739 = vld [vmem:[%s1570 + $0xd0] sm:$0xff]
    %v2740 = vld [vmem:[%s1570 + $0xd8] sm:$0xff]
    %v2741 = vld [vmem:[%s1570 + $0xe0] sm:$0xff]
    %v2742 = vld [vmem:[%s1570 + $0xe8] sm:$0xff]
    %v2743 = vld [vmem:[%s1570 + $0xf0] sm:$0xff]
    %v2744 = vld [vmem:[%s1570 + $0xf8] sm:$0xff]
    %v2745 = vld [vmem:[%s1570 + $0x100] sm:$0xff]
    %v2746 = vld [vmem:[%s1570 + $0x108] sm:$0xff]
    %v2747 = vld [vmem:[%s1570 + $0x110] sm:$0xff]
    %v2748 = vld [vmem:[%s1570 + $0x118] sm:$0xff]
    %2751 = vst [vmem:[#allocation1] ss:$9 sm:$0xff] %v2711
    %s2752 = scalar_lea.vmem [#allocation1], 1
    %2753 = vst [vmem:[%s2752] ss:$9 sm:$0xff] %v2712
    %v2754 = vld [vmem:[#allocation1] sm:$0xff]
    %v2755 = vld [vmem:[#allocation1 + $0x9] sm:$0xff]
    %v2756 = vld [vmem:[#allocation1 + $0x12] sm:$0xff]
    %v2759 = vsel %vm778, %v2756, 0
    %2761 = vmatpush.msra.mxu0 %v2728
    %2762 = vmatpush.msra.mxu0 %v2727
    %2763 = vmatpush.msra.mxu0 %v2726
    %2764 = vmatpush.msra.mxu0 %v2725
    %2765 = vmatpush.msra.mxu0 %v2724
    %2766 = vmatpush.msra.mxu0 %v2723
    %2767 = vmatpush.msra.mxu0 %v2722
    %2768 = vmatpush.msra.mxu0 %v2721
    %2769 = vmatpush.msra.mxu0 %v2720
    %2770 = vmatpush.msra.mxu0 %v2719
    %2771 = vmatpush.msra.mxu0 %v2718
    %2772 = vmatpush.msra.mxu0 %v2717
    %2773 = vmatpush.msra.mxu0 %v2716
    %2774 = vmatpush.msra.mxu0 %v2715
    %2775 = vmatpush.msra.mxu0 %v2714
    %2776 = vmatpush.msra.mxu0 %v2713
    %2777 = vmatmul.f32.gmra.mxu0 %v2754
    %v2778 = vpop.f32.mrf.mxu0
    %v2779 = vadd.f32 0.0, %v2778
    %2780 = vdwg.mxu0
    %2781 = vmatpush.msra.mxu0 %v2744
    %2782 = vmatpush.msra.mxu0 %v2743
    %2783 = vmatpush.msra.mxu0 %v2742
    %2784 = vmatpush.msra.mxu0 %v2741
    %2785 = vmatpush.msra.mxu0 %v2740
    %2786 = vmatpush.msra.mxu0 %v2739
    %2787 = vmatpush.msra.mxu0 %v2738
    %2788 = vmatpush.msra.mxu0 %v2737
    %2789 = vmatpush.msra.mxu0 %v2736
    %2790 = vmatpush.msra.mxu0 %v2735
    %2791 = vmatpush.msra.mxu0 %v2734
    %2792 = vmatpush.msra.mxu0 %v2733
    %2793 = vmatpush.msra.mxu0 %v2732
    %2794 = vmatpush.msra.mxu0 %v2731
    %2795 = vmatpush.msra.mxu0 %v2730
    %2796 = vmatpush.msra.mxu0 %v2729
    %2797 = vmatmul.f32.gmra.mxu0 %v2755
    %v2798 = vpop.f32.mrf.mxu0
    %v2799 = vadd.f32 %v2779, %v2798
    %2800 = vdwg.mxu0
    %2801 = vmatpush.msra.mxu0 0.0
    %2802 = vmatpush.msra.mxu0 0.0
    %2803 = vmatpush.msra.mxu0 0.0
    %2804 = vmatpush.msra.mxu0 0.0
    %2805 = vmatpush.msra.mxu0 0.0
    %2806 = vmatpush.msra.mxu0 0.0
    %2807 = vmatpush.msra.mxu0 0.0
    %2808 = vmatpush.msra.mxu0 0.0
    %2809 = vmatpush.msra.mxu0 0.0
    %2810 = vmatpush.msra.mxu0 0.0
    %2811 = vmatpush.msra.mxu0 0.0
    %2812 = vmatpush.msra.mxu0 0.0
    %2813 = vmatpush.msra.mxu0 %v2748
    %2814 = vmatpush.msra.mxu0 %v2747
    %2815 = vmatpush.msra.mxu0 %v2746
    %2816 = vmatpush.msra.mxu0 %v2745
    %2817 = vmatmul.f32.gmra.mxu0 %v2759
    %v2818 = vpop.f32.mrf.mxu0
    %v2819 = vadd.f32 %v2799, %v2818
    %2820 = vdwg.mxu0
    %2823 = vst [vmem:[#allocation1] ss:$9 sm:$0xff] %v2673
    %s2824 = scalar_lea.vmem [#allocation1], 1
    %2825 = vst [vmem:[%s2824] ss:$9 sm:$0xff] %v2674
    %v2826 = vld [vmem:[#allocation1] sm:$0xff]
    %v2827 = vld [vmem:[#allocation1 + $0x9] sm:$0xff]
    %v2828 = vld [vmem:[#allocation1 + $0x12] sm:$0xff]
    %v2831 = vsel %vm778, %v2828, 0
    %2833 = vmatpush.msra.mxu0 %v2690
    %2834 = vmatpush.msra.mxu0 %v2689
    %2835 = vmatpush.msra.mxu0 %v2688
    %2836 = vmatpush.msra.mxu0 %v2687
    %2837 = vmatpush.msra.mxu0 %v2686
    %2838 = vmatpush.msra.mxu0 %v2685
    %2839 = vmatpush.msra.mxu0 %v2684
    %2840 = vmatpush.msra.mxu0 %v2683
    %2841 = vmatpush.msra.mxu0 %v2682
    %2842 = vmatpush.msra.mxu0 %v2681
    %2843 = vmatpush.msra.mxu0 %v2680
    %2844 = vmatpush.msra.mxu0 %v2679
    %2845 = vmatpush.msra.mxu0 %v2678
    %2846 = vmatpush.msra.mxu0 %v2677
    %2847 = vmatpush.msra.mxu0 %v2676
    %2848 = vmatpush.msra.mxu0 %v2675
    %2849 = vmatmul.f32.gmra.mxu0 %v2826
    %v2850 = vpop.f32.mrf.mxu0
    %v2851 = vadd.f32 %v2819, %v2850
    %2852 = vdwg.mxu0
    %2853 = vmatpush.msra.mxu0 %v2706
    %2854 = vmatpush.msra.mxu0 %v2705
    %2855 = vmatpush.msra.mxu0 %v2704
    %2856 = vmatpush.msra.mxu0 %v2703
    %2857 = vmatpush.msra.mxu0 %v2702
    %2858 = vmatpush.msra.mxu0 %v2701
    %2859 = vmatpush.msra.mxu0 %v2700
    %2860 = vmatpush.msra.mxu0 %v2699
    %2861 = vmatpush.msra.mxu0 %v2698
    %2862 = vmatpush.msra.mxu0 %v2697
    %2863 = vmatpush.msra.mxu0 %v2696
    %2864 = vmatpush.msra.mxu0 %v2695
    %2865 = vmatpush.msra.mxu0 %v2694
    %2866 = vmatpush.msra.mxu0 %v2693
    %2867 = vmatpush.msra.mxu0 %v2692
    %2868 = vmatpush.msra.mxu0 %v2691
    %2869 = vmatmul.f32.gmra.mxu0 %v2827
    %v2870 = vpop.f32.mrf.mxu0
    %v2871 = vadd.f32 %v2851, %v2870
    %2872 = vdwg.mxu0
    %2873 = vmatpush.msra.mxu0 0.0
    %2874 = vmatpush.msra.mxu0 0.0
    %2875 = vmatpush.msra.mxu0 0.0
    %2876 = vmatpush.msra.mxu0 0.0
    %2877 = vmatpush.msra.mxu0 0.0
    %2878 = vmatpush.msra.mxu0 0.0
    %2879 = vmatpush.msra.mxu0 0.0
    %2880 = vmatpush.msra.mxu0 0.0
    %2881 = vmatpush.msra.mxu0 0.0
    %2882 = vmatpush.msra.mxu0 0.0
    %2883 = vmatpush.msra.mxu0 0.0
    %2884 = vmatpush.msra.mxu0 0.0
    %2885 = vmatpush.msra.mxu0 %v2710
    %2886 = vmatpush.msra.mxu0 %v2709
    %2887 = vmatpush.msra.mxu0 %v2708
    %2888 = vmatpush.msra.mxu0 %v2707
    %2889 = vmatmul.f32.gmra.mxu0 %v2831
    %v2890 = vpop.f32.mrf.mxu0
    %v2891 = vadd.f32 %v2871, %v2890
    %2892 = vdwg.mxu0
    %v2893 = vld [vmem:[%s2549] ss:$8 sm:$0x7]
    %v2894 = vld [vmem:[%s2551] ss:$8 sm:$0x7]
    %v2895 = vld [vmem:[%s1755] sm:$0xff]
    %v2896 = vld [vmem:[%s1755 + $0x8] sm:$0xff]
    %v2897 = vld [vmem:[%s1755 + $0x10] sm:$0xff]
    %v2898 = vld [vmem:[%s1755 + $0x18] sm:$0xff]
    %v2899 = vld [vmem:[%s1755 + $0x20] sm:$0xff]
    %v2900 = vld [vmem:[%s1755 + $0x28] sm:$0xff]
    %v2901 = vld [vmem:[%s1755 + $0x30] sm:$0xff]
    %v2902 = vld [vmem:[%s1755 + $0x38] sm:$0xff]
    %v2903 = vld [vmem:[%s1755 + $0x40] sm:$0xff]
    %v2904 = vld [vmem:[%s1755 + $0x48] sm:$0xff]
    %v2905 = vld [vmem:[%s1755 + $0x50] sm:$0xff]
    %v2906 = vld [vmem:[%s1755 + $0x58] sm:$0xff]
    %v2907 = vld [vmem:[%s1755 + $0x60] sm:$0xff]
    %v2908 = vld [vmem:[%s1755 + $0x68] sm:$0xff]
    %v2909 = vld [vmem:[%s1755 + $0x70] sm:$0xff]
    %v2910 = vld [vmem:[%s1755 + $0x78] sm:$0xff]
    %v2911 = vld [vmem:[%s1755 + $0x80] sm:$0xff]
    %v2912 = vld [vmem:[%s1755 + $0x88] sm:$0xff]
    %v2913 = vld [vmem:[%s1755 + $0x90] sm:$0xff]
    %v2914 = vld [vmem:[%s1755 + $0x98] sm:$0xff]
    %v2915 = vld [vmem:[%s1755 + $0xa0] sm:$0xff]
    %v2916 = vld [vmem:[%s1755 + $0xa8] sm:$0xff]
    %v2917 = vld [vmem:[%s1755 + $0xb0] sm:$0xff]
    %v2918 = vld [vmem:[%s1755 + $0xb8] sm:$0xff]
    %v2919 = vld [vmem:[%s1755 + $0xc0] sm:$0xff]
    %v2920 = vld [vmem:[%s1755 + $0xc8] sm:$0xff]
    %v2921 = vld [vmem:[%s1755 + $0xd0] sm:$0xff]
    %v2922 = vld [vmem:[%s1755 + $0xd8] sm:$0xff]
    %v2923 = vld [vmem:[%s1755 + $0xe0] sm:$0xff]
    %v2924 = vld [vmem:[%s1755 + $0xe8] sm:$0xff]
    %v2925 = vld [vmem:[%s1755 + $0xf0] sm:$0xff]
    %v2926 = vld [vmem:[%s1755 + $0xf8] sm:$0xff]
    %v2927 = vld [vmem:[%s1755 + $0x100] sm:$0xff]
    %v2928 = vld [vmem:[%s1755 + $0x108] sm:$0xff]
    %v2929 = vld [vmem:[%s1755 + $0x110] sm:$0xff]
    %v2930 = vld [vmem:[%s1755 + $0x118] sm:$0xff]
    %2933 = vst [vmem:[#allocation1] ss:$9 sm:$0xff] %v2893
    %s2934 = scalar_lea.vmem [#allocation1], 1
    %2935 = vst [vmem:[%s2934] ss:$9 sm:$0xff] %v2894
    %v2936 = vld [vmem:[#allocation1] sm:$0xff]
    %v2937 = vld [vmem:[#allocation1 + $0x9] sm:$0xff]
    %v2938 = vld [vmem:[#allocation1 + $0x12] sm:$0xff]
    %v2941 = vsel %vm778, %v2938, 0
    %2943 = vmatpush.msra.mxu0 %v2910
    %2944 = vmatpush.msra.mxu0 %v2909
    %2945 = vmatpush.msra.mxu0 %v2908
    %2946 = vmatpush.msra.mxu0 %v2907
    %2947 = vmatpush.msra.mxu0 %v2906
    %2948 = vmatpush.msra.mxu0 %v2905
    %2949 = vmatpush.msra.mxu0 %v2904
    %2950 = vmatpush.msra.mxu0 %v2903
    %2951 = vmatpush.msra.mxu0 %v2902
    %2952 = vmatpush.msra.mxu0 %v2901
    %2953 = vmatpush.msra.mxu0 %v2900
    %2954 = vmatpush.msra.mxu0 %v2899
    %2955 = vmatpush.msra.mxu0 %v2898
    %2956 = vmatpush.msra.mxu0 %v2897
    %2957 = vmatpush.msra.mxu0 %v2896
    %2958 = vmatpush.msra.mxu0 %v2895
    %2959 = vmatmul.f32.gmra.mxu0 %v2936
    %v2960 = vpop.f32.mrf.mxu0
    %v2961 = vadd.f32 0.0, %v2960
    %2962 = vdwg.mxu0
    %2963 = vmatpush.msra.mxu0 %v2926
    %2964 = vmatpush.msra.mxu0 %v2925
    %2965 = vmatpush.msra.mxu0 %v2924
    %2966 = vmatpush.msra.mxu0 %v2923
    %2967 = vmatpush.msra.mxu0 %v2922
    %2968 = vmatpush.msra.mxu0 %v2921
    %2969 = vmatpush.msra.mxu0 %v2920
    %2970 = vmatpush.msra.mxu0 %v2919
    %2971 = vmatpush.msra.mxu0 %v2918
    %2972 = vmatpush.msra.mxu0 %v2917
    %2973 = vmatpush.msra.mxu0 %v2916
    %2974 = vmatpush.msra.mxu0 %v2915
    %2975 = vmatpush.msra.mxu0 %v2914
    %2976 = vmatpush.msra.mxu0 %v2913
    %2977 = vmatpush.msra.mxu0 %v2912
    %2978 = vmatpush.msra.mxu0 %v2911
    %2979 = vmatmul.f32.gmra.mxu0 %v2937
    %v2980 = vpop.f32.mrf.mxu0
    %v2981 = vadd.f32 %v2961, %v2980
    %2982 = vdwg.mxu0
    %2983 = vmatpush.msra.mxu0 0.0
    %2984 = vmatpush.msra.mxu0 0.0
    %2985 = vmatpush.msra.mxu0 0.0
    %2986 = vmatpush.msra.mxu0 0.0
    %2987 = vmatpush.msra.mxu0 0.0
    %2988 = vmatpush.msra.mxu0 0.0
    %2989 = vmatpush.msra.mxu0 0.0
    %2990 = vmatpush.msra.mxu0 0.0
    %2991 = vmatpush.msra.mxu0 0.0
    %2992 = vmatpush.msra.mxu0 0.0
    %2993 = vmatpush.msra.mxu0 0.0
    %2994 = vmatpush.msra.mxu0 0.0
    %2995 = vmatpush.msra.mxu0 %v2930
    %2996 = vmatpush.msra.mxu0 %v2929
    %2997 = vmatpush.msra.mxu0 %v2928
    %2998 = vmatpush.msra.mxu0 %v2927
    %2999 = vmatmul.f32.gmra.mxu0 %v2941
    %v3000 = vpop.f32.mrf.mxu0
    %v3001 = vadd.f32 %v2981, %v3000
    %3002 = vdwg.mxu0
    %v3003 = vadd.f32 %v2891, %v3001
    %s3004 = scalar_lea.vmem [#allocation2], 7
    %v3005 = vld [vmem:[%s3004] ss:$8 sm:$0x7]
    %s3006 = scalar_lea.vmem [#allocation2], 79
    %v3007 = vld [vmem:[%s3006] ss:$8 sm:$0x7]
    %v3008 = vld [vmem:[%s1869] sm:$0xff]
    %v3009 = vld [vmem:[%s1869 + $0x8] sm:$0xff]
    %v3010 = vld [vmem:[%s1869 + $0x10] sm:$0xff]
    %v3011 = vld [vmem:[%s1869 + $0x18] sm:$0xff]
    %v3012 = vld [vmem:[%s1869 + $0x20] sm:$0xff]
    %v3013 = vld [vmem:[%s1869 + $0x28] sm:$0xff]
    %v3014 = vld [vmem:[%s1869 + $0x30] sm:$0xff]
    %v3015 = vld [vmem:[%s1869 + $0x38] sm:$0xff]
    %v3016 = vld [vmem:[%s1869 + $0x40] sm:$0xff]
    %v3017 = vld [vmem:[%s1869 + $0x48] sm:$0xff]
    %v3018 = vld [vmem:[%s1869 + $0x50] sm:$0xff]
    %v3019 = vld [vmem:[%s1869 + $0x58] sm:$0xff]
    %v3020 = vld [vmem:[%s1869 + $0x60] sm:$0xff]
    %v3021 = vld [vmem:[%s1869 + $0x68] sm:$0xff]
    %v3022 = vld [vmem:[%s1869 + $0x70] sm:$0xff]
    %v3023 = vld [vmem:[%s1869 + $0x78] sm:$0xff]
    %v3024 = vld [vmem:[%s1869 + $0x80] sm:$0xff]
    %v3025 = vld [vmem:[%s1869 + $0x88] sm:$0xff]
    %v3026 = vld [vmem:[%s1869 + $0x90] sm:$0xff]
    %v3027 = vld [vmem:[%s1869 + $0x98] sm:$0xff]
    %v3028 = vld [vmem:[%s1869 + $0xa0] sm:$0xff]
    %v3029 = vld [vmem:[%s1869 + $0xa8] sm:$0xff]
    %v3030 = vld [vmem:[%s1869 + $0xb0] sm:$0xff]
    %v3031 = vld [vmem:[%s1869 + $0xb8] sm:$0xff]
    %v3032 = vld [vmem:[%s1869 + $0xc0] sm:$0xff]
    %v3033 = vld [vmem:[%s1869 + $0xc8] sm:$0xff]
    %v3034 = vld [vmem:[%s1869 + $0xd0] sm:$0xff]
    %v3035 = vld [vmem:[%s1869 + $0xd8] sm:$0xff]
    %v3036 = vld [vmem:[%s1869 + $0xe0] sm:$0xff]
    %v3037 = vld [vmem:[%s1869 + $0xe8] sm:$0xff]
    %v3038 = vld [vmem:[%s1869 + $0xf0] sm:$0xff]
    %v3039 = vld [vmem:[%s1869 + $0xf8] sm:$0xff]
    %v3040 = vld [vmem:[%s1869 + $0x100] sm:$0xff]
    %v3041 = vld [vmem:[%s1869 + $0x108] sm:$0xff]
    %v3042 = vld [vmem:[%s1869 + $0x110] sm:$0xff]
    %v3043 = vld [vmem:[%s1869 + $0x118] sm:$0xff]
    %3046 = vst [vmem:[#allocation1] ss:$9 sm:$0xff] %v3005
    %s3047 = scalar_lea.vmem [#allocation1], 1
    %3048 = vst [vmem:[%s3047] ss:$9 sm:$0xff] %v3007
    %v3049 = vld [vmem:[#allocation1] sm:$0xff]
    %v3050 = vld [vmem:[#allocation1 + $0x9] sm:$0xff]
    %v3051 = vld [vmem:[#allocation1 + $0x12] sm:$0xff]
    %v3054 = vsel %vm778, %v3051, 0
    %3056 = vmatpush.msra.mxu0 %v3023
    %3057 = vmatpush.msra.mxu0 %v3022
    %3058 = vmatpush.msra.mxu0 %v3021
    %3059 = vmatpush.msra.mxu0 %v3020
    %3060 = vmatpush.msra.mxu0 %v3019
    %3061 = vmatpush.msra.mxu0 %v3018
    %3062 = vmatpush.msra.mxu0 %v3017
    %3063 = vmatpush.msra.mxu0 %v3016
    %3064 = vmatpush.msra.mxu0 %v3015
    %3065 = vmatpush.msra.mxu0 %v3014
    %3066 = vmatpush.msra.mxu0 %v3013
    %3067 = vmatpush.msra.mxu0 %v3012
    %3068 = vmatpush.msra.mxu0 %v3011
    %3069 = vmatpush.msra.mxu0 %v3010
    %3070 = vmatpush.msra.mxu0 %v3009
    %3071 = vmatpush.msra.mxu0 %v3008
    %3072 = vmatmul.f32.gmra.mxu0 %v3049
    %v3073 = vpop.f32.mrf.mxu0
    %v3074 = vadd.f32 0.0, %v3073
    %3075 = vdwg.mxu0
    %3076 = vmatpush.msra.mxu0 %v3039
    %3077 = vmatpush.msra.mxu0 %v3038
    %3078 = vmatpush.msra.mxu0 %v3037
    %3079 = vmatpush.msra.mxu0 %v3036
    %3080 = vmatpush.msra.mxu0 %v3035
    %3081 = vmatpush.msra.mxu0 %v3034
    %3082 = vmatpush.msra.mxu0 %v3033
    %3083 = vmatpush.msra.mxu0 %v3032
    %3084 = vmatpush.msra.mxu0 %v3031
    %3085 = vmatpush.msra.mxu0 %v3030
    %3086 = vmatpush.msra.mxu0 %v3029
    %3087 = vmatpush.msra.mxu0 %v3028
    %3088 = vmatpush.msra.mxu0 %v3027
    %3089 = vmatpush.msra.mxu0 %v3026
    %3090 = vmatpush.msra.mxu0 %v3025
    %3091 = vmatpush.msra.mxu0 %v3024
    %3092 = vmatmul.f32.gmra.mxu0 %v3050
    %v3093 = vpop.f32.mrf.mxu0
    %v3094 = vadd.f32 %v3074, %v3093
    %3095 = vdwg.mxu0
    %3096 = vmatpush.msra.mxu0 0.0
    %3097 = vmatpush.msra.mxu0 0.0
    %3098 = vmatpush.msra.mxu0 0.0
    %3099 = vmatpush.msra.mxu0 0.0
    %3100 = vmatpush.msra.mxu0 0.0
    %3101 = vmatpush.msra.mxu0 0.0
    %3102 = vmatpush.msra.mxu0 0.0
    %3103 = vmatpush.msra.mxu0 0.0
    %3104 = vmatpush.msra.mxu0 0.0
    %3105 = vmatpush.msra.mxu0 0.0
    %3106 = vmatpush.msra.mxu0 0.0
    %3107 = vmatpush.msra.mxu0 0.0
    %3108 = vmatpush.msra.mxu0 %v3043
    %3109 = vmatpush.msra.mxu0 %v3042
    %3110 = vmatpush.msra.mxu0 %v3041
    %3111 = vmatpush.msra.mxu0 %v3040
    %3112 = vmatmul.f32.gmra.mxu0 %v3054
    %v3113 = vpop.f32.mrf.mxu0
    %v3114 = vadd.f32 %v3094, %v3113
    %3115 = vdwg.mxu0
    %v3116 = vadd.f32 %v3003, %v3114
    %s3117 = scalar_lea.vmem [#allocation2], 24
    %v3118 = vld [vmem:[%s3117] ss:$8 sm:$0x7]
    %s3119 = scalar_lea.vmem [#allocation2], 96
    %v3120 = vld [vmem:[%s3119] ss:$8 sm:$0x7]
    %v3121 = vld [vmem:[%s1983] sm:$0xff]
    %v3122 = vld [vmem:[%s1983 + $0x8] sm:$0xff]
    %v3123 = vld [vmem:[%s1983 + $0x10] sm:$0xff]
    %v3124 = vld [vmem:[%s1983 + $0x18] sm:$0xff]
    %v3125 = vld [vmem:[%s1983 + $0x20] sm:$0xff]
    %v3126 = vld [vmem:[%s1983 + $0x28] sm:$0xff]
    %v3127 = vld [vmem:[%s1983 + $0x30] sm:$0xff]
    %v3128 = vld [vmem:[%s1983 + $0x38] sm:$0xff]
    %v3129 = vld [vmem:[%s1983 + $0x40] sm:$0xff]
    %v3130 = vld [vmem:[%s1983 + $0x48] sm:$0xff]
    %v3131 = vld [vmem:[%s1983 + $0x50] sm:$0xff]
    %v3132 = vld [vmem:[%s1983 + $0x58] sm:$0xff]
    %v3133 = vld [vmem:[%s1983 + $0x60] sm:$0xff]
    %v3134 = vld [vmem:[%s1983 + $0x68] sm:$0xff]
    %v3135 = vld [vmem:[%s1983 + $0x70] sm:$0xff]
    %v3136 = vld [vmem:[%s1983 + $0x78] sm:$0xff]
    %v3137 = vld [vmem:[%s1983 + $0x80] sm:$0xff]
    %v3138 = vld [vmem:[%s1983 + $0x88] sm:$0xff]
    %v3139 = vld [vmem:[%s1983 + $0x90] sm:$0xff]
    %v3140 = vld [vmem:[%s1983 + $0x98] sm:$0xff]
    %v3141 = vld [vmem:[%s1983 + $0xa0] sm:$0xff]
    %v3142 = vld [vmem:[%s1983 + $0xa8] sm:$0xff]
    %v3143 = vld [vmem:[%s1983 + $0xb0] sm:$0xff]
    %v3144 = vld [vmem:[%s1983 + $0xb8] sm:$0xff]
    %v3145 = vld [vmem:[%s1983 + $0xc0] sm:$0xff]
    %v3146 = vld [vmem:[%s1983 + $0xc8] sm:$0xff]
    %v3147 = vld [vmem:[%s1983 + $0xd0] sm:$0xff]
    %v3148 = vld [vmem:[%s1983 + $0xd8] sm:$0xff]
    %v3149 = vld [vmem:[%s1983 + $0xe0] sm:$0xff]
    %v3150 = vld [vmem:[%s1983 + $0xe8] sm:$0xff]
    %v3151 = vld [vmem:[%s1983 + $0xf0] sm:$0xff]
    %v3152 = vld [vmem:[%s1983 + $0xf8] sm:$0xff]
    %v3153 = vld [vmem:[%s1983 + $0x100] sm:$0xff]
    %v3154 = vld [vmem:[%s1983 + $0x108] sm:$0xff]
    %v3155 = vld [vmem:[%s1983 + $0x110] sm:$0xff]
    %v3156 = vld [vmem:[%s1983 + $0x118] sm:$0xff]
    %3159 = vst [vmem:[#allocation1] ss:$9 sm:$0xff] %v3118
    %s3160 = scalar_lea.vmem [#allocation1], 1
    %3161 = vst [vmem:[%s3160] ss:$9 sm:$0xff] %v3120
    %v3162 = vld [vmem:[#allocation1] sm:$0xff]
    %v3163 = vld [vmem:[#allocation1 + $0x9] sm:$0xff]
    %v3164 = vld [vmem:[#allocation1 + $0x12] sm:$0xff]
    %v3167 = vsel %vm778, %v3164, 0
    %3169 = vmatpush.msra.mxu0 %v3136
    %3170 = vmatpush.msra.mxu0 %v3135
    %3171 = vmatpush.msra.mxu0 %v3134
    %3172 = vmatpush.msra.mxu0 %v3133
    %3173 = vmatpush.msra.mxu0 %v3132
    %3174 = vmatpush.msra.mxu0 %v3131
    %3175 = vmatpush.msra.mxu0 %v3130
    %3176 = vmatpush.msra.mxu0 %v3129
    %3177 = vmatpush.msra.mxu0 %v3128
    %3178 = vmatpush.msra.mxu0 %v3127
    %3179 = vmatpush.msra.mxu0 %v3126
    %3180 = vmatpush.msra.mxu0 %v3125
    %3181 = vmatpush.msra.mxu0 %v3124
    %3182 = vmatpush.msra.mxu0 %v3123
    %3183 = vmatpush.msra.mxu0 %v3122
    %3184 = vmatpush.msra.mxu0 %v3121
    %3185 = vmatmul.f32.gmra.mxu0 %v3162
    %v3186 = vpop.f32.mrf.mxu0
    %v3187 = vadd.f32 0.0, %v3186
    %3188 = vdwg.mxu0
    %3189 = vmatpush.msra.mxu0 %v3152
    %3190 = vmatpush.msra.mxu0 %v3151
    %3191 = vmatpush.msra.mxu0 %v3150
    %3192 = vmatpush.msra.mxu0 %v3149
    %3193 = vmatpush.msra.mxu0 %v3148
    %3194 = vmatpush.msra.mxu0 %v3147
    %3195 = vmatpush.msra.mxu0 %v3146
    %3196 = vmatpush.msra.mxu0 %v3145
    %3197 = vmatpush.msra.mxu0 %v3144
    %3198 = vmatpush.msra.mxu0 %v3143
    %3199 = vmatpush.msra.mxu0 %v3142
    %3200 = vmatpush.msra.mxu0 %v3141
    %3201 = vmatpush.msra.mxu0 %v3140
    %3202 = vmatpush.msra.mxu0 %v3139
    %3203 = vmatpush.msra.mxu0 %v3138
    %3204 = vmatpush.msra.mxu0 %v3137
    %3205 = vmatmul.f32.gmra.mxu0 %v3163
    %v3206 = vpop.f32.mrf.mxu0
    %v3207 = vadd.f32 %v3187, %v3206
    %3208 = vdwg.mxu0
    %3209 = vmatpush.msra.mxu0 0.0
    %3210 = vmatpush.msra.mxu0 0.0
    %3211 = vmatpush.msra.mxu0 0.0
    %3212 = vmatpush.msra.mxu0 0.0
    %3213 = vmatpush.msra.mxu0 0.0
    %3214 = vmatpush.msra.mxu0 0.0
    %3215 = vmatpush.msra.mxu0 0.0
    %3216 = vmatpush.msra.mxu0 0.0
    %3217 = vmatpush.msra.mxu0 0.0
    %3218 = vmatpush.msra.mxu0 0.0
    %3219 = vmatpush.msra.mxu0 0.0
    %3220 = vmatpush.msra.mxu0 0.0
    %3221 = vmatpush.msra.mxu0 %v3156
    %3222 = vmatpush.msra.mxu0 %v3155
    %3223 = vmatpush.msra.mxu0 %v3154
    %3224 = vmatpush.msra.mxu0 %v3153
    %3225 = vmatmul.f32.gmra.mxu0 %v3167
    %v3226 = vpop.f32.mrf.mxu0
    %v3227 = vadd.f32 %v3207, %v3226
    %3228 = vdwg.mxu0
    %v3229 = vadd.f32 %v3116, %v3227
    %v3230 = vld [vmem:[%s4] sm:$0x1]
    %v3232 = vperm.slane %v3230, 0
    %v3234 = vadd.f32 %v3229, %v3232
    %v3235 = vmax.f32 %v3234, 0.0
    %v3237 = vrot.slane %v3235, 1
    %3239 = vst.msk [vmem:[#allocation3 + $0x2] sm:$0x1] %vm2102, %v3235
    %3240 = vst.msk [vmem:[#allocation3 + $0xa] sm:$0x1] %vm2102, %v3237
    %v3241 = vld [vmem:[%s2549] ss:$8 sm:$0x7]
    %v3242 = vld [vmem:[%s2551] ss:$8 sm:$0x7]
    %v3243 = vld [vmem:[%s3] sm:$0xff]
    %v3244 = vld [vmem:[%s3 + $0x8] sm:$0xff]
    %v3245 = vld [vmem:[%s3 + $0x10] sm:$0xff]
    %v3246 = vld [vmem:[%s3 + $0x18] sm:$0xff]
    %v3247 = vld [vmem:[%s3 + $0x20] sm:$0xff]
    %v3248 = vld [vmem:[%s3 + $0x28] sm:$0xff]
    %v3249 = vld [vmem:[%s3 + $0x30] sm:$0xff]
    %v3250 = vld [vmem:[%s3 + $0x38] sm:$0xff]
    %v3251 = vld [vmem:[%s3 + $0x40] sm:$0xff]
    %v3252 = vld [vmem:[%s3 + $0x48] sm:$0xff]
    %v3253 = vld [vmem:[%s3 + $0x50] sm:$0xff]
    %v3254 = vld [vmem:[%s3 + $0x58] sm:$0xff]
    %v3255 = vld [vmem:[%s3 + $0x60] sm:$0xff]
    %v3256 = vld [vmem:[%s3 + $0x68] sm:$0xff]
    %v3257 = vld [vmem:[%s3 + $0x70] sm:$0xff]
    %v3258 = vld [vmem:[%s3 + $0x78] sm:$0xff]
    %v3259 = vld [vmem:[%s3 + $0x80] sm:$0xff]
    %v3260 = vld [vmem:[%s3 + $0x88] sm:$0xff]
    %v3261 = vld [vmem:[%s3 + $0x90] sm:$0xff]
    %v3262 = vld [vmem:[%s3 + $0x98] sm:$0xff]
    %v3263 = vld [vmem:[%s3 + $0xa0] sm:$0xff]
    %v3264 = vld [vmem:[%s3 + $0xa8] sm:$0xff]
    %v3265 = vld [vmem:[%s3 + $0xb0] sm:$0xff]
    %v3266 = vld [vmem:[%s3 + $0xb8] sm:$0xff]
    %v3267 = vld [vmem:[%s3 + $0xc0] sm:$0xff]
    %v3268 = vld [vmem:[%s3 + $0xc8] sm:$0xff]
    %v3269 = vld [vmem:[%s3 + $0xd0] sm:$0xff]
    %v3270 = vld [vmem:[%s3 + $0xd8] sm:$0xff]
    %v3271 = vld [vmem:[%s3 + $0xe0] sm:$0xff]
    %v3272 = vld [vmem:[%s3 + $0xe8] sm:$0xff]
    %v3273 = vld [vmem:[%s3 + $0xf0] sm:$0xff]
    %v3274 = vld [vmem:[%s3 + $0xf8] sm:$0xff]
    %v3275 = vld [vmem:[%s3 + $0x100] sm:$0xff]
    %v3276 = vld [vmem:[%s3 + $0x108] sm:$0xff]
    %v3277 = vld [vmem:[%s3 + $0x110] sm:$0xff]
    %v3278 = vld [vmem:[%s3 + $0x118] sm:$0xff]
    %v3279 = vld [vmem:[%s3004] ss:$8 sm:$0x7]
    %v3280 = vld [vmem:[%s3006] ss:$8 sm:$0x7]
    %v3281 = vld [vmem:[%s1570] sm:$0xff]
    %v3282 = vld [vmem:[%s1570 + $0x8] sm:$0xff]
    %v3283 = vld [vmem:[%s1570 + $0x10] sm:$0xff]
    %v3284 = vld [vmem:[%s1570 + $0x18] sm:$0xff]
    %v3285 = vld [vmem:[%s1570 + $0x20] sm:$0xff]
    %v3286 = vld [vmem:[%s1570 + $0x28] sm:$0xff]
    %v3287 = vld [vmem:[%s1570 + $0x30] sm:$0xff]
    %v3288 = vld [vmem:[%s1570 + $0x38] sm:$0xff]
    %v3289 = vld [vmem:[%s1570 + $0x40] sm:$0xff]
    %v3290 = vld [vmem:[%s1570 + $0x48] sm:$0xff]
    %v3291 = vld [vmem:[%s1570 + $0x50] sm:$0xff]
    %v3292 = vld [vmem:[%s1570 + $0x58] sm:$0xff]
    %v3293 = vld [vmem:[%s1570 + $0x60] sm:$0xff]
    %v3294 = vld [vmem:[%s1570 + $0x68] sm:$0xff]
    %v3295 = vld [vmem:[%s1570 + $0x70] sm:$0xff]
    %v3296 = vld [vmem:[%s1570 + $0x78] sm:$0xff]
    %v3297 = vld [vmem:[%s1570 + $0x80] sm:$0xff]
    %v3298 = vld [vmem:[%s1570 + $0x88] sm:$0xff]
    %v3299 = vld [vmem:[%s1570 + $0x90] sm:$0xff]
    %v3300 = vld [vmem:[%s1570 + $0x98] sm:$0xff]
    %v3301 = vld [vmem:[%s1570 + $0xa0] sm:$0xff]
    %v3302 = vld [vmem:[%s1570 + $0xa8] sm:$0xff]
    %v3303 = vld [vmem:[%s1570 + $0xb0] sm:$0xff]
    %v3304 = vld [vmem:[%s1570 + $0xb8] sm:$0xff]
    %v3305 = vld [vmem:[%s1570 + $0xc0] sm:$0xff]
    %v3306 = vld [vmem:[%s1570 + $0xc8] sm:$0xff]
    %v3307 = vld [vmem:[%s1570 + $0xd0] sm:$0xff]
    %v3308 = vld [vmem:[%s1570 + $0xd8] sm:$0xff]
    %v3309 = vld [vmem:[%s1570 + $0xe0] sm:$0xff]
    %v3310 = vld [vmem:[%s1570 + $0xe8] sm:$0xff]
    %v3311 = vld [vmem:[%s1570 + $0xf0] sm:$0xff]
    %v3312 = vld [vmem:[%s1570 + $0xf8] sm:$0xff]
    %v3313 = vld [vmem:[%s1570 + $0x100] sm:$0xff]
    %v3314 = vld [vmem:[%s1570 + $0x108] sm:$0xff]
    %v3315 = vld [vmem:[%s1570 + $0x110] sm:$0xff]
    %v3316 = vld [vmem:[%s1570 + $0x118] sm:$0xff]
    %3319 = vst [vmem:[#allocation1] ss:$9 sm:$0xff] %v3279
    %s3320 = scalar_lea.vmem [#allocation1], 1
    %3321 = vst [vmem:[%s3320] ss:$9 sm:$0xff] %v3280
    %v3322 = vld [vmem:[#allocation1] sm:$0xff]
    %v3323 = vld [vmem:[#allocation1 + $0x9] sm:$0xff]
    %v3324 = vld [vmem:[#allocation1 + $0x12] sm:$0xff]
    %v3327 = vsel %vm778, %v3324, 0
    %3329 = vmatpush.msra.mxu0 %v3296
    %3330 = vmatpush.msra.mxu0 %v3295
    %3331 = vmatpush.msra.mxu0 %v3294
    %3332 = vmatpush.msra.mxu0 %v3293
    %3333 = vmatpush.msra.mxu0 %v3292
    %3334 = vmatpush.msra.mxu0 %v3291
    %3335 = vmatpush.msra.mxu0 %v3290
    %3336 = vmatpush.msra.mxu0 %v3289
    %3337 = vmatpush.msra.mxu0 %v3288
    %3338 = vmatpush.msra.mxu0 %v3287
    %3339 = vmatpush.msra.mxu0 %v3286
    %3340 = vmatpush.msra.mxu0 %v3285
    %3341 = vmatpush.msra.mxu0 %v3284
    %3342 = vmatpush.msra.mxu0 %v3283
    %3343 = vmatpush.msra.mxu0 %v3282
    %3344 = vmatpush.msra.mxu0 %v3281
    %3345 = vmatmul.f32.gmra.mxu0 %v3322
    %v3346 = vpop.f32.mrf.mxu0
    %v3347 = vadd.f32 0.0, %v3346
    %3348 = vdwg.mxu0
    %3349 = vmatpush.msra.mxu0 %v3312
    %3350 = vmatpush.msra.mxu0 %v3311
    %3351 = vmatpush.msra.mxu0 %v3310
    %3352 = vmatpush.msra.mxu0 %v3309
    %3353 = vmatpush.msra.mxu0 %v3308
    %3354 = vmatpush.msra.mxu0 %v3307
    %3355 = vmatpush.msra.mxu0 %v3306
    %3356 = vmatpush.msra.mxu0 %v3305
    %3357 = vmatpush.msra.mxu0 %v3304
    %3358 = vmatpush.msra.mxu0 %v3303
    %3359 = vmatpush.msra.mxu0 %v3302
    %3360 = vmatpush.msra.mxu0 %v3301
    %3361 = vmatpush.msra.mxu0 %v3300
    %3362 = vmatpush.msra.mxu0 %v3299
    %3363 = vmatpush.msra.mxu0 %v3298
    %3364 = vmatpush.msra.mxu0 %v3297
    %3365 = vmatmul.f32.gmra.mxu0 %v3323
    %v3366 = vpop.f32.mrf.mxu0
    %v3367 = vadd.f32 %v3347, %v3366
    %3368 = vdwg.mxu0
    %3369 = vmatpush.msra.mxu0 0.0
    %3370 = vmatpush.msra.mxu0 0.0
    %3371 = vmatpush.msra.mxu0 0.0
    %3372 = vmatpush.msra.mxu0 0.0
    %3373 = vmatpush.msra.mxu0 0.0
    %3374 = vmatpush.msra.mxu0 0.0
    %3375 = vmatpush.msra.mxu0 0.0
    %3376 = vmatpush.msra.mxu0 0.0
    %3377 = vmatpush.msra.mxu0 0.0
    %3378 = vmatpush.msra.mxu0 0.0
    %3379 = vmatpush.msra.mxu0 0.0
    %3380 = vmatpush.msra.mxu0 0.0
    %3381 = vmatpush.msra.mxu0 %v3316
    %3382 = vmatpush.msra.mxu0 %v3315
    %3383 = vmatpush.msra.mxu0 %v3314
    %3384 = vmatpush.msra.mxu0 %v3313
    %3385 = vmatmul.f32.gmra.mxu0 %v3327
    %v3386 = vpop.f32.mrf.mxu0
    %v3387 = vadd.f32 %v3367, %v3386
    %3388 = vdwg.mxu0
    %3391 = vst [vmem:[#allocation1] ss:$9 sm:$0xff] %v3241
    %s3392 = scalar_lea.vmem [#allocation1], 1
    %3393 = vst [vmem:[%s3392] ss:$9 sm:$0xff] %v3242
    %v3394 = vld [vmem:[#allocation1] sm:$0xff]
    %v3395 = vld [vmem:[#allocation1 + $0x9] sm:$0xff]
    %v3396 = vld [vmem:[#allocation1 + $0x12] sm:$0xff]
    %v3399 = vsel %vm778, %v3396, 0
    %3401 = vmatpush.msra.mxu0 %v3258
    %3402 = vmatpush.msra.mxu0 %v3257
    %3403 = vmatpush.msra.mxu0 %v3256
    %3404 = vmatpush.msra.mxu0 %v3255
    %3405 = vmatpush.msra.mxu0 %v3254
    %3406 = vmatpush.msra.mxu0 %v3253
    %3407 = vmatpush.msra.mxu0 %v3252
    %3408 = vmatpush.msra.mxu0 %v3251
    %3409 = vmatpush.msra.mxu0 %v3250
    %3410 = vmatpush.msra.mxu0 %v3249
    %3411 = vmatpush.msra.mxu0 %v3248
    %3412 = vmatpush.msra.mxu0 %v3247
    %3413 = vmatpush.msra.mxu0 %v3246
    %3414 = vmatpush.msra.mxu0 %v3245
    %3415 = vmatpush.msra.mxu0 %v3244
    %3416 = vmatpush.msra.mxu0 %v3243
    %3417 = vmatmul.f32.gmra.mxu0 %v3394
    %v3418 = vpop.f32.mrf.mxu0
    %v3419 = vadd.f32 %v3387, %v3418
    %3420 = vdwg.mxu0
    %3421 = vmatpush.msra.mxu0 %v3274
    %3422 = vmatpush.msra.mxu0 %v3273
    %3423 = vmatpush.msra.mxu0 %v3272
    %3424 = vmatpush.msra.mxu0 %v3271
    %3425 = vmatpush.msra.mxu0 %v3270
    %3426 = vmatpush.msra.mxu0 %v3269
    %3427 = vmatpush.msra.mxu0 %v3268
    %3428 = vmatpush.msra.mxu0 %v3267
    %3429 = vmatpush.msra.mxu0 %v3266
    %3430 = vmatpush.msra.mxu0 %v3265
    %3431 = vmatpush.msra.mxu0 %v3264
    %3432 = vmatpush.msra.mxu0 %v3263
    %3433 = vmatpush.msra.mxu0 %v3262
    %3434 = vmatpush.msra.mxu0 %v3261
    %3435 = vmatpush.msra.mxu0 %v3260
    %3436 = vmatpush.msra.mxu0 %v3259
    %3437 = vmatmul.f32.gmra.mxu0 %v3395
    %v3438 = vpop.f32.mrf.mxu0
    %v3439 = vadd.f32 %v3419, %v3438
    %3440 = vdwg.mxu0
    %3441 = vmatpush.msra.mxu0 0.0
    %3442 = vmatpush.msra.mxu0 0.0
    %3443 = vmatpush.msra.mxu0 0.0
    %3444 = vmatpush.msra.mxu0 0.0
    %3445 = vmatpush.msra.mxu0 0.0
    %3446 = vmatpush.msra.mxu0 0.0
    %3447 = vmatpush.msra.mxu0 0.0
    %3448 = vmatpush.msra.mxu0 0.0
    %3449 = vmatpush.msra.mxu0 0.0
    %3450 = vmatpush.msra.mxu0 0.0
    %3451 = vmatpush.msra.mxu0 0.0
    %3452 = vmatpush.msra.mxu0 0.0
    %3453 = vmatpush.msra.mxu0 %v3278
    %3454 = vmatpush.msra.mxu0 %v3277
    %3455 = vmatpush.msra.mxu0 %v3276
    %3456 = vmatpush.msra.mxu0 %v3275
    %3457 = vmatmul.f32.gmra.mxu0 %v3399
    %v3458 = vpop.f32.mrf.mxu0
    %v3459 = vadd.f32 %v3439, %v3458
    %3460 = vdwg.mxu0
    %v3461 = vld [vmem:[%s3117] ss:$8 sm:$0x7]
    %v3462 = vld [vmem:[%s3119] ss:$8 sm:$0x7]
    %v3463 = vld [vmem:[%s1755] sm:$0xff]
    %v3464 = vld [vmem:[%s1755 + $0x8] sm:$0xff]
    %v3465 = vld [vmem:[%s1755 + $0x10] sm:$0xff]
    %v3466 = vld [vmem:[%s1755 + $0x18] sm:$0xff]
    %v3467 = vld [vmem:[%s1755 + $0x20] sm:$0xff]
    %v3468 = vld [vmem:[%s1755 + $0x28] sm:$0xff]
    %v3469 = vld [vmem:[%s1755 + $0x30] sm:$0xff]
    %v3470 = vld [vmem:[%s1755 + $0x38] sm:$0xff]
    %v3471 = vld [vmem:[%s1755 + $0x40] sm:$0xff]
    %v3472 = vld [vmem:[%s1755 + $0x48] sm:$0xff]
    %v3473 = vld [vmem:[%s1755 + $0x50] sm:$0xff]
    %v3474 = vld [vmem:[%s1755 + $0x58] sm:$0xff]
    %v3475 = vld [vmem:[%s1755 + $0x60] sm:$0xff]
    %v3476 = vld [vmem:[%s1755 + $0x68] sm:$0xff]
    %v3477 = vld [vmem:[%s1755 + $0x70] sm:$0xff]
    %v3478 = vld [vmem:[%s1755 + $0x78] sm:$0xff]
    %v3479 = vld [vmem:[%s1755 + $0x80] sm:$0xff]
    %v3480 = vld [vmem:[%s1755 + $0x88] sm:$0xff]
    %v3481 = vld [vmem:[%s1755 + $0x90] sm:$0xff]
    %v3482 = vld [vmem:[%s1755 + $0x98] sm:$0xff]
    %v3483 = vld [vmem:[%s1755 + $0xa0] sm:$0xff]
    %v3484 = vld [vmem:[%s1755 + $0xa8] sm:$0xff]
    %v3485 = vld [vmem:[%s1755 + $0xb0] sm:$0xff]
    %v3486 = vld [vmem:[%s1755 + $0xb8] sm:$0xff]
    %v3487 = vld [vmem:[%s1755 + $0xc0] sm:$0xff]
    %v3488 = vld [vmem:[%s1755 + $0xc8] sm:$0xff]
    %v3489 = vld [vmem:[%s1755 + $0xd0] sm:$0xff]
    %v3490 = vld [vmem:[%s1755 + $0xd8] sm:$0xff]
    %v3491 = vld [vmem:[%s1755 + $0xe0] sm:$0xff]
    %v3492 = vld [vmem:[%s1755 + $0xe8] sm:$0xff]
    %v3493 = vld [vmem:[%s1755 + $0xf0] sm:$0xff]
    %v3494 = vld [vmem:[%s1755 + $0xf8] sm:$0xff]
    %v3495 = vld [vmem:[%s1755 + $0x100] sm:$0xff]
    %v3496 = vld [vmem:[%s1755 + $0x108] sm:$0xff]
    %v3497 = vld [vmem:[%s1755 + $0x110] sm:$0xff]
    %v3498 = vld [vmem:[%s1755 + $0x118] sm:$0xff]
    %3501 = vst [vmem:[#allocation1] ss:$9 sm:$0xff] %v3461
    %s3502 = scalar_lea.vmem [#allocation1], 1
    %3503 = vst [vmem:[%s3502] ss:$9 sm:$0xff] %v3462
    %v3504 = vld [vmem:[#allocation1] sm:$0xff]
    %v3505 = vld [vmem:[#allocation1 + $0x9] sm:$0xff]
    %v3506 = vld [vmem:[#allocation1 + $0x12] sm:$0xff]
    %v3509 = vsel %vm778, %v3506, 0
    %3511 = vmatpush.msra.mxu0 %v3478
    %3512 = vmatpush.msra.mxu0 %v3477
    %3513 = vmatpush.msra.mxu0 %v3476
    %3514 = vmatpush.msra.mxu0 %v3475
    %3515 = vmatpush.msra.mxu0 %v3474
    %3516 = vmatpush.msra.mxu0 %v3473
    %3517 = vmatpush.msra.mxu0 %v3472
    %3518 = vmatpush.msra.mxu0 %v3471
    %3519 = vmatpush.msra.mxu0 %v3470
    %3520 = vmatpush.msra.mxu0 %v3469
    %3521 = vmatpush.msra.mxu0 %v3468
    %3522 = vmatpush.msra.mxu0 %v3467
    %3523 = vmatpush.msra.mxu0 %v3466
    %3524 = vmatpush.msra.mxu0 %v3465
    %3525 = vmatpush.msra.mxu0 %v3464
    %3526 = vmatpush.msra.mxu0 %v3463
    %3527 = vmatmul.f32.gmra.mxu0 %v3504
    %v3528 = vpop.f32.mrf.mxu0
    %v3529 = vadd.f32 0.0, %v3528
    %3530 = vdwg.mxu0
    %3531 = vmatpush.msra.mxu0 %v3494
    %3532 = vmatpush.msra.mxu0 %v3493
    %3533 = vmatpush.msra.mxu0 %v3492
    %3534 = vmatpush.msra.mxu0 %v3491
    %3535 = vmatpush.msra.mxu0 %v3490
    %3536 = vmatpush.msra.mxu0 %v3489
    %3537 = vmatpush.msra.mxu0 %v3488
    %3538 = vmatpush.msra.mxu0 %v3487
    %3539 = vmatpush.msra.mxu0 %v3486
    %3540 = vmatpush.msra.mxu0 %v3485
    %3541 = vmatpush.msra.mxu0 %v3484
    %3542 = vmatpush.msra.mxu0 %v3483
    %3543 = vmatpush.msra.mxu0 %v3482
    %3544 = vmatpush.msra.mxu0 %v3481
    %3545 = vmatpush.msra.mxu0 %v3480
    %3546 = vmatpush.msra.mxu0 %v3479
    %3547 = vmatmul.f32.gmra.mxu0 %v3505
    %v3548 = vpop.f32.mrf.mxu0
    %v3549 = vadd.f32 %v3529, %v3548
    %3550 = vdwg.mxu0
    %3551 = vmatpush.msra.mxu0 0.0
    %3552 = vmatpush.msra.mxu0 0.0
    %3553 = vmatpush.msra.mxu0 0.0
    %3554 = vmatpush.msra.mxu0 0.0
    %3555 = vmatpush.msra.mxu0 0.0
    %3556 = vmatpush.msra.mxu0 0.0
    %3557 = vmatpush.msra.mxu0 0.0
    %3558 = vmatpush.msra.mxu0 0.0
    %3559 = vmatpush.msra.mxu0 0.0
    %3560 = vmatpush.msra.mxu0 0.0
    %3561 = vmatpush.msra.mxu0 0.0
    %3562 = vmatpush.msra.mxu0 0.0
    %3563 = vmatpush.msra.mxu0 %v3498
    %3564 = vmatpush.msra.mxu0 %v3497
    %3565 = vmatpush.msra.mxu0 %v3496
    %3566 = vmatpush.msra.mxu0 %v3495
    %3567 = vmatmul.f32.gmra.mxu0 %v3509
    %v3568 = vpop.f32.mrf.mxu0
    %v3569 = vadd.f32 %v3549, %v3568
    %3570 = vdwg.mxu0
    %v3571 = vadd.f32 %v3459, %v3569
    %s3572 = scalar_lea.vmem [#allocation2], 25
    %v3573 = vld [vmem:[%s3572] ss:$8 sm:$0x7]
    %s3574 = scalar_lea.vmem [#allocation2], 97
    %v3575 = vld [vmem:[%s3574] ss:$8 sm:$0x7]
    %v3576 = vld [vmem:[%s1869] sm:$0xff]
    %v3577 = vld [vmem:[%s1869 + $0x8] sm:$0xff]
    %v3578 = vld [vmem:[%s1869 + $0x10] sm:$0xff]
    %v3579 = vld [vmem:[%s1869 + $0x18] sm:$0xff]
    %v3580 = vld [vmem:[%s1869 + $0x20] sm:$0xff]
    %v3581 = vld [vmem:[%s1869 + $0x28] sm:$0xff]
    %v3582 = vld [vmem:[%s1869 + $0x30] sm:$0xff]
    %v3583 = vld [vmem:[%s1869 + $0x38] sm:$0xff]
    %v3584 = vld [vmem:[%s1869 + $0x40] sm:$0xff]
    %v3585 = vld [vmem:[%s1869 + $0x48] sm:$0xff]
    %v3586 = vld [vmem:[%s1869 + $0x50] sm:$0xff]
    %v3587 = vld [vmem:[%s1869 + $0x58] sm:$0xff]
    %v3588 = vld [vmem:[%s1869 + $0x60] sm:$0xff]
    %v3589 = vld [vmem:[%s1869 + $0x68] sm:$0xff]
    %v3590 = vld [vmem:[%s1869 + $0x70] sm:$0xff]
    %v3591 = vld [vmem:[%s1869 + $0x78] sm:$0xff]
    %v3592 = vld [vmem:[%s1869 + $0x80] sm:$0xff]
    %v3593 = vld [vmem:[%s1869 + $0x88] sm:$0xff]
    %v3594 = vld [vmem:[%s1869 + $0x90] sm:$0xff]
    %v3595 = vld [vmem:[%s1869 + $0x98] sm:$0xff]
    %v3596 = vld [vmem:[%s1869 + $0xa0] sm:$0xff]
    %v3597 = vld [vmem:[%s1869 + $0xa8] sm:$0xff]
    %v3598 = vld [vmem:[%s1869 + $0xb0] sm:$0xff]
    %v3599 = vld [vmem:[%s1869 + $0xb8] sm:$0xff]
    %v3600 = vld [vmem:[%s1869 + $0xc0] sm:$0xff]
    %v3601 = vld [vmem:[%s1869 + $0xc8] sm:$0xff]
    %v3602 = vld [vmem:[%s1869 + $0xd0] sm:$0xff]
    %v3603 = vld [vmem:[%s1869 + $0xd8] sm:$0xff]
    %v3604 = vld [vmem:[%s1869 + $0xe0] sm:$0xff]
    %v3605 = vld [vmem:[%s1869 + $0xe8] sm:$0xff]
    %v3606 = vld [vmem:[%s1869 + $0xf0] sm:$0xff]
    %v3607 = vld [vmem:[%s1869 + $0xf8] sm:$0xff]
    %v3608 = vld [vmem:[%s1869 + $0x100] sm:$0xff]
    %v3609 = vld [vmem:[%s1869 + $0x108] sm:$0xff]
    %v3610 = vld [vmem:[%s1869 + $0x110] sm:$0xff]
    %v3611 = vld [vmem:[%s1869 + $0x118] sm:$0xff]
    %3614 = vst [vmem:[#allocation1] ss:$9 sm:$0xff] %v3573
    %s3615 = scalar_lea.vmem [#allocation1], 1
    %3616 = vst [vmem:[%s3615] ss:$9 sm:$0xff] %v3575
    %v3617 = vld [vmem:[#allocation1] sm:$0xff]
    %v3618 = vld [vmem:[#allocation1 + $0x9] sm:$0xff]
    %v3619 = vld [vmem:[#allocation1 + $0x12] sm:$0xff]
    %v3622 = vsel %vm778, %v3619, 0
    %3624 = vmatpush.msra.mxu0 %v3591
    %3625 = vmatpush.msra.mxu0 %v3590
    %3626 = vmatpush.msra.mxu0 %v3589
    %3627 = vmatpush.msra.mxu0 %v3588
    %3628 = vmatpush.msra.mxu0 %v3587
    %3629 = vmatpush.msra.mxu0 %v3586
    %3630 = vmatpush.msra.mxu0 %v3585
    %3631 = vmatpush.msra.mxu0 %v3584
    %3632 = vmatpush.msra.mxu0 %v3583
    %3633 = vmatpush.msra.mxu0 %v3582
    %3634 = vmatpush.msra.mxu0 %v3581
    %3635 = vmatpush.msra.mxu0 %v3580
    %3636 = vmatpush.msra.mxu0 %v3579
    %3637 = vmatpush.msra.mxu0 %v3578
    %3638 = vmatpush.msra.mxu0 %v3577
    %3639 = vmatpush.msra.mxu0 %v3576
    %3640 = vmatmul.f32.gmra.mxu0 %v3617
    %v3641 = vpop.f32.mrf.mxu0
    %v3642 = vadd.f32 0.0, %v3641
    %3643 = vdwg.mxu0
    %3644 = vmatpush.msra.mxu0 %v3607
    %3645 = vmatpush.msra.mxu0 %v3606
    %3646 = vmatpush.msra.mxu0 %v3605
    %3647 = vmatpush.msra.mxu0 %v3604
    %3648 = vmatpush.msra.mxu0 %v3603
    %3649 = vmatpush.msra.mxu0 %v3602
    %3650 = vmatpush.msra.mxu0 %v3601
    %3651 = vmatpush.msra.mxu0 %v3600
    %3652 = vmatpush.msra.mxu0 %v3599
    %3653 = vmatpush.msra.mxu0 %v3598
    %3654 = vmatpush.msra.mxu0 %v3597
    %3655 = vmatpush.msra.mxu0 %v3596
    %3656 = vmatpush.msra.mxu0 %v3595
    %3657 = vmatpush.msra.mxu0 %v3594
    %3658 = vmatpush.msra.mxu0 %v3593
    %3659 = vmatpush.msra.mxu0 %v3592
    %3660 = vmatmul.f32.gmra.mxu0 %v3618
    %v3661 = vpop.f32.mrf.mxu0
    %v3662 = vadd.f32 %v3642, %v3661
    %3663 = vdwg.mxu0
    %3664 = vmatpush.msra.mxu0 0.0
    %3665 = vmatpush.msra.mxu0 0.0
    %3666 = vmatpush.msra.mxu0 0.0
    %3667 = vmatpush.msra.mxu0 0.0
    %3668 = vmatpush.msra.mxu0 0.0
    %3669 = vmatpush.msra.mxu0 0.0
    %3670 = vmatpush.msra.mxu0 0.0
    %3671 = vmatpush.msra.mxu0 0.0
    %3672 = vmatpush.msra.mxu0 0.0
    %3673 = vmatpush.msra.mxu0 0.0
    %3674 = vmatpush.msra.mxu0 0.0
    %3675 = vmatpush.msra.mxu0 0.0
    %3676 = vmatpush.msra.mxu0 %v3611
    %3677 = vmatpush.msra.mxu0 %v3610
    %3678 = vmatpush.msra.mxu0 %v3609
    %3679 = vmatpush.msra.mxu0 %v3608
    %3680 = vmatmul.f32.gmra.mxu0 %v3622
    %v3681 = vpop.f32.mrf.mxu0
    %v3682 = vadd.f32 %v3662, %v3681
    %3683 = vdwg.mxu0
    %v3684 = vadd.f32 %v3571, %v3682
    %s3685 = scalar_lea.vmem [#allocation2], 26
    %v3686 = vld [vmem:[%s3685] ss:$8 sm:$0x7]
    %s3687 = scalar_lea.vmem [#allocation2], 98
    %v3688 = vld [vmem:[%s3687] ss:$8 sm:$0x7]
    %v3689 = vld [vmem:[%s1983] sm:$0xff]
    %v3690 = vld [vmem:[%s1983 + $0x8] sm:$0xff]
    %v3691 = vld [vmem:[%s1983 + $0x10] sm:$0xff]
    %v3692 = vld [vmem:[%s1983 + $0x18] sm:$0xff]
    %v3693 = vld [vmem:[%s1983 + $0x20] sm:$0xff]
    %v3694 = vld [vmem:[%s1983 + $0x28] sm:$0xff]
    %v3695 = vld [vmem:[%s1983 + $0x30] sm:$0xff]
    %v3696 = vld [vmem:[%s1983 + $0x38] sm:$0xff]
    %v3697 = vld [vmem:[%s1983 + $0x40] sm:$0xff]
    %v3698 = vld [vmem:[%s1983 + $0x48] sm:$0xff]
    %v3699 = vld [vmem:[%s1983 + $0x50] sm:$0xff]
    %v3700 = vld [vmem:[%s1983 + $0x58] sm:$0xff]
    %v3701 = vld [vmem:[%s1983 + $0x60] sm:$0xff]
    %v3702 = vld [vmem:[%s1983 + $0x68] sm:$0xff]
    %v3703 = vld [vmem:[%s1983 + $0x70] sm:$0xff]
    %v3704 = vld [vmem:[%s1983 + $0x78] sm:$0xff]
    %v3705 = vld [vmem:[%s1983 + $0x80] sm:$0xff]
    %v3706 = vld [vmem:[%s1983 + $0x88] sm:$0xff]
    %v3707 = vld [vmem:[%s1983 + $0x90] sm:$0xff]
    %v3708 = vld [vmem:[%s1983 + $0x98] sm:$0xff]
    %v3709 = vld [vmem:[%s1983 + $0xa0] sm:$0xff]
    %v3710 = vld [vmem:[%s1983 + $0xa8] sm:$0xff]
    %v3711 = vld [vmem:[%s1983 + $0xb0] sm:$0xff]
    %v3712 = vld [vmem:[%s1983 + $0xb8] sm:$0xff]
    %v3713 = vld [vmem:[%s1983 + $0xc0] sm:$0xff]
    %v3714 = vld [vmem:[%s1983 + $0xc8] sm:$0xff]
    %v3715 = vld [vmem:[%s1983 + $0xd0] sm:$0xff]
    %v3716 = vld [vmem:[%s1983 + $0xd8] sm:$0xff]
    %v3717 = vld [vmem:[%s1983 + $0xe0] sm:$0xff]
    %v3718 = vld [vmem:[%s1983 + $0xe8] sm:$0xff]
    %v3719 = vld [vmem:[%s1983 + $0xf0] sm:$0xff]
    %v3720 = vld [vmem:[%s1983 + $0xf8] sm:$0xff]
    %v3721 = vld [vmem:[%s1983 + $0x100] sm:$0xff]
    %v3722 = vld [vmem:[%s1983 + $0x108] sm:$0xff]
    %v3723 = vld [vmem:[%s1983 + $0x110] sm:$0xff]
    %v3724 = vld [vmem:[%s1983 + $0x118] sm:$0xff]
    %3727 = vst [vmem:[#allocation1] ss:$9 sm:$0xff] %v3686
    %s3728 = scalar_lea.vmem [#allocation1], 1
    %3729 = vst [vmem:[%s3728] ss:$9 sm:$0xff] %v3688
    %v3730 = vld [vmem:[#allocation1] sm:$0xff]
    %v3731 = vld [vmem:[#allocation1 + $0x9] sm:$0xff]
    %v3732 = vld [vmem:[#allocation1 + $0x12] sm:$0xff]
    %v3735 = vsel %vm778, %v3732, 0
    %3737 = vmatpush.msra.mxu0 %v3704
    %3738 = vmatpush.msra.mxu0 %v3703
    %3739 = vmatpush.msra.mxu0 %v3702
    %3740 = vmatpush.msra.mxu0 %v3701
    %3741 = vmatpush.msra.mxu0 %v3700
    %3742 = vmatpush.msra.mxu0 %v3699
    %3743 = vmatpush.msra.mxu0 %v3698
    %3744 = vmatpush.msra.mxu0 %v3697
    %3745 = vmatpush.msra.mxu0 %v3696
    %3746 = vmatpush.msra.mxu0 %v3695
    %3747 = vmatpush.msra.mxu0 %v3694
    %3748 = vmatpush.msra.mxu0 %v3693
    %3749 = vmatpush.msra.mxu0 %v3692
    %3750 = vmatpush.msra.mxu0 %v3691
    %3751 = vmatpush.msra.mxu0 %v3690
    %3752 = vmatpush.msra.mxu0 %v3689
    %3753 = vmatmul.f32.gmra.mxu0 %v3730
    %v3754 = vpop.f32.mrf.mxu0
    %v3755 = vadd.f32 0.0, %v3754
    %3756 = vdwg.mxu0
    %3757 = vmatpush.msra.mxu0 %v3720
    %3758 = vmatpush.msra.mxu0 %v3719
    %3759 = vmatpush.msra.mxu0 %v3718
    %3760 = vmatpush.msra.mxu0 %v3717
    %3761 = vmatpush.msra.mxu0 %v3716
    %3762 = vmatpush.msra.mxu0 %v3715
    %3763 = vmatpush.msra.mxu0 %v3714
    %3764 = vmatpush.msra.mxu0 %v3713
    %3765 = vmatpush.msra.mxu0 %v3712
    %3766 = vmatpush.msra.mxu0 %v3711
    %3767 = vmatpush.msra.mxu0 %v3710
    %3768 = vmatpush.msra.mxu0 %v3709
    %3769 = vmatpush.msra.mxu0 %v3708
    %3770 = vmatpush.msra.mxu0 %v3707
    %3771 = vmatpush.msra.mxu0 %v3706
    %3772 = vmatpush.msra.mxu0 %v3705
    %3773 = vmatmul.f32.gmra.mxu0 %v3731
    %v3774 = vpop.f32.mrf.mxu0
    %v3775 = vadd.f32 %v3755, %v3774
    %3776 = vdwg.mxu0
    %3777 = vmatpush.msra.mxu0 0.0
    %3778 = vmatpush.msra.mxu0 0.0
    %3779 = vmatpush.msra.mxu0 0.0
    %3780 = vmatpush.msra.mxu0 0.0
    %3781 = vmatpush.msra.mxu0 0.0
    %3782 = vmatpush.msra.mxu0 0.0
    %3783 = vmatpush.msra.mxu0 0.0
    %3784 = vmatpush.msra.mxu0 0.0
    %3785 = vmatpush.msra.mxu0 0.0
    %3786 = vmatpush.msra.mxu0 0.0
    %3787 = vmatpush.msra.mxu0 0.0
    %3788 = vmatpush.msra.mxu0 0.0
    %3789 = vmatpush.msra.mxu0 %v3724
    %3790 = vmatpush.msra.mxu0 %v3723
    %3791 = vmatpush.msra.mxu0 %v3722
    %3792 = vmatpush.msra.mxu0 %v3721
    %3793 = vmatmul.f32.gmra.mxu0 %v3735
    %v3794 = vpop.f32.mrf.mxu0
    %v3795 = vadd.f32 %v3775, %v3794
    %3796 = vdwg.mxu0
    %v3797 = vadd.f32 %v3684, %v3795
    %v3798 = vld [vmem:[%s4] sm:$0x1]
    %v3800 = vperm.slane %v3798, 0
    %v3802 = vadd.f32 %v3797, %v3800
    %v3803 = vmax.f32 %v3802, 0.0
    %v3805 = vrot.slane %v3803, 1
    %3807 = vst.msk [vmem:[#allocation3 + $0x3] sm:$0x1] %vm2102, %v3803
    %3808 = vst.msk [vmem:[#allocation3 + $0xb] sm:$0x1] %vm2102, %v3805
    %v3809 = vld [vmem:[%s3117] ss:$8 sm:$0x7]
    %v3810 = vld [vmem:[%s3119] ss:$8 sm:$0x7]
    %v3811 = vld [vmem:[%s3] sm:$0xff]
    %v3812 = vld [vmem:[%s3 + $0x8] sm:$0xff]
    %v3813 = vld [vmem:[%s3 + $0x10] sm:$0xff]
    %v3814 = vld [vmem:[%s3 + $0x18] sm:$0xff]
    %v3815 = vld [vmem:[%s3 + $0x20] sm:$0xff]
    %v3816 = vld [vmem:[%s3 + $0x28] sm:$0xff]
    %v3817 = vld [vmem:[%s3 + $0x30] sm:$0xff]
    %v3818 = vld [vmem:[%s3 + $0x38] sm:$0xff]
    %v3819 = vld [vmem:[%s3 + $0x40] sm:$0xff]
    %v3820 = vld [vmem:[%s3 + $0x48] sm:$0xff]
    %v3821 = vld [vmem:[%s3 + $0x50] sm:$0xff]
    %v3822 = vld [vmem:[%s3 + $0x58] sm:$0xff]
    %v3823 = vld [vmem:[%s3 + $0x60] sm:$0xff]
    %v3824 = vld [vmem:[%s3 + $0x68] sm:$0xff]
    %v3825 = vld [vmem:[%s3 + $0x70] sm:$0xff]
    %v3826 = vld [vmem:[%s3 + $0x78] sm:$0xff]
    %v3827 = vld [vmem:[%s3 + $0x80] sm:$0xff]
    %v3828 = vld [vmem:[%s3 + $0x88] sm:$0xff]
    %v3829 = vld [vmem:[%s3 + $0x90] sm:$0xff]
    %v3830 = vld [vmem:[%s3 + $0x98] sm:$0xff]
    %v3831 = vld [vmem:[%s3 + $0xa0] sm:$0xff]
    %v3832 = vld [vmem:[%s3 + $0xa8] sm:$0xff]
    %v3833 = vld [vmem:[%s3 + $0xb0] sm:$0xff]
    %v3834 = vld [vmem:[%s3 + $0xb8] sm:$0xff]
    %v3835 = vld [vmem:[%s3 + $0xc0] sm:$0xff]
    %v3836 = vld [vmem:[%s3 + $0xc8] sm:$0xff]
    %v3837 = vld [vmem:[%s3 + $0xd0] sm:$0xff]
    %v3838 = vld [vmem:[%s3 + $0xd8] sm:$0xff]
    %v3839 = vld [vmem:[%s3 + $0xe0] sm:$0xff]
    %v3840 = vld [vmem:[%s3 + $0xe8] sm:$0xff]
    %v3841 = vld [vmem:[%s3 + $0xf0] sm:$0xff]
    %v3842 = vld [vmem:[%s3 + $0xf8] sm:$0xff]
    %v3843 = vld [vmem:[%s3 + $0x100] sm:$0xff]
    %v3844 = vld [vmem:[%s3 + $0x108] sm:$0xff]
    %v3845 = vld [vmem:[%s3 + $0x110] sm:$0xff]
    %v3846 = vld [vmem:[%s3 + $0x118] sm:$0xff]
    %v3847 = vld [vmem:[%s3572] ss:$8 sm:$0x7]
    %v3848 = vld [vmem:[%s3574] ss:$8 sm:$0x7]
    %v3849 = vld [vmem:[%s1570] sm:$0xff]
    %v3850 = vld [vmem:[%s1570 + $0x8] sm:$0xff]
    %v3851 = vld [vmem:[%s1570 + $0x10] sm:$0xff]
    %v3852 = vld [vmem:[%s1570 + $0x18] sm:$0xff]
    %v3853 = vld [vmem:[%s1570 + $0x20] sm:$0xff]
    %v3854 = vld [vmem:[%s1570 + $0x28] sm:$0xff]
    %v3855 = vld [vmem:[%s1570 + $0x30] sm:$0xff]
    %v3856 = vld [vmem:[%s1570 + $0x38] sm:$0xff]
    %v3857 = vld [vmem:[%s1570 + $0x40] sm:$0xff]
    %v3858 = vld [vmem:[%s1570 + $0x48] sm:$0xff]
    %v3859 = vld [vmem:[%s1570 + $0x50] sm:$0xff]
    %v3860 = vld [vmem:[%s1570 + $0x58] sm:$0xff]
    %v3861 = vld [vmem:[%s1570 + $0x60] sm:$0xff]
    %v3862 = vld [vmem:[%s1570 + $0x68] sm:$0xff]
    %v3863 = vld [vmem:[%s1570 + $0x70] sm:$0xff]
    %v3864 = vld [vmem:[%s1570 + $0x78] sm:$0xff]
    %v3865 = vld [vmem:[%s1570 + $0x80] sm:$0xff]
    %v3866 = vld [vmem:[%s1570 + $0x88] sm:$0xff]
    %v3867 = vld [vmem:[%s1570 + $0x90] sm:$0xff]
    %v3868 = vld [vmem:[%s1570 + $0x98] sm:$0xff]
    %v3869 = vld [vmem:[%s1570 + $0xa0] sm:$0xff]
    %v3870 = vld [vmem:[%s1570 + $0xa8] sm:$0xff]
    %v3871 = vld [vmem:[%s1570 + $0xb0] sm:$0xff]
    %v3872 = vld [vmem:[%s1570 + $0xb8] sm:$0xff]
    %v3873 = vld [vmem:[%s1570 + $0xc0] sm:$0xff]
    %v3874 = vld [vmem:[%s1570 + $0xc8] sm:$0xff]
    %v3875 = vld [vmem:[%s1570 + $0xd0] sm:$0xff]
    %v3876 = vld [vmem:[%s1570 + $0xd8] sm:$0xff]
    %v3877 = vld [vmem:[%s1570 + $0xe0] sm:$0xff]
    %v3878 = vld [vmem:[%s1570 + $0xe8] sm:$0xff]
    %v3879 = vld [vmem:[%s1570 + $0xf0] sm:$0xff]
    %v3880 = vld [vmem:[%s1570 + $0xf8] sm:$0xff]
    %v3881 = vld [vmem:[%s1570 + $0x100] sm:$0xff]
    %v3882 = vld [vmem:[%s1570 + $0x108] sm:$0xff]
    %v3883 = vld [vmem:[%s1570 + $0x110] sm:$0xff]
    %v3884 = vld [vmem:[%s1570 + $0x118] sm:$0xff]
    %3887 = vst [vmem:[#allocation1] ss:$9 sm:$0xff] %v3847
    %s3888 = scalar_lea.vmem [#allocation1], 1
    %3889 = vst [vmem:[%s3888] ss:$9 sm:$0xff] %v3848
    %v3890 = vld [vmem:[#allocation1] sm:$0xff]
    %v3891 = vld [vmem:[#allocation1 + $0x9] sm:$0xff]
    %v3892 = vld [vmem:[#allocation1 + $0x12] sm:$0xff]
    %v3895 = vsel %vm778, %v3892, 0
    %3897 = vmatpush.msra.mxu0 %v3864
    %3898 = vmatpush.msra.mxu0 %v3863
    %3899 = vmatpush.msra.mxu0 %v3862
    %3900 = vmatpush.msra.mxu0 %v3861
    %3901 = vmatpush.msra.mxu0 %v3860
    %3902 = vmatpush.msra.mxu0 %v3859
    %3903 = vmatpush.msra.mxu0 %v3858
    %3904 = vmatpush.msra.mxu0 %v3857
    %3905 = vmatpush.msra.mxu0 %v3856
    %3906 = vmatpush.msra.mxu0 %v3855
    %3907 = vmatpush.msra.mxu0 %v3854
    %3908 = vmatpush.msra.mxu0 %v3853
    %3909 = vmatpush.msra.mxu0 %v3852
    %3910 = vmatpush.msra.mxu0 %v3851
    %3911 = vmatpush.msra.mxu0 %v3850
    %3912 = vmatpush.msra.mxu0 %v3849
    %3913 = vmatmul.f32.gmra.mxu0 %v3890
    %v3914 = vpop.f32.mrf.mxu0
    %v3915 = vadd.f32 0.0, %v3914
    %3916 = vdwg.mxu0
    %3917 = vmatpush.msra.mxu0 %v3880
    %3918 = vmatpush.msra.mxu0 %v3879
    %3919 = vmatpush.msra.mxu0 %v3878
    %3920 = vmatpush.msra.mxu0 %v3877
    %3921 = vmatpush.msra.mxu0 %v3876
    %3922 = vmatpush.msra.mxu0 %v3875
    %3923 = vmatpush.msra.mxu0 %v3874
    %3924 = vmatpush.msra.mxu0 %v3873
    %3925 = vmatpush.msra.mxu0 %v3872
    %3926 = vmatpush.msra.mxu0 %v3871
    %3927 = vmatpush.msra.mxu0 %v3870
    %3928 = vmatpush.msra.mxu0 %v3869
    %3929 = vmatpush.msra.mxu0 %v3868
    %3930 = vmatpush.msra.mxu0 %v3867
    %3931 = vmatpush.msra.mxu0 %v3866
    %3932 = vmatpush.msra.mxu0 %v3865
    %3933 = vmatmul.f32.gmra.mxu0 %v3891
    %v3934 = vpop.f32.mrf.mxu0
    %v3935 = vadd.f32 %v3915, %v3934
    %3936 = vdwg.mxu0
    %3937 = vmatpush.msra.mxu0 0.0
    %3938 = vmatpush.msra.mxu0 0.0
    %3939 = vmatpush.msra.mxu0 0.0
    %3940 = vmatpush.msra.mxu0 0.0
    %3941 = vmatpush.msra.mxu0 0.0
    %3942 = vmatpush.msra.mxu0 0.0
    %3943 = vmatpush.msra.mxu0 0.0
    %3944 = vmatpush.msra.mxu0 0.0
    %3945 = vmatpush.msra.mxu0 0.0
    %3946 = vmatpush.msra.mxu0 0.0
    %3947 = vmatpush.msra.mxu0 0.0
    %3948 = vmatpush.msra.mxu0 0.0
    %3949 = vmatpush.msra.mxu0 %v3884
    %3950 = vmatpush.msra.mxu0 %v3883
    %3951 = vmatpush.msra.mxu0 %v3882
    %3952 = vmatpush.msra.mxu0 %v3881
    %3953 = vmatmul.f32.gmra.mxu0 %v3895
    %v3954 = vpop.f32.mrf.mxu0
    %v3955 = vadd.f32 %v3935, %v3954
    %3956 = vdwg.mxu0
    %3959 = vst [vmem:[#allocation1] ss:$9 sm:$0xff] %v3809
    %s3960 = scalar_lea.vmem [#allocation1], 1
    %3961 = vst [vmem:[%s3960] ss:$9 sm:$0xff] %v3810
    %v3962 = vld [vmem:[#allocation1] sm:$0xff]
    %v3963 = vld [vmem:[#allocation1 + $0x9] sm:$0xff]
    %v3964 = vld [vmem:[#allocation1 + $0x12] sm:$0xff]
    %v3967 = vsel %vm778, %v3964, 0
    %3969 = vmatpush.msra.mxu0 %v3826
    %3970 = vmatpush.msra.mxu0 %v3825
    %3971 = vmatpush.msra.mxu0 %v3824
    %3972 = vmatpush.msra.mxu0 %v3823
    %3973 = vmatpush.msra.mxu0 %v3822
    %3974 = vmatpush.msra.mxu0 %v3821
    %3975 = vmatpush.msra.mxu0 %v3820
    %3976 = vmatpush.msra.mxu0 %v3819
    %3977 = vmatpush.msra.mxu0 %v3818
    %3978 = vmatpush.msra.mxu0 %v3817
    %3979 = vmatpush.msra.mxu0 %v3816
    %3980 = vmatpush.msra.mxu0 %v3815
    %3981 = vmatpush.msra.mxu0 %v3814
    %3982 = vmatpush.msra.mxu0 %v3813
    %3983 = vmatpush.msra.mxu0 %v3812
    %3984 = vmatpush.msra.mxu0 %v3811
    %3985 = vmatmul.f32.gmra.mxu0 %v3962
    %v3986 = vpop.f32.mrf.mxu0
    %v3987 = vadd.f32 %v3955, %v3986
    %3988 = vdwg.mxu0
    %3989 = vmatpush.msra.mxu0 %v3842
    %3990 = vmatpush.msra.mxu0 %v3841
    %3991 = vmatpush.msra.mxu0 %v3840
    %3992 = vmatpush.msra.mxu0 %v3839
    %3993 = vmatpush.msra.mxu0 %v3838
    %3994 = vmatpush.msra.mxu0 %v3837
    %3995 = vmatpush.msra.mxu0 %v3836
    %3996 = vmatpush.msra.mxu0 %v3835
    %3997 = vmatpush.msra.mxu0 %v3834
    %3998 = vmatpush.msra.mxu0 %v3833
    %3999 = vmatpush.msra.mxu0 %v3832
    %4000 = vmatpush.msra.mxu0 %v3831
    %4001 = vmatpush.msra.mxu0 %v3830
    %4002 = vmatpush.msra.mxu0 %v3829
    %4003 = vmatpush.msra.mxu0 %v3828
    %4004 = vmatpush.msra.mxu0 %v3827
    %4005 = vmatmul.f32.gmra.mxu0 %v3963
    %v4006 = vpop.f32.mrf.mxu0
    %v4007 = vadd.f32 %v3987, %v4006
    %4008 = vdwg.mxu0
    %4009 = vmatpush.msra.mxu0 0.0
    %4010 = vmatpush.msra.mxu0 0.0
    %4011 = vmatpush.msra.mxu0 0.0
    %4012 = vmatpush.msra.mxu0 0.0
    %4013 = vmatpush.msra.mxu0 0.0
    %4014 = vmatpush.msra.mxu0 0.0
    %4015 = vmatpush.msra.mxu0 0.0
    %4016 = vmatpush.msra.mxu0 0.0
    %4017 = vmatpush.msra.mxu0 0.0
    %4018 = vmatpush.msra.mxu0 0.0
    %4019 = vmatpush.msra.mxu0 0.0
    %4020 = vmatpush.msra.mxu0 0.0
    %4021 = vmatpush.msra.mxu0 %v3846
    %4022 = vmatpush.msra.mxu0 %v3845
    %4023 = vmatpush.msra.mxu0 %v3844
    %4024 = vmatpush.msra.mxu0 %v3843
    %4025 = vmatmul.f32.gmra.mxu0 %v3967
    %v4026 = vpop.f32.mrf.mxu0
    %v4027 = vadd.f32 %v4007, %v4026
    %4028 = vdwg.mxu0
    %v4029 = vld [vmem:[%s3685] ss:$8 sm:$0x7]
    %v4030 = vld [vmem:[%s3687] ss:$8 sm:$0x7]
    %v4031 = vld [vmem:[%s1755] sm:$0xff]
    %v4032 = vld [vmem:[%s1755 + $0x8] sm:$0xff]
    %v4033 = vld [vmem:[%s1755 + $0x10] sm:$0xff]
    %v4034 = vld [vmem:[%s1755 + $0x18] sm:$0xff]
    %v4035 = vld [vmem:[%s1755 + $0x20] sm:$0xff]
    %v4036 = vld [vmem:[%s1755 + $0x28] sm:$0xff]
    %v4037 = vld [vmem:[%s1755 + $0x30] sm:$0xff]
    %v4038 = vld [vmem:[%s1755 + $0x38] sm:$0xff]
    %v4039 = vld [vmem:[%s1755 + $0x40] sm:$0xff]
    %v4040 = vld [vmem:[%s1755 + $0x48] sm:$0xff]
    %v4041 = vld [vmem:[%s1755 + $0x50] sm:$0xff]
    %v4042 = vld [vmem:[%s1755 + $0x58] sm:$0xff]
    %v4043 = vld [vmem:[%s1755 + $0x60] sm:$0xff]
    %v4044 = vld [vmem:[%s1755 + $0x68] sm:$0xff]
    %v4045 = vld [vmem:[%s1755 + $0x70] sm:$0xff]
    %v4046 = vld [vmem:[%s1755 + $0x78] sm:$0xff]
    %v4047 = vld [vmem:[%s1755 + $0x80] sm:$0xff]
    %v4048 = vld [vmem:[%s1755 + $0x88] sm:$0xff]
    %v4049 = vld [vmem:[%s1755 + $0x90] sm:$0xff]
    %v4050 = vld [vmem:[%s1755 + $0x98] sm:$0xff]
    %v4051 = vld [vmem:[%s1755 + $0xa0] sm:$0xff]
    %v4052 = vld [vmem:[%s1755 + $0xa8] sm:$0xff]
    %v4053 = vld [vmem:[%s1755 + $0xb0] sm:$0xff]
    %v4054 = vld [vmem:[%s1755 + $0xb8] sm:$0xff]
    %v4055 = vld [vmem:[%s1755 + $0xc0] sm:$0xff]
    %v4056 = vld [vmem:[%s1755 + $0xc8] sm:$0xff]
    %v4057 = vld [vmem:[%s1755 + $0xd0] sm:$0xff]
    %v4058 = vld [vmem:[%s1755 + $0xd8] sm:$0xff]
    %v4059 = vld [vmem:[%s1755 + $0xe0] sm:$0xff]
    %v4060 = vld [vmem:[%s1755 + $0xe8] sm:$0xff]
    %v4061 = vld [vmem:[%s1755 + $0xf0] sm:$0xff]
    %v4062 = vld [vmem:[%s1755 + $0xf8] sm:$0xff]
    %v4063 = vld [vmem:[%s1755 + $0x100] sm:$0xff]
    %v4064 = vld [vmem:[%s1755 + $0x108] sm:$0xff]
    %v4065 = vld [vmem:[%s1755 + $0x110] sm:$0xff]
    %v4066 = vld [vmem:[%s1755 + $0x118] sm:$0xff]
    %4069 = vst [vmem:[#allocation1] ss:$9 sm:$0xff] %v4029
    %s4070 = scalar_lea.vmem [#allocation1], 1
    %4071 = vst [vmem:[%s4070] ss:$9 sm:$0xff] %v4030
    %v4072 = vld [vmem:[#allocation1] sm:$0xff]
    %v4073 = vld [vmem:[#allocation1 + $0x9] sm:$0xff]
    %v4074 = vld [vmem:[#allocation1 + $0x12] sm:$0xff]
    %v4077 = vsel %vm778, %v4074, 0
    %4079 = vmatpush.msra.mxu0 %v4046
    %4080 = vmatpush.msra.mxu0 %v4045
    %4081 = vmatpush.msra.mxu0 %v4044
    %4082 = vmatpush.msra.mxu0 %v4043
    %4083 = vmatpush.msra.mxu0 %v4042
    %4084 = vmatpush.msra.mxu0 %v4041
    %4085 = vmatpush.msra.mxu0 %v4040
    %4086 = vmatpush.msra.mxu0 %v4039
    %4087 = vmatpush.msra.mxu0 %v4038
    %4088 = vmatpush.msra.mxu0 %v4037
    %4089 = vmatpush.msra.mxu0 %v4036
    %4090 = vmatpush.msra.mxu0 %v4035
    %4091 = vmatpush.msra.mxu0 %v4034
    %4092 = vmatpush.msra.mxu0 %v4033
    %4093 = vmatpush.msra.mxu0 %v4032
    %4094 = vmatpush.msra.mxu0 %v4031
    %4095 = vmatmul.f32.gmra.mxu0 %v4072
    %v4096 = vpop.f32.mrf.mxu0
    %v4097 = vadd.f32 0.0, %v4096
    %4098 = vdwg.mxu0
    %4099 = vmatpush.msra.mxu0 %v4062
    %4100 = vmatpush.msra.mxu0 %v4061
    %4101 = vmatpush.msra.mxu0 %v4060
    %4102 = vmatpush.msra.mxu0 %v4059
    %4103 = vmatpush.msra.mxu0 %v4058
    %4104 = vmatpush.msra.mxu0 %v4057
    %4105 = vmatpush.msra.mxu0 %v4056
    %4106 = vmatpush.msra.mxu0 %v4055
    %4107 = vmatpush.msra.mxu0 %v4054
    %4108 = vmatpush.msra.mxu0 %v4053
    %4109 = vmatpush.msra.mxu0 %v4052
    %4110 = vmatpush.msra.mxu0 %v4051
    %4111 = vmatpush.msra.mxu0 %v4050
    %4112 = vmatpush.msra.mxu0 %v4049
    %4113 = vmatpush.msra.mxu0 %v4048
    %4114 = vmatpush.msra.mxu0 %v4047
    %4115 = vmatmul.f32.gmra.mxu0 %v4073
    %v4116 = vpop.f32.mrf.mxu0
    %v4117 = vadd.f32 %v4097, %v4116
    %4118 = vdwg.mxu0
    %4119 = vmatpush.msra.mxu0 0.0
    %4120 = vmatpush.msra.mxu0 0.0
    %4121 = vmatpush.msra.mxu0 0.0
    %4122 = vmatpush.msra.mxu0 0.0
    %4123 = vmatpush.msra.mxu0 0.0
    %4124 = vmatpush.msra.mxu0 0.0
    %4125 = vmatpush.msra.mxu0 0.0
    %4126 = vmatpush.msra.mxu0 0.0
    %4127 = vmatpush.msra.mxu0 0.0
    %4128 = vmatpush.msra.mxu0 0.0
    %4129 = vmatpush.msra.mxu0 0.0
    %4130 = vmatpush.msra.mxu0 0.0
    %4131 = vmatpush.msra.mxu0 %v4066
    %4132 = vmatpush.msra.mxu0 %v4065
    %4133 = vmatpush.msra.mxu0 %v4064
    %4134 = vmatpush.msra.mxu0 %v4063
    %4135 = vmatmul.f32.gmra.mxu0 %v4077
    %v4136 = vpop.f32.mrf.mxu0
    %v4137 = vadd.f32 %v4117, %v4136
    %4138 = vdwg.mxu0
    %v4139 = vadd.f32 %v4027, %v4137
    %s4140 = scalar_lea.vmem [#allocation2], 27
    %v4141 = vld [vmem:[%s4140] ss:$8 sm:$0x7]
    %s4142 = scalar_lea.vmem [#allocation2], 99
    %v4143 = vld [vmem:[%s4142] ss:$8 sm:$0x7]
    %v4144 = vld [vmem:[%s1869] sm:$0xff]
    %v4145 = vld [vmem:[%s1869 + $0x8] sm:$0xff]
    %v4146 = vld [vmem:[%s1869 + $0x10] sm:$0xff]
    %v4147 = vld [vmem:[%s1869 + $0x18] sm:$0xff]
    %v4148 = vld [vmem:[%s1869 + $0x20] sm:$0xff]
    %v4149 = vld [vmem:[%s1869 + $0x28] sm:$0xff]
    %v4150 = vld [vmem:[%s1869 + $0x30] sm:$0xff]
    %v4151 = vld [vmem:[%s1869 + $0x38] sm:$0xff]
    %v4152 = vld [vmem:[%s1869 + $0x40] sm:$0xff]
    %v4153 = vld [vmem:[%s1869 + $0x48] sm:$0xff]
    %v4154 = vld [vmem:[%s1869 + $0x50] sm:$0xff]
    %v4155 = vld [vmem:[%s1869 + $0x58] sm:$0xff]
    %v4156 = vld [vmem:[%s1869 + $0x60] sm:$0xff]
    %v4157 = vld [vmem:[%s1869 + $0x68] sm:$0xff]
    %v4158 = vld [vmem:[%s1869 + $0x70] sm:$0xff]
    %v4159 = vld [vmem:[%s1869 + $0x78] sm:$0xff]
    %v4160 = vld [vmem:[%s1869 + $0x80] sm:$0xff]
    %v4161 = vld [vmem:[%s1869 + $0x88] sm:$0xff]
    %v4162 = vld [vmem:[%s1869 + $0x90] sm:$0xff]
    %v4163 = vld [vmem:[%s1869 + $0x98] sm:$0xff]
    %v4164 = vld [vmem:[%s1869 + $0xa0] sm:$0xff]
    %v4165 = vld [vmem:[%s1869 + $0xa8] sm:$0xff]
    %v4166 = vld [vmem:[%s1869 + $0xb0] sm:$0xff]
    %v4167 = vld [vmem:[%s1869 + $0xb8] sm:$0xff]
    %v4168 = vld [vmem:[%s1869 + $0xc0] sm:$0xff]
    %v4169 = vld [vmem:[%s1869 + $0xc8] sm:$0xff]
    %v4170 = vld [vmem:[%s1869 + $0xd0] sm:$0xff]
    %v4171 = vld [vmem:[%s1869 + $0xd8] sm:$0xff]
    %v4172 = vld [vmem:[%s1869 + $0xe0] sm:$0xff]
    %v4173 = vld [vmem:[%s1869 + $0xe8] sm:$0xff]
    %v4174 = vld [vmem:[%s1869 + $0xf0] sm:$0xff]
    %v4175 = vld [vmem:[%s1869 + $0xf8] sm:$0xff]
    %v4176 = vld [vmem:[%s1869 + $0x100] sm:$0xff]
    %v4177 = vld [vmem:[%s1869 + $0x108] sm:$0xff]
    %v4178 = vld [vmem:[%s1869 + $0x110] sm:$0xff]
    %v4179 = vld [vmem:[%s1869 + $0x118] sm:$0xff]
    %4182 = vst [vmem:[#allocation1] ss:$9 sm:$0xff] %v4141
    %s4183 = scalar_lea.vmem [#allocation1], 1
    %4184 = vst [vmem:[%s4183] ss:$9 sm:$0xff] %v4143
    %v4185 = vld [vmem:[#allocation1] sm:$0xff]
    %v4186 = vld [vmem:[#allocation1 + $0x9] sm:$0xff]
    %v4187 = vld [vmem:[#allocation1 + $0x12] sm:$0xff]
    %v4190 = vsel %vm778, %v4187, 0
    %4192 = vmatpush.msra.mxu0 %v4159
    %4193 = vmatpush.msra.mxu0 %v4158
    %4194 = vmatpush.msra.mxu0 %v4157
    %4195 = vmatpush.msra.mxu0 %v4156
    %4196 = vmatpush.msra.mxu0 %v4155
    %4197 = vmatpush.msra.mxu0 %v4154
    %4198 = vmatpush.msra.mxu0 %v4153
    %4199 = vmatpush.msra.mxu0 %v4152
    %4200 = vmatpush.msra.mxu0 %v4151
    %4201 = vmatpush.msra.mxu0 %v4150
    %4202 = vmatpush.msra.mxu0 %v4149
    %4203 = vmatpush.msra.mxu0 %v4148
    %4204 = vmatpush.msra.mxu0 %v4147
    %4205 = vmatpush.msra.mxu0 %v4146
    %4206 = vmatpush.msra.mxu0 %v4145
    %4207 = vmatpush.msra.mxu0 %v4144
    %4208 = vmatmul.f32.gmra.mxu0 %v4185
    %v4209 = vpop.f32.mrf.mxu0
    %v4210 = vadd.f32 0.0, %v4209
    %4211 = vdwg.mxu0
    %4212 = vmatpush.msra.mxu0 %v4175
    %4213 = vmatpush.msra.mxu0 %v4174
    %4214 = vmatpush.msra.mxu0 %v4173
    %4215 = vmatpush.msra.mxu0 %v4172
    %4216 = vmatpush.msra.mxu0 %v4171
    %4217 = vmatpush.msra.mxu0 %v4170
    %4218 = vmatpush.msra.mxu0 %v4169
    %4219 = vmatpush.msra.mxu0 %v4168
    %4220 = vmatpush.msra.mxu0 %v4167
    %4221 = vmatpush.msra.mxu0 %v4166
    %4222 = vmatpush.msra.mxu0 %v4165
    %4223 = vmatpush.msra.mxu0 %v4164
    %4224 = vmatpush.msra.mxu0 %v4163
    %4225 = vmatpush.msra.mxu0 %v4162
    %4226 = vmatpush.msra.mxu0 %v4161
    %4227 = vmatpush.msra.mxu0 %v4160
    %4228 = vmatmul.f32.gmra.mxu0 %v4186
    %v4229 = vpop.f32.mrf.mxu0
    %v4230 = vadd.f32 %v4210, %v4229
    %4231 = vdwg.mxu0
    %4232 = vmatpush.msra.mxu0 0.0
    %4233 = vmatpush.msra.mxu0 0.0
    %4234 = vmatpush.msra.mxu0 0.0
    %4235 = vmatpush.msra.mxu0 0.0
    %4236 = vmatpush.msra.mxu0 0.0
    %4237 = vmatpush.msra.mxu0 0.0
    %4238 = vmatpush.msra.mxu0 0.0
    %4239 = vmatpush.msra.mxu0 0.0
    %4240 = vmatpush.msra.mxu0 0.0
    %4241 = vmatpush.msra.mxu0 0.0
    %4242 = vmatpush.msra.mxu0 0.0
    %4243 = vmatpush.msra.mxu0 0.0
    %4244 = vmatpush.msra.mxu0 %v4179
    %4245 = vmatpush.msra.mxu0 %v4178
    %4246 = vmatpush.msra.mxu0 %v4177
    %4247 = vmatpush.msra.mxu0 %v4176
    %4248 = vmatmul.f32.gmra.mxu0 %v4190
    %v4249 = vpop.f32.mrf.mxu0
    %v4250 = vadd.f32 %v4230, %v4249
    %4251 = vdwg.mxu0
    %v4252 = vadd.f32 %v4139, %v4250
    %s4253 = scalar_lea.vmem [#allocation2], 28
    %v4254 = vld [vmem:[%s4253] ss:$8 sm:$0x7]
    %s4255 = scalar_lea.vmem [#allocation2], 100
    %v4256 = vld [vmem:[%s4255] ss:$8 sm:$0x7]
    %v4257 = vld [vmem:[%s1983] sm:$0xff]
    %v4258 = vld [vmem:[%s1983 + $0x8] sm:$0xff]
    %v4259 = vld [vmem:[%s1983 + $0x10] sm:$0xff]
    %v4260 = vld [vmem:[%s1983 + $0x18] sm:$0xff]
    %v4261 = vld [vmem:[%s1983 + $0x20] sm:$0xff]
    %v4262 = vld [vmem:[%s1983 + $0x28] sm:$0xff]
    %v4263 = vld [vmem:[%s1983 + $0x30] sm:$0xff]
    %v4264 = vld [vmem:[%s1983 + $0x38] sm:$0xff]
    %v4265 = vld [vmem:[%s1983 + $0x40] sm:$0xff]
    %v4266 = vld [vmem:[%s1983 + $0x48] sm:$0xff]
    %v4267 = vld [vmem:[%s1983 + $0x50] sm:$0xff]
    %v4268 = vld [vmem:[%s1983 + $0x58] sm:$0xff]
    %v4269 = vld [vmem:[%s1983 + $0x60] sm:$0xff]
    %v4270 = vld [vmem:[%s1983 + $0x68] sm:$0xff]
    %v4271 = vld [vmem:[%s1983 + $0x70] sm:$0xff]
    %v4272 = vld [vmem:[%s1983 + $0x78] sm:$0xff]
    %v4273 = vld [vmem:[%s1983 + $0x80] sm:$0xff]
    %v4274 = vld [vmem:[%s1983 + $0x88] sm:$0xff]
    %v4275 = vld [vmem:[%s1983 + $0x90] sm:$0xff]
    %v4276 = vld [vmem:[%s1983 + $0x98] sm:$0xff]
    %v4277 = vld [vmem:[%s1983 + $0xa0] sm:$0xff]
    %v4278 = vld [vmem:[%s1983 + $0xa8] sm:$0xff]
    %v4279 = vld [vmem:[%s1983 + $0xb0] sm:$0xff]
    %v4280 = vld [vmem:[%s1983 + $0xb8] sm:$0xff]
    %v4281 = vld [vmem:[%s1983 + $0xc0] sm:$0xff]
    %v4282 = vld [vmem:[%s1983 + $0xc8] sm:$0xff]
    %v4283 = vld [vmem:[%s1983 + $0xd0] sm:$0xff]
    %v4284 = vld [vmem:[%s1983 + $0xd8] sm:$0xff]
    %v4285 = vld [vmem:[%s1983 + $0xe0] sm:$0xff]
    %v4286 = vld [vmem:[%s1983 + $0xe8] sm:$0xff]
    %v4287 = vld [vmem:[%s1983 + $0xf0] sm:$0xff]
    %v4288 = vld [vmem:[%s1983 + $0xf8] sm:$0xff]
    %v4289 = vld [vmem:[%s1983 + $0x100] sm:$0xff]
    %v4290 = vld [vmem:[%s1983 + $0x108] sm:$0xff]
    %v4291 = vld [vmem:[%s1983 + $0x110] sm:$0xff]
    %v4292 = vld [vmem:[%s1983 + $0x118] sm:$0xff]
    %4295 = vst [vmem:[#allocation1] ss:$9 sm:$0xff] %v4254
    %s4296 = scalar_lea.vmem [#allocation1], 1
    %4297 = vst [vmem:[%s4296] ss:$9 sm:$0xff] %v4256
    %v4298 = vld [vmem:[#allocation1] sm:$0xff]
    %v4299 = vld [vmem:[#allocation1 + $0x9] sm:$0xff]
    %v4300 = vld [vmem:[#allocation1 + $0x12] sm:$0xff]
    %v4303 = vsel %vm778, %v4300, 0
    %4305 = vmatpush.msra.mxu0 %v4272
    %4306 = vmatpush.msra.mxu0 %v4271
    %4307 = vmatpush.msra.mxu0 %v4270
    %4308 = vmatpush.msra.mxu0 %v4269
    %4309 = vmatpush.msra.mxu0 %v4268
    %4310 = vmatpush.msra.mxu0 %v4267
    %4311 = vmatpush.msra.mxu0 %v4266
    %4312 = vmatpush.msra.mxu0 %v4265
    %4313 = vmatpush.msra.mxu0 %v4264
    %4314 = vmatpush.msra.mxu0 %v4263
    %4315 = vmatpush.msra.mxu0 %v4262
    %4316 = vmatpush.msra.mxu0 %v4261
    %4317 = vmatpush.msra.mxu0 %v4260
    %4318 = vmatpush.msra.mxu0 %v4259
    %4319 = vmatpush.msra.mxu0 %v4258
    %4320 = vmatpush.msra.mxu0 %v4257
    %4321 = vmatmul.f32.gmra.mxu0 %v4298
    %v4322 = vpop.f32.mrf.mxu0
    %v4323 = vadd.f32 0.0, %v4322
    %4324 = vdwg.mxu0
    %4325 = vmatpush.msra.mxu0 %v4288
    %4326 = vmatpush.msra.mxu0 %v4287
    %4327 = vmatpush.msra.mxu0 %v4286
    %4328 = vmatpush.msra.mxu0 %v4285
    %4329 = vmatpush.msra.mxu0 %v4284
    %4330 = vmatpush.msra.mxu0 %v4283
    %4331 = vmatpush.msra.mxu0 %v4282
    %4332 = vmatpush.msra.mxu0 %v4281
    %4333 = vmatpush.msra.mxu0 %v4280
    %4334 = vmatpush.msra.mxu0 %v4279
    %4335 = vmatpush.msra.mxu0 %v4278
    %4336 = vmatpush.msra.mxu0 %v4277
    %4337 = vmatpush.msra.mxu0 %v4276
    %4338 = vmatpush.msra.mxu0 %v4275
    %4339 = vmatpush.msra.mxu0 %v4274
    %4340 = vmatpush.msra.mxu0 %v4273
    %4341 = vmatmul.f32.gmra.mxu0 %v4299
    %v4342 = vpop.f32.mrf.mxu0
    %v4343 = vadd.f32 %v4323, %v4342
    %4344 = vdwg.mxu0
    %4345 = vmatpush.msra.mxu0 0.0
    %4346 = vmatpush.msra.mxu0 0.0
    %4347 = vmatpush.msra.mxu0 0.0
    %4348 = vmatpush.msra.mxu0 0.0
    %4349 = vmatpush.msra.mxu0 0.0
    %4350 = vmatpush.msra.mxu0 0.0
    %4351 = vmatpush.msra.mxu0 0.0
    %4352 = vmatpush.msra.mxu0 0.0
    %4353 = vmatpush.msra.mxu0 0.0
    %4354 = vmatpush.msra.mxu0 0.0
    %4355 = vmatpush.msra.mxu0 0.0
    %4356 = vmatpush.msra.mxu0 0.0
    %4357 = vmatpush.msra.mxu0 %v4292
    %4358 = vmatpush.msra.mxu0 %v4291
    %4359 = vmatpush.msra.mxu0 %v4290
    %4360 = vmatpush.msra.mxu0 %v4289
    %4361 = vmatmul.f32.gmra.mxu0 %v4303
    %v4362 = vpop.f32.mrf.mxu0
    %v4363 = vadd.f32 %v4343, %v4362
    %4364 = vdwg.mxu0
    %v4365 = vadd.f32 %v4252, %v4363
    %v4366 = vld [vmem:[%s4] sm:$0x1]
    %v4368 = vperm.slane %v4366, 0
    %v4370 = vadd.f32 %v4365, %v4368
    %v4371 = vmax.f32 %v4370, 0.0
    %v4373 = vrot.slane %v4371, 1
    %4375 = vst.msk [vmem:[#allocation3 + $0x4] sm:$0x1] %vm2102, %v4371
    %4376 = vst.msk [vmem:[#allocation3 + $0xc] sm:$0x1] %vm2102, %v4373
    %v4377 = vld [vmem:[%s3685] ss:$8 sm:$0x7]
    %v4378 = vld [vmem:[%s3687] ss:$8 sm:$0x7]
    %v4379 = vld [vmem:[%s3] sm:$0xff]
    %v4380 = vld [vmem:[%s3 + $0x8] sm:$0xff]
    %v4381 = vld [vmem:[%s3 + $0x10] sm:$0xff]
    %v4382 = vld [vmem:[%s3 + $0x18] sm:$0xff]
    %v4383 = vld [vmem:[%s3 + $0x20] sm:$0xff]
    %v4384 = vld [vmem:[%s3 + $0x28] sm:$0xff]
    %v4385 = vld [vmem:[%s3 + $0x30] sm:$0xff]
    %v4386 = vld [vmem:[%s3 + $0x38] sm:$0xff]
    %v4387 = vld [vmem:[%s3 + $0x40] sm:$0xff]
    %v4388 = vld [vmem:[%s3 + $0x48] sm:$0xff]
    %v4389 = vld [vmem:[%s3 + $0x50] sm:$0xff]
    %v4390 = vld [vmem:[%s3 + $0x58] sm:$0xff]
    %v4391 = vld [vmem:[%s3 + $0x60] sm:$0xff]
    %v4392 = vld [vmem:[%s3 + $0x68] sm:$0xff]
    %v4393 = vld [vmem:[%s3 + $0x70] sm:$0xff]
    %v4394 = vld [vmem:[%s3 + $0x78] sm:$0xff]
    %v4395 = vld [vmem:[%s3 + $0x80] sm:$0xff]
    %v4396 = vld [vmem:[%s3 + $0x88] sm:$0xff]
    %v4397 = vld [vmem:[%s3 + $0x90] sm:$0xff]
    %v4398 = vld [vmem:[%s3 + $0x98] sm:$0xff]
    %v4399 = vld [vmem:[%s3 + $0xa0] sm:$0xff]
    %v4400 = vld [vmem:[%s3 + $0xa8] sm:$0xff]
    %v4401 = vld [vmem:[%s3 + $0xb0] sm:$0xff]
    %v4402 = vld [vmem:[%s3 + $0xb8] sm:$0xff]
    %v4403 = vld [vmem:[%s3 + $0xc0] sm:$0xff]
    %v4404 = vld [vmem:[%s3 + $0xc8] sm:$0xff]
    %v4405 = vld [vmem:[%s3 + $0xd0] sm:$0xff]
    %v4406 = vld [vmem:[%s3 + $0xd8] sm:$0xff]
    %v4407 = vld [vmem:[%s3 + $0xe0] sm:$0xff]
    %v4408 = vld [vmem:[%s3 + $0xe8] sm:$0xff]
    %v4409 = vld [vmem:[%s3 + $0xf0] sm:$0xff]
    %v4410 = vld [vmem:[%s3 + $0xf8] sm:$0xff]
    %v4411 = vld [vmem:[%s3 + $0x100] sm:$0xff]
    %v4412 = vld [vmem:[%s3 + $0x108] sm:$0xff]
    %v4413 = vld [vmem:[%s3 + $0x110] sm:$0xff]
    %v4414 = vld [vmem:[%s3 + $0x118] sm:$0xff]
    %v4415 = vld [vmem:[%s4140] ss:$8 sm:$0x7]
    %v4416 = vld [vmem:[%s4142] ss:$8 sm:$0x7]
    %v4417 = vld [vmem:[%s1570] sm:$0xff]
    %v4418 = vld [vmem:[%s1570 + $0x8] sm:$0xff]
    %v4419 = vld [vmem:[%s1570 + $0x10] sm:$0xff]
    %v4420 = vld [vmem:[%s1570 + $0x18] sm:$0xff]
    %v4421 = vld [vmem:[%s1570 + $0x20] sm:$0xff]
    %v4422 = vld [vmem:[%s1570 + $0x28] sm:$0xff]
    %v4423 = vld [vmem:[%s1570 + $0x30] sm:$0xff]
    %v4424 = vld [vmem:[%s1570 + $0x38] sm:$0xff]
    %v4425 = vld [vmem:[%s1570 + $0x40] sm:$0xff]
    %v4426 = vld [vmem:[%s1570 + $0x48] sm:$0xff]
    %v4427 = vld [vmem:[%s1570 + $0x50] sm:$0xff]
    %v4428 = vld [vmem:[%s1570 + $0x58] sm:$0xff]
    %v4429 = vld [vmem:[%s1570 + $0x60] sm:$0xff]
    %v4430 = vld [vmem:[%s1570 + $0x68] sm:$0xff]
    %v4431 = vld [vmem:[%s1570 + $0x70] sm:$0xff]
    %v4432 = vld [vmem:[%s1570 + $0x78] sm:$0xff]
    %v4433 = vld [vmem:[%s1570 + $0x80] sm:$0xff]
    %v4434 = vld [vmem:[%s1570 + $0x88] sm:$0xff]
    %v4435 = vld [vmem:[%s1570 + $0x90] sm:$0xff]
    %v4436 = vld [vmem:[%s1570 + $0x98] sm:$0xff]
    %v4437 = vld [vmem:[%s1570 + $0xa0] sm:$0xff]
    %v4438 = vld [vmem:[%s1570 + $0xa8] sm:$0xff]
    %v4439 = vld [vmem:[%s1570 + $0xb0] sm:$0xff]
    %v4440 = vld [vmem:[%s1570 + $0xb8] sm:$0xff]
    %v4441 = vld [vmem:[%s1570 + $0xc0] sm:$0xff]
    %v4442 = vld [vmem:[%s1570 + $0xc8] sm:$0xff]
    %v4443 = vld [vmem:[%s1570 + $0xd0] sm:$0xff]
    %v4444 = vld [vmem:[%s1570 + $0xd8] sm:$0xff]
    %v4445 = vld [vmem:[%s1570 + $0xe0] sm:$0xff]
    %v4446 = vld [vmem:[%s1570 + $0xe8] sm:$0xff]
    %v4447 = vld [vmem:[%s1570 + $0xf0] sm:$0xff]
    %v4448 = vld [vmem:[%s1570 + $0xf8] sm:$0xff]
    %v4449 = vld [vmem:[%s1570 + $0x100] sm:$0xff]
    %v4450 = vld [vmem:[%s1570 + $0x108] sm:$0xff]
    %v4451 = vld [vmem:[%s1570 + $0x110] sm:$0xff]
    %v4452 = vld [vmem:[%s1570 + $0x118] sm:$0xff]
    %4455 = vst [vmem:[#allocation1] ss:$9 sm:$0xff] %v4415
    %s4456 = scalar_lea.vmem [#allocation1], 1
    %4457 = vst [vmem:[%s4456] ss:$9 sm:$0xff] %v4416
    %v4458 = vld [vmem:[#allocation1] sm:$0xff]
    %v4459 = vld [vmem:[#allocation1 + $0x9] sm:$0xff]
    %v4460 = vld [vmem:[#allocation1 + $0x12] sm:$0xff]
    %v4463 = vsel %vm778, %v4460, 0
    %4465 = vmatpush.msra.mxu0 %v4432
    %4466 = vmatpush.msra.mxu0 %v4431
    %4467 = vmatpush.msra.mxu0 %v4430
    %4468 = vmatpush.msra.mxu0 %v4429
    %4469 = vmatpush.msra.mxu0 %v4428
    %4470 = vmatpush.msra.mxu0 %v4427
    %4471 = vmatpush.msra.mxu0 %v4426
    %4472 = vmatpush.msra.mxu0 %v4425
    %4473 = vmatpush.msra.mxu0 %v4424
    %4474 = vmatpush.msra.mxu0 %v4423
    %4475 = vmatpush.msra.mxu0 %v4422
    %4476 = vmatpush.msra.mxu0 %v4421
    %4477 = vmatpush.msra.mxu0 %v4420
    %4478 = vmatpush.msra.mxu0 %v4419
    %4479 = vmatpush.msra.mxu0 %v4418
    %4480 = vmatpush.msra.mxu0 %v4417
    %4481 = vmatmul.f32.gmra.mxu0 %v4458
    %v4482 = vpop.f32.mrf.mxu0
    %v4483 = vadd.f32 0.0, %v4482
    %4484 = vdwg.mxu0
    %4485 = vmatpush.msra.mxu0 %v4448
    %4486 = vmatpush.msra.mxu0 %v4447
    %4487 = vmatpush.msra.mxu0 %v4446
    %4488 = vmatpush.msra.mxu0 %v4445
    %4489 = vmatpush.msra.mxu0 %v4444
    %4490 = vmatpush.msra.mxu0 %v4443
    %4491 = vmatpush.msra.mxu0 %v4442
    %4492 = vmatpush.msra.mxu0 %v4441
    %4493 = vmatpush.msra.mxu0 %v4440
    %4494 = vmatpush.msra.mxu0 %v4439
    %4495 = vmatpush.msra.mxu0 %v4438
    %4496 = vmatpush.msra.mxu0 %v4437
    %4497 = vmatpush.msra.mxu0 %v4436
    %4498 = vmatpush.msra.mxu0 %v4435
    %4499 = vmatpush.msra.mxu0 %v4434
    %4500 = vmatpush.msra.mxu0 %v4433
    %4501 = vmatmul.f32.gmra.mxu0 %v4459
    %v4502 = vpop.f32.mrf.mxu0
    %v4503 = vadd.f32 %v4483, %v4502
    %4504 = vdwg.mxu0
    %4505 = vmatpush.msra.mxu0 0.0
    %4506 = vmatpush.msra.mxu0 0.0
    %4507 = vmatpush.msra.mxu0 0.0
    %4508 = vmatpush.msra.mxu0 0.0
    %4509 = vmatpush.msra.mxu0 0.0
    %4510 = vmatpush.msra.mxu0 0.0
    %4511 = vmatpush.msra.mxu0 0.0
    %4512 = vmatpush.msra.mxu0 0.0
    %4513 = vmatpush.msra.mxu0 0.0
    %4514 = vmatpush.msra.mxu0 0.0
    %4515 = vmatpush.msra.mxu0 0.0
    %4516 = vmatpush.msra.mxu0 0.0
    %4517 = vmatpush.msra.mxu0 %v4452
    %4518 = vmatpush.msra.mxu0 %v4451
    %4519 = vmatpush.msra.mxu0 %v4450
    %4520 = vmatpush.msra.mxu0 %v4449
    %4521 = vmatmul.f32.gmra.mxu0 %v4463
    %v4522 = vpop.f32.mrf.mxu0
    %v4523 = vadd.f32 %v4503, %v4522
    %4524 = vdwg.mxu0
    %4527 = vst [vmem:[#allocation1] ss:$9 sm:$0xff] %v4377
    %s4528 = scalar_lea.vmem [#allocation1], 1
    %4529 = vst [vmem:[%s4528] ss:$9 sm:$0xff] %v4378
    %v4530 = vld [vmem:[#allocation1] sm:$0xff]
    %v4531 = vld [vmem:[#allocation1 + $0x9] sm:$0xff]
    %v4532 = vld [vmem:[#allocation1 + $0x12] sm:$0xff]
    %v4535 = vsel %vm778, %v4532, 0
    %4537 = vmatpush.msra.mxu0 %v4394
    %4538 = vmatpush.msra.mxu0 %v4393
    %4539 = vmatpush.msra.mxu0 %v4392
    %4540 = vmatpush.msra.mxu0 %v4391
    %4541 = vmatpush.msra.mxu0 %v4390
    %4542 = vmatpush.msra.mxu0 %v4389
    %4543 = vmatpush.msra.mxu0 %v4388
    %4544 = vmatpush.msra.mxu0 %v4387
    %4545 = vmatpush.msra.mxu0 %v4386
    %4546 = vmatpush.msra.mxu0 %v4385
    %4547 = vmatpush.msra.mxu0 %v4384
    %4548 = vmatpush.msra.mxu0 %v4383
    %4549 = vmatpush.msra.mxu0 %v4382
    %4550 = vmatpush.msra.mxu0 %v4381
    %4551 = vmatpush.msra.mxu0 %v4380
    %4552 = vmatpush.msra.mxu0 %v4379
    %4553 = vmatmul.f32.gmra.mxu0 %v4530
    %v4554 = vpop.f32.mrf.mxu0
    %v4555 = vadd.f32 %v4523, %v4554
    %4556 = vdwg.mxu0
    %4557 = vmatpush.msra.mxu0 %v4410
    %4558 = vmatpush.msra.mxu0 %v4409
    %4559 = vmatpush.msra.mxu0 %v4408
    %4560 = vmatpush.msra.mxu0 %v4407
    %4561 = vmatpush.msra.mxu0 %v4406
    %4562 = vmatpush.msra.mxu0 %v4405
    %4563 = vmatpush.msra.mxu0 %v4404
    %4564 = vmatpush.msra.mxu0 %v4403
    %4565 = vmatpush.msra.mxu0 %v4402
    %4566 = vmatpush.msra.mxu0 %v4401
    %4567 = vmatpush.msra.mxu0 %v4400
    %4568 = vmatpush.msra.mxu0 %v4399
    %4569 = vmatpush.msra.mxu0 %v4398
    %4570 = vmatpush.msra.mxu0 %v4397
    %4571 = vmatpush.msra.mxu0 %v4396
    %4572 = vmatpush.msra.mxu0 %v4395
    %4573 = vmatmul.f32.gmra.mxu0 %v4531
    %v4574 = vpop.f32.mrf.mxu0
    %v4575 = vadd.f32 %v4555, %v4574
    %4576 = vdwg.mxu0
    %4577 = vmatpush.msra.mxu0 0.0
    %4578 = vmatpush.msra.mxu0 0.0
    %4579 = vmatpush.msra.mxu0 0.0
    %4580 = vmatpush.msra.mxu0 0.0
    %4581 = vmatpush.msra.mxu0 0.0
    %4582 = vmatpush.msra.mxu0 0.0
    %4583 = vmatpush.msra.mxu0 0.0
    %4584 = vmatpush.msra.mxu0 0.0
    %4585 = vmatpush.msra.mxu0 0.0
    %4586 = vmatpush.msra.mxu0 0.0
    %4587 = vmatpush.msra.mxu0 0.0
    %4588 = vmatpush.msra.mxu0 0.0
    %4589 = vmatpush.msra.mxu0 %v4414
    %4590 = vmatpush.msra.mxu0 %v4413
    %4591 = vmatpush.msra.mxu0 %v4412
    %4592 = vmatpush.msra.mxu0 %v4411
    %4593 = vmatmul.f32.gmra.mxu0 %v4535
    %v4594 = vpop.f32.mrf.mxu0
    %v4595 = vadd.f32 %v4575, %v4594
    %4596 = vdwg.mxu0
    %v4597 = vld [vmem:[%s4253] ss:$8 sm:$0x7]
    %v4598 = vld [vmem:[%s4255] ss:$8 sm:$0x7]
    %v4599 = vld [vmem:[%s1755] sm:$0xff]
    %v4600 = vld [vmem:[%s1755 + $0x8] sm:$0xff]
    %v4601 = vld [vmem:[%s1755 + $0x10] sm:$0xff]
    %v4602 = vld [vmem:[%s1755 + $0x18] sm:$0xff]
    %v4603 = vld [vmem:[%s1755 + $0x20] sm:$0xff]
    %v4604 = vld [vmem:[%s1755 + $0x28] sm:$0xff]
    %v4605 = vld [vmem:[%s1755 + $0x30] sm:$0xff]
    %v4606 = vld [vmem:[%s1755 + $0x38] sm:$0xff]
    %v4607 = vld [vmem:[%s1755 + $0x40] sm:$0xff]
    %v4608 = vld [vmem:[%s1755 + $0x48] sm:$0xff]
    %v4609 = vld [vmem:[%s1755 + $0x50] sm:$0xff]
    %v4610 = vld [vmem:[%s1755 + $0x58] sm:$0xff]
    %v4611 = vld [vmem:[%s1755 + $0x60] sm:$0xff]
    %v4612 = vld [vmem:[%s1755 + $0x68] sm:$0xff]
    %v4613 = vld [vmem:[%s1755 + $0x70] sm:$0xff]
    %v4614 = vld [vmem:[%s1755 + $0x78] sm:$0xff]
    %v4615 = vld [vmem:[%s1755 + $0x80] sm:$0xff]
    %v4616 = vld [vmem:[%s1755 + $0x88] sm:$0xff]
    %v4617 = vld [vmem:[%s1755 + $0x90] sm:$0xff]
    %v4618 = vld [vmem:[%s1755 + $0x98] sm:$0xff]
    %v4619 = vld [vmem:[%s1755 + $0xa0] sm:$0xff]
    %v4620 = vld [vmem:[%s1755 + $0xa8] sm:$0xff]
    %v4621 = vld [vmem:[%s1755 + $0xb0] sm:$0xff]
    %v4622 = vld [vmem:[%s1755 + $0xb8] sm:$0xff]
    %v4623 = vld [vmem:[%s1755 + $0xc0] sm:$0xff]
    %v4624 = vld [vmem:[%s1755 + $0xc8] sm:$0xff]
    %v4625 = vld [vmem:[%s1755 + $0xd0] sm:$0xff]
    %v4626 = vld [vmem:[%s1755 + $0xd8] sm:$0xff]
    %v4627 = vld [vmem:[%s1755 + $0xe0] sm:$0xff]
    %v4628 = vld [vmem:[%s1755 + $0xe8] sm:$0xff]
    %v4629 = vld [vmem:[%s1755 + $0xf0] sm:$0xff]
    %v4630 = vld [vmem:[%s1755 + $0xf8] sm:$0xff]
    %v4631 = vld [vmem:[%s1755 + $0x100] sm:$0xff]
    %v4632 = vld [vmem:[%s1755 + $0x108] sm:$0xff]
    %v4633 = vld [vmem:[%s1755 + $0x110] sm:$0xff]
    %v4634 = vld [vmem:[%s1755 + $0x118] sm:$0xff]
    %4637 = vst [vmem:[#allocation1] ss:$9 sm:$0xff] %v4597
    %s4638 = scalar_lea.vmem [#allocation1], 1
    %4639 = vst [vmem:[%s4638] ss:$9 sm:$0xff] %v4598
    %v4640 = vld [vmem:[#allocation1] sm:$0xff]
    %v4641 = vld [vmem:[#allocation1 + $0x9] sm:$0xff]
    %v4642 = vld [vmem:[#allocation1 + $0x12] sm:$0xff]
    %v4645 = vsel %vm778, %v4642, 0
    %4647 = vmatpush.msra.mxu0 %v4614
    %4648 = vmatpush.msra.mxu0 %v4613
    %4649 = vmatpush.msra.mxu0 %v4612
    %4650 = vmatpush.msra.mxu0 %v4611
    %4651 = vmatpush.msra.mxu0 %v4610
    %4652 = vmatpush.msra.mxu0 %v4609
    %4653 = vmatpush.msra.mxu0 %v4608
    %4654 = vmatpush.msra.mxu0 %v4607
    %4655 = vmatpush.msra.mxu0 %v4606
    %4656 = vmatpush.msra.mxu0 %v4605
    %4657 = vmatpush.msra.mxu0 %v4604
    %4658 = vmatpush.msra.mxu0 %v4603
    %4659 = vmatpush.msra.mxu0 %v4602
    %4660 = vmatpush.msra.mxu0 %v4601
    %4661 = vmatpush.msra.mxu0 %v4600
    %4662 = vmatpush.msra.mxu0 %v4599
    %4663 = vmatmul.f32.gmra.mxu0 %v4640
    %v4664 = vpop.f32.mrf.mxu0
    %v4665 = vadd.f32 0.0, %v4664
    %4666 = vdwg.mxu0
    %4667 = vmatpush.msra.mxu0 %v4630
    %4668 = vmatpush.msra.mxu0 %v4629
    %4669 = vmatpush.msra.mxu0 %v4628
    %4670 = vmatpush.msra.mxu0 %v4627
    %4671 = vmatpush.msra.mxu0 %v4626
    %4672 = vmatpush.msra.mxu0 %v4625
    %4673 = vmatpush.msra.mxu0 %v4624
    %4674 = vmatpush.msra.mxu0 %v4623
    %4675 = vmatpush.msra.mxu0 %v4622
    %4676 = vmatpush.msra.mxu0 %v4621
    %4677 = vmatpush.msra.mxu0 %v4620
    %4678 = vmatpush.msra.mxu0 %v4619
    %4679 = vmatpush.msra.mxu0 %v4618
    %4680 = vmatpush.msra.mxu0 %v4617
    %4681 = vmatpush.msra.mxu0 %v4616
    %4682 = vmatpush.msra.mxu0 %v4615
    %4683 = vmatmul.f32.gmra.mxu0 %v4641
    %v4684 = vpop.f32.mrf.mxu0
    %v4685 = vadd.f32 %v4665, %v4684
    %4686 = vdwg.mxu0
    %4687 = vmatpush.msra.mxu0 0.0
    %4688 = vmatpush.msra.mxu0 0.0
    %4689 = vmatpush.msra.mxu0 0.0
    %4690 = vmatpush.msra.mxu0 0.0
    %4691 = vmatpush.msra.mxu0 0.0
    %4692 = vmatpush.msra.mxu0 0.0
    %4693 = vmatpush.msra.mxu0 0.0
    %4694 = vmatpush.msra.mxu0 0.0
    %4695 = vmatpush.msra.mxu0 0.0
    %4696 = vmatpush.msra.mxu0 0.0
    %4697 = vmatpush.msra.mxu0 0.0
    %4698 = vmatpush.msra.mxu0 0.0
    %4699 = vmatpush.msra.mxu0 %v4634
    %4700 = vmatpush.msra.mxu0 %v4633
    %4701 = vmatpush.msra.mxu0 %v4632
    %4702 = vmatpush.msra.mxu0 %v4631
    %4703 = vmatmul.f32.gmra.mxu0 %v4645
    %v4704 = vpop.f32.mrf.mxu0
    %v4705 = vadd.f32 %v4685, %v4704
    %4706 = vdwg.mxu0
    %v4707 = vadd.f32 %v4595, %v4705
    %s4708 = scalar_lea.vmem [#allocation2], 29
    %v4709 = vld [vmem:[%s4708] ss:$8 sm:$0x7]
    %s4710 = scalar_lea.vmem [#allocation2], 101
    %v4711 = vld [vmem:[%s4710] ss:$8 sm:$0x7]
    %v4712 = vld [vmem:[%s1869] sm:$0xff]
    %v4713 = vld [vmem:[%s1869 + $0x8] sm:$0xff]
    %v4714 = vld [vmem:[%s1869 + $0x10] sm:$0xff]
    %v4715 = vld [vmem:[%s1869 + $0x18] sm:$0xff]
    %v4716 = vld [vmem:[%s1869 + $0x20] sm:$0xff]
    %v4717 = vld [vmem:[%s1869 + $0x28] sm:$0xff]
    %v4718 = vld [vmem:[%s1869 + $0x30] sm:$0xff]
    %v4719 = vld [vmem:[%s1869 + $0x38] sm:$0xff]
    %v4720 = vld [vmem:[%s1869 + $0x40] sm:$0xff]
    %v4721 = vld [vmem:[%s1869 + $0x48] sm:$0xff]
    %v4722 = vld [vmem:[%s1869 + $0x50] sm:$0xff]
    %v4723 = vld [vmem:[%s1869 + $0x58] sm:$0xff]
    %v4724 = vld [vmem:[%s1869 + $0x60] sm:$0xff]
    %v4725 = vld [vmem:[%s1869 + $0x68] sm:$0xff]
    %v4726 = vld [vmem:[%s1869 + $0x70] sm:$0xff]
    %v4727 = vld [vmem:[%s1869 + $0x78] sm:$0xff]
    %v4728 = vld [vmem:[%s1869 + $0x80] sm:$0xff]
    %v4729 = vld [vmem:[%s1869 + $0x88] sm:$0xff]
    %v4730 = vld [vmem:[%s1869 + $0x90] sm:$0xff]
    %v4731 = vld [vmem:[%s1869 + $0x98] sm:$0xff]
    %v4732 = vld [vmem:[%s1869 + $0xa0] sm:$0xff]
    %v4733 = vld [vmem:[%s1869 + $0xa8] sm:$0xff]
    %v4734 = vld [vmem:[%s1869 + $0xb0] sm:$0xff]
    %v4735 = vld [vmem:[%s1869 + $0xb8] sm:$0xff]
    %v4736 = vld [vmem:[%s1869 + $0xc0] sm:$0xff]
    %v4737 = vld [vmem:[%s1869 + $0xc8] sm:$0xff]
    %v4738 = vld [vmem:[%s1869 + $0xd0] sm:$0xff]
    %v4739 = vld [vmem:[%s1869 + $0xd8] sm:$0xff]
    %v4740 = vld [vmem:[%s1869 + $0xe0] sm:$0xff]
    %v4741 = vld [vmem:[%s1869 + $0xe8] sm:$0xff]
    %v4742 = vld [vmem:[%s1869 + $0xf0] sm:$0xff]
    %v4743 = vld [vmem:[%s1869 + $0xf8] sm:$0xff]
    %v4744 = vld [vmem:[%s1869 + $0x100] sm:$0xff]
    %v4745 = vld [vmem:[%s1869 + $0x108] sm:$0xff]
    %v4746 = vld [vmem:[%s1869 + $0x110] sm:$0xff]
    %v4747 = vld [vmem:[%s1869 + $0x118] sm:$0xff]
    %4750 = vst [vmem:[#allocation1] ss:$9 sm:$0xff] %v4709
    %s4751 = scalar_lea.vmem [#allocation1], 1
    %4752 = vst [vmem:[%s4751] ss:$9 sm:$0xff] %v4711
    %v4753 = vld [vmem:[#allocation1] sm:$0xff]
    %v4754 = vld [vmem:[#allocation1 + $0x9] sm:$0xff]
    %v4755 = vld [vmem:[#allocation1 + $0x12] sm:$0xff]
    %v4758 = vsel %vm778, %v4755, 0
    %4760 = vmatpush.msra.mxu0 %v4727
    %4761 = vmatpush.msra.mxu0 %v4726
    %4762 = vmatpush.msra.mxu0 %v4725
    %4763 = vmatpush.msra.mxu0 %v4724
    %4764 = vmatpush.msra.mxu0 %v4723
    %4765 = vmatpush.msra.mxu0 %v4722
    %4766 = vmatpush.msra.mxu0 %v4721
    %4767 = vmatpush.msra.mxu0 %v4720
    %4768 = vmatpush.msra.mxu0 %v4719
    %4769 = vmatpush.msra.mxu0 %v4718
    %4770 = vmatpush.msra.mxu0 %v4717
    %4771 = vmatpush.msra.mxu0 %v4716
    %4772 = vmatpush.msra.mxu0 %v4715
    %4773 = vmatpush.msra.mxu0 %v4714
    %4774 = vmatpush.msra.mxu0 %v4713
    %4775 = vmatpush.msra.mxu0 %v4712
    %4776 = vmatmul.f32.gmra.mxu0 %v4753
    %v4777 = vpop.f32.mrf.mxu0
    %v4778 = vadd.f32 0.0, %v4777
    %4779 = vdwg.mxu0
    %4780 = vmatpush.msra.mxu0 %v4743
    %4781 = vmatpush.msra.mxu0 %v4742
    %4782 = vmatpush.msra.mxu0 %v4741
    %4783 = vmatpush.msra.mxu0 %v4740
    %4784 = vmatpush.msra.mxu0 %v4739
    %4785 = vmatpush.msra.mxu0 %v4738
    %4786 = vmatpush.msra.mxu0 %v4737
    %4787 = vmatpush.msra.mxu0 %v4736
    %4788 = vmatpush.msra.mxu0 %v4735
    %4789 = vmatpush.msra.mxu0 %v4734
    %4790 = vmatpush.msra.mxu0 %v4733
    %4791 = vmatpush.msra.mxu0 %v4732
    %4792 = vmatpush.msra.mxu0 %v4731
    %4793 = vmatpush.msra.mxu0 %v4730
    %4794 = vmatpush.msra.mxu0 %v4729
    %4795 = vmatpush.msra.mxu0 %v4728
    %4796 = vmatmul.f32.gmra.mxu0 %v4754
    %v4797 = vpop.f32.mrf.mxu0
    %v4798 = vadd.f32 %v4778, %v4797
    %4799 = vdwg.mxu0
    %4800 = vmatpush.msra.mxu0 0.0
    %4801 = vmatpush.msra.mxu0 0.0
    %4802 = vmatpush.msra.mxu0 0.0
    %4803 = vmatpush.msra.mxu0 0.0
    %4804 = vmatpush.msra.mxu0 0.0
    %4805 = vmatpush.msra.mxu0 0.0
    %4806 = vmatpush.msra.mxu0 0.0
    %4807 = vmatpush.msra.mxu0 0.0
    %4808 = vmatpush.msra.mxu0 0.0
    %4809 = vmatpush.msra.mxu0 0.0
    %4810 = vmatpush.msra.mxu0 0.0
    %4811 = vmatpush.msra.mxu0 0.0
    %4812 = vmatpush.msra.mxu0 %v4747
    %4813 = vmatpush.msra.mxu0 %v4746
    %4814 = vmatpush.msra.mxu0 %v4745
    %4815 = vmatpush.msra.mxu0 %v4744
    %4816 = vmatmul.f32.gmra.mxu0 %v4758
    %v4817 = vpop.f32.mrf.mxu0
    %v4818 = vadd.f32 %v4798, %v4817
    %4819 = vdwg.mxu0
    %v4820 = vadd.f32 %v4707, %v4818
    %s4821 = scalar_lea.vmem [#allocation2], 30
    %v4822 = vld [vmem:[%s4821] ss:$8 sm:$0x7]
    %s4823 = scalar_lea.vmem [#allocation2], 102
    %v4824 = vld [vmem:[%s4823] ss:$8 sm:$0x7]
    %v4825 = vld [vmem:[%s1983] sm:$0xff]
    %v4826 = vld [vmem:[%s1983 + $0x8] sm:$0xff]
    %v4827 = vld [vmem:[%s1983 + $0x10] sm:$0xff]
    %v4828 = vld [vmem:[%s1983 + $0x18] sm:$0xff]
    %v4829 = vld [vmem:[%s1983 + $0x20] sm:$0xff]
    %v4830 = vld [vmem:[%s1983 + $0x28] sm:$0xff]
    %v4831 = vld [vmem:[%s1983 + $0x30] sm:$0xff]
    %v4832 = vld [vmem:[%s1983 + $0x38] sm:$0xff]
    %v4833 = vld [vmem:[%s1983 + $0x40] sm:$0xff]
    %v4834 = vld [vmem:[%s1983 + $0x48] sm:$0xff]
    %v4835 = vld [vmem:[%s1983 + $0x50] sm:$0xff]
    %v4836 = vld [vmem:[%s1983 + $0x58] sm:$0xff]
    %v4837 = vld [vmem:[%s1983 + $0x60] sm:$0xff]
    %v4838 = vld [vmem:[%s1983 + $0x68] sm:$0xff]
    %v4839 = vld [vmem:[%s1983 + $0x70] sm:$0xff]
    %v4840 = vld [vmem:[%s1983 + $0x78] sm:$0xff]
    %v4841 = vld [vmem:[%s1983 + $0x80] sm:$0xff]
    %v4842 = vld [vmem:[%s1983 + $0x88] sm:$0xff]
    %v4843 = vld [vmem:[%s1983 + $0x90] sm:$0xff]
    %v4844 = vld [vmem:[%s1983 + $0x98] sm:$0xff]
    %v4845 = vld [vmem:[%s1983 + $0xa0] sm:$0xff]
    %v4846 = vld [vmem:[%s1983 + $0xa8] sm:$0xff]
    %v4847 = vld [vmem:[%s1983 + $0xb0] sm:$0xff]
    %v4848 = vld [vmem:[%s1983 + $0xb8] sm:$0xff]
    %v4849 = vld [vmem:[%s1983 + $0xc0] sm:$0xff]
    %v4850 = vld [vmem:[%s1983 + $0xc8] sm:$0xff]
    %v4851 = vld [vmem:[%s1983 + $0xd0] sm:$0xff]
    %v4852 = vld [vmem:[%s1983 + $0xd8] sm:$0xff]
    %v4853 = vld [vmem:[%s1983 + $0xe0] sm:$0xff]
    %v4854 = vld [vmem:[%s1983 + $0xe8] sm:$0xff]
    %v4855 = vld [vmem:[%s1983 + $0xf0] sm:$0xff]
    %v4856 = vld [vmem:[%s1983 + $0xf8] sm:$0xff]
    %v4857 = vld [vmem:[%s1983 + $0x100] sm:$0xff]
    %v4858 = vld [vmem:[%s1983 + $0x108] sm:$0xff]
    %v4859 = vld [vmem:[%s1983 + $0x110] sm:$0xff]
    %v4860 = vld [vmem:[%s1983 + $0x118] sm:$0xff]
    %4863 = vst [vmem:[#allocation1] ss:$9 sm:$0xff] %v4822
    %s4864 = scalar_lea.vmem [#allocation1], 1
    %4865 = vst [vmem:[%s4864] ss:$9 sm:$0xff] %v4824
    %v4866 = vld [vmem:[#allocation1] sm:$0xff]
    %v4867 = vld [vmem:[#allocation1 + $0x9] sm:$0xff]
    %v4868 = vld [vmem:[#allocation1 + $0x12] sm:$0xff]
    %v4871 = vsel %vm778, %v4868, 0
    %4873 = vmatpush.msra.mxu0 %v4840
    %4874 = vmatpush.msra.mxu0 %v4839
    %4875 = vmatpush.msra.mxu0 %v4838
    %4876 = vmatpush.msra.mxu0 %v4837
    %4877 = vmatpush.msra.mxu0 %v4836
    %4878 = vmatpush.msra.mxu0 %v4835
    %4879 = vmatpush.msra.mxu0 %v4834
    %4880 = vmatpush.msra.mxu0 %v4833
    %4881 = vmatpush.msra.mxu0 %v4832
    %4882 = vmatpush.msra.mxu0 %v4831
    %4883 = vmatpush.msra.mxu0 %v4830
    %4884 = vmatpush.msra.mxu0 %v4829
    %4885 = vmatpush.msra.mxu0 %v4828
    %4886 = vmatpush.msra.mxu0 %v4827
    %4887 = vmatpush.msra.mxu0 %v4826
    %4888 = vmatpush.msra.mxu0 %v4825
    %4889 = vmatmul.f32.gmra.mxu0 %v4866
    %v4890 = vpop.f32.mrf.mxu0
    %v4891 = vadd.f32 0.0, %v4890
    %4892 = vdwg.mxu0
    %4893 = vmatpush.msra.mxu0 %v4856
    %4894 = vmatpush.msra.mxu0 %v4855
    %4895 = vmatpush.msra.mxu0 %v4854
    %4896 = vmatpush.msra.mxu0 %v4853
    %4897 = vmatpush.msra.mxu0 %v4852
    %4898 = vmatpush.msra.mxu0 %v4851
    %4899 = vmatpush.msra.mxu0 %v4850
    %4900 = vmatpush.msra.mxu0 %v4849
    %4901 = vmatpush.msra.mxu0 %v4848
    %4902 = vmatpush.msra.mxu0 %v4847
    %4903 = vmatpush.msra.mxu0 %v4846
    %4904 = vmatpush.msra.mxu0 %v4845
    %4905 = vmatpush.msra.mxu0 %v4844
    %4906 = vmatpush.msra.mxu0 %v4843
    %4907 = vmatpush.msra.mxu0 %v4842
    %4908 = vmatpush.msra.mxu0 %v4841
    %4909 = vmatmul.f32.gmra.mxu0 %v4867
    %v4910 = vpop.f32.mrf.mxu0
    %v4911 = vadd.f32 %v4891, %v4910
    %4912 = vdwg.mxu0
    %4913 = vmatpush.msra.mxu0 0.0
    %4914 = vmatpush.msra.mxu0 0.0
    %4915 = vmatpush.msra.mxu0 0.0
    %4916 = vmatpush.msra.mxu0 0.0
    %4917 = vmatpush.msra.mxu0 0.0
    %4918 = vmatpush.msra.mxu0 0.0
    %4919 = vmatpush.msra.mxu0 0.0
    %4920 = vmatpush.msra.mxu0 0.0
    %4921 = vmatpush.msra.mxu0 0.0
    %4922 = vmatpush.msra.mxu0 0.0
    %4923 = vmatpush.msra.mxu0 0.0
    %4924 = vmatpush.msra.mxu0 0.0
    %4925 = vmatpush.msra.mxu0 %v4860
    %4926 = vmatpush.msra.mxu0 %v4859
    %4927 = vmatpush.msra.mxu0 %v4858
    %4928 = vmatpush.msra.mxu0 %v4857
    %4929 = vmatmul.f32.gmra.mxu0 %v4871
    %v4930 = vpop.f32.mrf.mxu0
    %v4931 = vadd.f32 %v4911, %v4930
    %4932 = vdwg.mxu0
    %v4933 = vadd.f32 %v4820, %v4931
    %v4934 = vld [vmem:[%s4] sm:$0x1]
    %v4936 = vperm.slane %v4934, 0
    %v4938 = vadd.f32 %v4933, %v4936
    %v4939 = vmax.f32 %v4938, 0.0
    %v4941 = vrot.slane %v4939, 1
    %4943 = vst.msk [vmem:[#allocation3 + $0x5] sm:$0x1] %vm2102, %v4939
    %4944 = vst.msk [vmem:[#allocation3 + $0xd] sm:$0x1] %vm2102, %v4941
    %v4945 = vld [vmem:[%s4253] ss:$8 sm:$0x7]
    %v4946 = vld [vmem:[%s4255] ss:$8 sm:$0x7]
    %v4947 = vld [vmem:[%s3] sm:$0xff]
    %v4948 = vld [vmem:[%s3 + $0x8] sm:$0xff]
    %v4949 = vld [vmem:[%s3 + $0x10] sm:$0xff]
    %v4950 = vld [vmem:[%s3 + $0x18] sm:$0xff]
    %v4951 = vld [vmem:[%s3 + $0x20] sm:$0xff]
    %v4952 = vld [vmem:[%s3 + $0x28] sm:$0xff]
    %v4953 = vld [vmem:[%s3 + $0x30] sm:$0xff]
    %v4954 = vld [vmem:[%s3 + $0x38] sm:$0xff]
    %v4955 = vld [vmem:[%s3 + $0x40] sm:$0xff]
    %v4956 = vld [vmem:[%s3 + $0x48] sm:$0xff]
    %v4957 = vld [vmem:[%s3 + $0x50] sm:$0xff]
    %v4958 = vld [vmem:[%s3 + $0x58] sm:$0xff]
    %v4959 = vld [vmem:[%s3 + $0x60] sm:$0xff]
    %v4960 = vld [vmem:[%s3 + $0x68] sm:$0xff]
    %v4961 = vld [vmem:[%s3 + $0x70] sm:$0xff]
    %v4962 = vld [vmem:[%s3 + $0x78] sm:$0xff]
    %v4963 = vld [vmem:[%s3 + $0x80] sm:$0xff]
    %v4964 = vld [vmem:[%s3 + $0x88] sm:$0xff]
    %v4965 = vld [vmem:[%s3 + $0x90] sm:$0xff]
    %v4966 = vld [vmem:[%s3 + $0x98] sm:$0xff]
    %v4967 = vld [vmem:[%s3 + $0xa0] sm:$0xff]
    %v4968 = vld [vmem:[%s3 + $0xa8] sm:$0xff]
    %v4969 = vld [vmem:[%s3 + $0xb0] sm:$0xff]
    %v4970 = vld [vmem:[%s3 + $0xb8] sm:$0xff]
    %v4971 = vld [vmem:[%s3 + $0xc0] sm:$0xff]
    %v4972 = vld [vmem:[%s3 + $0xc8] sm:$0xff]
    %v4973 = vld [vmem:[%s3 + $0xd0] sm:$0xff]
    %v4974 = vld [vmem:[%s3 + $0xd8] sm:$0xff]
    %v4975 = vld [vmem:[%s3 + $0xe0] sm:$0xff]
    %v4976 = vld [vmem:[%s3 + $0xe8] sm:$0xff]
    %v4977 = vld [vmem:[%s3 + $0xf0] sm:$0xff]
    %v4978 = vld [vmem:[%s3 + $0xf8] sm:$0xff]
    %v4979 = vld [vmem:[%s3 + $0x100] sm:$0xff]
    %v4980 = vld [vmem:[%s3 + $0x108] sm:$0xff]
    %v4981 = vld [vmem:[%s3 + $0x110] sm:$0xff]
    %v4982 = vld [vmem:[%s3 + $0x118] sm:$0xff]
    %v4983 = vld [vmem:[%s4708] ss:$8 sm:$0x7]
    %v4984 = vld [vmem:[%s4710] ss:$8 sm:$0x7]
    %v4985 = vld [vmem:[%s1570] sm:$0xff]
    %v4986 = vld [vmem:[%s1570 + $0x8] sm:$0xff]
    %v4987 = vld [vmem:[%s1570 + $0x10] sm:$0xff]
    %v4988 = vld [vmem:[%s1570 + $0x18] sm:$0xff]
    %v4989 = vld [vmem:[%s1570 + $0x20] sm:$0xff]
    %v4990 = vld [vmem:[%s1570 + $0x28] sm:$0xff]
    %v4991 = vld [vmem:[%s1570 + $0x30] sm:$0xff]
    %v4992 = vld [vmem:[%s1570 + $0x38] sm:$0xff]
    %v4993 = vld [vmem:[%s1570 + $0x40] sm:$0xff]
    %v4994 = vld [vmem:[%s1570 + $0x48] sm:$0xff]
    %v4995 = vld [vmem:[%s1570 + $0x50] sm:$0xff]
    %v4996 = vld [vmem:[%s1570 + $0x58] sm:$0xff]
    %v4997 = vld [vmem:[%s1570 + $0x60] sm:$0xff]
    %v4998 = vld [vmem:[%s1570 + $0x68] sm:$0xff]
    %v4999 = vld [vmem:[%s1570 + $0x70] sm:$0xff]
    %v5000 = vld [vmem:[%s1570 + $0x78] sm:$0xff]
    %v5001 = vld [vmem:[%s1570 + $0x80] sm:$0xff]
    %v5002 = vld [vmem:[%s1570 + $0x88] sm:$0xff]
    %v5003 = vld [vmem:[%s1570 + $0x90] sm:$0xff]
    %v5004 = vld [vmem:[%s1570 + $0x98] sm:$0xff]
    %v5005 = vld [vmem:[%s1570 + $0xa0] sm:$0xff]
    %v5006 = vld [vmem:[%s1570 + $0xa8] sm:$0xff]
    %v5007 = vld [vmem:[%s1570 + $0xb0] sm:$0xff]
    %v5008 = vld [vmem:[%s1570 + $0xb8] sm:$0xff]
    %v5009 = vld [vmem:[%s1570 + $0xc0] sm:$0xff]
    %v5010 = vld [vmem:[%s1570 + $0xc8] sm:$0xff]
    %v5011 = vld [vmem:[%s1570 + $0xd0] sm:$0xff]
    %v5012 = vld [vmem:[%s1570 + $0xd8] sm:$0xff]
    %v5013 = vld [vmem:[%s1570 + $0xe0] sm:$0xff]
    %v5014 = vld [vmem:[%s1570 + $0xe8] sm:$0xff]
    %v5015 = vld [vmem:[%s1570 + $0xf0] sm:$0xff]
    %v5016 = vld [vmem:[%s1570 + $0xf8] sm:$0xff]
    %v5017 = vld [vmem:[%s1570 + $0x100] sm:$0xff]
    %v5018 = vld [vmem:[%s1570 + $0x108] sm:$0xff]
    %v5019 = vld [vmem:[%s1570 + $0x110] sm:$0xff]
    %v5020 = vld [vmem:[%s1570 + $0x118] sm:$0xff]
    %5023 = vst [vmem:[#allocation1] ss:$9 sm:$0xff] %v4983
    %s5024 = scalar_lea.vmem [#allocation1], 1
    %5025 = vst [vmem:[%s5024] ss:$9 sm:$0xff] %v4984
    %v5026 = vld [vmem:[#allocation1] sm:$0xff]
    %v5027 = vld [vmem:[#allocation1 + $0x9] sm:$0xff]
    %v5028 = vld [vmem:[#allocation1 + $0x12] sm:$0xff]
    %v5031 = vsel %vm778, %v5028, 0
    %5033 = vmatpush.msra.mxu0 %v5000
    %5034 = vmatpush.msra.mxu0 %v4999
    %5035 = vmatpush.msra.mxu0 %v4998
    %5036 = vmatpush.msra.mxu0 %v4997
    %5037 = vmatpush.msra.mxu0 %v4996
    %5038 = vmatpush.msra.mxu0 %v4995
    %5039 = vmatpush.msra.mxu0 %v4994
    %5040 = vmatpush.msra.mxu0 %v4993
    %5041 = vmatpush.msra.mxu0 %v4992
    %5042 = vmatpush.msra.mxu0 %v4991
    %5043 = vmatpush.msra.mxu0 %v4990
    %5044 = vmatpush.msra.mxu0 %v4989
    %5045 = vmatpush.msra.mxu0 %v4988
    %5046 = vmatpush.msra.mxu0 %v4987
    %5047 = vmatpush.msra.mxu0 %v4986
    %5048 = vmatpush.msra.mxu0 %v4985
    %5049 = vmatmul.f32.gmra.mxu0 %v5026
    %v5050 = vpop.f32.mrf.mxu0
    %v5051 = vadd.f32 0.0, %v5050
    %5052 = vdwg.mxu0
    %5053 = vmatpush.msra.mxu0 %v5016
    %5054 = vmatpush.msra.mxu0 %v5015
    %5055 = vmatpush.msra.mxu0 %v5014
    %5056 = vmatpush.msra.mxu0 %v5013
    %5057 = vmatpush.msra.mxu0 %v5012
    %5058 = vmatpush.msra.mxu0 %v5011
    %5059 = vmatpush.msra.mxu0 %v5010
    %5060 = vmatpush.msra.mxu0 %v5009
    %5061 = vmatpush.msra.mxu0 %v5008
    %5062 = vmatpush.msra.mxu0 %v5007
    %5063 = vmatpush.msra.mxu0 %v5006
    %5064 = vmatpush.msra.mxu0 %v5005
    %5065 = vmatpush.msra.mxu0 %v5004
    %5066 = vmatpush.msra.mxu0 %v5003
    %5067 = vmatpush.msra.mxu0 %v5002
    %5068 = vmatpush.msra.mxu0 %v5001
    %5069 = vmatmul.f32.gmra.mxu0 %v5027
    %v5070 = vpop.f32.mrf.mxu0
    %v5071 = vadd.f32 %v5051, %v5070
    %5072 = vdwg.mxu0
    %5073 = vmatpush.msra.mxu0 0.0
    %5074 = vmatpush.msra.mxu0 0.0
    %5075 = vmatpush.msra.mxu0 0.0
    %5076 = vmatpush.msra.mxu0 0.0
    %5077 = vmatpush.msra.mxu0 0.0
    %5078 = vmatpush.msra.mxu0 0.0
    %5079 = vmatpush.msra.mxu0 0.0
    %5080 = vmatpush.msra.mxu0 0.0
    %5081 = vmatpush.msra.mxu0 0.0
    %5082 = vmatpush.msra.mxu0 0.0
    %5083 = vmatpush.msra.mxu0 0.0
    %5084 = vmatpush.msra.mxu0 0.0
    %5085 = vmatpush.msra.mxu0 %v5020
    %5086 = vmatpush.msra.mxu0 %v5019
    %5087 = vmatpush.msra.mxu0 %v5018
    %5088 = vmatpush.msra.mxu0 %v5017
    %5089 = vmatmul.f32.gmra.mxu0 %v5031
    %v5090 = vpop.f32.mrf.mxu0
    %v5091 = vadd.f32 %v5071, %v5090
    %5092 = vdwg.mxu0
    %5095 = vst [vmem:[#allocation1] ss:$9 sm:$0xff] %v4945
    %s5096 = scalar_lea.vmem [#allocation1], 1
    %5097 = vst [vmem:[%s5096] ss:$9 sm:$0xff] %v4946
    %v5098 = vld [vmem:[#allocation1] sm:$0xff]
    %v5099 = vld [vmem:[#allocation1 + $0x9] sm:$0xff]
    %v5100 = vld [vmem:[#allocation1 + $0x12] sm:$0xff]
    %v5103 = vsel %vm778, %v5100, 0
    %5105 = vmatpush.msra.mxu0 %v4962
    %5106 = vmatpush.msra.mxu0 %v4961
    %5107 = vmatpush.msra.mxu0 %v4960
    %5108 = vmatpush.msra.mxu0 %v4959
    %5109 = vmatpush.msra.mxu0 %v4958
    %5110 = vmatpush.msra.mxu0 %v4957
    %5111 = vmatpush.msra.mxu0 %v4956
    %5112 = vmatpush.msra.mxu0 %v4955
    %5113 = vmatpush.msra.mxu0 %v4954
    %5114 = vmatpush.msra.mxu0 %v4953
    %5115 = vmatpush.msra.mxu0 %v4952
    %5116 = vmatpush.msra.mxu0 %v4951
    %5117 = vmatpush.msra.mxu0 %v4950
    %5118 = vmatpush.msra.mxu0 %v4949
    %5119 = vmatpush.msra.mxu0 %v4948
    %5120 = vmatpush.msra.mxu0 %v4947
    %5121 = vmatmul.f32.gmra.mxu0 %v5098
    %v5122 = vpop.f32.mrf.mxu0
    %v5123 = vadd.f32 %v5091, %v5122
    %5124 = vdwg.mxu0
    %5125 = vmatpush.msra.mxu0 %v4978
    %5126 = vmatpush.msra.mxu0 %v4977
    %5127 = vmatpush.msra.mxu0 %v4976
    %5128 = vmatpush.msra.mxu0 %v4975
    %5129 = vmatpush.msra.mxu0 %v4974
    %5130 = vmatpush.msra.mxu0 %v4973
    %5131 = vmatpush.msra.mxu0 %v4972
    %5132 = vmatpush.msra.mxu0 %v4971
    %5133 = vmatpush.msra.mxu0 %v4970
    %5134 = vmatpush.msra.mxu0 %v4969
    %5135 = vmatpush.msra.mxu0 %v4968
    %5136 = vmatpush.msra.mxu0 %v4967
    %5137 = vmatpush.msra.mxu0 %v4966
    %5138 = vmatpush.msra.mxu0 %v4965
    %5139 = vmatpush.msra.mxu0 %v4964
    %5140 = vmatpush.msra.mxu0 %v4963
    %5141 = vmatmul.f32.gmra.mxu0 %v5099
    %v5142 = vpop.f32.mrf.mxu0
    %v5143 = vadd.f32 %v5123, %v5142
    %5144 = vdwg.mxu0
    %5145 = vmatpush.msra.mxu0 0.0
    %5146 = vmatpush.msra.mxu0 0.0
    %5147 = vmatpush.msra.mxu0 0.0
    %5148 = vmatpush.msra.mxu0 0.0
    %5149 = vmatpush.msra.mxu0 0.0
    %5150 = vmatpush.msra.mxu0 0.0
    %5151 = vmatpush.msra.mxu0 0.0
    %5152 = vmatpush.msra.mxu0 0.0
    %5153 = vmatpush.msra.mxu0 0.0
    %5154 = vmatpush.msra.mxu0 0.0
    %5155 = vmatpush.msra.mxu0 0.0
    %5156 = vmatpush.msra.mxu0 0.0
    %5157 = vmatpush.msra.mxu0 %v4982
    %5158 = vmatpush.msra.mxu0 %v4981
    %5159 = vmatpush.msra.mxu0 %v4980
    %5160 = vmatpush.msra.mxu0 %v4979
    %5161 = vmatmul.f32.gmra.mxu0 %v5103
    %v5162 = vpop.f32.mrf.mxu0
    %v5163 = vadd.f32 %v5143, %v5162
    %5164 = vdwg.mxu0
    %v5165 = vld [vmem:[%s4821] ss:$8 sm:$0x7]
    %v5166 = vld [vmem:[%s4823] ss:$8 sm:$0x7]
    %v5167 = vld [vmem:[%s1755] sm:$0xff]
    %v5168 = vld [vmem:[%s1755 + $0x8] sm:$0xff]
    %v5169 = vld [vmem:[%s1755 + $0x10] sm:$0xff]
    %v5170 = vld [vmem:[%s1755 + $0x18] sm:$0xff]
    %v5171 = vld [vmem:[%s1755 + $0x20] sm:$0xff]
    %v5172 = vld [vmem:[%s1755 + $0x28] sm:$0xff]
    %v5173 = vld [vmem:[%s1755 + $0x30] sm:$0xff]
    %v5174 = vld [vmem:[%s1755 + $0x38] sm:$0xff]
    %v5175 = vld [vmem:[%s1755 + $0x40] sm:$0xff]
    %v5176 = vld [vmem:[%s1755 + $0x48] sm:$0xff]
    %v5177 = vld [vmem:[%s1755 + $0x50] sm:$0xff]
    %v5178 = vld [vmem:[%s1755 + $0x58] sm:$0xff]
    %v5179 = vld [vmem:[%s1755 + $0x60] sm:$0xff]
    %v5180 = vld [vmem:[%s1755 + $0x68] sm:$0xff]
    %v5181 = vld [vmem:[%s1755 + $0x70] sm:$0xff]
    %v5182 = vld [vmem:[%s1755 + $0x78] sm:$0xff]
    %v5183 = vld [vmem:[%s1755 + $0x80] sm:$0xff]
    %v5184 = vld [vmem:[%s1755 + $0x88] sm:$0xff]
    %v5185 = vld [vmem:[%s1755 + $0x90] sm:$0xff]
    %v5186 = vld [vmem:[%s1755 + $0x98] sm:$0xff]
    %v5187 = vld [vmem:[%s1755 + $0xa0] sm:$0xff]
    %v5188 = vld [vmem:[%s1755 + $0xa8] sm:$0xff]
    %v5189 = vld [vmem:[%s1755 + $0xb0] sm:$0xff]
    %v5190 = vld [vmem:[%s1755 + $0xb8] sm:$0xff]
    %v5191 = vld [vmem:[%s1755 + $0xc0] sm:$0xff]
    %v5192 = vld [vmem:[%s1755 + $0xc8] sm:$0xff]
    %v5193 = vld [vmem:[%s1755 + $0xd0] sm:$0xff]
    %v5194 = vld [vmem:[%s1755 + $0xd8] sm:$0xff]
    %v5195 = vld [vmem:[%s1755 + $0xe0] sm:$0xff]
    %v5196 = vld [vmem:[%s1755 + $0xe8] sm:$0xff]
    %v5197 = vld [vmem:[%s1755 + $0xf0] sm:$0xff]
    %v5198 = vld [vmem:[%s1755 + $0xf8] sm:$0xff]
    %v5199 = vld [vmem:[%s1755 + $0x100] sm:$0xff]
    %v5200 = vld [vmem:[%s1755 + $0x108] sm:$0xff]
    %v5201 = vld [vmem:[%s1755 + $0x110] sm:$0xff]
    %v5202 = vld [vmem:[%s1755 + $0x118] sm:$0xff]
    %5205 = vst [vmem:[#allocation1] ss:$9 sm:$0xff] %v5165
    %s5206 = scalar_lea.vmem [#allocation1], 1
    %5207 = vst [vmem:[%s5206] ss:$9 sm:$0xff] %v5166
    %v5208 = vld [vmem:[#allocation1] sm:$0xff]
    %v5209 = vld [vmem:[#allocation1 + $0x9] sm:$0xff]
    %v5210 = vld [vmem:[#allocation1 + $0x12] sm:$0xff]
    %v5213 = vsel %vm778, %v5210, 0
    %5215 = vmatpush.msra.mxu0 %v5182
    %5216 = vmatpush.msra.mxu0 %v5181
    %5217 = vmatpush.msra.mxu0 %v5180
    %5218 = vmatpush.msra.mxu0 %v5179
    %5219 = vmatpush.msra.mxu0 %v5178
    %5220 = vmatpush.msra.mxu0 %v5177
    %5221 = vmatpush.msra.mxu0 %v5176
    %5222 = vmatpush.msra.mxu0 %v5175
    %5223 = vmatpush.msra.mxu0 %v5174
    %5224 = vmatpush.msra.mxu0 %v5173
    %5225 = vmatpush.msra.mxu0 %v5172
    %5226 = vmatpush.msra.mxu0 %v5171
    %5227 = vmatpush.msra.mxu0 %v5170
    %5228 = vmatpush.msra.mxu0 %v5169
    %5229 = vmatpush.msra.mxu0 %v5168
    %5230 = vmatpush.msra.mxu0 %v5167
    %5231 = vmatmul.f32.gmra.mxu0 %v5208
    %v5232 = vpop.f32.mrf.mxu0
    %v5233 = vadd.f32 0.0, %v5232
    %5234 = vdwg.mxu0
    %5235 = vmatpush.msra.mxu0 %v5198
    %5236 = vmatpush.msra.mxu0 %v5197
    %5237 = vmatpush.msra.mxu0 %v5196
    %5238 = vmatpush.msra.mxu0 %v5195
    %5239 = vmatpush.msra.mxu0 %v5194
    %5240 = vmatpush.msra.mxu0 %v5193
    %5241 = vmatpush.msra.mxu0 %v5192
    %5242 = vmatpush.msra.mxu0 %v5191
    %5243 = vmatpush.msra.mxu0 %v5190
    %5244 = vmatpush.msra.mxu0 %v5189
    %5245 = vmatpush.msra.mxu0 %v5188
    %5246 = vmatpush.msra.mxu0 %v5187
    %5247 = vmatpush.msra.mxu0 %v5186
    %5248 = vmatpush.msra.mxu0 %v5185
    %5249 = vmatpush.msra.mxu0 %v5184
    %5250 = vmatpush.msra.mxu0 %v5183
    %5251 = vmatmul.f32.gmra.mxu0 %v5209
    %v5252 = vpop.f32.mrf.mxu0
    %v5253 = vadd.f32 %v5233, %v5252
    %5254 = vdwg.mxu0
    %5255 = vmatpush.msra.mxu0 0.0
    %5256 = vmatpush.msra.mxu0 0.0
    %5257 = vmatpush.msra.mxu0 0.0
    %5258 = vmatpush.msra.mxu0 0.0
    %5259 = vmatpush.msra.mxu0 0.0
    %5260 = vmatpush.msra.mxu0 0.0
    %5261 = vmatpush.msra.mxu0 0.0
    %5262 = vmatpush.msra.mxu0 0.0
    %5263 = vmatpush.msra.mxu0 0.0
    %5264 = vmatpush.msra.mxu0 0.0
    %5265 = vmatpush.msra.mxu0 0.0
    %5266 = vmatpush.msra.mxu0 0.0
    %5267 = vmatpush.msra.mxu0 %v5202
    %5268 = vmatpush.msra.mxu0 %v5201
    %5269 = vmatpush.msra.mxu0 %v5200
    %5270 = vmatpush.msra.mxu0 %v5199
    %5271 = vmatmul.f32.gmra.mxu0 %v5213
    %v5272 = vpop.f32.mrf.mxu0
    %v5273 = vadd.f32 %v5253, %v5272
    %5274 = vdwg.mxu0
    %v5275 = vadd.f32 %v5163, %v5273
    %s5276 = scalar_lea.vmem [#allocation2], 31
    %v5277 = vld [vmem:[%s5276] ss:$8 sm:$0x7]
    %s5278 = scalar_lea.vmem [#allocation2], 103
    %v5279 = vld [vmem:[%s5278] ss:$8 sm:$0x7]
    %v5280 = vld [vmem:[%s1869] sm:$0xff]
    %v5281 = vld [vmem:[%s1869 + $0x8] sm:$0xff]
    %v5282 = vld [vmem:[%s1869 + $0x10] sm:$0xff]
    %v5283 = vld [vmem:[%s1869 + $0x18] sm:$0xff]
    %v5284 = vld [vmem:[%s1869 + $0x20] sm:$0xff]
    %v5285 = vld [vmem:[%s1869 + $0x28] sm:$0xff]
    %v5286 = vld [vmem:[%s1869 + $0x30] sm:$0xff]
    %v5287 = vld [vmem:[%s1869 + $0x38] sm:$0xff]
    %v5288 = vld [vmem:[%s1869 + $0x40] sm:$0xff]
    %v5289 = vld [vmem:[%s1869 + $0x48] sm:$0xff]
    %v5290 = vld [vmem:[%s1869 + $0x50] sm:$0xff]
    %v5291 = vld [vmem:[%s1869 + $0x58] sm:$0xff]
    %v5292 = vld [vmem:[%s1869 + $0x60] sm:$0xff]
    %v5293 = vld [vmem:[%s1869 + $0x68] sm:$0xff]
    %v5294 = vld [vmem:[%s1869 + $0x70] sm:$0xff]
    %v5295 = vld [vmem:[%s1869 + $0x78] sm:$0xff]
    %v5296 = vld [vmem:[%s1869 + $0x80] sm:$0xff]
    %v5297 = vld [vmem:[%s1869 + $0x88] sm:$0xff]
    %v5298 = vld [vmem:[%s1869 + $0x90] sm:$0xff]
    %v5299 = vld [vmem:[%s1869 + $0x98] sm:$0xff]
    %v5300 = vld [vmem:[%s1869 + $0xa0] sm:$0xff]
    %v5301 = vld [vmem:[%s1869 + $0xa8] sm:$0xff]
    %v5302 = vld [vmem:[%s1869 + $0xb0] sm:$0xff]
    %v5303 = vld [vmem:[%s1869 + $0xb8] sm:$0xff]
    %v5304 = vld [vmem:[%s1869 + $0xc0] sm:$0xff]
    %v5305 = vld [vmem:[%s1869 + $0xc8] sm:$0xff]
    %v5306 = vld [vmem:[%s1869 + $0xd0] sm:$0xff]
    %v5307 = vld [vmem:[%s1869 + $0xd8] sm:$0xff]
    %v5308 = vld [vmem:[%s1869 + $0xe0] sm:$0xff]
    %v5309 = vld [vmem:[%s1869 + $0xe8] sm:$0xff]
    %v5310 = vld [vmem:[%s1869 + $0xf0] sm:$0xff]
    %v5311 = vld [vmem:[%s1869 + $0xf8] sm:$0xff]
    %v5312 = vld [vmem:[%s1869 + $0x100] sm:$0xff]
    %v5313 = vld [vmem:[%s1869 + $0x108] sm:$0xff]
    %v5314 = vld [vmem:[%s1869 + $0x110] sm:$0xff]
    %v5315 = vld [vmem:[%s1869 + $0x118] sm:$0xff]
    %5318 = vst [vmem:[#allocation1] ss:$9 sm:$0xff] %v5277
    %s5319 = scalar_lea.vmem [#allocation1], 1
    %5320 = vst [vmem:[%s5319] ss:$9 sm:$0xff] %v5279
    %v5321 = vld [vmem:[#allocation1] sm:$0xff]
    %v5322 = vld [vmem:[#allocation1 + $0x9] sm:$0xff]
    %v5323 = vld [vmem:[#allocation1 + $0x12] sm:$0xff]
    %v5326 = vsel %vm778, %v5323, 0
    %5328 = vmatpush.msra.mxu0 %v5295
    %5329 = vmatpush.msra.mxu0 %v5294
    %5330 = vmatpush.msra.mxu0 %v5293
    %5331 = vmatpush.msra.mxu0 %v5292
    %5332 = vmatpush.msra.mxu0 %v5291
    %5333 = vmatpush.msra.mxu0 %v5290
    %5334 = vmatpush.msra.mxu0 %v5289
    %5335 = vmatpush.msra.mxu0 %v5288
    %5336 = vmatpush.msra.mxu0 %v5287
    %5337 = vmatpush.msra.mxu0 %v5286
    %5338 = vmatpush.msra.mxu0 %v5285
    %5339 = vmatpush.msra.mxu0 %v5284
    %5340 = vmatpush.msra.mxu0 %v5283
    %5341 = vmatpush.msra.mxu0 %v5282
    %5342 = vmatpush.msra.mxu0 %v5281
    %5343 = vmatpush.msra.mxu0 %v5280
    %5344 = vmatmul.f32.gmra.mxu0 %v5321
    %v5345 = vpop.f32.mrf.mxu0
    %v5346 = vadd.f32 0.0, %v5345
    %5347 = vdwg.mxu0
    %5348 = vmatpush.msra.mxu0 %v5311
    %5349 = vmatpush.msra.mxu0 %v5310
    %5350 = vmatpush.msra.mxu0 %v5309
    %5351 = vmatpush.msra.mxu0 %v5308
    %5352 = vmatpush.msra.mxu0 %v5307
    %5353 = vmatpush.msra.mxu0 %v5306
    %5354 = vmatpush.msra.mxu0 %v5305
    %5355 = vmatpush.msra.mxu0 %v5304
    %5356 = vmatpush.msra.mxu0 %v5303
    %5357 = vmatpush.msra.mxu0 %v5302
    %5358 = vmatpush.msra.mxu0 %v5301
    %5359 = vmatpush.msra.mxu0 %v5300
    %5360 = vmatpush.msra.mxu0 %v5299
    %5361 = vmatpush.msra.mxu0 %v5298
    %5362 = vmatpush.msra.mxu0 %v5297
    %5363 = vmatpush.msra.mxu0 %v5296
    %5364 = vmatmul.f32.gmra.mxu0 %v5322
    %v5365 = vpop.f32.mrf.mxu0
    %v5366 = vadd.f32 %v5346, %v5365
    %5367 = vdwg.mxu0
    %5368 = vmatpush.msra.mxu0 0.0
    %5369 = vmatpush.msra.mxu0 0.0
    %5370 = vmatpush.msra.mxu0 0.0
    %5371 = vmatpush.msra.mxu0 0.0
    %5372 = vmatpush.msra.mxu0 0.0
    %5373 = vmatpush.msra.mxu0 0.0
    %5374 = vmatpush.msra.mxu0 0.0
    %5375 = vmatpush.msra.mxu0 0.0
    %5376 = vmatpush.msra.mxu0 0.0
    %5377 = vmatpush.msra.mxu0 0.0
    %5378 = vmatpush.msra.mxu0 0.0
    %5379 = vmatpush.msra.mxu0 0.0
    %5380 = vmatpush.msra.mxu0 %v5315
    %5381 = vmatpush.msra.mxu0 %v5314
    %5382 = vmatpush.msra.mxu0 %v5313
    %5383 = vmatpush.msra.mxu0 %v5312
    %5384 = vmatmul.f32.gmra.mxu0 %v5326
    %v5385 = vpop.f32.mrf.mxu0
    %v5386 = vadd.f32 %v5366, %v5385
    %5387 = vdwg.mxu0
    %v5388 = vadd.f32 %v5275, %v5386
    %s5389 = scalar_lea.vmem [#allocation2], 48
    %v5390 = vld [vmem:[%s5389] ss:$8 sm:$0x7]
    %s5391 = scalar_lea.vmem [#allocation2], 120
    %v5392 = vld [vmem:[%s5391] ss:$8 sm:$0x7]
    %v5393 = vld [vmem:[%s1983] sm:$0xff]
    %v5394 = vld [vmem:[%s1983 + $0x8] sm:$0xff]
    %v5395 = vld [vmem:[%s1983 + $0x10] sm:$0xff]
    %v5396 = vld [vmem:[%s1983 + $0x18] sm:$0xff]
    %v5397 = vld [vmem:[%s1983 + $0x20] sm:$0xff]
    %v5398 = vld [vmem:[%s1983 + $0x28] sm:$0xff]
    %v5399 = vld [vmem:[%s1983 + $0x30] sm:$0xff]
    %v5400 = vld [vmem:[%s1983 + $0x38] sm:$0xff]
    %v5401 = vld [vmem:[%s1983 + $0x40] sm:$0xff]
    %v5402 = vld [vmem:[%s1983 + $0x48] sm:$0xff]
    %v5403 = vld [vmem:[%s1983 + $0x50] sm:$0xff]
    %v5404 = vld [vmem:[%s1983 + $0x58] sm:$0xff]
    %v5405 = vld [vmem:[%s1983 + $0x60] sm:$0xff]
    %v5406 = vld [vmem:[%s1983 + $0x68] sm:$0xff]
    %v5407 = vld [vmem:[%s1983 + $0x70] sm:$0xff]
    %v5408 = vld [vmem:[%s1983 + $0x78] sm:$0xff]
    %v5409 = vld [vmem:[%s1983 + $0x80] sm:$0xff]
    %v5410 = vld [vmem:[%s1983 + $0x88] sm:$0xff]
    %v5411 = vld [vmem:[%s1983 + $0x90] sm:$0xff]
    %v5412 = vld [vmem:[%s1983 + $0x98] sm:$0xff]
    %v5413 = vld [vmem:[%s1983 + $0xa0] sm:$0xff]
    %v5414 = vld [vmem:[%s1983 + $0xa8] sm:$0xff]
    %v5415 = vld [vmem:[%s1983 + $0xb0] sm:$0xff]
    %v5416 = vld [vmem:[%s1983 + $0xb8] sm:$0xff]
    %v5417 = vld [vmem:[%s1983 + $0xc0] sm:$0xff]
    %v5418 = vld [vmem:[%s1983 + $0xc8] sm:$0xff]
    %v5419 = vld [vmem:[%s1983 + $0xd0] sm:$0xff]
    %v5420 = vld [vmem:[%s1983 + $0xd8] sm:$0xff]
    %v5421 = vld [vmem:[%s1983 + $0xe0] sm:$0xff]
    %v5422 = vld [vmem:[%s1983 + $0xe8] sm:$0xff]
    %v5423 = vld [vmem:[%s1983 + $0xf0] sm:$0xff]
    %v5424 = vld [vmem:[%s1983 + $0xf8] sm:$0xff]
    %v5425 = vld [vmem:[%s1983 + $0x100] sm:$0xff]
    %v5426 = vld [vmem:[%s1983 + $0x108] sm:$0xff]
    %v5427 = vld [vmem:[%s1983 + $0x110] sm:$0xff]
    %v5428 = vld [vmem:[%s1983 + $0x118] sm:$0xff]
    %5431 = vst [vmem:[#allocation1] ss:$9 sm:$0xff] %v5390
    %s5432 = scalar_lea.vmem [#allocation1], 1
    %5433 = vst [vmem:[%s5432] ss:$9 sm:$0xff] %v5392
    %v5434 = vld [vmem:[#allocation1] sm:$0xff]
    %v5435 = vld [vmem:[#allocation1 + $0x9] sm:$0xff]
    %v5436 = vld [vmem:[#allocation1 + $0x12] sm:$0xff]
    %v5439 = vsel %vm778, %v5436, 0
    %5441 = vmatpush.msra.mxu0 %v5408
    %5442 = vmatpush.msra.mxu0 %v5407
    %5443 = vmatpush.msra.mxu0 %v5406
    %5444 = vmatpush.msra.mxu0 %v5405
    %5445 = vmatpush.msra.mxu0 %v5404
    %5446 = vmatpush.msra.mxu0 %v5403
    %5447 = vmatpush.msra.mxu0 %v5402
    %5448 = vmatpush.msra.mxu0 %v5401
    %5449 = vmatpush.msra.mxu0 %v5400
    %5450 = vmatpush.msra.mxu0 %v5399
    %5451 = vmatpush.msra.mxu0 %v5398
    %5452 = vmatpush.msra.mxu0 %v5397
    %5453 = vmatpush.msra.mxu0 %v5396
    %5454 = vmatpush.msra.mxu0 %v5395
    %5455 = vmatpush.msra.mxu0 %v5394
    %5456 = vmatpush.msra.mxu0 %v5393
    %5457 = vmatmul.f32.gmra.mxu0 %v5434
    %v5458 = vpop.f32.mrf.mxu0
    %v5459 = vadd.f32 0.0, %v5458
    %5460 = vdwg.mxu0
    %5461 = vmatpush.msra.mxu0 %v5424
    %5462 = vmatpush.msra.mxu0 %v5423
    %5463 = vmatpush.msra.mxu0 %v5422
    %5464 = vmatpush.msra.mxu0 %v5421
    %5465 = vmatpush.msra.mxu0 %v5420
    %5466 = vmatpush.msra.mxu0 %v5419
    %5467 = vmatpush.msra.mxu0 %v5418
    %5468 = vmatpush.msra.mxu0 %v5417
    %5469 = vmatpush.msra.mxu0 %v5416
    %5470 = vmatpush.msra.mxu0 %v5415
    %5471 = vmatpush.msra.mxu0 %v5414
    %5472 = vmatpush.msra.mxu0 %v5413
    %5473 = vmatpush.msra.mxu0 %v5412
    %5474 = vmatpush.msra.mxu0 %v5411
    %5475 = vmatpush.msra.mxu0 %v5410
    %5476 = vmatpush.msra.mxu0 %v5409
    %5477 = vmatmul.f32.gmra.mxu0 %v5435
    %v5478 = vpop.f32.mrf.mxu0
    %v5479 = vadd.f32 %v5459, %v5478
    %5480 = vdwg.mxu0
    %5481 = vmatpush.msra.mxu0 0.0
    %5482 = vmatpush.msra.mxu0 0.0
    %5483 = vmatpush.msra.mxu0 0.0
    %5484 = vmatpush.msra.mxu0 0.0
    %5485 = vmatpush.msra.mxu0 0.0
    %5486 = vmatpush.msra.mxu0 0.0
    %5487 = vmatpush.msra.mxu0 0.0
    %5488 = vmatpush.msra.mxu0 0.0
    %5489 = vmatpush.msra.mxu0 0.0
    %5490 = vmatpush.msra.mxu0 0.0
    %5491 = vmatpush.msra.mxu0 0.0
    %5492 = vmatpush.msra.mxu0 0.0
    %5493 = vmatpush.msra.mxu0 %v5428
    %5494 = vmatpush.msra.mxu0 %v5427
    %5495 = vmatpush.msra.mxu0 %v5426
    %5496 = vmatpush.msra.mxu0 %v5425
    %5497 = vmatmul.f32.gmra.mxu0 %v5439
    %v5498 = vpop.f32.mrf.mxu0
    %v5499 = vadd.f32 %v5479, %v5498
    %5500 = vdwg.mxu0
    %v5501 = vadd.f32 %v5388, %v5499
    %v5502 = vld [vmem:[%s4] sm:$0x1]
    %v5504 = vperm.slane %v5502, 0
    %v5506 = vadd.f32 %v5501, %v5504
    %v5507 = vmax.f32 %v5506, 0.0
    %v5509 = vrot.slane %v5507, 1
    %5511 = vst.msk [vmem:[#allocation3 + $0x6] sm:$0x1] %vm2102, %v5507
    %5512 = vst.msk [vmem:[#allocation3 + $0xe] sm:$0x1] %vm2102, %v5509
    %v5513 = vld [vmem:[#allocation3] sm:$0x1]
    %v5514 = vld [vmem:[#allocation3 + $0x8] sm:$0x1]
    %v5515 = vld [vmem:[%s5] sm:$0xff]
    %v5516 = vld [vmem:[%s5 + $0x8] sm:$0xff]
    %v5517 = vld [vmem:[%s5 + $0x10] sm:$0xff]
    %v5518 = vld [vmem:[%s5 + $0x18] sm:$0xff]
    %v5519 = vld [vmem:[%s5 + $0x20] sm:$0xff]
    %v5520 = vld [vmem:[%s5 + $0x28] sm:$0xff]
    %v5521 = vld [vmem:[%s5 + $0x30] sm:$0xff]
    %v5522 = vld [vmem:[%s5 + $0x38] sm:$0xff]
    %v5523 = vld [vmem:[%s5 + $0x40] sm:$0xff]
    %v5524 = vld [vmem:[%s5 + $0x48] sm:$0xff]
    %v5525 = vld [vmem:[%s5 + $0x50] sm:$0xff]
    %v5526 = vld [vmem:[%s5 + $0x58] sm:$0xff]
    %v5527 = vld [vmem:[%s5 + $0x60] sm:$0xff]
    %v5528 = vld [vmem:[%s5 + $0x68] sm:$0xff]
    %v5529 = vld [vmem:[#allocation3 + $0x1] sm:$0x1]
    %v5530 = vld [vmem:[#allocation3 + $0x9] sm:$0x1]
    %s5531 = scalar_lea.vmem %s5, 112
    %v5532 = vld [vmem:[%s5531] sm:$0xff]
    %v5533 = vld [vmem:[%s5531 + $0x8] sm:$0xff]
    %v5534 = vld [vmem:[%s5531 + $0x10] sm:$0xff]
    %v5535 = vld [vmem:[%s5531 + $0x18] sm:$0xff]
    %v5536 = vld [vmem:[%s5531 + $0x20] sm:$0xff]
    %v5537 = vld [vmem:[%s5531 + $0x28] sm:$0xff]
    %v5538 = vld [vmem:[%s5531 + $0x30] sm:$0xff]
    %v5539 = vld [vmem:[%s5531 + $0x38] sm:$0xff]
    %v5540 = vld [vmem:[%s5531 + $0x40] sm:$0xff]
    %v5541 = vld [vmem:[%s5531 + $0x48] sm:$0xff]
    %v5542 = vld [vmem:[%s5531 + $0x50] sm:$0xff]
    %v5543 = vld [vmem:[%s5531 + $0x58] sm:$0xff]
    %v5544 = vld [vmem:[%s5531 + $0x60] sm:$0xff]
    %v5545 = vld [vmem:[%s5531 + $0x68] sm:$0xff]
    %v5548 = vrot.slane %v5530, 7
    %vm5549 = vcmask 1041409
    %v5550 = vsel %vm5549, %v5548, %v5529
    %vm5551 = vcmask 916480
    %v5552 = vsel %vm5551, %v5550, 0
    %5554 = vmatpush.msra.mxu0 0.0
    %5555 = vmatpush.msra.mxu0 0.0
    %5556 = vmatpush.msra.mxu0 %v5545
    %5557 = vmatpush.msra.mxu0 %v5544
    %5558 = vmatpush.msra.mxu0 %v5543
    %5559 = vmatpush.msra.mxu0 %v5542
    %5560 = vmatpush.msra.mxu0 %v5541
    %5561 = vmatpush.msra.mxu0 %v5540
    %5562 = vmatpush.msra.mxu0 %v5539
    %5563 = vmatpush.msra.mxu0 %v5538
    %5564 = vmatpush.msra.mxu0 %v5537
    %5565 = vmatpush.msra.mxu0 %v5536
    %5566 = vmatpush.msra.mxu0 %v5535
    %5567 = vmatpush.msra.mxu0 %v5534
    %5568 = vmatpush.msra.mxu0 %v5533
    %5569 = vmatpush.msra.mxu0 %v5532
    %5570 = vmatmul.f32.gmra.mxu0 %v5552
    %v5571 = vpop.f32.mrf.mxu0
    %v5572 = vadd.f32 0.0, %v5571
    %5573 = vdwg.mxu0
    %v5576 = vrot.slane %v5514, 7
    %v5577 = vsel %vm5549, %v5576, %v5513
    %v5578 = vsel %vm5551, %v5577, 0
    %5580 = vmatpush.msra.mxu0 0.0
    %5581 = vmatpush.msra.mxu0 0.0
    %5582 = vmatpush.msra.mxu0 %v5528
    %5583 = vmatpush.msra.mxu0 %v5527
    %5584 = vmatpush.msra.mxu0 %v5526
    %5585 = vmatpush.msra.mxu0 %v5525
    %5586 = vmatpush.msra.mxu0 %v5524
    %5587 = vmatpush.msra.mxu0 %v5523
    %5588 = vmatpush.msra.mxu0 %v5522
    %5589 = vmatpush.msra.mxu0 %v5521
    %5590 = vmatpush.msra.mxu0 %v5520
    %5591 = vmatpush.msra.mxu0 %v5519
    %5592 = vmatpush.msra.mxu0 %v5518
    %5593 = vmatpush.msra.mxu0 %v5517
    %5594 = vmatpush.msra.mxu0 %v5516
    %5595 = vmatpush.msra.mxu0 %v5515
    %5596 = vmatmul.f32.gmra.mxu0 %v5578
    %v5597 = vpop.f32.mrf.mxu0
    %v5598 = vadd.f32 %v5572, %v5597
    %5599 = vdwg.mxu0
    %v5600 = vld [vmem:[#allocation3 + $0x2] sm:$0x1]
    %v5601 = vld [vmem:[#allocation3 + $0xa] sm:$0x1]
    %s5602 = scalar_lea.vmem %s5, 224
    %v5603 = vld [vmem:[%s5602] sm:$0xff]
    %v5604 = vld [vmem:[%s5602 + $0x8] sm:$0xff]
    %v5605 = vld [vmem:[%s5602 + $0x10] sm:$0xff]
    %v5606 = vld [vmem:[%s5602 + $0x18] sm:$0xff]
    %v5607 = vld [vmem:[%s5602 + $0x20] sm:$0xff]
    %v5608 = vld [vmem:[%s5602 + $0x28] sm:$0xff]
    %v5609 = vld [vmem:[%s5602 + $0x30] sm:$0xff]
    %v5610 = vld [vmem:[%s5602 + $0x38] sm:$0xff]
    %v5611 = vld [vmem:[%s5602 + $0x40] sm:$0xff]
    %v5612 = vld [vmem:[%s5602 + $0x48] sm:$0xff]
    %v5613 = vld [vmem:[%s5602 + $0x50] sm:$0xff]
    %v5614 = vld [vmem:[%s5602 + $0x58] sm:$0xff]
    %v5615 = vld [vmem:[%s5602 + $0x60] sm:$0xff]
    %v5616 = vld [vmem:[%s5602 + $0x68] sm:$0xff]
    %v5619 = vrot.slane %v5601, 7
    %v5620 = vsel %vm5549, %v5619, %v5600
    %v5621 = vsel %vm5551, %v5620, 0
    %5623 = vmatpush.msra.mxu0 0.0
    %5624 = vmatpush.msra.mxu0 0.0
    %5625 = vmatpush.msra.mxu0 %v5616
    %5626 = vmatpush.msra.mxu0 %v5615
    %5627 = vmatpush.msra.mxu0 %v5614
    %5628 = vmatpush.msra.mxu0 %v5613
    %5629 = vmatpush.msra.mxu0 %v5612
    %5630 = vmatpush.msra.mxu0 %v5611
    %5631 = vmatpush.msra.mxu0 %v5610
    %5632 = vmatpush.msra.mxu0 %v5609
    %5633 = vmatpush.msra.mxu0 %v5608
    %5634 = vmatpush.msra.mxu0 %v5607
    %5635 = vmatpush.msra.mxu0 %v5606
    %5636 = vmatpush.msra.mxu0 %v5605
    %5637 = vmatpush.msra.mxu0 %v5604
    %5638 = vmatpush.msra.mxu0 %v5603
    %5639 = vmatmul.f32.gmra.mxu0 %v5621
    %v5640 = vpop.f32.mrf.mxu0
    %v5641 = vadd.f32 0.0, %v5640
    %5642 = vdwg.mxu0
    %v5643 = vadd.f32 %v5598, %v5641
    %v5644 = vld [vmem:[#allocation3 + $0x3] sm:$0x1]
    %v5645 = vld [vmem:[#allocation3 + $0xb] sm:$0x1]
    %s5646 = scalar_lea.vmem %s5, 336
    %v5647 = vld [vmem:[%s5646] sm:$0xff]
    %v5648 = vld [vmem:[%s5646 + $0x8] sm:$0xff]
    %v5649 = vld [vmem:[%s5646 + $0x10] sm:$0xff]
    %v5650 = vld [vmem:[%s5646 + $0x18] sm:$0xff]
    %v5651 = vld [vmem:[%s5646 + $0x20] sm:$0xff]
    %v5652 = vld [vmem:[%s5646 + $0x28] sm:$0xff]
    %v5653 = vld [vmem:[%s5646 + $0x30] sm:$0xff]
    %v5654 = vld [vmem:[%s5646 + $0x38] sm:$0xff]
    %v5655 = vld [vmem:[%s5646 + $0x40] sm:$0xff]
    %v5656 = vld [vmem:[%s5646 + $0x48] sm:$0xff]
    %v5657 = vld [vmem:[%s5646 + $0x50] sm:$0xff]
    %v5658 = vld [vmem:[%s5646 + $0x58] sm:$0xff]
    %v5659 = vld [vmem:[%s5646 + $0x60] sm:$0xff]
    %v5660 = vld [vmem:[%s5646 + $0x68] sm:$0xff]
    %v5663 = vrot.slane %v5645, 7
    %v5664 = vsel %vm5549, %v5663, %v5644
    %v5665 = vsel %vm5551, %v5664, 0
    %5667 = vmatpush.msra.mxu0 0.0
    %5668 = vmatpush.msra.mxu0 0.0
    %5669 = vmatpush.msra.mxu0 %v5660
    %5670 = vmatpush.msra.mxu0 %v5659
    %5671 = vmatpush.msra.mxu0 %v5658
    %5672 = vmatpush.msra.mxu0 %v5657
    %5673 = vmatpush.msra.mxu0 %v5656
    %5674 = vmatpush.msra.mxu0 %v5655
    %5675 = vmatpush.msra.mxu0 %v5654
    %5676 = vmatpush.msra.mxu0 %v5653
    %5677 = vmatpush.msra.mxu0 %v5652
    %5678 = vmatpush.msra.mxu0 %v5651
    %5679 = vmatpush.msra.mxu0 %v5650
    %5680 = vmatpush.msra.mxu0 %v5649
    %5681 = vmatpush.msra.mxu0 %v5648
    %5682 = vmatpush.msra.mxu0 %v5647
    %5683 = vmatmul.f32.gmra.mxu0 %v5665
    %v5684 = vpop.f32.mrf.mxu0
    %v5685 = vadd.f32 0.0, %v5684
    %5686 = vdwg.mxu0
    %v5687 = vadd.f32 %v5643, %v5685
    %v5688 = vld [vmem:[#allocation3 + $0x4] sm:$0x1]
    %v5689 = vld [vmem:[#allocation3 + $0xc] sm:$0x1]
    %s5690 = scalar_lea.vmem %s5, 448
    %v5691 = vld [vmem:[%s5690] sm:$0xff]
    %v5692 = vld [vmem:[%s5690 + $0x8] sm:$0xff]
    %v5693 = vld [vmem:[%s5690 + $0x10] sm:$0xff]
    %v5694 = vld [vmem:[%s5690 + $0x18] sm:$0xff]
    %v5695 = vld [vmem:[%s5690 + $0x20] sm:$0xff]
    %v5696 = vld [vmem:[%s5690 + $0x28] sm:$0xff]
    %v5697 = vld [vmem:[%s5690 + $0x30] sm:$0xff]
    %v5698 = vld [vmem:[%s5690 + $0x38] sm:$0xff]
    %v5699 = vld [vmem:[%s5690 + $0x40] sm:$0xff]
    %v5700 = vld [vmem:[%s5690 + $0x48] sm:$0xff]
    %v5701 = vld [vmem:[%s5690 + $0x50] sm:$0xff]
    %v5702 = vld [vmem:[%s5690 + $0x58] sm:$0xff]
    %v5703 = vld [vmem:[%s5690 + $0x60] sm:$0xff]
    %v5704 = vld [vmem:[%s5690 + $0x68] sm:$0xff]
    %v5707 = vrot.slane %v5689, 7
    %v5708 = vsel %vm5549, %v5707, %v5688
    %v5709 = vsel %vm5551, %v5708, 0
    %5711 = vmatpush.msra.mxu0 0.0
    %5712 = vmatpush.msra.mxu0 0.0
    %5713 = vmatpush.msra.mxu0 %v5704
    %5714 = vmatpush.msra.mxu0 %v5703
    %5715 = vmatpush.msra.mxu0 %v5702
    %5716 = vmatpush.msra.mxu0 %v5701
    %5717 = vmatpush.msra.mxu0 %v5700
    %5718 = vmatpush.msra.mxu0 %v5699
    %5719 = vmatpush.msra.mxu0 %v5698
    %5720 = vmatpush.msra.mxu0 %v5697
    %5721 = vmatpush.msra.mxu0 %v5696
    %5722 = vmatpush.msra.mxu0 %v5695
    %5723 = vmatpush.msra.mxu0 %v5694
    %5724 = vmatpush.msra.mxu0 %v5693
    %5725 = vmatpush.msra.mxu0 %v5692
    %5726 = vmatpush.msra.mxu0 %v5691
    %5727 = vmatmul.f32.gmra.mxu0 %v5709
    %v5728 = vpop.f32.mrf.mxu0
    %v5729 = vadd.f32 0.0, %v5728
    %5730 = vdwg.mxu0
    %v5731 = vadd.f32 %v5687, %v5729
    %v5732 = vld [vmem:[%s6] sm:$0x1]
    %v5734 = vperm.slane %v5732, 0
    %v5736 = vadd.f32 %v5731, %v5734
    %v5737 = vmax.f32 %v5736, 0.0
    %vm5738 = vcmask 517120
    %5739 = vst.msk [vmem:[#allocation4] sm:$0x3] %vm5738, %v5737
    %v5740 = vld [vmem:[#allocation3 + $0x2] sm:$0x1]
    %v5741 = vld [vmem:[#allocation3 + $0xa] sm:$0x1]
    %v5742 = vld [vmem:[%s5] sm:$0xff]
    %v5743 = vld [vmem:[%s5 + $0x8] sm:$0xff]
    %v5744 = vld [vmem:[%s5 + $0x10] sm:$0xff]
    %v5745 = vld [vmem:[%s5 + $0x18] sm:$0xff]
    %v5746 = vld [vmem:[%s5 + $0x20] sm:$0xff]
    %v5747 = vld [vmem:[%s5 + $0x28] sm:$0xff]
    %v5748 = vld [vmem:[%s5 + $0x30] sm:$0xff]
    %v5749 = vld [vmem:[%s5 + $0x38] sm:$0xff]
    %v5750 = vld [vmem:[%s5 + $0x40] sm:$0xff]
    %v5751 = vld [vmem:[%s5 + $0x48] sm:$0xff]
    %v5752 = vld [vmem:[%s5 + $0x50] sm:$0xff]
    %v5753 = vld [vmem:[%s5 + $0x58] sm:$0xff]
    %v5754 = vld [vmem:[%s5 + $0x60] sm:$0xff]
    %v5755 = vld [vmem:[%s5 + $0x68] sm:$0xff]
    %v5756 = vld [vmem:[#allocation3 + $0x3] sm:$0x1]
    %v5757 = vld [vmem:[#allocation3 + $0xb] sm:$0x1]
    %v5758 = vld [vmem:[%s5531] sm:$0xff]
    %v5759 = vld [vmem:[%s5531 + $0x8] sm:$0xff]
    %v5760 = vld [vmem:[%s5531 + $0x10] sm:$0xff]
    %v5761 = vld [vmem:[%s5531 + $0x18] sm:$0xff]
    %v5762 = vld [vmem:[%s5531 + $0x20] sm:$0xff]
    %v5763 = vld [vmem:[%s5531 + $0x28] sm:$0xff]
    %v5764 = vld [vmem:[%s5531 + $0x30] sm:$0xff]
    %v5765 = vld [vmem:[%s5531 + $0x38] sm:$0xff]
    %v5766 = vld [vmem:[%s5531 + $0x40] sm:$0xff]
    %v5767 = vld [vmem:[%s5531 + $0x48] sm:$0xff]
    %v5768 = vld [vmem:[%s5531 + $0x50] sm:$0xff]
    %v5769 = vld [vmem:[%s5531 + $0x58] sm:$0xff]
    %v5770 = vld [vmem:[%s5531 + $0x60] sm:$0xff]
    %v5771 = vld [vmem:[%s5531 + $0x68] sm:$0xff]
    %v5774 = vrot.slane %v5757, 7
    %v5775 = vsel %vm5549, %v5774, %v5756
    %v5776 = vsel %vm5551, %v5775, 0
    %5778 = vmatpush.msra.mxu0 0.0
    %5779 = vmatpush.msra.mxu0 0.0
    %5780 = vmatpush.msra.mxu0 %v5771
    %5781 = vmatpush.msra.mxu0 %v5770
    %5782 = vmatpush.msra.mxu0 %v5769
    %5783 = vmatpush.msra.mxu0 %v5768
    %5784 = vmatpush.msra.mxu0 %v5767
    %5785 = vmatpush.msra.mxu0 %v5766
    %5786 = vmatpush.msra.mxu0 %v5765
    %5787 = vmatpush.msra.mxu0 %v5764
    %5788 = vmatpush.msra.mxu0 %v5763
    %5789 = vmatpush.msra.mxu0 %v5762
    %5790 = vmatpush.msra.mxu0 %v5761
    %5791 = vmatpush.msra.mxu0 %v5760
    %5792 = vmatpush.msra.mxu0 %v5759
    %5793 = vmatpush.msra.mxu0 %v5758
    %5794 = vmatmul.f32.gmra.mxu0 %v5776
    %v5795 = vpop.f32.mrf.mxu0
    %v5796 = vadd.f32 0.0, %v5795
    %5797 = vdwg.mxu0
    %v5800 = vrot.slane %v5741, 7
    %v5801 = vsel %vm5549, %v5800, %v5740
    %v5802 = vsel %vm5551, %v5801, 0
    %5804 = vmatpush.msra.mxu0 0.0
    %5805 = vmatpush.msra.mxu0 0.0
    %5806 = vmatpush.msra.mxu0 %v5755
    %5807 = vmatpush.msra.mxu0 %v5754
    %5808 = vmatpush.msra.mxu0 %v5753
    %5809 = vmatpush.msra.mxu0 %v5752
    %5810 = vmatpush.msra.mxu0 %v5751
    %5811 = vmatpush.msra.mxu0 %v5750
    %5812 = vmatpush.msra.mxu0 %v5749
    %5813 = vmatpush.msra.mxu0 %v5748
    %5814 = vmatpush.msra.mxu0 %v5747
    %5815 = vmatpush.msra.mxu0 %v5746
    %5816 = vmatpush.msra.mxu0 %v5745
    %5817 = vmatpush.msra.mxu0 %v5744
    %5818 = vmatpush.msra.mxu0 %v5743
    %5819 = vmatpush.msra.mxu0 %v5742
    %5820 = vmatmul.f32.gmra.mxu0 %v5802
    %v5821 = vpop.f32.mrf.mxu0
    %v5822 = vadd.f32 %v5796, %v5821
    %5823 = vdwg.mxu0
    %v5824 = vld [vmem:[#allocation3 + $0x4] sm:$0x1]
    %v5825 = vld [vmem:[#allocation3 + $0xc] sm:$0x1]
    %v5826 = vld [vmem:[%s5602] sm:$0xff]
    %v5827 = vld [vmem:[%s5602 + $0x8] sm:$0xff]
    %v5828 = vld [vmem:[%s5602 + $0x10] sm:$0xff]
    %v5829 = vld [vmem:[%s5602 + $0x18] sm:$0xff]
    %v5830 = vld [vmem:[%s5602 + $0x20] sm:$0xff]
    %v5831 = vld [vmem:[%s5602 + $0x28] sm:$0xff]
    %v5832 = vld [vmem:[%s5602 + $0x30] sm:$0xff]
    %v5833 = vld [vmem:[%s5602 + $0x38] sm:$0xff]
    %v5834 = vld [vmem:[%s5602 + $0x40] sm:$0xff]
    %v5835 = vld [vmem:[%s5602 + $0x48] sm:$0xff]
    %v5836 = vld [vmem:[%s5602 + $0x50] sm:$0xff]
    %v5837 = vld [vmem:[%s5602 + $0x58] sm:$0xff]
    %v5838 = vld [vmem:[%s5602 + $0x60] sm:$0xff]
    %v5839 = vld [vmem:[%s5602 + $0x68] sm:$0xff]
    %v5842 = vrot.slane %v5825, 7
    %v5843 = vsel %vm5549, %v5842, %v5824
    %v5844 = vsel %vm5551, %v5843, 0
    %5846 = vmatpush.msra.mxu0 0.0
    %5847 = vmatpush.msra.mxu0 0.0
    %5848 = vmatpush.msra.mxu0 %v5839
    %5849 = vmatpush.msra.mxu0 %v5838
    %5850 = vmatpush.msra.mxu0 %v5837
    %5851 = vmatpush.msra.mxu0 %v5836
    %5852 = vmatpush.msra.mxu0 %v5835
    %5853 = vmatpush.msra.mxu0 %v5834
    %5854 = vmatpush.msra.mxu0 %v5833
    %5855 = vmatpush.msra.mxu0 %v5832
    %5856 = vmatpush.msra.mxu0 %v5831
    %5857 = vmatpush.msra.mxu0 %v5830
    %5858 = vmatpush.msra.mxu0 %v5829
    %5859 = vmatpush.msra.mxu0 %v5828
    %5860 = vmatpush.msra.mxu0 %v5827
    %5861 = vmatpush.msra.mxu0 %v5826
    %5862 = vmatmul.f32.gmra.mxu0 %v5844
    %v5863 = vpop.f32.mrf.mxu0
    %v5864 = vadd.f32 0.0, %v5863
    %5865 = vdwg.mxu0
    %v5866 = vadd.f32 %v5822, %v5864
    %v5867 = vld [vmem:[#allocation3 + $0x5] sm:$0x1]
    %v5868 = vld [vmem:[#allocation3 + $0xd] sm:$0x1]
    %v5869 = vld [vmem:[%s5646] sm:$0xff]
    %v5870 = vld [vmem:[%s5646 + $0x8] sm:$0xff]
    %v5871 = vld [vmem:[%s5646 + $0x10] sm:$0xff]
    %v5872 = vld [vmem:[%s5646 + $0x18] sm:$0xff]
    %v5873 = vld [vmem:[%s5646 + $0x20] sm:$0xff]
    %v5874 = vld [vmem:[%s5646 + $0x28] sm:$0xff]
    %v5875 = vld [vmem:[%s5646 + $0x30] sm:$0xff]
    %v5876 = vld [vmem:[%s5646 + $0x38] sm:$0xff]
    %v5877 = vld [vmem:[%s5646 + $0x40] sm:$0xff]
    %v5878 = vld [vmem:[%s5646 + $0x48] sm:$0xff]
    %v5879 = vld [vmem:[%s5646 + $0x50] sm:$0xff]
    %v5880 = vld [vmem:[%s5646 + $0x58] sm:$0xff]
    %v5881 = vld [vmem:[%s5646 + $0x60] sm:$0xff]
    %v5882 = vld [vmem:[%s5646 + $0x68] sm:$0xff]
    %v5885 = vrot.slane %v5868, 7
    %v5886 = vsel %vm5549, %v5885, %v5867
    %v5887 = vsel %vm5551, %v5886, 0
    %5889 = vmatpush.msra.mxu0 0.0
    %5890 = vmatpush.msra.mxu0 0.0
    %5891 = vmatpush.msra.mxu0 %v5882
    %5892 = vmatpush.msra.mxu0 %v5881
    %5893 = vmatpush.msra.mxu0 %v5880
    %5894 = vmatpush.msra.mxu0 %v5879
    %5895 = vmatpush.msra.mxu0 %v5878
    %5896 = vmatpush.msra.mxu0 %v5877
    %5897 = vmatpush.msra.mxu0 %v5876
    %5898 = vmatpush.msra.mxu0 %v5875
    %5899 = vmatpush.msra.mxu0 %v5874
    %5900 = vmatpush.msra.mxu0 %v5873
    %5901 = vmatpush.msra.mxu0 %v5872
    %5902 = vmatpush.msra.mxu0 %v5871
    %5903 = vmatpush.msra.mxu0 %v5870
    %5904 = vmatpush.msra.mxu0 %v5869
    %5905 = vmatmul.f32.gmra.mxu0 %v5887
    %v5906 = vpop.f32.mrf.mxu0
    %v5907 = vadd.f32 0.0, %v5906
    %5908 = vdwg.mxu0
    %v5909 = vadd.f32 %v5866, %v5907
    %v5910 = vld [vmem:[#allocation3 + $0x6] sm:$0x1]
    %v5911 = vld [vmem:[#allocation3 + $0xe] sm:$0x1]
    %v5912 = vld [vmem:[%s5690] sm:$0xff]
    %v5913 = vld [vmem:[%s5690 + $0x8] sm:$0xff]
    %v5914 = vld [vmem:[%s5690 + $0x10] sm:$0xff]
    %v5915 = vld [vmem:[%s5690 + $0x18] sm:$0xff]
    %v5916 = vld [vmem:[%s5690 + $0x20] sm:$0xff]
    %v5917 = vld [vmem:[%s5690 + $0x28] sm:$0xff]
    %v5918 = vld [vmem:[%s5690 + $0x30] sm:$0xff]
    %v5919 = vld [vmem:[%s5690 + $0x38] sm:$0xff]
    %v5920 = vld [vmem:[%s5690 + $0x40] sm:$0xff]
    %v5921 = vld [vmem:[%s5690 + $0x48] sm:$0xff]
    %v5922 = vld [vmem:[%s5690 + $0x50] sm:$0xff]
    %v5923 = vld [vmem:[%s5690 + $0x58] sm:$0xff]
    %v5924 = vld [vmem:[%s5690 + $0x60] sm:$0xff]
    %v5925 = vld [vmem:[%s5690 + $0x68] sm:$0xff]
    %v5928 = vrot.slane %v5911, 7
    %v5929 = vsel %vm5549, %v5928, %v5910
    %v5930 = vsel %vm5551, %v5929, 0
    %5932 = vmatpush.msra.mxu0 0.0
    %5933 = vmatpush.msra.mxu0 0.0
    %5934 = vmatpush.msra.mxu0 %v5925
    %5935 = vmatpush.msra.mxu0 %v5924
    %5936 = vmatpush.msra.mxu0 %v5923
    %5937 = vmatpush.msra.mxu0 %v5922
    %5938 = vmatpush.msra.mxu0 %v5921
    %5939 = vmatpush.msra.mxu0 %v5920
    %5940 = vmatpush.msra.mxu0 %v5919
    %5941 = vmatpush.msra.mxu0 %v5918
    %5942 = vmatpush.msra.mxu0 %v5917
    %5943 = vmatpush.msra.mxu0 %v5916
    %5944 = vmatpush.msra.mxu0 %v5915
    %5945 = vmatpush.msra.mxu0 %v5914
    %5946 = vmatpush.msra.mxu0 %v5913
    %5947 = vmatpush.msra.mxu0 %v5912
    %5948 = vmatmul.f32.gmra.mxu0 %v5930
    %v5949 = vpop.f32.mrf.mxu0
    %v5950 = vadd.f32 0.0, %v5949
    %5951 = vdwg.mxu0
    %v5952 = vadd.f32 %v5909, %v5950
    %v5953 = vld [vmem:[%s6] sm:$0x1]
    %v5955 = vperm.slane %v5953, 0
    %v5957 = vadd.f32 %v5952, %v5955
    %v5958 = vmax.f32 %v5957, 0.0
    %5960 = vrot.lane.b32.xlu0 %v5958, 64
    %v5961 = vpop.permute.xlu0 %5960
    %vm5963 = vcmask 1041920
    %5964 = vst.msk [vmem:[#allocation4] sm:$0x3] %vm5963, %v5961
    %v5965 = vld [vmem:[#allocation4] sm:$0x3]
    %v5966 = vld [vmem:[%s7] sm:$0xff]
    %v5967 = vld [vmem:[%s7 + $0x8] sm:$0xff]
    %v5968 = vld [vmem:[%s7 + $0x10] sm:$0xff]
    %v5969 = vld [vmem:[%s7 + $0x18] sm:$0xff]
    %v5970 = vld [vmem:[%s7 + $0x20] sm:$0xff]
    %v5971 = vld [vmem:[%s7 + $0x28] sm:$0xff]
    %v5972 = vld [vmem:[%s7 + $0x30] sm:$0xff]
    %v5973 = vld [vmem:[%s7 + $0x38] sm:$0xff]
    %v5974 = vld [vmem:[%s7 + $0x40] sm:$0xff]
    %v5975 = vld [vmem:[%s7 + $0x48] sm:$0xff]
    %v5976 = vld [vmem:[%s7 + $0x50] sm:$0xff]
    %v5977 = vld [vmem:[%s7 + $0x58] sm:$0xff]
    %v5978 = vld [vmem:[%s7 + $0x60] sm:$0xff]
    %v5979 = vld [vmem:[%s7 + $0x68] sm:$0xff]
    %v5980 = vld [vmem:[%s7 + $0x70] sm:$0xff]
    %v5981 = vld [vmem:[%s7 + $0x78] sm:$0xff]
    %v5982 = vld [vmem:[%s7 + $0x80] sm:$0xff]
    %v5983 = vld [vmem:[%s7 + $0x88] sm:$0xff]
    %v5984 = vld [vmem:[%s7 + $0x90] sm:$0xff]
    %v5985 = vld [vmem:[%s7 + $0x98] sm:$0xff]
    %v5986 = vld [vmem:[%s7 + $0xa0] sm:$0xff]
    %v5987 = vld [vmem:[%s7 + $0xa8] sm:$0xff]
    %v5988 = vld [vmem:[%s7 + $0xb0] sm:$0xff]
    %v5989 = vld [vmem:[%s7 + $0xb8] sm:$0xff]
    %v5990 = vld [vmem:[%s7 + $0xc0] sm:$0xff]
    %v5991 = vld [vmem:[%s7 + $0xc8] sm:$0xff]
    %v5992 = vld [vmem:[%s7 + $0xd0] sm:$0xff]
    %v5993 = vld [vmem:[%s7 + $0xd8] sm:$0xff]
    %v5994 = vld [vmem:[%s7 + $0xe0] sm:$0xff]
    %v5995 = vld [vmem:[%s7 + $0xe8] sm:$0xff]
    %v5996 = vld [vmem:[%s7 + $0xf0] sm:$0xff]
    %v5997 = vld [vmem:[%s7 + $0xf8] sm:$0xff]
    %v5998 = vld [vmem:[%s8] sm:$0x3]
    %v6000 = vperm.slane %v5998, 0
    %v6001 = vperm.slane %v5998, 1
    %6004 = vmatpush.msra.mxu0 %v5996
    %6005 = vmatpush.msra.mxu0 %v5994
    %6006 = vmatpush.msra.mxu0 %v5992
    %6007 = vmatpush.msra.mxu0 %v5990
    %6008 = vmatpush.msra.mxu0 %v5988
    %6009 = vmatpush.msra.mxu0 %v5986
    %6010 = vmatpush.msra.mxu0 %v5984
    %6011 = vmatpush.msra.mxu0 %v5982
    %6012 = vmatpush.msra.mxu0 %v5980
    %6013 = vmatpush.msra.mxu0 %v5978
    %6014 = vmatpush.msra.mxu0 %v5976
    %6015 = vmatpush.msra.mxu0 %v5974
    %6016 = vmatpush.msra.mxu0 %v5972
    %6017 = vmatpush.msra.mxu0 %v5970
    %6018 = vmatpush.msra.mxu0 %v5968
    %6019 = vmatpush.msra.mxu0 %v5966
    %6020 = vmatmul.f32.gmra.mxu0 %v5965
    %v6021 = vpop.f32.mrf.mxu0
    %v6022 = vadd.f32 %v6000, %v6021
    %6023 = vdwg.mxu0
    %6024 = vmatpush.msra.mxu0 %v5997
    %6025 = vmatpush.msra.mxu0 %v5995
    %6026 = vmatpush.msra.mxu0 %v5993
    %6027 = vmatpush.msra.mxu0 %v5991
    %6028 = vmatpush.msra.mxu0 %v5989
    %6029 = vmatpush.msra.mxu0 %v5987
    %6030 = vmatpush.msra.mxu0 %v5985
    %6031 = vmatpush.msra.mxu0 %v5983
    %6032 = vmatpush.msra.mxu0 %v5981
    %6033 = vmatpush.msra.mxu0 %v5979
    %6034 = vmatpush.msra.mxu0 %v5977
    %6035 = vmatpush.msra.mxu0 %v5975
    %6036 = vmatpush.msra.mxu0 %v5973
    %6037 = vmatpush.msra.mxu0 %v5971
    %6038 = vmatpush.msra.mxu0 %v5969
    %6039 = vmatpush.msra.mxu0 %v5967
    %6040 = vmatmul.f32.gmra.mxu0 %v5965
    %v6041 = vpop.f32.mrf.mxu0
    %v6042 = vadd.f32 %v6001, %v6041
    %6043 = vdwg.mxu0
    %v6044 = vmax.f32 %v6022, 0.0
    %v6045 = vmax.f32 %v6042, 0.0
    %v6046 = vld [vmem:[%s9] sm:$0xf]
    %6048 = vst [vmem:[#allocation1] ss:$4 sm:$0xff] %v6046
    %v6049 = vld.sshfl [vmem:[#allocation1] sm:$0xff pattern:$0x73625140]
    %v6050 = vld.sshfl [vmem:[#allocation1 + $0x8] sm:$0xff pattern:$0x73625140]
    %v6053 = vmul.f32 %v6044, %v6049
    %v6054 = vmul.f32 %v6045, %v6050
    %v6055 = vld [vmem:[%s10] sm:$0xff]
    %v6056 = vld [vmem:[%s10 + $0x8] sm:$0xff]
    %v6057 = vld [vmem:[%s10 + $0x10] sm:$0xff]
    %v6058 = vld [vmem:[%s10 + $0x18] sm:$0xff]
    %v6059 = vld [vmem:[%s10 + $0x20] sm:$0xff]
    %v6060 = vld [vmem:[%s10 + $0x28] sm:$0xff]
    %v6061 = vld [vmem:[%s10 + $0x30] sm:$0xff]
    %v6062 = vld [vmem:[%s10 + $0x38] sm:$0xff]
    %v6063 = vld [vmem:[%s10 + $0x40] sm:$0xff]
    %v6064 = vld [vmem:[%s10 + $0x48] sm:$0xff]
    %v6065 = vld [vmem:[%s10 + $0x50] sm:$0xff]
    %v6066 = vld [vmem:[%s10 + $0x58] sm:$0xff]
    %v6067 = vld [vmem:[%s10 + $0x60] sm:$0xff]
    %v6068 = vld [vmem:[%s10 + $0x68] sm:$0xff]
    %v6069 = vld [vmem:[%s10 + $0x70] sm:$0xff]
    %v6070 = vld [vmem:[%s10 + $0x78] sm:$0xff]
    %v6071 = vld [vmem:[%s10 + $0x80] sm:$0xff]
    %v6072 = vld [vmem:[%s10 + $0x88] sm:$0xff]
    %v6073 = vld [vmem:[%s10 + $0x90] sm:$0xff]
    %v6074 = vld [vmem:[%s10 + $0x98] sm:$0xff]
    %v6075 = vld [vmem:[%s10 + $0xa0] sm:$0xff]
    %v6076 = vld [vmem:[%s10 + $0xa8] sm:$0xff]
    %v6077 = vld [vmem:[%s10 + $0xb0] sm:$0xff]
    %v6078 = vld [vmem:[%s10 + $0xb8] sm:$0xff]
    %v6079 = vld [vmem:[%s10 + $0xc0] sm:$0xff]
    %v6080 = vld [vmem:[%s10 + $0xc8] sm:$0xff]
    %v6081 = vld [vmem:[%s10 + $0xd0] sm:$0xff]
    %v6082 = vld [vmem:[%s10 + $0xd8] sm:$0xff]
    %v6083 = vld [vmem:[%s10 + $0xe0] sm:$0xff]
    %v6084 = vld [vmem:[%s10 + $0xe8] sm:$0xff]
    %v6085 = vld [vmem:[%s10 + $0xf0] sm:$0xff]
    %v6086 = vld [vmem:[%s10 + $0xf8] sm:$0xff]
    %v6087 = vld [vmem:[%s11] sm:$0x1]
    %v6089 = vperm.slane %v6087, 0
    %6091 = vmatpush.msra.mxu0 %v6070
    %6092 = vmatpush.msra.mxu0 %v6069
    %6093 = vmatpush.msra.mxu0 %v6068
    %6094 = vmatpush.msra.mxu0 %v6067
    %6095 = vmatpush.msra.mxu0 %v6066
    %6096 = vmatpush.msra.mxu0 %v6065
    %6097 = vmatpush.msra.mxu0 %v6064
    %6098 = vmatpush.msra.mxu0 %v6063
    %6099 = vmatpush.msra.mxu0 %v6062
    %6100 = vmatpush.msra.mxu0 %v6061
    %6101 = vmatpush.msra.mxu0 %v6060
    %6102 = vmatpush.msra.mxu0 %v6059
    %6103 = vmatpush.msra.mxu0 %v6058
    %6104 = vmatpush.msra.mxu0 %v6057
    %6105 = vmatpush.msra.mxu0 %v6056
    %6106 = vmatpush.msra.mxu0 %v6055
    %6107 = vmatmul.f32.gmra.mxu0 %v6053
    %v6108 = vpop.f32.mrf.mxu0
    %v6109 = vadd.f32 %v6089, %v6108
    %6110 = vdwg.mxu0
    %6111 = vmatpush.msra.mxu0 %v6086
    %6112 = vmatpush.msra.mxu0 %v6085
    %6113 = vmatpush.msra.mxu0 %v6084
    %6114 = vmatpush.msra.mxu0 %v6083
    %6115 = vmatpush.msra.mxu0 %v6082
    %6116 = vmatpush.msra.mxu0 %v6081
    %6117 = vmatpush.msra.mxu0 %v6080
    %6118 = vmatpush.msra.mxu0 %v6079
    %6119 = vmatpush.msra.mxu0 %v6078
    %6120 = vmatpush.msra.mxu0 %v6077
    %6121 = vmatpush.msra.mxu0 %v6076
    %6122 = vmatpush.msra.mxu0 %v6075
    %6123 = vmatpush.msra.mxu0 %v6074
    %6124 = vmatpush.msra.mxu0 %v6073
    %6125 = vmatpush.msra.mxu0 %v6072
    %6126 = vmatpush.msra.mxu0 %v6071
    %6127 = vmatmul.f32.gmra.mxu0 %v6054
    %v6128 = vpop.f32.mrf.mxu0
    %v6129 = vadd.f32 %v6109, %v6128
    %6130 = vdwg.mxu0
    %vm6131 = vcmask 17408
    %6132 = vst.msk [vmem:[#allocation5] sm:$0x3] %vm6131, %v6129
    // Predicated region
    $region50: #{forward.1} parent=1 // pred_check
      _
    $region51: #{forward.1} parent=1 // pred_check_branch
      %6134 = sbr.rel (0) target = $region53
    $region52: #{forward.1} parent=1 // pred_region
      %6136 = vsyncadd [#allocation6], 0
      %s6138 = sshll.u32 [#allocation5], 4
      %s6139 = int_to_ptr.vmem [resolvable:$true] %s6138
      %s6140 = sshll.u32 %s12, 4
      %s6141 = int_to_ptr.hbm [resolvable:$true] %s6140
      %6143 = dma.vmem_to_hbm [thread:$0]  %s6139, 32, %s6141, [#allocation6]
    $region53: #{forward.1} parent=1 // pred_fallthru
      _
    // Predicated region
    $region54: #{forward.1} parent=1 // pred_check
      _
    $region55: #{forward.1} parent=1 // pred_check_branch
      %6145 = sbr.rel (0) target = $region57
    $region56: #{forward.1} parent=1 // pred_region
      %6147 = dma.done [#allocation6], 32
    $region57: #{forward.1} parent=1 // pred_fallthru
      _
    %6148 = vsyncpa [#allocation6], 1

</llo_original>
